<compile_context>
chip_gen: v7x
topology: tpu7x:2x2x1
jax: 0.10.0
libtpu: 0.0.40
codegen_flags: <defaults>
</compile_context>

<pallas_src>
import functools

import jax
import jax.numpy as jnp
from jax.experimental import pallas as pl
from jax.experimental.pallas import tpu as pltpu

DTYPE = jnp.float32

_RESBLOCK_KEYS = ("ln1_g", "ln1_b", "qkv_w", "qkv_b", "out_w", "out_b",
                  "ln2_g", "ln2_b", "mlp_w1", "mlp_b1", "mlp_w2", "mlp_b2")


# --------------------------------------------------------------------------
# In-kernel math helpers (traced inside the single fused Pallas kernel)
# --------------------------------------------------------------------------
def _layernorm(x, g, b, eps=1e-5):
    mu = jnp.mean(x, axis=-1, keepdims=True)
    xc = x - mu
    var = jnp.mean(xc * xc, axis=-1, keepdims=True)
    return xc * jax.lax.rsqrt(var + eps) * g + b


def _softmax_rows(s):
    s = s - jnp.max(s, axis=-1, keepdims=True)
    p = jnp.exp(s)
    return p * pl.reciprocal(jnp.sum(p, axis=-1, keepdims=True), approx=True)


def _mha_batched(x, qkv_w, qkv_b, out_w, out_b, mask, heads, B, S):
    """Self-attention on B stacked length-S sequences; x is the flat (B*S, D) matrix.

    QKV projection and the output projection run batch-flattened (one MXU push each);
    only the tiny per-sequence score/softmax/PV step loops statically over B.
    """
    D = x.shape[-1]
    Dh = D // heads
    scale = Dh ** -0.5
    qkv = jnp.dot(x, qkv_w, preferred_element_type=jnp.float32) + qkv_b      # (B*S, 3D)
    per_seq = []
    for b in range(B):                                                       # static unroll
        seq = qkv[b * S:(b + 1) * S]                                         # (S, 3D)
        head_outs = []
        for h in range(heads):                                               # static unroll
            q = seq[:, h * Dh:(h + 1) * Dh]
            k = seq[:, D + h * Dh:D + (h + 1) * Dh]
            v = seq[:, 2 * D + h * Dh:2 * D + (h + 1) * Dh]
            s = jax.lax.dot_general(q, k, (((1,), (1,)), ((), ())),
                                    preferred_element_type=jnp.float32) * scale
            if mask is not None:
                s = s + mask
            head_outs.append(jnp.dot(_softmax_rows(s), v,
                                     preferred_element_type=jnp.float32))    # (S, Dh)
        per_seq.append(jnp.concatenate(head_outs, axis=-1))                  # (S, D)
    o = jnp.concatenate(per_seq, axis=0)                                     # (B*S, D)
    # Single output projection for the whole batch (instead of B*heads K=Dh matmuls).
    return jnp.dot(o, out_w, preferred_element_type=jnp.float32) + out_b


def _resblock(x, p, heads, mask, B, S):
    """CLIP-style pre-norm residual attention block (QuickGELU MLP), batch-flattened."""
    h = _layernorm(x, p["ln1_g"], p["ln1_b"])
    x = x + _mha_batched(h, p["qkv_w"], p["qkv_b"], p["out_w"], p["out_b"],
                         mask, heads, B, S)
    h = _layernorm(x, p["ln2_g"], p["ln2_b"])
    h = jnp.dot(h, p["mlp_w1"], preferred_element_type=jnp.float32) + p["mlp_b1"]
    h = h * jax.nn.sigmoid(1.702 * h)                                        # QuickGELU
    h = jnp.dot(h, p["mlp_w2"], preferred_element_type=jnp.float32) + p["mlp_b2"]
    return x + h


def _block_params(refs):
    return {k: r[...] for k, r in zip(_RESBLOCK_KEYS, refs)}


def _block_args(p):
    return [p[k] for k in _RESBLOCK_KEYS]


# --------------------------------------------------------------------------
# The single fused kernel: image encoder + text encoder + fusion + hash heads
# --------------------------------------------------------------------------
def _cagmh_kernel(*refs, B, s_img, ctx, heads):
    it = iter(refs)

    def take(n):
        return [next(it) for _ in range(n)]

    # ---- ref unpacking (order matches the `inputs` list built in the wrapper) ----
    patch_ref, posimg_ref, conv1_ref, lnpre_g, lnpre_b = take(5)
    vis_blk = _block_params(take(12))
    lnpost_g, lnpost_b, vproj = take(3)
    tok_ref, eot_ref = take(2)                       # eot_ref: (B,) int32 in SMEM
    txt_blk = _block_params(take(12))
    lnf_g, lnf_b, tproj = take(3)
    fuse_blk = _block_params(take(12))
    ih_w1, ih_b1, ih_w2, ih_b2, th_w1, th_b1, th_w2, th_b2 = [r[...] for r in take(8)]
    out_ref, txt_scratch = take(2)

    # ------------------------- image encoder --------------------------------
    # conv1 (stride=patch, no bias) on the whole batch at once: (B*s_img, Cpp)@(Cpp, W).
    # CLS row of the patch matrix is zero; the class embedding is folded into pos[0].
    x = jnp.dot(patch_ref[...], conv1_ref[...],
                preferred_element_type=jnp.float32) + posimg_ref[...]        # (B*s_img, W)
    x = _layernorm(x, lnpre_g[...], lnpre_b[...])
    # TODO(synk): real ViT-B/32 has 12 transformer layers; 1 layer here (same math).
    x = _resblock(x, vis_blk, heads, None, B, s_img)
    cls = jnp.concatenate([x[b * s_img:b * s_img + 1] for b in range(B)], axis=0)  # (B, W)
    cls = _layernorm(cls, lnpost_g[...], lnpost_b[...])
    img_embed = jnp.dot(cls, vproj[...], preferred_element_type=jnp.float32)        # (B, E)

    # ------------------------- text encoder ---------------------------------
    t = tok_ref[...]                                                         # (B*ctx, W), pos pre-added
    row = jax.lax.broadcasted_iota(jnp.int32, (ctx, ctx), 0)
    col = jax.lax.broadcasted_iota(jnp.int32, (ctx, ctx), 1)
    causal = jnp.where(col > row, jnp.float32(-1e9), jnp.float32(0.0))       # built once
    t = _resblock(t, txt_blk, heads, causal, B, ctx)
    t = _layernorm(t, lnf_g[...], lnf_b[...])
    txt_scratch[...] = t
    # EOT token selection via SMEM scalar index + dynamic sublane slice (no one-hot matmul).
    eot_rows = [txt_scratch[pl.ds(b * ctx + eot_ref[b], 1), :] for b in range(B)]
    txt_feat = jnp.concatenate(eot_rows, axis=0)                             # (B, W)
    txt_embed = jnp.dot(txt_feat, tproj[...], preferred_element_type=jnp.float32)   # (B, E)

    # ---------------------- fusion + hash heads -----------------------------
    # TODO(synk): MambaEncoder source unavailable; modeled as a 2-token (image, text)
    # self-attention fusion block returning both refined embeddings.
    fused = jnp.concatenate(
        [jnp.concatenate([img_embed[b:b + 1], txt_embed[b:b + 1]], axis=0)
         for b in range(B)], axis=0)                                         # (B*2, E)
    f = _resblock(fused, fuse_blk, heads, None, B, 2)
    img_tok = jnp.concatenate([f[2 * b:2 * b + 1] for b in range(B)], axis=0)        # (B, E)
    txt_tok = jnp.concatenate([f[2 * b + 1:2 * b + 2] for b in range(B)], axis=0)    # (B, E)

    def hash_mlp(v, w1, b1, w2, b2):
        # TODO(synk): ImageMlp/TextMlp source unavailable; modeled as Linear->GELU->Linear->Tanh.
        h = jnp.dot(v, w1, preferred_element_type=jnp.float32) + b1
        h = jax.nn.gelu(h, approximate=True)
        y = jnp.dot(h, w2, preferred_element_type=jnp.float32) + b2
        return jnp.tanh(y)

    # Packed output slab: row 0 = image hashes, row 1 = text hashes.
    out_ref[0] = hash_mlp(img_tok, ih_w1, ih_b1, ih_w2, ih_b2).astype(out_ref.dtype)
    out_ref[1] = hash_mlp(txt_tok, th_w1, th_b1, th_w2, th_b2).astype(out_ref.dtype)


# --------------------------------------------------------------------------
# Wrapper: XLA glue (patchify / token gather / argmax) + ONE pallas_call
# --------------------------------------------------------------------------
def cagmh_forward(params, image, text, heads=4, patch=16):
    v, t, fuse = params["visual"], params["text"], params["fuse"]
    ih, th = params["image_hash"], params["text_hash"]

    B, C, H, W_img = image.shape
    gh, gw = H // patch, W_img // patch
    n_patches = gh * gw
    cpp = C * patch * patch
    s_img = n_patches + 1
    width = v["conv1_w"].shape[1]
    ctx = text.shape[1]
    out_dim = ih["w2"].shape[1]

    # ---- glue (fused under the caller's jit) ----
    patches = image.astype(DTYPE).reshape(B, C, gh, patch, gw, patch)
    patches = patches.transpose(0, 2, 4, 1, 3, 5).reshape(B, n_patches, cpp)
    patches = jnp.pad(patches, ((0, 0), (1, 0), (0, 0)))        # zero CLS row (cls folded into pos[0])
    patches_flat = patches.reshape(B * s_img, cpp)
    pos_img = jnp.tile(v["pos_embed"], (B, 1))                  # (B*s_img, width)

    tok = (t["token_embedding"][text] + t["pos_embed"]).astype(DTYPE).reshape(B * ctx, width)
    eot_idx = jnp.argmax(text, axis=-1).astype(jnp.int32)       # (B,) EOT token positions

    img_inputs = [patches_flat, pos_img, v["conv1_w"], v["ln_pre_g"], v["ln_pre_b"],
                  *_block_args(v["block"]), v["ln_post_g"], v["ln_post_b"], v["proj"]]
    txt_inputs = [tok, eot_idx, *_block_args(t["block"]),
                  t["ln_final_g"], t["ln_final_b"], t["text_projection"]]
    tail_inputs = [*_block_args(fuse["block"]),
                   ih["w1"], ih["b1"], ih["w2"], ih["b2"],
                   th["w1"], th["b1"], th["w2"], th["b2"]]
    inputs = img_inputs + txt_inputs + tail_inputs

    def _vmem():
        return pl.BlockSpec(memory_space=pltpu.MemorySpace.VMEM)

    in_specs = ([_vmem() for _ in img_inputs]
                + [_vmem(), pl.BlockSpec(memory_space=pltpu.MemorySpace.SMEM)]  # tok, eot_idx
                + [_vmem() for _ in txt_inputs[2:]]
                + [_vmem() for _ in tail_inputs])

    out = pl.pallas_call(
        functools.partial(_cagmh_kernel, B=B, s_img=s_img, ctx=ctx, heads=heads),
        out_shape=jax.ShapeDtypeStruct((2, B, out_dim), DTYPE),
        in_specs=in_specs,
        out_specs=pl.BlockSpec(memory_space=pltpu.MemorySpace.VMEM),
        scratch_shapes=[pltpu.VMEM((B * ctx, width), jnp.float32)],
        compiler_params=pltpu.CompilerParams(vmem_limit_bytes=32 * 1024 * 1024),
    )(*inputs)
    return out[0], out[1]                                        # (B, O) image hash, (B, O) text hash


# --------------------------------------------------------------------------
# Deterministic parameter initialization (kernel-ready layouts: biases/LN (1,N))
# --------------------------------------------------------------------------
def _normal(key, shape, std):
    return jax.random.normal(key, shape, dtype=jnp.float32) * std


def init_resblock(key, d):
    ks = jax.random.split(key, 4)
    return dict(
        ln1_g=jnp.ones((1, d), DTYPE), ln1_b=jnp.zeros((1, d), DTYPE),
        qkv_w=_normal(ks[0], (d, 3 * d), d ** -0.5), qkv_b=jnp.zeros((1, 3 * d), DTYPE),
        out_w=_normal(ks[1], (d, d), d ** -0.5), out_b=jnp.zeros((1, d), DTYPE),
        ln2_g=jnp.ones((1, d), DTYPE), ln2_b=jnp.zeros((1, d), DTYPE),
        mlp_w1=_normal(ks[2], (d, 4 * d), d ** -0.5), mlp_b1=jnp.zeros((1, 4 * d), DTYPE),
        mlp_w2=_normal(ks[3], (4 * d, d), (4 * d) ** -0.5), mlp_b2=jnp.zeros((1, d), DTYPE),
    )


def init_params(key, *, width=32, embed_dim=32, output_dim=16,
                patch=16, img_size=32, in_chans=3, vocab=50, ctx=8):
    ks = jax.random.split(key, 16)
    n_patches = (img_size // patch) ** 2
    cpp = in_chans * patch * patch
    conv1_w = _normal(ks[0], (cpp, width), cpp ** -0.5)
    class_embedding = _normal(ks[1], (1, width), width ** -0.5)
    pos_embed = _normal(ks[2], (n_patches + 1, width), width ** -0.5)
    # Fold the class embedding into pos_embed row 0: the (zero) CLS patch row's conv
    # output is 0, so adding pos reproduces cat([cls, patches]) + pos exactly.
    pos_embed = pos_embed.at[0:1, :].add(class_embedding)
    visual = dict(
        conv1_w=conv1_w,
        pos_embed=pos_embed,
        ln_pre_g=jnp.ones((1, width), DTYPE), ln_pre_b=jnp.zeros((1, width), DTYPE),
        block=init_resblock(ks[3], width),
        ln_post_g=jnp.ones((1, width), DTYPE), ln_post_b=jnp.zeros((1, width), DTYPE),
        proj=_normal(ks[4], (width, embed_dim), width ** -0.5),
    )
    text = dict(
        token_embedding=_normal(ks[5], (vocab, width), 0.02),
        pos_embed=_normal(ks[6], (ctx, width), 0.01),
        block=init_resblock(ks[7], width),
        ln_final_g=jnp.ones((1, width), DTYPE), ln_final_b=jnp.zeros((1, width), DTYPE),
        text_projection=_normal(ks[8], (width, embed_dim), width ** -0.5),
    )
    fuse = dict(block=init_resblock(ks[9], embed_dim))
    hidden = embed_dim * 2

    def hash_head(k):
        k1, k2 = jax.random.split(k)
        return dict(
            w1=_normal(k1, (embed_dim, hidden), embed_dim ** -0.5),
            b1=jnp.zeros((1, hidden), DTYPE),
            w2=_normal(k2, (hidden, output_dim), hidden ** -0.5),
            b2=jnp.zeros((1, output_dim), DTYPE),
        )

    return dict(visual=visual, text=text, fuse=fuse,
                image_hash=hash_head(ks[10]), text_hash=hash_head(ks[11]))


# --------------------------------------------------------------------------
if __name__ == "__main__":
    key = jax.random.PRNGKey(0)
    k_param, k_img, k_txt = jax.random.split(key, 3)

    params = init_params(k_param, width=32, embed_dim=32, output_dim=16,
                         patch=16, img_size=32, in_chans=3, vocab=50, ctx=8)

    image = jax.random.normal(k_img, (2, 3, 32, 32), dtype=jnp.float32)     # NCHW
    text = jax.random.randint(k_txt, (2, 8), minval=1, maxval=49, dtype=jnp.int32)
    text = text.at[:, -1].set(49)                                           # EOT-like max token id

    fwd = jax.jit(cagmh_forward, static_argnames=("heads", "patch"))
    image_hash, text_hash = fwd(params, image, text, heads=4, patch=16)
    jax.block_until_ready((image_hash, text_hash))

    assert image_hash.shape == (2, 16) and text_hash.shape == (2, 16)
    assert bool(jnp.all(jnp.isfinite(image_hash))) and bool(jnp.all(jnp.isfinite(text_hash)))
    print("KERNEL_OK")
</pallas_src>

<mosaic_0001>
module attributes {stable_mosaic.version = 11 : i64} {
  func.func @_cagmh_kernel(%arg0: memref<10x768xf32, #tpu.memory_space<vmem>>, %arg1: memref<10x32xf32, #tpu.memory_space<vmem>>, %arg2: memref<768x32xf32, #tpu.memory_space<vmem>>, %arg3: memref<1x32xf32, #tpu.memory_space<vmem>>, %arg4: memref<1x32xf32, #tpu.memory_space<vmem>>, %arg5: memref<1x32xf32, #tpu.memory_space<vmem>>, %arg6: memref<1x32xf32, #tpu.memory_space<vmem>>, %arg7: memref<32x96xf32, #tpu.memory_space<vmem>>, %arg8: memref<1x96xf32, #tpu.memory_space<vmem>>, %arg9: memref<32x32xf32, #tpu.memory_space<vmem>>, %arg10: memref<1x32xf32, #tpu.memory_space<vmem>>, %arg11: memref<1x32xf32, #tpu.memory_space<vmem>>, %arg12: memref<1x32xf32, #tpu.memory_space<vmem>>, %arg13: memref<32x128xf32, #tpu.memory_space<vmem>>, %arg14: memref<1x128xf32, #tpu.memory_space<vmem>>, %arg15: memref<128x32xf32, #tpu.memory_space<vmem>>, %arg16: memref<1x32xf32, #tpu.memory_space<vmem>>, %arg17: memref<1x32xf32, #tpu.memory_space<vmem>>, %arg18: memref<1x32xf32, #tpu.memory_space<vmem>>, %arg19: memref<32x32xf32, #tpu.memory_space<vmem>>, %arg20: memref<16x32xf32, #tpu.memory_space<vmem>>, %arg21: memref<2xi32, #tpu.memory_space<smem>>, %arg22: memref<1x32xf32, #tpu.memory_space<vmem>>, %arg23: memref<1x32xf32, #tpu.memory_space<vmem>>, %arg24: memref<32x96xf32, #tpu.memory_space<vmem>>, %arg25: memref<1x96xf32, #tpu.memory_space<vmem>>, %arg26: memref<32x32xf32, #tpu.memory_space<vmem>>, %arg27: memref<1x32xf32, #tpu.memory_space<vmem>>, %arg28: memref<1x32xf32, #tpu.memory_space<vmem>>, %arg29: memref<1x32xf32, #tpu.memory_space<vmem>>, %arg30: memref<32x128xf32, #tpu.memory_space<vmem>>, %arg31: memref<1x128xf32, #tpu.memory_space<vmem>>, %arg32: memref<128x32xf32, #tpu.memory_space<vmem>>, %arg33: memref<1x32xf32, #tpu.memory_space<vmem>>, %arg34: memref<1x32xf32, #tpu.memory_space<vmem>>, %arg35: memref<1x32xf32, #tpu.memory_space<vmem>>, %arg36: memref<32x32xf32, #tpu.memory_space<vmem>>, %arg37: memref<1x32xf32, #tpu.memory_space<vmem>>, %arg38: memref<1x32xf32, #tpu.memory_space<vmem>>, %arg39: memref<32x96xf32, #tpu.memory_space<vmem>>, %arg40: memref<1x96xf32, #tpu.memory_space<vmem>>, %arg41: memref<32x32xf32, #tpu.memory_space<vmem>>, %arg42: memref<1x32xf32, #tpu.memory_space<vmem>>, %arg43: memref<1x32xf32, #tpu.memory_space<vmem>>, %arg44: memref<1x32xf32, #tpu.memory_space<vmem>>, %arg45: memref<32x128xf32, #tpu.memory_space<vmem>>, %arg46: memref<1x128xf32, #tpu.memory_space<vmem>>, %arg47: memref<128x32xf32, #tpu.memory_space<vmem>>, %arg48: memref<1x32xf32, #tpu.memory_space<vmem>>, %arg49: memref<32x64xf32, #tpu.memory_space<vmem>>, %arg50: memref<1x64xf32, #tpu.memory_space<vmem>>, %arg51: memref<64x16xf32, #tpu.memory_space<vmem>>, %arg52: memref<1x16xf32, #tpu.memory_space<vmem>>, %arg53: memref<32x64xf32, #tpu.memory_space<vmem>>, %arg54: memref<1x64xf32, #tpu.memory_space<vmem>>, %arg55: memref<64x16xf32, #tpu.memory_space<vmem>>, %arg56: memref<1x16xf32, #tpu.memory_space<vmem>>, %arg57: memref<2x2x16xf32, #tpu.memory_space<vmem>>, %arg58: memref<16x32xf32, #tpu.memory_space<vmem>>) attributes {dimension_semantics = [], scalar_prefetch = 0 : i64, scratch_operands = 1 : i64, tpu.core_type = #tpu.core_type<tc>} {
    %c0 = arith.constant 0 : index
    %c0_0 = arith.constant 0 : index
    %0 = vector.load %arg5[%c0, %c0_0] : memref<1x32xf32, #tpu.memory_space<vmem>>, vector<1x32xf32>
    %c0_1 = arith.constant 0 : index
    %c0_2 = arith.constant 0 : index
    %1 = vector.load %arg6[%c0_1, %c0_2] : memref<1x32xf32, #tpu.memory_space<vmem>>, vector<1x32xf32>
    %c0_3 = arith.constant 0 : index
    %c0_4 = arith.constant 0 : index
    %2 = vector.load %arg7[%c0_3, %c0_4] : memref<32x96xf32, #tpu.memory_space<vmem>>, vector<32x96xf32>
    %c0_5 = arith.constant 0 : index
    %c0_6 = arith.constant 0 : index
    %3 = vector.load %arg8[%c0_5, %c0_6] : memref<1x96xf32, #tpu.memory_space<vmem>>, vector<1x96xf32>
    %c0_7 = arith.constant 0 : index
    %c0_8 = arith.constant 0 : index
    %4 = vector.load %arg9[%c0_7, %c0_8] : memref<32x32xf32, #tpu.memory_space<vmem>>, vector<32x32xf32>
    %c0_9 = arith.constant 0 : index
    %c0_10 = arith.constant 0 : index
    %5 = vector.load %arg10[%c0_9, %c0_10] : memref<1x32xf32, #tpu.memory_space<vmem>>, vector<1x32xf32>
    %c0_11 = arith.constant 0 : index
    %c0_12 = arith.constant 0 : index
    %6 = vector.load %arg11[%c0_11, %c0_12] : memref<1x32xf32, #tpu.memory_space<vmem>>, vector<1x32xf32>
    %c0_13 = arith.constant 0 : index
    %c0_14 = arith.constant 0 : index
    %7 = vector.load %arg12[%c0_13, %c0_14] : memref<1x32xf32, #tpu.memory_space<vmem>>, vector<1x32xf32>
    %c0_15 = arith.constant 0 : index
    %c0_16 = arith.constant 0 : index
    %8 = vector.load %arg13[%c0_15, %c0_16] : memref<32x128xf32, #tpu.memory_space<vmem>>, vector<32x128xf32>
    %c0_17 = arith.constant 0 : index
    %c0_18 = arith.constant 0 : index
    %9 = vector.load %arg14[%c0_17, %c0_18] : memref<1x128xf32, #tpu.memory_space<vmem>>, vector<1x128xf32>
    %c0_19 = arith.constant 0 : index
    %c0_20 = arith.constant 0 : index
    %10 = vector.load %arg15[%c0_19, %c0_20] : memref<128x32xf32, #tpu.memory_space<vmem>>, vector<128x32xf32>
    %c0_21 = arith.constant 0 : index
    %c0_22 = arith.constant 0 : index
    %11 = vector.load %arg16[%c0_21, %c0_22] : memref<1x32xf32, #tpu.memory_space<vmem>>, vector<1x32xf32>
    %c0_23 = arith.constant 0 : index
    %c0_24 = arith.constant 0 : index
    %12 = vector.load %arg22[%c0_23, %c0_24] : memref<1x32xf32, #tpu.memory_space<vmem>>, vector<1x32xf32>
    %c0_25 = arith.constant 0 : index
    %c0_26 = arith.constant 0 : index
    %13 = vector.load %arg23[%c0_25, %c0_26] : memref<1x32xf32, #tpu.memory_space<vmem>>, vector<1x32xf32>
    %c0_27 = arith.constant 0 : index
    %c0_28 = arith.constant 0 : index
    %14 = vector.load %arg24[%c0_27, %c0_28] : memref<32x96xf32, #tpu.memory_space<vmem>>, vector<32x96xf32>
    %c0_29 = arith.constant 0 : index
    %c0_30 = arith.constant 0 : index
    %15 = vector.load %arg25[%c0_29, %c0_30] : memref<1x96xf32, #tpu.memory_space<vmem>>, vector<1x96xf32>
    %c0_31 = arith.constant 0 : index
    %c0_32 = arith.constant 0 : index
    %16 = vector.load %arg26[%c0_31, %c0_32] : memref<32x32xf32, #tpu.memory_space<vmem>>, vector<32x32xf32>
    %c0_33 = arith.constant 0 : index
    %c0_34 = arith.constant 0 : index
    %17 = vector.load %arg27[%c0_33, %c0_34] : memref<1x32xf32, #tpu.memory_space<vmem>>, vector<1x32xf32>
    %c0_35 = arith.constant 0 : index
    %c0_36 = arith.constant 0 : index
    %18 = vector.load %arg28[%c0_35, %c0_36] : memref<1x32xf32, #tpu.memory_space<vmem>>, vector<1x32xf32>
    %c0_37 = arith.constant 0 : index
    %c0_38 = arith.constant 0 : index
    %19 = vector.load %arg29[%c0_37, %c0_38] : memref<1x32xf32, #tpu.memory_space<vmem>>, vector<1x32xf32>
    %c0_39 = arith.constant 0 : index
    %c0_40 = arith.constant 0 : index
    %20 = vector.load %arg30[%c0_39, %c0_40] : memref<32x128xf32, #tpu.memory_space<vmem>>, vector<32x128xf32>
    %c0_41 = arith.constant 0 : index
    %c0_42 = arith.constant 0 : index
    %21 = vector.load %arg31[%c0_41, %c0_42] : memref<1x128xf32, #tpu.memory_space<vmem>>, vector<1x128xf32>
    %c0_43 = arith.constant 0 : index
    %c0_44 = arith.constant 0 : index
    %22 = vector.load %arg32[%c0_43, %c0_44] : memref<128x32xf32, #tpu.memory_space<vmem>>, vector<128x32xf32>
    %c0_45 = arith.constant 0 : index
    %c0_46 = arith.constant 0 : index
    %23 = vector.load %arg33[%c0_45, %c0_46] : memref<1x32xf32, #tpu.memory_space<vmem>>, vector<1x32xf32>
    %c0_47 = arith.constant 0 : index
    %c0_48 = arith.constant 0 : index
    %24 = vector.load %arg37[%c0_47, %c0_48] : memref<1x32xf32, #tpu.memory_space<vmem>>, vector<1x32xf32>
    %c0_49 = arith.constant 0 : index
    %c0_50 = arith.constant 0 : index
    %25 = vector.load %arg38[%c0_49, %c0_50] : memref<1x32xf32, #tpu.memory_space<vmem>>, vector<1x32xf32>
    %c0_51 = arith.constant 0 : index
    %c0_52 = arith.constant 0 : index
    %26 = vector.load %arg39[%c0_51, %c0_52] : memref<32x96xf32, #tpu.memory_space<vmem>>, vector<32x96xf32>
    %c0_53 = arith.constant 0 : index
    %c0_54 = arith.constant 0 : index
    %27 = vector.load %arg40[%c0_53, %c0_54] : memref<1x96xf32, #tpu.memory_space<vmem>>, vector<1x96xf32>
    %c0_55 = arith.constant 0 : index
    %c0_56 = arith.constant 0 : index
    %28 = vector.load %arg41[%c0_55, %c0_56] : memref<32x32xf32, #tpu.memory_space<vmem>>, vector<32x32xf32>
    %c0_57 = arith.constant 0 : index
    %c0_58 = arith.constant 0 : index
    %29 = vector.load %arg42[%c0_57, %c0_58] : memref<1x32xf32, #tpu.memory_space<vmem>>, vector<1x32xf32>
    %c0_59 = arith.constant 0 : index
    %c0_60 = arith.constant 0 : index
    %30 = vector.load %arg43[%c0_59, %c0_60] : memref<1x32xf32, #tpu.memory_space<vmem>>, vector<1x32xf32>
    %c0_61 = arith.constant 0 : index
    %c0_62 = arith.constant 0 : index
    %31 = vector.load %arg44[%c0_61, %c0_62] : memref<1x32xf32, #tpu.memory_space<vmem>>, vector<1x32xf32>
    %c0_63 = arith.constant 0 : index
    %c0_64 = arith.constant 0 : index
    %32 = vector.load %arg45[%c0_63, %c0_64] : memref<32x128xf32, #tpu.memory_space<vmem>>, vector<32x128xf32>
    %c0_65 = arith.constant 0 : index
    %c0_66 = arith.constant 0 : index
    %33 = vector.load %arg46[%c0_65, %c0_66] : memref<1x128xf32, #tpu.memory_space<vmem>>, vector<1x128xf32>
    %c0_67 = arith.constant 0 : index
    %c0_68 = arith.constant 0 : index
    %34 = vector.load %arg47[%c0_67, %c0_68] : memref<128x32xf32, #tpu.memory_space<vmem>>, vector<128x32xf32>
    %c0_69 = arith.constant 0 : index
    %c0_70 = arith.constant 0 : index
    %35 = vector.load %arg48[%c0_69, %c0_70] : memref<1x32xf32, #tpu.memory_space<vmem>>, vector<1x32xf32>
    %c0_71 = arith.constant 0 : index
    %c0_72 = arith.constant 0 : index
    %36 = vector.load %arg49[%c0_71, %c0_72] : memref<32x64xf32, #tpu.memory_space<vmem>>, vector<32x64xf32>
    %c0_73 = arith.constant 0 : index
    %c0_74 = arith.constant 0 : index
    %37 = vector.load %arg50[%c0_73, %c0_74] : memref<1x64xf32, #tpu.memory_space<vmem>>, vector<1x64xf32>
    %c0_75 = arith.constant 0 : index
    %c0_76 = arith.constant 0 : index
    %38 = vector.load %arg51[%c0_75, %c0_76] : memref<64x16xf32, #tpu.memory_space<vmem>>, vector<64x16xf32>
    %c0_77 = arith.constant 0 : index
    %c0_78 = arith.constant 0 : index
    %39 = vector.load %arg52[%c0_77, %c0_78] : memref<1x16xf32, #tpu.memory_space<vmem>>, vector<1x16xf32>
    %c0_79 = arith.constant 0 : index
    %c0_80 = arith.constant 0 : index
    %40 = vector.load %arg53[%c0_79, %c0_80] : memref<32x64xf32, #tpu.memory_space<vmem>>, vector<32x64xf32>
    %c0_81 = arith.constant 0 : index
    %c0_82 = arith.constant 0 : index
    %41 = vector.load %arg54[%c0_81, %c0_82] : memref<1x64xf32, #tpu.memory_space<vmem>>, vector<1x64xf32>
    %c0_83 = arith.constant 0 : index
    %c0_84 = arith.constant 0 : index
    %42 = vector.load %arg55[%c0_83, %c0_84] : memref<64x16xf32, #tpu.memory_space<vmem>>, vector<64x16xf32>
    %c0_85 = arith.constant 0 : index
    %c0_86 = arith.constant 0 : index
    %43 = vector.load %arg56[%c0_85, %c0_86] : memref<1x16xf32, #tpu.memory_space<vmem>>, vector<1x16xf32>
    %c0_87 = arith.constant 0 : index
    %c0_88 = arith.constant 0 : index
    %44 = vector.load %arg0[%c0_87, %c0_88] : memref<10x768xf32, #tpu.memory_space<vmem>>, vector<10x768xf32>
    %c0_89 = arith.constant 0 : index
    %c0_90 = arith.constant 0 : index
    %45 = vector.load %arg2[%c0_89, %c0_90] : memref<768x32xf32, #tpu.memory_space<vmem>>, vector<768x32xf32>
    %cst = arith.constant dense<0.000000e+00> : vector<10x32xf32>
    %46 = tpu.matmul %44, %45, %cst {dimension_numbers = #tpu.dot_dimension_numbers<[1], [0], [0], [1], [0, 0, 1, 1], [], []>} : vector<10x768xf32>, vector<768x32xf32>, vector<10x32xf32> -> vector<10x32xf32>
    %c0_91 = arith.constant 0 : index
    %c0_92 = arith.constant 0 : index
    %47 = vector.load %arg1[%c0_91, %c0_92] : memref<10x32xf32, #tpu.memory_space<vmem>>, vector<10x32xf32>
    %48 = arith.addf %46, %47 : vector<10x32xf32>
    %c0_93 = arith.constant 0 : index
    %c0_94 = arith.constant 0 : index
    %49 = vector.load %arg3[%c0_93, %c0_94] : memref<1x32xf32, #tpu.memory_space<vmem>>, vector<1x32xf32>
    %c0_95 = arith.constant 0 : index
    %c0_96 = arith.constant 0 : index
    %50 = vector.load %arg4[%c0_95, %c0_96] : memref<1x32xf32, #tpu.memory_space<vmem>>, vector<1x32xf32>
    %cst_97 = arith.constant dense<0.000000e+00> : vector<10xf32>
    %51 = vector.multi_reduction <add>, %48, %cst_97 [1] : vector<10x32xf32> to vector<10xf32>
    %52 = vector.shape_cast %51 : vector<10xf32> to vector<10x1xf32>
    %cst_98 = arith.constant 3.200000e+01 : f32
    %53 = vector.broadcast %cst_98 : f32 to vector<10x1xf32>
    %54 = arith.divf %52, %53 : vector<10x1xf32>
    %55 = vector.broadcast %54 : vector<10x1xf32> to vector<10x32xf32>
    %56 = arith.subf %48, %55 : vector<10x32xf32>
    %57 = arith.mulf %56, %56 : vector<10x32xf32>
    %cst_99 = arith.constant dense<0.000000e+00> : vector<10xf32>
    %58 = vector.multi_reduction <add>, %57, %cst_99 [1] : vector<10x32xf32> to vector<10xf32>
    %59 = vector.shape_cast %58 : vector<10xf32> to vector<10x1xf32>
    %cst_100 = arith.constant 3.200000e+01 : f32
    %60 = vector.broadcast %cst_100 : f32 to vector<10x1xf32>
    %61 = arith.divf %59, %60 : vector<10x1xf32>
    %cst_101 = arith.constant 9.99999974E-6 : f32
    %62 = vector.broadcast %cst_101 : f32 to vector<10x1xf32>
    %63 = arith.addf %61, %62 : vector<10x1xf32>
    %64 = math.rsqrt %63 : vector<10x1xf32>
    %65 = vector.broadcast %64 : vector<10x1xf32> to vector<10x32xf32>
    %66 = arith.mulf %56, %65 : vector<10x32xf32>
    %67 = vector.broadcast %49 : vector<1x32xf32> to vector<10x32xf32>
    %68 = arith.mulf %66, %67 : vector<10x32xf32>
    %69 = vector.broadcast %50 : vector<1x32xf32> to vector<10x32xf32>
    %70 = arith.addf %68, %69 : vector<10x32xf32>
    %cst_102 = arith.constant dense<0.000000e+00> : vector<10xf32>
    %71 = vector.multi_reduction <add>, %70, %cst_102 [1] : vector<10x32xf32> to vector<10xf32>
    %72 = vector.shape_cast %71 : vector<10xf32> to vector<10x1xf32>
    %cst_103 = arith.constant 3.200000e+01 : f32
    %73 = vector.broadcast %cst_103 : f32 to vector<10x1xf32>
    %74 = arith.divf %72, %73 : vector<10x1xf32>
    %75 = vector.broadcast %74 : vector<10x1xf32> to vector<10x32xf32>
    %76 = arith.subf %70, %75 : vector<10x32xf32>
    %77 = arith.mulf %76, %76 : vector<10x32xf32>
    %cst_104 = arith.constant dense<0.000000e+00> : vector<10xf32>
    %78 = vector.multi_reduction <add>, %77, %cst_104 [1] : vector<10x32xf32> to vector<10xf32>
    %79 = vector.shape_cast %78 : vector<10xf32> to vector<10x1xf32>
    %cst_105 = arith.constant 3.200000e+01 : f32
    %80 = vector.broadcast %cst_105 : f32 to vector<10x1xf32>
    %81 = arith.divf %79, %80 : vector<10x1xf32>
    %cst_106 = arith.constant 9.99999974E-6 : f32
    %82 = vector.broadcast %cst_106 : f32 to vector<10x1xf32>
    %83 = arith.addf %81, %82 : vector<10x1xf32>
    %84 = math.rsqrt %83 : vector<10x1xf32>
    %85 = vector.broadcast %84 : vector<10x1xf32> to vector<10x32xf32>
    %86 = arith.mulf %76, %85 : vector<10x32xf32>
    %87 = vector.broadcast %0 : vector<1x32xf32> to vector<10x32xf32>
    %88 = arith.mulf %86, %87 : vector<10x32xf32>
    %89 = vector.broadcast %1 : vector<1x32xf32> to vector<10x32xf32>
    %90 = arith.addf %88, %89 : vector<10x32xf32>
    %cst_107 = arith.constant dense<0.000000e+00> : vector<10x96xf32>
    %91 = tpu.matmul %90, %2, %cst_107 {dimension_numbers = #tpu.dot_dimension_numbers<[1], [0], [0], [1], [0, 0, 1, 1], [], []>} : vector<10x32xf32>, vector<32x96xf32>, vector<10x96xf32> -> vector<10x96xf32>
    %92 = vector.broadcast %3 : vector<1x96xf32> to vector<10x96xf32>
    %93 = arith.addf %91, %92 : vector<10x96xf32>
    %94 = vector.extract_strided_slice %93 {offsets = [0, 0], sizes = [5, 96], strides = [1, 1]} : vector<10x96xf32> to vector<5x96xf32>
    %95 = vector.extract_strided_slice %94 {offsets = [0, 0], sizes = [5, 8], strides = [1, 1]} : vector<5x96xf32> to vector<5x8xf32>
    %96 = vector.extract_strided_slice %94 {offsets = [0, 32], sizes = [5, 8], strides = [1, 1]} : vector<5x96xf32> to vector<5x8xf32>
    %97 = vector.extract_strided_slice %94 {offsets = [0, 64], sizes = [5, 8], strides = [1, 1]} : vector<5x96xf32> to vector<5x8xf32>
    %cst_108 = arith.constant dense<0.000000e+00> : vector<5x5xf32>
    %98 = tpu.matmul %95, %96, %cst_108 {dimension_numbers = #tpu.dot_dimension_numbers<[1], [1], [0], [0], [0, 0, 1, 0], [], []>} : vector<5x8xf32>, vector<5x8xf32>, vector<5x5xf32> -> vector<5x5xf32>
    %cst_109 = arith.constant 0.353553385 : f32
    %99 = vector.broadcast %cst_109 : f32 to vector<5x5xf32>
    %100 = arith.mulf %98, %99 : vector<5x5xf32>
    %cst_110 = arith.constant dense<0xFF800000> : vector<5xf32>
    %101 = vector.multi_reduction <maximumf>, %100, %cst_110 [1] : vector<5x5xf32> to vector<5xf32>
    %102 = vector.shape_cast %101 : vector<5xf32> to vector<5x1xf32>
    %103 = vector.broadcast %102 : vector<5x1xf32> to vector<5x5xf32>
    %104 = arith.subf %100, %103 : vector<5x5xf32>
    %105 = math.exp %104 : vector<5x5xf32>
    %cst_111 = arith.constant dense<0.000000e+00> : vector<5xf32>
    %106 = vector.multi_reduction <add>, %105, %cst_111 [1] : vector<5x5xf32> to vector<5xf32>
    %107 = vector.shape_cast %106 : vector<5xf32> to vector<5x1xf32>
    %108 = tpu.reciprocal %107 {approx = true} : vector<5x1xf32> -> vector<5x1xf32>
    %109 = vector.broadcast %108 : vector<5x1xf32> to vector<5x5xf32>
    %110 = arith.mulf %105, %109 : vector<5x5xf32>
    %cst_112 = arith.constant dense<0.000000e+00> : vector<5x8xf32>
    %111 = tpu.matmul %110, %97, %cst_112 {dimension_numbers = #tpu.dot_dimension_numbers<[1], [0], [0], [1], [0, 0, 1, 1], [], []>} : vector<5x5xf32>, vector<5x8xf32>, vector<5x8xf32> -> vector<5x8xf32>
    %112 = vector.extract_strided_slice %94 {offsets = [0, 8], sizes = [5, 8], strides = [1, 1]} : vector<5x96xf32> to vector<5x8xf32>
    %113 = vector.extract_strided_slice %94 {offsets = [0, 40], sizes = [5, 8], strides = [1, 1]} : vector<5x96xf32> to vector<5x8xf32>
    %114 = vector.extract_strided_slice %94 {offsets = [0, 72], sizes = [5, 8], strides = [1, 1]} : vector<5x96xf32> to vector<5x8xf32>
    %cst_113 = arith.constant dense<0.000000e+00> : vector<5x5xf32>
    %115 = tpu.matmul %112, %113, %cst_113 {dimension_numbers = #tpu.dot_dimension_numbers<[1], [1], [0], [0], [0, 0, 1, 0], [], []>} : vector<5x8xf32>, vector<5x8xf32>, vector<5x5xf32> -> vector<5x5xf32>
    %cst_114 = arith.constant 0.353553385 : f32
    %116 = vector.broadcast %cst_114 : f32 to vector<5x5xf32>
    %117 = arith.mulf %115, %116 : vector<5x5xf32>
    %cst_115 = arith.constant dense<0xFF800000> : vector<5xf32>
    %118 = vector.multi_reduction <maximumf>, %117, %cst_115 [1] : vector<5x5xf32> to vector<5xf32>
    %119 = vector.shape_cast %118 : vector<5xf32> to vector<5x1xf32>
    %120 = vector.broadcast %119 : vector<5x1xf32> to vector<5x5xf32>
    %121 = arith.subf %117, %120 : vector<5x5xf32>
    %122 = math.exp %121 : vector<5x5xf32>
    %cst_116 = arith.constant dense<0.000000e+00> : vector<5xf32>
    %123 = vector.multi_reduction <add>, %122, %cst_116 [1] : vector<5x5xf32> to vector<5xf32>
    %124 = vector.shape_cast %123 : vector<5xf32> to vector<5x1xf32>
    %125 = tpu.reciprocal %124 {approx = true} : vector<5x1xf32> -> vector<5x1xf32>
    %126 = vector.broadcast %125 : vector<5x1xf32> to vector<5x5xf32>
    %127 = arith.mulf %122, %126 : vector<5x5xf32>
    %cst_117 = arith.constant dense<0.000000e+00> : vector<5x8xf32>
    %128 = tpu.matmul %127, %114, %cst_117 {dimension_numbers = #tpu.dot_dimension_numbers<[1], [0], [0], [1], [0, 0, 1, 1], [], []>} : vector<5x5xf32>, vector<5x8xf32>, vector<5x8xf32> -> vector<5x8xf32>
    %129 = vector.extract_strided_slice %94 {offsets = [0, 16], sizes = [5, 8], strides = [1, 1]} : vector<5x96xf32> to vector<5x8xf32>
    %130 = vector.extract_strided_slice %94 {offsets = [0, 48], sizes = [5, 8], strides = [1, 1]} : vector<5x96xf32> to vector<5x8xf32>
    %131 = vector.extract_strided_slice %94 {offsets = [0, 80], sizes = [5, 8], strides = [1, 1]} : vector<5x96xf32> to vector<5x8xf32>
    %cst_118 = arith.constant dense<0.000000e+00> : vector<5x5xf32>
    %132 = tpu.matmul %129, %130, %cst_118 {dimension_numbers = #tpu.dot_dimension_numbers<[1], [1], [0], [0], [0, 0, 1, 0], [], []>} : vector<5x8xf32>, vector<5x8xf32>, vector<5x5xf32> -> vector<5x5xf32>
    %cst_119 = arith.constant 0.353553385 : f32
    %133 = vector.broadcast %cst_119 : f32 to vector<5x5xf32>
    %134 = arith.mulf %132, %133 : vector<5x5xf32>
    %cst_120 = arith.constant dense<0xFF800000> : vector<5xf32>
    %135 = vector.multi_reduction <maximumf>, %134, %cst_120 [1] : vector<5x5xf32> to vector<5xf32>
    %136 = vector.shape_cast %135 : vector<5xf32> to vector<5x1xf32>
    %137 = vector.broadcast %136 : vector<5x1xf32> to vector<5x5xf32>
    %138 = arith.subf %134, %137 : vector<5x5xf32>
    %139 = math.exp %138 : vector<5x5xf32>
    %cst_121 = arith.constant dense<0.000000e+00> : vector<5xf32>
    %140 = vector.multi_reduction <add>, %139, %cst_121 [1] : vector<5x5xf32> to vector<5xf32>
    %141 = vector.shape_cast %140 : vector<5xf32> to vector<5x1xf32>
    %142 = tpu.reciprocal %141 {approx = true} : vector<5x1xf32> -> vector<5x1xf32>
    %143 = vector.broadcast %142 : vector<5x1xf32> to vector<5x5xf32>
    %144 = arith.mulf %139, %143 : vector<5x5xf32>
    %cst_122 = arith.constant dense<0.000000e+00> : vector<5x8xf32>
    %145 = tpu.matmul %144, %131, %cst_122 {dimension_numbers = #tpu.dot_dimension_numbers<[1], [0], [0], [1], [0, 0, 1, 1], [], []>} : vector<5x5xf32>, vector<5x8xf32>, vector<5x8xf32> -> vector<5x8xf32>
    %146 = vector.extract_strided_slice %94 {offsets = [0, 24], sizes = [5, 8], strides = [1, 1]} : vector<5x96xf32> to vector<5x8xf32>
    %147 = vector.extract_strided_slice %94 {offsets = [0, 56], sizes = [5, 8], strides = [1, 1]} : vector<5x96xf32> to vector<5x8xf32>
    %148 = vector.extract_strided_slice %94 {offsets = [0, 88], sizes = [5, 8], strides = [1, 1]} : vector<5x96xf32> to vector<5x8xf32>
    %cst_123 = arith.constant dense<0.000000e+00> : vector<5x5xf32>
    %149 = tpu.matmul %146, %147, %cst_123 {dimension_numbers = #tpu.dot_dimension_numbers<[1], [1], [0], [0], [0, 0, 1, 0], [], []>} : vector<5x8xf32>, vector<5x8xf32>, vector<5x5xf32> -> vector<5x5xf32>
    %cst_124 = arith.constant 0.353553385 : f32
    %150 = vector.broadcast %cst_124 : f32 to vector<5x5xf32>
    %151 = arith.mulf %149, %150 : vector<5x5xf32>
    %cst_125 = arith.constant dense<0xFF800000> : vector<5xf32>
    %152 = vector.multi_reduction <maximumf>, %151, %cst_125 [1] : vector<5x5xf32> to vector<5xf32>
    %153 = vector.shape_cast %152 : vector<5xf32> to vector<5x1xf32>
    %154 = vector.broadcast %153 : vector<5x1xf32> to vector<5x5xf32>
    %155 = arith.subf %151, %154 : vector<5x5xf32>
    %156 = math.exp %155 : vector<5x5xf32>
    %cst_126 = arith.constant dense<0.000000e+00> : vector<5xf32>
    %157 = vector.multi_reduction <add>, %156, %cst_126 [1] : vector<5x5xf32> to vector<5xf32>
    %158 = vector.shape_cast %157 : vector<5xf32> to vector<5x1xf32>
    %159 = tpu.reciprocal %158 {approx = true} : vector<5x1xf32> -> vector<5x1xf32>
    %160 = vector.broadcast %159 : vector<5x1xf32> to vector<5x5xf32>
    %161 = arith.mulf %156, %160 : vector<5x5xf32>
    %cst_127 = arith.constant dense<0.000000e+00> : vector<5x8xf32>
    %162 = tpu.matmul %161, %148, %cst_127 {dimension_numbers = #tpu.dot_dimension_numbers<[1], [0], [0], [1], [0, 0, 1, 1], [], []>} : vector<5x5xf32>, vector<5x8xf32>, vector<5x8xf32> -> vector<5x8xf32>
    %163 = tpu.concatenate %111, %128, %145, %162 in 1 : vector<5x8xf32>, vector<5x8xf32>, vector<5x8xf32>, vector<5x8xf32> -> vector<5x32xf32>
    %164 = vector.extract_strided_slice %93 {offsets = [5, 0], sizes = [5, 96], strides = [1, 1]} : vector<10x96xf32> to vector<5x96xf32>
    %165 = vector.extract_strided_slice %164 {offsets = [0, 0], sizes = [5, 8], strides = [1, 1]} : vector<5x96xf32> to vector<5x8xf32>
    %166 = vector.extract_strided_slice %164 {offsets = [0, 32], sizes = [5, 8], strides = [1, 1]} : vector<5x96xf32> to vector<5x8xf32>
    %167 = vector.extract_strided_slice %164 {offsets = [0, 64], sizes = [5, 8], strides = [1, 1]} : vector<5x96xf32> to vector<5x8xf32>
    %cst_128 = arith.constant dense<0.000000e+00> : vector<5x5xf32>
    %168 = tpu.matmul %165, %166, %cst_128 {dimension_numbers = #tpu.dot_dimension_numbers<[1], [1], [0], [0], [0, 0, 1, 0], [], []>} : vector<5x8xf32>, vector<5x8xf32>, vector<5x5xf32> -> vector<5x5xf32>
    %cst_129 = arith.constant 0.353553385 : f32
    %169 = vector.broadcast %cst_129 : f32 to vector<5x5xf32>
    %170 = arith.mulf %168, %169 : vector<5x5xf32>
    %cst_130 = arith.constant dense<0xFF800000> : vector<5xf32>
    %171 = vector.multi_reduction <maximumf>, %170, %cst_130 [1] : vector<5x5xf32> to vector<5xf32>
    %172 = vector.shape_cast %171 : vector<5xf32> to vector<5x1xf32>
    %173 = vector.broadcast %172 : vector<5x1xf32> to vector<5x5xf32>
    %174 = arith.subf %170, %173 : vector<5x5xf32>
    %175 = math.exp %174 : vector<5x5xf32>
    %cst_131 = arith.constant dense<0.000000e+00> : vector<5xf32>
    %176 = vector.multi_reduction <add>, %175, %cst_131 [1] : vector<5x5xf32> to vector<5xf32>
    %177 = vector.shape_cast %176 : vector<5xf32> to vector<5x1xf32>
    %178 = tpu.reciprocal %177 {approx = true} : vector<5x1xf32> -> vector<5x1xf32>
    %179 = vector.broadcast %178 : vector<5x1xf32> to vector<5x5xf32>
    %180 = arith.mulf %175, %179 : vector<5x5xf32>
    %cst_132 = arith.constant dense<0.000000e+00> : vector<5x8xf32>
    %181 = tpu.matmul %180, %167, %cst_132 {dimension_numbers = #tpu.dot_dimension_numbers<[1], [0], [0], [1], [0, 0, 1, 1], [], []>} : vector<5x5xf32>, vector<5x8xf32>, vector<5x8xf32> -> vector<5x8xf32>
    %182 = vector.extract_strided_slice %164 {offsets = [0, 8], sizes = [5, 8], strides = [1, 1]} : vector<5x96xf32> to vector<5x8xf32>
    %183 = vector.extract_strided_slice %164 {offsets = [0, 40], sizes = [5, 8], strides = [1, 1]} : vector<5x96xf32> to vector<5x8xf32>
    %184 = vector.extract_strided_slice %164 {offsets = [0, 72], sizes = [5, 8], strides = [1, 1]} : vector<5x96xf32> to vector<5x8xf32>
    %cst_133 = arith.constant dense<0.000000e+00> : vector<5x5xf32>
    %185 = tpu.matmul %182, %183, %cst_133 {dimension_numbers = #tpu.dot_dimension_numbers<[1], [1], [0], [0], [0, 0, 1, 0], [], []>} : vector<5x8xf32>, vector<5x8xf32>, vector<5x5xf32> -> vector<5x5xf32>
    %cst_134 = arith.constant 0.353553385 : f32
    %186 = vector.broadcast %cst_134 : f32 to vector<5x5xf32>
    %187 = arith.mulf %185, %186 : vector<5x5xf32>
    %cst_135 = arith.constant dense<0xFF800000> : vector<5xf32>
    %188 = vector.multi_reduction <maximumf>, %187, %cst_135 [1] : vector<5x5xf32> to vector<5xf32>
    %189 = vector.shape_cast %188 : vector<5xf32> to vector<5x1xf32>
    %190 = vector.broadcast %189 : vector<5x1xf32> to vector<5x5xf32>
    %191 = arith.subf %187, %190 : vector<5x5xf32>
    %192 = math.exp %191 : vector<5x5xf32>
    %cst_136 = arith.constant dense<0.000000e+00> : vector<5xf32>
    %193 = vector.multi_reduction <add>, %192, %cst_136 [1] : vector<5x5xf32> to vector<5xf32>
    %194 = vector.shape_cast %193 : vector<5xf32> to vector<5x1xf32>
    %195 = tpu.reciprocal %194 {approx = true} : vector<5x1xf32> -> vector<5x1xf32>
    %196 = vector.broadcast %195 : vector<5x1xf32> to vector<5x5xf32>
    %197 = arith.mulf %192, %196 : vector<5x5xf32>
    %cst_137 = arith.constant dense<0.000000e+00> : vector<5x8xf32>
    %198 = tpu.matmul %197, %184, %cst_137 {dimension_numbers = #tpu.dot_dimension_numbers<[1], [0], [0], [1], [0, 0, 1, 1], [], []>} : vector<5x5xf32>, vector<5x8xf32>, vector<5x8xf32> -> vector<5x8xf32>
    %199 = vector.extract_strided_slice %164 {offsets = [0, 16], sizes = [5, 8], strides = [1, 1]} : vector<5x96xf32> to vector<5x8xf32>
    %200 = vector.extract_strided_slice %164 {offsets = [0, 48], sizes = [5, 8], strides = [1, 1]} : vector<5x96xf32> to vector<5x8xf32>
    %201 = vector.extract_strided_slice %164 {offsets = [0, 80], sizes = [5, 8], strides = [1, 1]} : vector<5x96xf32> to vector<5x8xf32>
    %cst_138 = arith.constant dense<0.000000e+00> : vector<5x5xf32>
    %202 = tpu.matmul %199, %200, %cst_138 {dimension_numbers = #tpu.dot_dimension_numbers<[1], [1], [0], [0], [0, 0, 1, 0], [], []>} : vector<5x8xf32>, vector<5x8xf32>, vector<5x5xf32> -> vector<5x5xf32>
    %cst_139 = arith.constant 0.353553385 : f32
    %203 = vector.broadcast %cst_139 : f32 to vector<5x5xf32>
    %204 = arith.mulf %202, %203 : vector<5x5xf32>
    %cst_140 = arith.constant dense<0xFF800000> : vector<5xf32>
    %205 = vector.multi_reduction <maximumf>, %204, %cst_140 [1] : vector<5x5xf32> to vector<5xf32>
    %206 = vector.shape_cast %205 : vector<5xf32> to vector<5x1xf32>
    %207 = vector.broadcast %206 : vector<5x1xf32> to vector<5x5xf32>
    %208 = arith.subf %204, %207 : vector<5x5xf32>
    %209 = math.exp %208 : vector<5x5xf32>
    %cst_141 = arith.constant dense<0.000000e+00> : vector<5xf32>
    %210 = vector.multi_reduction <add>, %209, %cst_141 [1] : vector<5x5xf32> to vector<5xf32>
    %211 = vector.shape_cast %210 : vector<5xf32> to vector<5x1xf32>
    %212 = tpu.reciprocal %211 {approx = true} : vector<5x1xf32> -> vector<5x1xf32>
    %213 = vector.broadcast %212 : vector<5x1xf32> to vector<5x5xf32>
    %214 = arith.mulf %209, %213 : vector<5x5xf32>
    %cst_142 = arith.constant dense<0.000000e+00> : vector<5x8xf32>
    %215 = tpu.matmul %214, %201, %cst_142 {dimension_numbers = #tpu.dot_dimension_numbers<[1], [0], [0], [1], [0, 0, 1, 1], [], []>} : vector<5x5xf32>, vector<5x8xf32>, vector<5x8xf32> -> vector<5x8xf32>
    %216 = vector.extract_strided_slice %164 {offsets = [0, 24], sizes = [5, 8], strides = [1, 1]} : vector<5x96xf32> to vector<5x8xf32>
    %217 = vector.extract_strided_slice %164 {offsets = [0, 56], sizes = [5, 8], strides = [1, 1]} : vector<5x96xf32> to vector<5x8xf32>
    %218 = vector.extract_strided_slice %164 {offsets = [0, 88], sizes = [5, 8], strides = [1, 1]} : vector<5x96xf32> to vector<5x8xf32>
    %cst_143 = arith.constant dense<0.000000e+00> : vector<5x5xf32>
    %219 = tpu.matmul %216, %217, %cst_143 {dimension_numbers = #tpu.dot_dimension_numbers<[1], [1], [0], [0], [0, 0, 1, 0], [], []>} : vector<5x8xf32>, vector<5x8xf32>, vector<5x5xf32> -> vector<5x5xf32>
    %cst_144 = arith.constant 0.353553385 : f32
    %220 = vector.broadcast %cst_144 : f32 to vector<5x5xf32>
    %221 = arith.mulf %219, %220 : vector<5x5xf32>
    %cst_145 = arith.constant dense<0xFF800000> : vector<5xf32>
    %222 = vector.multi_reduction <maximumf>, %221, %cst_145 [1] : vector<5x5xf32> to vector<5xf32>
    %223 = vector.shape_cast %222 : vector<5xf32> to vector<5x1xf32>
    %224 = vector.broadcast %223 : vector<5x1xf32> to vector<5x5xf32>
    %225 = arith.subf %221, %224 : vector<5x5xf32>
    %226 = math.exp %225 : vector<5x5xf32>
    %cst_146 = arith.constant dense<0.000000e+00> : vector<5xf32>
    %227 = vector.multi_reduction <add>, %226, %cst_146 [1] : vector<5x5xf32> to vector<5xf32>
    %228 = vector.shape_cast %227 : vector<5xf32> to vector<5x1xf32>
    %229 = tpu.reciprocal %228 {approx = true} : vector<5x1xf32> -> vector<5x1xf32>
    %230 = vector.broadcast %229 : vector<5x1xf32> to vector<5x5xf32>
    %231 = arith.mulf %226, %230 : vector<5x5xf32>
    %cst_147 = arith.constant dense<0.000000e+00> : vector<5x8xf32>
    %232 = tpu.matmul %231, %218, %cst_147 {dimension_numbers = #tpu.dot_dimension_numbers<[1], [0], [0], [1], [0, 0, 1, 1], [], []>} : vector<5x5xf32>, vector<5x8xf32>, vector<5x8xf32> -> vector<5x8xf32>
    %233 = tpu.concatenate %181, %198, %215, %232 in 1 : vector<5x8xf32>, vector<5x8xf32>, vector<5x8xf32>, vector<5x8xf32> -> vector<5x32xf32>
    %234 = tpu.concatenate %163, %233 in 0 : vector<5x32xf32>, vector<5x32xf32> -> vector<10x32xf32>
    %cst_148 = arith.constant dense<0.000000e+00> : vector<10x32xf32>
    %235 = tpu.matmul %234, %4, %cst_148 {dimension_numbers = #tpu.dot_dimension_numbers<[1], [0], [0], [1], [0, 0, 1, 1], [], []>} : vector<10x32xf32>, vector<32x32xf32>, vector<10x32xf32> -> vector<10x32xf32>
    %236 = vector.broadcast %5 : vector<1x32xf32> to vector<10x32xf32>
    %237 = arith.addf %235, %236 : vector<10x32xf32>
    %238 = arith.addf %70, %237 : vector<10x32xf32>
    %cst_149 = arith.constant dense<0.000000e+00> : vector<10xf32>
    %239 = vector.multi_reduction <add>, %238, %cst_149 [1] : vector<10x32xf32> to vector<10xf32>
    %240 = vector.shape_cast %239 : vector<10xf32> to vector<10x1xf32>
    %cst_150 = arith.constant 3.200000e+01 : f32
    %241 = vector.broadcast %cst_150 : f32 to vector<10x1xf32>
    %242 = arith.divf %240, %241 : vector<10x1xf32>
    %243 = vector.broadcast %242 : vector<10x1xf32> to vector<10x32xf32>
    %244 = arith.subf %238, %243 : vector<10x32xf32>
    %245 = arith.mulf %244, %244 : vector<10x32xf32>
    %cst_151 = arith.constant dense<0.000000e+00> : vector<10xf32>
    %246 = vector.multi_reduction <add>, %245, %cst_151 [1] : vector<10x32xf32> to vector<10xf32>
    %247 = vector.shape_cast %246 : vector<10xf32> to vector<10x1xf32>
    %cst_152 = arith.constant 3.200000e+01 : f32
    %248 = vector.broadcast %cst_152 : f32 to vector<10x1xf32>
    %249 = arith.divf %247, %248 : vector<10x1xf32>
    %cst_153 = arith.constant 9.99999974E-6 : f32
    %250 = vector.broadcast %cst_153 : f32 to vector<10x1xf32>
    %251 = arith.addf %249, %250 : vector<10x1xf32>
    %252 = math.rsqrt %251 : vector<10x1xf32>
    %253 = vector.broadcast %252 : vector<10x1xf32> to vector<10x32xf32>
    %254 = arith.mulf %244, %253 : vector<10x32xf32>
    %255 = vector.broadcast %6 : vector<1x32xf32> to vector<10x32xf32>
    %256 = arith.mulf %254, %255 : vector<10x32xf32>
    %257 = vector.broadcast %7 : vector<1x32xf32> to vector<10x32xf32>
    %258 = arith.addf %256, %257 : vector<10x32xf32>
    %cst_154 = arith.constant dense<0.000000e+00> : vector<10x128xf32>
    %259 = tpu.matmul %258, %8, %cst_154 {dimension_numbers = #tpu.dot_dimension_numbers<[1], [0], [0], [1], [0, 0, 1, 1], [], []>} : vector<10x32xf32>, vector<32x128xf32>, vector<10x128xf32> -> vector<10x128xf32>
    %260 = vector.broadcast %9 : vector<1x128xf32> to vector<10x128xf32>
    %261 = arith.addf %259, %260 : vector<10x128xf32>
    %cst_155 = arith.constant 1.702000e+00 : f32
    %262 = vector.broadcast %cst_155 : f32 to vector<10x128xf32>
    %263 = arith.mulf %262, %261 : vector<10x128xf32>
    %264 = arith.negf %263 : vector<10x128xf32>
    %265 = math.exp %264 : vector<10x128xf32>
    %cst_156 = arith.constant 1.000000e+00 : f32
    %266 = vector.broadcast %cst_156 : f32 to vector<10x128xf32>
    %267 = arith.addf %266, %265 : vector<10x128xf32>
    %268 = arith.divf %266, %267 : vector<10x128xf32>
    %269 = arith.mulf %261, %268 : vector<10x128xf32>
    %cst_157 = arith.constant dense<0.000000e+00> : vector<10x32xf32>
    %270 = tpu.matmul %269, %10, %cst_157 {dimension_numbers = #tpu.dot_dimension_numbers<[1], [0], [0], [1], [0, 0, 1, 1], [], []>} : vector<10x128xf32>, vector<128x32xf32>, vector<10x32xf32> -> vector<10x32xf32>
    %271 = vector.broadcast %11 : vector<1x32xf32> to vector<10x32xf32>
    %272 = arith.addf %270, %271 : vector<10x32xf32>
    %273 = arith.addf %238, %272 : vector<10x32xf32>
    %274 = vector.extract_strided_slice %273 {offsets = [0, 0], sizes = [1, 32], strides = [1, 1]} : vector<10x32xf32> to vector<1x32xf32>
    %275 = vector.extract_strided_slice %273 {offsets = [5, 0], sizes = [1, 32], strides = [1, 1]} : vector<10x32xf32> to vector<1x32xf32>
    %276 = tpu.concatenate %274, %275 in 0 : vector<1x32xf32>, vector<1x32xf32> -> vector<2x32xf32>
    %c0_158 = arith.constant 0 : index
    %c0_159 = arith.constant 0 : index
    %277 = vector.load %arg17[%c0_158, %c0_159] : memref<1x32xf32, #tpu.memory_space<vmem>>, vector<1x32xf32>
    %c0_160 = arith.constant 0 : index
    %c0_161 = arith.constant 0 : index
    %278 = vector.load %arg18[%c0_160, %c0_161] : memref<1x32xf32, #tpu.memory_space<vmem>>, vector<1x32xf32>
    %cst_162 = arith.constant dense<0.000000e+00> : vector<2xf32>
    %279 = vector.multi_reduction <add>, %276, %cst_162 [1] : vector<2x32xf32> to vector<2xf32>
    %280 = vector.shape_cast %279 : vector<2xf32> to vector<2x1xf32>
    %cst_163 = arith.constant 3.200000e+01 : f32
    %281 = vector.broadcast %cst_163 : f32 to vector<2x1xf32>
    %282 = arith.divf %280, %281 : vector<2x1xf32>
    %283 = vector.broadcast %282 : vector<2x1xf32> to vector<2x32xf32>
    %284 = arith.subf %276, %283 : vector<2x32xf32>
    %285 = arith.mulf %284, %284 : vector<2x32xf32>
    %cst_164 = arith.constant dense<0.000000e+00> : vector<2xf32>
    %286 = vector.multi_reduction <add>, %285, %cst_164 [1] : vector<2x32xf32> to vector<2xf32>
    %287 = vector.shape_cast %286 : vector<2xf32> to vector<2x1xf32>
    %cst_165 = arith.constant 3.200000e+01 : f32
    %288 = vector.broadcast %cst_165 : f32 to vector<2x1xf32>
    %289 = arith.divf %287, %288 : vector<2x1xf32>
    %cst_166 = arith.constant 9.99999974E-6 : f32
    %290 = vector.broadcast %cst_166 : f32 to vector<2x1xf32>
    %291 = arith.addf %289, %290 : vector<2x1xf32>
    %292 = math.rsqrt %291 : vector<2x1xf32>
    %293 = vector.broadcast %292 : vector<2x1xf32> to vector<2x32xf32>
    %294 = arith.mulf %284, %293 : vector<2x32xf32>
    %295 = vector.broadcast %277 : vector<1x32xf32> to vector<2x32xf32>
    %296 = arith.mulf %294, %295 : vector<2x32xf32>
    %297 = vector.broadcast %278 : vector<1x32xf32> to vector<2x32xf32>
    %298 = arith.addf %296, %297 : vector<2x32xf32>
    %c0_167 = arith.constant 0 : index
    %c0_168 = arith.constant 0 : index
    %299 = vector.load %arg19[%c0_167, %c0_168] : memref<32x32xf32, #tpu.memory_space<vmem>>, vector<32x32xf32>
    %cst_169 = arith.constant dense<0.000000e+00> : vector<2x32xf32>
    %300 = tpu.matmul %298, %299, %cst_169 {dimension_numbers = #tpu.dot_dimension_numbers<[1], [0], [0], [1], [0, 0, 1, 1], [], []>} : vector<2x32xf32>, vector<32x32xf32>, vector<2x32xf32> -> vector<2x32xf32>
    %c0_170 = arith.constant 0 : index
    %c0_171 = arith.constant 0 : index
    %301 = vector.load %arg20[%c0_170, %c0_171] : memref<16x32xf32, #tpu.memory_space<vmem>>, vector<16x32xf32>
    %302 = tpu.iota {dimensions = array<i32: 0>} : vector<8x8xi32>
    %303 = tpu.iota {dimensions = array<i32: 1>} : vector<8x8xi32>
    %304 = arith.cmpi sgt, %303, %302 : vector<8x8xi32>
    %cst_172 = arith.constant -1.000000e+09 : f32
    %cst_173 = arith.constant 0.000000e+00 : f32
    %305 = vector.broadcast %cst_172 : f32 to vector<8x8xf32>
    %306 = vector.broadcast %cst_173 : f32 to vector<8x8xf32>
    %307 = arith.select %304, %305, %306 : vector<8x8xi1>, vector<8x8xf32>
    %cst_174 = arith.constant dense<0.000000e+00> : vector<16xf32>
    %308 = vector.multi_reduction <add>, %301, %cst_174 [1] : vector<16x32xf32> to vector<16xf32>
    %309 = vector.shape_cast %308 : vector<16xf32> to vector<16x1xf32>
    %cst_175 = arith.constant 3.200000e+01 : f32
    %310 = vector.broadcast %cst_175 : f32 to vector<16x1xf32>
    %311 = arith.divf %309, %310 : vector<16x1xf32>
    %312 = vector.broadcast %311 : vector<16x1xf32> to vector<16x32xf32>
    %313 = arith.subf %301, %312 : vector<16x32xf32>
    %314 = arith.mulf %313, %313 : vector<16x32xf32>
    %cst_176 = arith.constant dense<0.000000e+00> : vector<16xf32>
    %315 = vector.multi_reduction <add>, %314, %cst_176 [1] : vector<16x32xf32> to vector<16xf32>
    %316 = vector.shape_cast %315 : vector<16xf32> to vector<16x1xf32>
    %cst_177 = arith.constant 3.200000e+01 : f32
    %317 = vector.broadcast %cst_177 : f32 to vector<16x1xf32>
    %318 = arith.divf %316, %317 : vector<16x1xf32>
    %cst_178 = arith.constant 9.99999974E-6 : f32
    %319 = vector.broadcast %cst_178 : f32 to vector<16x1xf32>
    %320 = arith.addf %318, %319 : vector<16x1xf32>
    %321 = math.rsqrt %320 : vector<16x1xf32>
    %322 = vector.broadcast %321 : vector<16x1xf32> to vector<16x32xf32>
    %323 = arith.mulf %313, %322 : vector<16x32xf32>
    %324 = vector.broadcast %12 : vector<1x32xf32> to vector<16x32xf32>
    %325 = arith.mulf %323, %324 : vector<16x32xf32>
    %326 = vector.broadcast %13 : vector<1x32xf32> to vector<16x32xf32>
    %327 = arith.addf %325, %326 : vector<16x32xf32>
    %cst_179 = arith.constant dense<0.000000e+00> : vector<16x96xf32>
    %328 = tpu.matmul %327, %14, %cst_179 {dimension_numbers = #tpu.dot_dimension_numbers<[1], [0], [0], [1], [0, 0, 1, 1], [], []>} : vector<16x32xf32>, vector<32x96xf32>, vector<16x96xf32> -> vector<16x96xf32>
    %329 = vector.broadcast %15 : vector<1x96xf32> to vector<16x96xf32>
    %330 = arith.addf %328, %329 : vector<16x96xf32>
    %331 = vector.extract_strided_slice %330 {offsets = [0, 0], sizes = [8, 96], strides = [1, 1]} : vector<16x96xf32> to vector<8x96xf32>
    %332 = vector.extract_strided_slice %331 {offsets = [0, 0], sizes = [8, 8], strides = [1, 1]} : vector<8x96xf32> to vector<8x8xf32>
    %333 = vector.extract_strided_slice %331 {offsets = [0, 32], sizes = [8, 8], strides = [1, 1]} : vector<8x96xf32> to vector<8x8xf32>
    %334 = vector.extract_strided_slice %331 {offsets = [0, 64], sizes = [8, 8], strides = [1, 1]} : vector<8x96xf32> to vector<8x8xf32>
    %cst_180 = arith.constant dense<0.000000e+00> : vector<8x8xf32>
    %335 = tpu.matmul %332, %333, %cst_180 {dimension_numbers = #tpu.dot_dimension_numbers<[1], [1], [0], [0], [0, 0, 1, 0], [], []>} : vector<8x8xf32>, vector<8x8xf32>, vector<8x8xf32> -> vector<8x8xf32>
    %cst_181 = arith.constant 0.353553385 : f32
    %336 = vector.broadcast %cst_181 : f32 to vector<8x8xf32>
    %337 = arith.mulf %335, %336 : vector<8x8xf32>
    %338 = arith.addf %337, %307 : vector<8x8xf32>
    %cst_182 = arith.constant dense<0xFF800000> : vector<8xf32>
    %339 = vector.multi_reduction <maximumf>, %338, %cst_182 [1] : vector<8x8xf32> to vector<8xf32>
    %340 = vector.shape_cast %339 : vector<8xf32> to vector<8x1xf32>
    %341 = vector.broadcast %340 : vector<8x1xf32> to vector<8x8xf32>
    %342 = arith.subf %338, %341 : vector<8x8xf32>
    %343 = math.exp %342 : vector<8x8xf32>
    %cst_183 = arith.constant dense<0.000000e+00> : vector<8xf32>
    %344 = vector.multi_reduction <add>, %343, %cst_183 [1] : vector<8x8xf32> to vector<8xf32>
    %345 = vector.shape_cast %344 : vector<8xf32> to vector<8x1xf32>
    %346 = tpu.reciprocal %345 {approx = true} : vector<8x1xf32> -> vector<8x1xf32>
    %347 = vector.broadcast %346 : vector<8x1xf32> to vector<8x8xf32>
    %348 = arith.mulf %343, %347 : vector<8x8xf32>
    %cst_184 = arith.constant dense<0.000000e+00> : vector<8x8xf32>
    %349 = tpu.matmul %348, %334, %cst_184 {dimension_numbers = #tpu.dot_dimension_numbers<[1], [0], [0], [1], [0, 0, 1, 1], [], []>} : vector<8x8xf32>, vector<8x8xf32>, vector<8x8xf32> -> vector<8x8xf32>
    %350 = vector.extract_strided_slice %331 {offsets = [0, 8], sizes = [8, 8], strides = [1, 1]} : vector<8x96xf32> to vector<8x8xf32>
    %351 = vector.extract_strided_slice %331 {offsets = [0, 40], sizes = [8, 8], strides = [1, 1]} : vector<8x96xf32> to vector<8x8xf32>
    %352 = vector.extract_strided_slice %331 {offsets = [0, 72], sizes = [8, 8], strides = [1, 1]} : vector<8x96xf32> to vector<8x8xf32>
    %cst_185 = arith.constant dense<0.000000e+00> : vector<8x8xf32>
    %353 = tpu.matmul %350, %351, %cst_185 {dimension_numbers = #tpu.dot_dimension_numbers<[1], [1], [0], [0], [0, 0, 1, 0], [], []>} : vector<8x8xf32>, vector<8x8xf32>, vector<8x8xf32> -> vector<8x8xf32>
    %cst_186 = arith.constant 0.353553385 : f32
    %354 = vector.broadcast %cst_186 : f32 to vector<8x8xf32>
    %355 = arith.mulf %353, %354 : vector<8x8xf32>
    %356 = arith.addf %355, %307 : vector<8x8xf32>
    %cst_187 = arith.constant dense<0xFF800000> : vector<8xf32>
    %357 = vector.multi_reduction <maximumf>, %356, %cst_187 [1] : vector<8x8xf32> to vector<8xf32>
    %358 = vector.shape_cast %357 : vector<8xf32> to vector<8x1xf32>
    %359 = vector.broadcast %358 : vector<8x1xf32> to vector<8x8xf32>
    %360 = arith.subf %356, %359 : vector<8x8xf32>
    %361 = math.exp %360 : vector<8x8xf32>
    %cst_188 = arith.constant dense<0.000000e+00> : vector<8xf32>
    %362 = vector.multi_reduction <add>, %361, %cst_188 [1] : vector<8x8xf32> to vector<8xf32>
    %363 = vector.shape_cast %362 : vector<8xf32> to vector<8x1xf32>
    %364 = tpu.reciprocal %363 {approx = true} : vector<8x1xf32> -> vector<8x1xf32>
    %365 = vector.broadcast %364 : vector<8x1xf32> to vector<8x8xf32>
    %366 = arith.mulf %361, %365 : vector<8x8xf32>
    %cst_189 = arith.constant dense<0.000000e+00> : vector<8x8xf32>
    %367 = tpu.matmul %366, %352, %cst_189 {dimension_numbers = #tpu.dot_dimension_numbers<[1], [0], [0], [1], [0, 0, 1, 1], [], []>} : vector<8x8xf32>, vector<8x8xf32>, vector<8x8xf32> -> vector<8x8xf32>
    %368 = vector.extract_strided_slice %331 {offsets = [0, 16], sizes = [8, 8], strides = [1, 1]} : vector<8x96xf32> to vector<8x8xf32>
    %369 = vector.extract_strided_slice %331 {offsets = [0, 48], sizes = [8, 8], strides = [1, 1]} : vector<8x96xf32> to vector<8x8xf32>
    %370 = vector.extract_strided_slice %331 {offsets = [0, 80], sizes = [8, 8], strides = [1, 1]} : vector<8x96xf32> to vector<8x8xf32>
    %cst_190 = arith.constant dense<0.000000e+00> : vector<8x8xf32>
    %371 = tpu.matmul %368, %369, %cst_190 {dimension_numbers = #tpu.dot_dimension_numbers<[1], [1], [0], [0], [0, 0, 1, 0], [], []>} : vector<8x8xf32>, vector<8x8xf32>, vector<8x8xf32> -> vector<8x8xf32>
    %cst_191 = arith.constant 0.353553385 : f32
    %372 = vector.broadcast %cst_191 : f32 to vector<8x8xf32>
    %373 = arith.mulf %371, %372 : vector<8x8xf32>
    %374 = arith.addf %373, %307 : vector<8x8xf32>
    %cst_192 = arith.constant dense<0xFF800000> : vector<8xf32>
    %375 = vector.multi_reduction <maximumf>, %374, %cst_192 [1] : vector<8x8xf32> to vector<8xf32>
    %376 = vector.shape_cast %375 : vector<8xf32> to vector<8x1xf32>
    %377 = vector.broadcast %376 : vector<8x1xf32> to vector<8x8xf32>
    %378 = arith.subf %374, %377 : vector<8x8xf32>
    %379 = math.exp %378 : vector<8x8xf32>
    %cst_193 = arith.constant dense<0.000000e+00> : vector<8xf32>
    %380 = vector.multi_reduction <add>, %379, %cst_193 [1] : vector<8x8xf32> to vector<8xf32>
    %381 = vector.shape_cast %380 : vector<8xf32> to vector<8x1xf32>
    %382 = tpu.reciprocal %381 {approx = true} : vector<8x1xf32> -> vector<8x1xf32>
    %383 = vector.broadcast %382 : vector<8x1xf32> to vector<8x8xf32>
    %384 = arith.mulf %379, %383 : vector<8x8xf32>
    %cst_194 = arith.constant dense<0.000000e+00> : vector<8x8xf32>
    %385 = tpu.matmul %384, %370, %cst_194 {dimension_numbers = #tpu.dot_dimension_numbers<[1], [0], [0], [1], [0, 0, 1, 1], [], []>} : vector<8x8xf32>, vector<8x8xf32>, vector<8x8xf32> -> vector<8x8xf32>
    %386 = vector.extract_strided_slice %331 {offsets = [0, 24], sizes = [8, 8], strides = [1, 1]} : vector<8x96xf32> to vector<8x8xf32>
    %387 = vector.extract_strided_slice %331 {offsets = [0, 56], sizes = [8, 8], strides = [1, 1]} : vector<8x96xf32> to vector<8x8xf32>
    %388 = vector.extract_strided_slice %331 {offsets = [0, 88], sizes = [8, 8], strides = [1, 1]} : vector<8x96xf32> to vector<8x8xf32>
    %cst_195 = arith.constant dense<0.000000e+00> : vector<8x8xf32>
    %389 = tpu.matmul %386, %387, %cst_195 {dimension_numbers = #tpu.dot_dimension_numbers<[1], [1], [0], [0], [0, 0, 1, 0], [], []>} : vector<8x8xf32>, vector<8x8xf32>, vector<8x8xf32> -> vector<8x8xf32>
    %cst_196 = arith.constant 0.353553385 : f32
    %390 = vector.broadcast %cst_196 : f32 to vector<8x8xf32>
    %391 = arith.mulf %389, %390 : vector<8x8xf32>
    %392 = arith.addf %391, %307 : vector<8x8xf32>
    %cst_197 = arith.constant dense<0xFF800000> : vector<8xf32>
    %393 = vector.multi_reduction <maximumf>, %392, %cst_197 [1] : vector<8x8xf32> to vector<8xf32>
    %394 = vector.shape_cast %393 : vector<8xf32> to vector<8x1xf32>
    %395 = vector.broadcast %394 : vector<8x1xf32> to vector<8x8xf32>
    %396 = arith.subf %392, %395 : vector<8x8xf32>
    %397 = math.exp %396 : vector<8x8xf32>
    %cst_198 = arith.constant dense<0.000000e+00> : vector<8xf32>
    %398 = vector.multi_reduction <add>, %397, %cst_198 [1] : vector<8x8xf32> to vector<8xf32>
    %399 = vector.shape_cast %398 : vector<8xf32> to vector<8x1xf32>
    %400 = tpu.reciprocal %399 {approx = true} : vector<8x1xf32> -> vector<8x1xf32>
    %401 = vector.broadcast %400 : vector<8x1xf32> to vector<8x8xf32>
    %402 = arith.mulf %397, %401 : vector<8x8xf32>
    %cst_199 = arith.constant dense<0.000000e+00> : vector<8x8xf32>
    %403 = tpu.matmul %402, %388, %cst_199 {dimension_numbers = #tpu.dot_dimension_numbers<[1], [0], [0], [1], [0, 0, 1, 1], [], []>} : vector<8x8xf32>, vector<8x8xf32>, vector<8x8xf32> -> vector<8x8xf32>
    %404 = tpu.concatenate %349, %367, %385, %403 in 1 : vector<8x8xf32>, vector<8x8xf32>, vector<8x8xf32>, vector<8x8xf32> -> vector<8x32xf32>
    %405 = vector.extract_strided_slice %330 {offsets = [8, 0], sizes = [8, 96], strides = [1, 1]} : vector<16x96xf32> to vector<8x96xf32>
    %406 = vector.extract_strided_slice %405 {offsets = [0, 0], sizes = [8, 8], strides = [1, 1]} : vector<8x96xf32> to vector<8x8xf32>
    %407 = vector.extract_strided_slice %405 {offsets = [0, 32], sizes = [8, 8], strides = [1, 1]} : vector<8x96xf32> to vector<8x8xf32>
    %408 = vector.extract_strided_slice %405 {offsets = [0, 64], sizes = [8, 8], strides = [1, 1]} : vector<8x96xf32> to vector<8x8xf32>
    %cst_200 = arith.constant dense<0.000000e+00> : vector<8x8xf32>
    %409 = tpu.matmul %406, %407, %cst_200 {dimension_numbers = #tpu.dot_dimension_numbers<[1], [1], [0], [0], [0, 0, 1, 0], [], []>} : vector<8x8xf32>, vector<8x8xf32>, vector<8x8xf32> -> vector<8x8xf32>
    %cst_201 = arith.constant 0.353553385 : f32
    %410 = vector.broadcast %cst_201 : f32 to vector<8x8xf32>
    %411 = arith.mulf %409, %410 : vector<8x8xf32>
    %412 = arith.addf %411, %307 : vector<8x8xf32>
    %cst_202 = arith.constant dense<0xFF800000> : vector<8xf32>
    %413 = vector.multi_reduction <maximumf>, %412, %cst_202 [1] : vector<8x8xf32> to vector<8xf32>
    %414 = vector.shape_cast %413 : vector<8xf32> to vector<8x1xf32>
    %415 = vector.broadcast %414 : vector<8x1xf32> to vector<8x8xf32>
    %416 = arith.subf %412, %415 : vector<8x8xf32>
    %417 = math.exp %416 : vector<8x8xf32>
    %cst_203 = arith.constant dense<0.000000e+00> : vector<8xf32>
    %418 = vector.multi_reduction <add>, %417, %cst_203 [1] : vector<8x8xf32> to vector<8xf32>
    %419 = vector.shape_cast %418 : vector<8xf32> to vector<8x1xf32>
    %420 = tpu.reciprocal %419 {approx = true} : vector<8x1xf32> -> vector<8x1xf32>
    %421 = vector.broadcast %420 : vector<8x1xf32> to vector<8x8xf32>
    %422 = arith.mulf %417, %421 : vector<8x8xf32>
    %cst_204 = arith.constant dense<0.000000e+00> : vector<8x8xf32>
    %423 = tpu.matmul %422, %408, %cst_204 {dimension_numbers = #tpu.dot_dimension_numbers<[1], [0], [0], [1], [0, 0, 1, 1], [], []>} : vector<8x8xf32>, vector<8x8xf32>, vector<8x8xf32> -> vector<8x8xf32>
    %424 = vector.extract_strided_slice %405 {offsets = [0, 8], sizes = [8, 8], strides = [1, 1]} : vector<8x96xf32> to vector<8x8xf32>
    %425 = vector.extract_strided_slice %405 {offsets = [0, 40], sizes = [8, 8], strides = [1, 1]} : vector<8x96xf32> to vector<8x8xf32>
    %426 = vector.extract_strided_slice %405 {offsets = [0, 72], sizes = [8, 8], strides = [1, 1]} : vector<8x96xf32> to vector<8x8xf32>
    %cst_205 = arith.constant dense<0.000000e+00> : vector<8x8xf32>
    %427 = tpu.matmul %424, %425, %cst_205 {dimension_numbers = #tpu.dot_dimension_numbers<[1], [1], [0], [0], [0, 0, 1, 0], [], []>} : vector<8x8xf32>, vector<8x8xf32>, vector<8x8xf32> -> vector<8x8xf32>
    %cst_206 = arith.constant 0.353553385 : f32
    %428 = vector.broadcast %cst_206 : f32 to vector<8x8xf32>
    %429 = arith.mulf %427, %428 : vector<8x8xf32>
    %430 = arith.addf %429, %307 : vector<8x8xf32>
    %cst_207 = arith.constant dense<0xFF800000> : vector<8xf32>
    %431 = vector.multi_reduction <maximumf>, %430, %cst_207 [1] : vector<8x8xf32> to vector<8xf32>
    %432 = vector.shape_cast %431 : vector<8xf32> to vector<8x1xf32>
    %433 = vector.broadcast %432 : vector<8x1xf32> to vector<8x8xf32>
    %434 = arith.subf %430, %433 : vector<8x8xf32>
    %435 = math.exp %434 : vector<8x8xf32>
    %cst_208 = arith.constant dense<0.000000e+00> : vector<8xf32>
    %436 = vector.multi_reduction <add>, %435, %cst_208 [1] : vector<8x8xf32> to vector<8xf32>
    %437 = vector.shape_cast %436 : vector<8xf32> to vector<8x1xf32>
    %438 = tpu.reciprocal %437 {approx = true} : vector<8x1xf32> -> vector<8x1xf32>
    %439 = vector.broadcast %438 : vector<8x1xf32> to vector<8x8xf32>
    %440 = arith.mulf %435, %439 : vector<8x8xf32>
    %cst_209 = arith.constant dense<0.000000e+00> : vector<8x8xf32>
    %441 = tpu.matmul %440, %426, %cst_209 {dimension_numbers = #tpu.dot_dimension_numbers<[1], [0], [0], [1], [0, 0, 1, 1], [], []>} : vector<8x8xf32>, vector<8x8xf32>, vector<8x8xf32> -> vector<8x8xf32>
    %442 = vector.extract_strided_slice %405 {offsets = [0, 16], sizes = [8, 8], strides = [1, 1]} : vector<8x96xf32> to vector<8x8xf32>
    %443 = vector.extract_strided_slice %405 {offsets = [0, 48], sizes = [8, 8], strides = [1, 1]} : vector<8x96xf32> to vector<8x8xf32>
    %444 = vector.extract_strided_slice %405 {offsets = [0, 80], sizes = [8, 8], strides = [1, 1]} : vector<8x96xf32> to vector<8x8xf32>
    %cst_210 = arith.constant dense<0.000000e+00> : vector<8x8xf32>
    %445 = tpu.matmul %442, %443, %cst_210 {dimension_numbers = #tpu.dot_dimension_numbers<[1], [1], [0], [0], [0, 0, 1, 0], [], []>} : vector<8x8xf32>, vector<8x8xf32>, vector<8x8xf32> -> vector<8x8xf32>
    %cst_211 = arith.constant 0.353553385 : f32
    %446 = vector.broadcast %cst_211 : f32 to vector<8x8xf32>
    %447 = arith.mulf %445, %446 : vector<8x8xf32>
    %448 = arith.addf %447, %307 : vector<8x8xf32>
    %cst_212 = arith.constant dense<0xFF800000> : vector<8xf32>
    %449 = vector.multi_reduction <maximumf>, %448, %cst_212 [1] : vector<8x8xf32> to vector<8xf32>
    %450 = vector.shape_cast %449 : vector<8xf32> to vector<8x1xf32>
    %451 = vector.broadcast %450 : vector<8x1xf32> to vector<8x8xf32>
    %452 = arith.subf %448, %451 : vector<8x8xf32>
    %453 = math.exp %452 : vector<8x8xf32>
    %cst_213 = arith.constant dense<0.000000e+00> : vector<8xf32>
    %454 = vector.multi_reduction <add>, %453, %cst_213 [1] : vector<8x8xf32> to vector<8xf32>
    %455 = vector.shape_cast %454 : vector<8xf32> to vector<8x1xf32>
    %456 = tpu.reciprocal %455 {approx = true} : vector<8x1xf32> -> vector<8x1xf32>
    %457 = vector.broadcast %456 : vector<8x1xf32> to vector<8x8xf32>
    %458 = arith.mulf %453, %457 : vector<8x8xf32>
    %cst_214 = arith.constant dense<0.000000e+00> : vector<8x8xf32>
    %459 = tpu.matmul %458, %444, %cst_214 {dimension_numbers = #tpu.dot_dimension_numbers<[1], [0], [0], [1], [0, 0, 1, 1], [], []>} : vector<8x8xf32>, vector<8x8xf32>, vector<8x8xf32> -> vector<8x8xf32>
    %460 = vector.extract_strided_slice %405 {offsets = [0, 24], sizes = [8, 8], strides = [1, 1]} : vector<8x96xf32> to vector<8x8xf32>
    %461 = vector.extract_strided_slice %405 {offsets = [0, 56], sizes = [8, 8], strides = [1, 1]} : vector<8x96xf32> to vector<8x8xf32>
    %462 = vector.extract_strided_slice %405 {offsets = [0, 88], sizes = [8, 8], strides = [1, 1]} : vector<8x96xf32> to vector<8x8xf32>
    %cst_215 = arith.constant dense<0.000000e+00> : vector<8x8xf32>
    %463 = tpu.matmul %460, %461, %cst_215 {dimension_numbers = #tpu.dot_dimension_numbers<[1], [1], [0], [0], [0, 0, 1, 0], [], []>} : vector<8x8xf32>, vector<8x8xf32>, vector<8x8xf32> -> vector<8x8xf32>
    %cst_216 = arith.constant 0.353553385 : f32
    %464 = vector.broadcast %cst_216 : f32 to vector<8x8xf32>
    %465 = arith.mulf %463, %464 : vector<8x8xf32>
    %466 = arith.addf %465, %307 : vector<8x8xf32>
    %cst_217 = arith.constant dense<0xFF800000> : vector<8xf32>
    %467 = vector.multi_reduction <maximumf>, %466, %cst_217 [1] : vector<8x8xf32> to vector<8xf32>
    %468 = vector.shape_cast %467 : vector<8xf32> to vector<8x1xf32>
    %469 = vector.broadcast %468 : vector<8x1xf32> to vector<8x8xf32>
    %470 = arith.subf %466, %469 : vector<8x8xf32>
    %471 = math.exp %470 : vector<8x8xf32>
    %cst_218 = arith.constant dense<0.000000e+00> : vector<8xf32>
    %472 = vector.multi_reduction <add>, %471, %cst_218 [1] : vector<8x8xf32> to vector<8xf32>
    %473 = vector.shape_cast %472 : vector<8xf32> to vector<8x1xf32>
    %474 = tpu.reciprocal %473 {approx = true} : vector<8x1xf32> -> vector<8x1xf32>
    %475 = vector.broadcast %474 : vector<8x1xf32> to vector<8x8xf32>
    %476 = arith.mulf %471, %475 : vector<8x8xf32>
    %cst_219 = arith.constant dense<0.000000e+00> : vector<8x8xf32>
    %477 = tpu.matmul %476, %462, %cst_219 {dimension_numbers = #tpu.dot_dimension_numbers<[1], [0], [0], [1], [0, 0, 1, 1], [], []>} : vector<8x8xf32>, vector<8x8xf32>, vector<8x8xf32> -> vector<8x8xf32>
    %478 = tpu.concatenate %423, %441, %459, %477 in 1 : vector<8x8xf32>, vector<8x8xf32>, vector<8x8xf32>, vector<8x8xf32> -> vector<8x32xf32>
    %479 = tpu.concatenate %404, %478 in 0 : vector<8x32xf32>, vector<8x32xf32> -> vector<16x32xf32>
    %cst_220 = arith.constant dense<0.000000e+00> : vector<16x32xf32>
    %480 = tpu.matmul %479, %16, %cst_220 {dimension_numbers = #tpu.dot_dimension_numbers<[1], [0], [0], [1], [0, 0, 1, 1], [], []>} : vector<16x32xf32>, vector<32x32xf32>, vector<16x32xf32> -> vector<16x32xf32>
    %481 = vector.broadcast %17 : vector<1x32xf32> to vector<16x32xf32>
    %482 = arith.addf %480, %481 : vector<16x32xf32>
    %483 = arith.addf %301, %482 : vector<16x32xf32>
    %cst_221 = arith.constant dense<0.000000e+00> : vector<16xf32>
    %484 = vector.multi_reduction <add>, %483, %cst_221 [1] : vector<16x32xf32> to vector<16xf32>
    %485 = vector.shape_cast %484 : vector<16xf32> to vector<16x1xf32>
    %cst_222 = arith.constant 3.200000e+01 : f32
    %486 = vector.broadcast %cst_222 : f32 to vector<16x1xf32>
    %487 = arith.divf %485, %486 : vector<16x1xf32>
    %488 = vector.broadcast %487 : vector<16x1xf32> to vector<16x32xf32>
    %489 = arith.subf %483, %488 : vector<16x32xf32>
    %490 = arith.mulf %489, %489 : vector<16x32xf32>
    %cst_223 = arith.constant dense<0.000000e+00> : vector<16xf32>
    %491 = vector.multi_reduction <add>, %490, %cst_223 [1] : vector<16x32xf32> to vector<16xf32>
    %492 = vector.shape_cast %491 : vector<16xf32> to vector<16x1xf32>
    %cst_224 = arith.constant 3.200000e+01 : f32
    %493 = vector.broadcast %cst_224 : f32 to vector<16x1xf32>
    %494 = arith.divf %492, %493 : vector<16x1xf32>
    %cst_225 = arith.constant 9.99999974E-6 : f32
    %495 = vector.broadcast %cst_225 : f32 to vector<16x1xf32>
    %496 = arith.addf %494, %495 : vector<16x1xf32>
    %497 = math.rsqrt %496 : vector<16x1xf32>
    %498 = vector.broadcast %497 : vector<16x1xf32> to vector<16x32xf32>
    %499 = arith.mulf %489, %498 : vector<16x32xf32>
    %500 = vector.broadcast %18 : vector<1x32xf32> to vector<16x32xf32>
    %501 = arith.mulf %499, %500 : vector<16x32xf32>
    %502 = vector.broadcast %19 : vector<1x32xf32> to vector<16x32xf32>
    %503 = arith.addf %501, %502 : vector<16x32xf32>
    %cst_226 = arith.constant dense<0.000000e+00> : vector<16x128xf32>
    %504 = tpu.matmul %503, %20, %cst_226 {dimension_numbers = #tpu.dot_dimension_numbers<[1], [0], [0], [1], [0, 0, 1, 1], [], []>} : vector<16x32xf32>, vector<32x128xf32>, vector<16x128xf32> -> vector<16x128xf32>
    %505 = vector.broadcast %21 : vector<1x128xf32> to vector<16x128xf32>
    %506 = arith.addf %504, %505 : vector<16x128xf32>
    %cst_227 = arith.constant 1.702000e+00 : f32
    %507 = vector.broadcast %cst_227 : f32 to vector<16x128xf32>
    %508 = arith.mulf %507, %506 : vector<16x128xf32>
    %509 = arith.negf %508 : vector<16x128xf32>
    %510 = math.exp %509 : vector<16x128xf32>
    %cst_228 = arith.constant 1.000000e+00 : f32
    %511 = vector.broadcast %cst_228 : f32 to vector<16x128xf32>
    %512 = arith.addf %511, %510 : vector<16x128xf32>
    %513 = arith.divf %511, %512 : vector<16x128xf32>
    %514 = arith.mulf %506, %513 : vector<16x128xf32>
    %cst_229 = arith.constant dense<0.000000e+00> : vector<16x32xf32>
    %515 = tpu.matmul %514, %22, %cst_229 {dimension_numbers = #tpu.dot_dimension_numbers<[1], [0], [0], [1], [0, 0, 1, 1], [], []>} : vector<16x128xf32>, vector<128x32xf32>, vector<16x32xf32> -> vector<16x32xf32>
    %516 = vector.broadcast %23 : vector<1x32xf32> to vector<16x32xf32>
    %517 = arith.addf %515, %516 : vector<16x32xf32>
    %518 = arith.addf %483, %517 : vector<16x32xf32>
    %c0_230 = arith.constant 0 : index
    %c0_231 = arith.constant 0 : index
    %519 = vector.load %arg34[%c0_230, %c0_231] : memref<1x32xf32, #tpu.memory_space<vmem>>, vector<1x32xf32>
    %c0_232 = arith.constant 0 : index
    %c0_233 = arith.constant 0 : index
    %520 = vector.load %arg35[%c0_232, %c0_233] : memref<1x32xf32, #tpu.memory_space<vmem>>, vector<1x32xf32>
    %cst_234 = arith.constant dense<0.000000e+00> : vector<16xf32>
    %521 = vector.multi_reduction <add>, %518, %cst_234 [1] : vector<16x32xf32> to vector<16xf32>
    %522 = vector.shape_cast %521 : vector<16xf32> to vector<16x1xf32>
    %cst_235 = arith.constant 3.200000e+01 : f32
    %523 = vector.broadcast %cst_235 : f32 to vector<16x1xf32>
    %524 = arith.divf %522, %523 : vector<16x1xf32>
    %525 = vector.broadcast %524 : vector<16x1xf32> to vector<16x32xf32>
    %526 = arith.subf %518, %525 : vector<16x32xf32>
    %527 = arith.mulf %526, %526 : vector<16x32xf32>
    %cst_236 = arith.constant dense<0.000000e+00> : vector<16xf32>
    %528 = vector.multi_reduction <add>, %527, %cst_236 [1] : vector<16x32xf32> to vector<16xf32>
    %529 = vector.shape_cast %528 : vector<16xf32> to vector<16x1xf32>
    %cst_237 = arith.constant 3.200000e+01 : f32
    %530 = vector.broadcast %cst_237 : f32 to vector<16x1xf32>
    %531 = arith.divf %529, %530 : vector<16x1xf32>
    %cst_238 = arith.constant 9.99999974E-6 : f32
    %532 = vector.broadcast %cst_238 : f32 to vector<16x1xf32>
    %533 = arith.addf %531, %532 : vector<16x1xf32>
    %534 = math.rsqrt %533 : vector<16x1xf32>
    %535 = vector.broadcast %534 : vector<16x1xf32> to vector<16x32xf32>
    %536 = arith.mulf %526, %535 : vector<16x32xf32>
    %537 = vector.broadcast %519 : vector<1x32xf32> to vector<16x32xf32>
    %538 = arith.mulf %536, %537 : vector<16x32xf32>
    %539 = vector.broadcast %520 : vector<1x32xf32> to vector<16x32xf32>
    %540 = arith.addf %538, %539 : vector<16x32xf32>
    %c0_239 = arith.constant 0 : index
    %c0_240 = arith.constant 0 : index
    %541 = vector.load %arg58[%c0_239, %c0_240] : memref<16x32xf32, #tpu.memory_space<vmem>>, vector<16x32xf32>
    tpu.vector_store %arg58[%c0_239, %c0_240], %540 {strides = array<i32>} : memref<16x32xf32, #tpu.memory_space<vmem>>, vector<16x32xf32>,
    %c0_241 = arith.constant 0 : index
    %542 = memref.load %arg21[%c0_241] : memref<2xi32, #tpu.memory_space<smem>>
    %c0_i32 = arith.constant 0 : i32
    %543 = arith.addi %c0_i32, %542 : i32
    %544 = arith.index_cast %543 : i32 to index
    %c0_242 = arith.constant 0 : index
    %545 = vector.load %arg58[%544, %c0_242] : memref<16x32xf32, #tpu.memory_space<vmem>>, vector<1x32xf32>
    %c1 = arith.constant 1 : index
    %546 = memref.load %arg21[%c1] : memref<2xi32, #tpu.memory_space<smem>>
    %c8_i32 = arith.constant 8 : i32
    %547 = arith.addi %c8_i32, %546 : i32
    %548 = arith.index_cast %547 : i32 to index
    %c0_243 = arith.constant 0 : index
    %549 = vector.load %arg58[%548, %c0_243] : memref<16x32xf32, #tpu.memory_space<vmem>>, vector<1x32xf32>
    %550 = tpu.concatenate %545, %549 in 0 : vector<1x32xf32>, vector<1x32xf32> -> vector<2x32xf32>
    %c0_244 = arith.constant 0 : index
    %c0_245 = arith.constant 0 : index
    %551 = vector.load %arg36[%c0_244, %c0_245] : memref<32x32xf32, #tpu.memory_space<vmem>>, vector<32x32xf32>
    %cst_246 = arith.constant dense<0.000000e+00> : vector<2x32xf32>
    %552 = tpu.matmul %550, %551, %cst_246 {dimension_numbers = #tpu.dot_dimension_numbers<[1], [0], [0], [1], [0, 0, 1, 1], [], []>} : vector<2x32xf32>, vector<32x32xf32>, vector<2x32xf32> -> vector<2x32xf32>
    %553 = vector.extract_strided_slice %300 {offsets = [0, 0], sizes = [1, 32], strides = [1, 1]} : vector<2x32xf32> to vector<1x32xf32>
    %554 = vector.extract_strided_slice %552 {offsets = [0, 0], sizes = [1, 32], strides = [1, 1]} : vector<2x32xf32> to vector<1x32xf32>
    %555 = tpu.concatenate %553, %554 in 0 : vector<1x32xf32>, vector<1x32xf32> -> vector<2x32xf32>
    %556 = vector.extract_strided_slice %300 {offsets = [1, 0], sizes = [1, 32], strides = [1, 1]} : vector<2x32xf32> to vector<1x32xf32>
    %557 = vector.extract_strided_slice %552 {offsets = [1, 0], sizes = [1, 32], strides = [1, 1]} : vector<2x32xf32> to vector<1x32xf32>
    %558 = tpu.concatenate %556, %557 in 0 : vector<1x32xf32>, vector<1x32xf32> -> vector<2x32xf32>
    %559 = tpu.concatenate %555, %558 in 0 : vector<2x32xf32>, vector<2x32xf32> -> vector<4x32xf32>
    %cst_247 = arith.constant dense<0.000000e+00> : vector<4xf32>
    %560 = vector.multi_reduction <add>, %559, %cst_247 [1] : vector<4x32xf32> to vector<4xf32>
    %561 = vector.shape_cast %560 : vector<4xf32> to vector<4x1xf32>
    %cst_248 = arith.constant 3.200000e+01 : f32
    %562 = vector.broadcast %cst_248 : f32 to vector<4x1xf32>
    %563 = arith.divf %561, %562 : vector<4x1xf32>
    %564 = vector.broadcast %563 : vector<4x1xf32> to vector<4x32xf32>
    %565 = arith.subf %559, %564 : vector<4x32xf32>
    %566 = arith.mulf %565, %565 : vector<4x32xf32>
    %cst_249 = arith.constant dense<0.000000e+00> : vector<4xf32>
    %567 = vector.multi_reduction <add>, %566, %cst_249 [1] : vector<4x32xf32> to vector<4xf32>
    %568 = vector.shape_cast %567 : vector<4xf32> to vector<4x1xf32>
    %cst_250 = arith.constant 3.200000e+01 : f32
    %569 = vector.broadcast %cst_250 : f32 to vector<4x1xf32>
    %570 = arith.divf %568, %569 : vector<4x1xf32>
    %cst_251 = arith.constant 9.99999974E-6 : f32
    %571 = vector.broadcast %cst_251 : f32 to vector<4x1xf32>
    %572 = arith.addf %570, %571 : vector<4x1xf32>
    %573 = math.rsqrt %572 : vector<4x1xf32>
    %574 = vector.broadcast %573 : vector<4x1xf32> to vector<4x32xf32>
    %575 = arith.mulf %565, %574 : vector<4x32xf32>
    %576 = vector.broadcast %24 : vector<1x32xf32> to vector<4x32xf32>
    %577 = arith.mulf %575, %576 : vector<4x32xf32>
    %578 = vector.broadcast %25 : vector<1x32xf32> to vector<4x32xf32>
    %579 = arith.addf %577, %578 : vector<4x32xf32>
    %cst_252 = arith.constant dense<0.000000e+00> : vector<4x96xf32>
    %580 = tpu.matmul %579, %26, %cst_252 {dimension_numbers = #tpu.dot_dimension_numbers<[1], [0], [0], [1], [0, 0, 1, 1], [], []>} : vector<4x32xf32>, vector<32x96xf32>, vector<4x96xf32> -> vector<4x96xf32>
    %581 = vector.broadcast %27 : vector<1x96xf32> to vector<4x96xf32>
    %582 = arith.addf %580, %581 : vector<4x96xf32>
    %583 = vector.extract_strided_slice %582 {offsets = [0, 0], sizes = [2, 96], strides = [1, 1]} : vector<4x96xf32> to vector<2x96xf32>
    %584 = vector.extract_strided_slice %583 {offsets = [0, 0], sizes = [2, 8], strides = [1, 1]} : vector<2x96xf32> to vector<2x8xf32>
    %585 = vector.extract_strided_slice %583 {offsets = [0, 32], sizes = [2, 8], strides = [1, 1]} : vector<2x96xf32> to vector<2x8xf32>
    %586 = vector.extract_strided_slice %583 {offsets = [0, 64], sizes = [2, 8], strides = [1, 1]} : vector<2x96xf32> to vector<2x8xf32>
    %cst_253 = arith.constant dense<0.000000e+00> : vector<2x2xf32>
    %587 = tpu.matmul %584, %585, %cst_253 {dimension_numbers = #tpu.dot_dimension_numbers<[1], [1], [0], [0], [0, 0, 1, 0], [], []>} : vector<2x8xf32>, vector<2x8xf32>, vector<2x2xf32> -> vector<2x2xf32>
    %cst_254 = arith.constant 0.353553385 : f32
    %588 = vector.broadcast %cst_254 : f32 to vector<2x2xf32>
    %589 = arith.mulf %587, %588 : vector<2x2xf32>
    %cst_255 = arith.constant dense<0xFF800000> : vector<2xf32>
    %590 = vector.multi_reduction <maximumf>, %589, %cst_255 [1] : vector<2x2xf32> to vector<2xf32>
    %591 = vector.shape_cast %590 : vector<2xf32> to vector<2x1xf32>
    %592 = vector.broadcast %591 : vector<2x1xf32> to vector<2x2xf32>
    %593 = arith.subf %589, %592 : vector<2x2xf32>
    %594 = math.exp %593 : vector<2x2xf32>
    %cst_256 = arith.constant dense<0.000000e+00> : vector<2xf32>
    %595 = vector.multi_reduction <add>, %594, %cst_256 [1] : vector<2x2xf32> to vector<2xf32>
    %596 = vector.shape_cast %595 : vector<2xf32> to vector<2x1xf32>
    %597 = tpu.reciprocal %596 {approx = true} : vector<2x1xf32> -> vector<2x1xf32>
    %598 = vector.broadcast %597 : vector<2x1xf32> to vector<2x2xf32>
    %599 = arith.mulf %594, %598 : vector<2x2xf32>
    %cst_257 = arith.constant dense<0.000000e+00> : vector<2x8xf32>
    %600 = tpu.matmul %599, %586, %cst_257 {dimension_numbers = #tpu.dot_dimension_numbers<[1], [0], [0], [1], [0, 0, 1, 1], [], []>} : vector<2x2xf32>, vector<2x8xf32>, vector<2x8xf32> -> vector<2x8xf32>
    %601 = vector.extract_strided_slice %583 {offsets = [0, 8], sizes = [2, 8], strides = [1, 1]} : vector<2x96xf32> to vector<2x8xf32>
    %602 = vector.extract_strided_slice %583 {offsets = [0, 40], sizes = [2, 8], strides = [1, 1]} : vector<2x96xf32> to vector<2x8xf32>
    %603 = vector.extract_strided_slice %583 {offsets = [0, 72], sizes = [2, 8], strides = [1, 1]} : vector<2x96xf32> to vector<2x8xf32>
    %cst_258 = arith.constant dense<0.000000e+00> : vector<2x2xf32>
    %604 = tpu.matmul %601, %602, %cst_258 {dimension_numbers = #tpu.dot_dimension_numbers<[1], [1], [0], [0], [0, 0, 1, 0], [], []>} : vector<2x8xf32>, vector<2x8xf32>, vector<2x2xf32> -> vector<2x2xf32>
    %cst_259 = arith.constant 0.353553385 : f32
    %605 = vector.broadcast %cst_259 : f32 to vector<2x2xf32>
    %606 = arith.mulf %604, %605 : vector<2x2xf32>
    %cst_260 = arith.constant dense<0xFF800000> : vector<2xf32>
    %607 = vector.multi_reduction <maximumf>, %606, %cst_260 [1] : vector<2x2xf32> to vector<2xf32>
    %608 = vector.shape_cast %607 : vector<2xf32> to vector<2x1xf32>
    %609 = vector.broadcast %608 : vector<2x1xf32> to vector<2x2xf32>
    %610 = arith.subf %606, %609 : vector<2x2xf32>
    %611 = math.exp %610 : vector<2x2xf32>
    %cst_261 = arith.constant dense<0.000000e+00> : vector<2xf32>
    %612 = vector.multi_reduction <add>, %611, %cst_261 [1] : vector<2x2xf32> to vector<2xf32>
    %613 = vector.shape_cast %612 : vector<2xf32> to vector<2x1xf32>
    %614 = tpu.reciprocal %613 {approx = true} : vector<2x1xf32> -> vector<2x1xf32>
    %615 = vector.broadcast %614 : vector<2x1xf32> to vector<2x2xf32>
    %616 = arith.mulf %611, %615 : vector<2x2xf32>
    %cst_262 = arith.constant dense<0.000000e+00> : vector<2x8xf32>
    %617 = tpu.matmul %616, %603, %cst_262 {dimension_numbers = #tpu.dot_dimension_numbers<[1], [0], [0], [1], [0, 0, 1, 1], [], []>} : vector<2x2xf32>, vector<2x8xf32>, vector<2x8xf32> -> vector<2x8xf32>
    %618 = vector.extract_strided_slice %583 {offsets = [0, 16], sizes = [2, 8], strides = [1, 1]} : vector<2x96xf32> to vector<2x8xf32>
    %619 = vector.extract_strided_slice %583 {offsets = [0, 48], sizes = [2, 8], strides = [1, 1]} : vector<2x96xf32> to vector<2x8xf32>
    %620 = vector.extract_strided_slice %583 {offsets = [0, 80], sizes = [2, 8], strides = [1, 1]} : vector<2x96xf32> to vector<2x8xf32>
    %cst_263 = arith.constant dense<0.000000e+00> : vector<2x2xf32>
    %621 = tpu.matmul %618, %619, %cst_263 {dimension_numbers = #tpu.dot_dimension_numbers<[1], [1], [0], [0], [0, 0, 1, 0], [], []>} : vector<2x8xf32>, vector<2x8xf32>, vector<2x2xf32> -> vector<2x2xf32>
    %cst_264 = arith.constant 0.353553385 : f32
    %622 = vector.broadcast %cst_264 : f32 to vector<2x2xf32>
    %623 = arith.mulf %621, %622 : vector<2x2xf32>
    %cst_265 = arith.constant dense<0xFF800000> : vector<2xf32>
    %624 = vector.multi_reduction <maximumf>, %623, %cst_265 [1] : vector<2x2xf32> to vector<2xf32>
    %625 = vector.shape_cast %624 : vector<2xf32> to vector<2x1xf32>
    %626 = vector.broadcast %625 : vector<2x1xf32> to vector<2x2xf32>
    %627 = arith.subf %623, %626 : vector<2x2xf32>
    %628 = math.exp %627 : vector<2x2xf32>
    %cst_266 = arith.constant dense<0.000000e+00> : vector<2xf32>
    %629 = vector.multi_reduction <add>, %628, %cst_266 [1] : vector<2x2xf32> to vector<2xf32>
    %630 = vector.shape_cast %629 : vector<2xf32> to vector<2x1xf32>
    %631 = tpu.reciprocal %630 {approx = true} : vector<2x1xf32> -> vector<2x1xf32>
    %632 = vector.broadcast %631 : vector<2x1xf32> to vector<2x2xf32>
    %633 = arith.mulf %628, %632 : vector<2x2xf32>
    %cst_267 = arith.constant dense<0.000000e+00> : vector<2x8xf32>
    %634 = tpu.matmul %633, %620, %cst_267 {dimension_numbers = #tpu.dot_dimension_numbers<[1], [0], [0], [1], [0, 0, 1, 1], [], []>} : vector<2x2xf32>, vector<2x8xf32>, vector<2x8xf32> -> vector<2x8xf32>
    %635 = vector.extract_strided_slice %583 {offsets = [0, 24], sizes = [2, 8], strides = [1, 1]} : vector<2x96xf32> to vector<2x8xf32>
    %636 = vector.extract_strided_slice %583 {offsets = [0, 56], sizes = [2, 8], strides = [1, 1]} : vector<2x96xf32> to vector<2x8xf32>
    %637 = vector.extract_strided_slice %583 {offsets = [0, 88], sizes = [2, 8], strides = [1, 1]} : vector<2x96xf32> to vector<2x8xf32>
    %cst_268 = arith.constant dense<0.000000e+00> : vector<2x2xf32>
    %638 = tpu.matmul %635, %636, %cst_268 {dimension_numbers = #tpu.dot_dimension_numbers<[1], [1], [0], [0], [0, 0, 1, 0], [], []>} : vector<2x8xf32>, vector<2x8xf32>, vector<2x2xf32> -> vector<2x2xf32>
    %cst_269 = arith.constant 0.353553385 : f32
    %639 = vector.broadcast %cst_269 : f32 to vector<2x2xf32>
    %640 = arith.mulf %638, %639 : vector<2x2xf32>
    %cst_270 = arith.constant dense<0xFF800000> : vector<2xf32>
    %641 = vector.multi_reduction <maximumf>, %640, %cst_270 [1] : vector<2x2xf32> to vector<2xf32>
    %642 = vector.shape_cast %641 : vector<2xf32> to vector<2x1xf32>
    %643 = vector.broadcast %642 : vector<2x1xf32> to vector<2x2xf32>
    %644 = arith.subf %640, %643 : vector<2x2xf32>
    %645 = math.exp %644 : vector<2x2xf32>
    %cst_271 = arith.constant dense<0.000000e+00> : vector<2xf32>
    %646 = vector.multi_reduction <add>, %645, %cst_271 [1] : vector<2x2xf32> to vector<2xf32>
    %647 = vector.shape_cast %646 : vector<2xf32> to vector<2x1xf32>
    %648 = tpu.reciprocal %647 {approx = true} : vector<2x1xf32> -> vector<2x1xf32>
    %649 = vector.broadcast %648 : vector<2x1xf32> to vector<2x2xf32>
    %650 = arith.mulf %645, %649 : vector<2x2xf32>
    %cst_272 = arith.constant dense<0.000000e+00> : vector<2x8xf32>
    %651 = tpu.matmul %650, %637, %cst_272 {dimension_numbers = #tpu.dot_dimension_numbers<[1], [0], [0], [1], [0, 0, 1, 1], [], []>} : vector<2x2xf32>, vector<2x8xf32>, vector<2x8xf32> -> vector<2x8xf32>
    %652 = tpu.concatenate %600, %617, %634, %651 in 1 : vector<2x8xf32>, vector<2x8xf32>, vector<2x8xf32>, vector<2x8xf32> -> vector<2x32xf32>
    %653 = vector.extract_strided_slice %582 {offsets = [2, 0], sizes = [2, 96], strides = [1, 1]} : vector<4x96xf32> to vector<2x96xf32>
    %654 = vector.extract_strided_slice %653 {offsets = [0, 0], sizes = [2, 8], strides = [1, 1]} : vector<2x96xf32> to vector<2x8xf32>
    %655 = vector.extract_strided_slice %653 {offsets = [0, 32], sizes = [2, 8], strides = [1, 1]} : vector<2x96xf32> to vector<2x8xf32>
    %656 = vector.extract_strided_slice %653 {offsets = [0, 64], sizes = [2, 8], strides = [1, 1]} : vector<2x96xf32> to vector<2x8xf32>
    %cst_273 = arith.constant dense<0.000000e+00> : vector<2x2xf32>
    %657 = tpu.matmul %654, %655, %cst_273 {dimension_numbers = #tpu.dot_dimension_numbers<[1], [1], [0], [0], [0, 0, 1, 0], [], []>} : vector<2x8xf32>, vector<2x8xf32>, vector<2x2xf32> -> vector<2x2xf32>
    %cst_274 = arith.constant 0.353553385 : f32
    %658 = vector.broadcast %cst_274 : f32 to vector<2x2xf32>
    %659 = arith.mulf %657, %658 : vector<2x2xf32>
    %cst_275 = arith.constant dense<0xFF800000> : vector<2xf32>
    %660 = vector.multi_reduction <maximumf>, %659, %cst_275 [1] : vector<2x2xf32> to vector<2xf32>
    %661 = vector.shape_cast %660 : vector<2xf32> to vector<2x1xf32>
    %662 = vector.broadcast %661 : vector<2x1xf32> to vector<2x2xf32>
    %663 = arith.subf %659, %662 : vector<2x2xf32>
    %664 = math.exp %663 : vector<2x2xf32>
    %cst_276 = arith.constant dense<0.000000e+00> : vector<2xf32>
    %665 = vector.multi_reduction <add>, %664, %cst_276 [1] : vector<2x2xf32> to vector<2xf32>
    %666 = vector.shape_cast %665 : vector<2xf32> to vector<2x1xf32>
    %667 = tpu.reciprocal %666 {approx = true} : vector<2x1xf32> -> vector<2x1xf32>
    %668 = vector.broadcast %667 : vector<2x1xf32> to vector<2x2xf32>
    %669 = arith.mulf %664, %668 : vector<2x2xf32>
    %cst_277 = arith.constant dense<0.000000e+00> : vector<2x8xf32>
    %670 = tpu.matmul %669, %656, %cst_277 {dimension_numbers = #tpu.dot_dimension_numbers<[1], [0], [0], [1], [0, 0, 1, 1], [], []>} : vector<2x2xf32>, vector<2x8xf32>, vector<2x8xf32> -> vector<2x8xf32>
    %671 = vector.extract_strided_slice %653 {offsets = [0, 8], sizes = [2, 8], strides = [1, 1]} : vector<2x96xf32> to vector<2x8xf32>
    %672 = vector.extract_strided_slice %653 {offsets = [0, 40], sizes = [2, 8], strides = [1, 1]} : vector<2x96xf32> to vector<2x8xf32>
    %673 = vector.extract_strided_slice %653 {offsets = [0, 72], sizes = [2, 8], strides = [1, 1]} : vector<2x96xf32> to vector<2x8xf32>
    %cst_278 = arith.constant dense<0.000000e+00> : vector<2x2xf32>
    %674 = tpu.matmul %671, %672, %cst_278 {dimension_numbers = #tpu.dot_dimension_numbers<[1], [1], [0], [0], [0, 0, 1, 0], [], []>} : vector<2x8xf32>, vector<2x8xf32>, vector<2x2xf32> -> vector<2x2xf32>
    %cst_279 = arith.constant 0.353553385 : f32
    %675 = vector.broadcast %cst_279 : f32 to vector<2x2xf32>
    %676 = arith.mulf %674, %675 : vector<2x2xf32>
    %cst_280 = arith.constant dense<0xFF800000> : vector<2xf32>
    %677 = vector.multi_reduction <maximumf>, %676, %cst_280 [1] : vector<2x2xf32> to vector<2xf32>
    %678 = vector.shape_cast %677 : vector<2xf32> to vector<2x1xf32>
    %679 = vector.broadcast %678 : vector<2x1xf32> to vector<2x2xf32>
    %680 = arith.subf %676, %679 : vector<2x2xf32>
    %681 = math.exp %680 : vector<2x2xf32>
    %cst_281 = arith.constant dense<0.000000e+00> : vector<2xf32>
    %682 = vector.multi_reduction <add>, %681, %cst_281 [1] : vector<2x2xf32> to vector<2xf32>
    %683 = vector.shape_cast %682 : vector<2xf32> to vector<2x1xf32>
    %684 = tpu.reciprocal %683 {approx = true} : vector<2x1xf32> -> vector<2x1xf32>
    %685 = vector.broadcast %684 : vector<2x1xf32> to vector<2x2xf32>
    %686 = arith.mulf %681, %685 : vector<2x2xf32>
    %cst_282 = arith.constant dense<0.000000e+00> : vector<2x8xf32>
    %687 = tpu.matmul %686, %673, %cst_282 {dimension_numbers = #tpu.dot_dimension_numbers<[1], [0], [0], [1], [0, 0, 1, 1], [], []>} : vector<2x2xf32>, vector<2x8xf32>, vector<2x8xf32> -> vector<2x8xf32>
    %688 = vector.extract_strided_slice %653 {offsets = [0, 16], sizes = [2, 8], strides = [1, 1]} : vector<2x96xf32> to vector<2x8xf32>
    %689 = vector.extract_strided_slice %653 {offsets = [0, 48], sizes = [2, 8], strides = [1, 1]} : vector<2x96xf32> to vector<2x8xf32>
    %690 = vector.extract_strided_slice %653 {offsets = [0, 80], sizes = [2, 8], strides = [1, 1]} : vector<2x96xf32> to vector<2x8xf32>
    %cst_283 = arith.constant dense<0.000000e+00> : vector<2x2xf32>
    %691 = tpu.matmul %688, %689, %cst_283 {dimension_numbers = #tpu.dot_dimension_numbers<[1], [1], [0], [0], [0, 0, 1, 0], [], []>} : vector<2x8xf32>, vector<2x8xf32>, vector<2x2xf32> -> vector<2x2xf32>
    %cst_284 = arith.constant 0.353553385 : f32
    %692 = vector.broadcast %cst_284 : f32 to vector<2x2xf32>
    %693 = arith.mulf %691, %692 : vector<2x2xf32>
    %cst_285 = arith.constant dense<0xFF800000> : vector<2xf32>
    %694 = vector.multi_reduction <maximumf>, %693, %cst_285 [1] : vector<2x2xf32> to vector<2xf32>
    %695 = vector.shape_cast %694 : vector<2xf32> to vector<2x1xf32>
    %696 = vector.broadcast %695 : vector<2x1xf32> to vector<2x2xf32>
    %697 = arith.subf %693, %696 : vector<2x2xf32>
    %698 = math.exp %697 : vector<2x2xf32>
    %cst_286 = arith.constant dense<0.000000e+00> : vector<2xf32>
    %699 = vector.multi_reduction <add>, %698, %cst_286 [1] : vector<2x2xf32> to vector<2xf32>
    %700 = vector.shape_cast %699 : vector<2xf32> to vector<2x1xf32>
    %701 = tpu.reciprocal %700 {approx = true} : vector<2x1xf32> -> vector<2x1xf32>
    %702 = vector.broadcast %701 : vector<2x1xf32> to vector<2x2xf32>
    %703 = arith.mulf %698, %702 : vector<2x2xf32>
    %cst_287 = arith.constant dense<0.000000e+00> : vector<2x8xf32>
    %704 = tpu.matmul %703, %690, %cst_287 {dimension_numbers = #tpu.dot_dimension_numbers<[1], [0], [0], [1], [0, 0, 1, 1], [], []>} : vector<2x2xf32>, vector<2x8xf32>, vector<2x8xf32> -> vector<2x8xf32>
    %705 = vector.extract_strided_slice %653 {offsets = [0, 24], sizes = [2, 8], strides = [1, 1]} : vector<2x96xf32> to vector<2x8xf32>
    %706 = vector.extract_strided_slice %653 {offsets = [0, 56], sizes = [2, 8], strides = [1, 1]} : vector<2x96xf32> to vector<2x8xf32>
    %707 = vector.extract_strided_slice %653 {offsets = [0, 88], sizes = [2, 8], strides = [1, 1]} : vector<2x96xf32> to vector<2x8xf32>
    %cst_288 = arith.constant dense<0.000000e+00> : vector<2x2xf32>
    %708 = tpu.matmul %705, %706, %cst_288 {dimension_numbers = #tpu.dot_dimension_numbers<[1], [1], [0], [0], [0, 0, 1, 0], [], []>} : vector<2x8xf32>, vector<2x8xf32>, vector<2x2xf32> -> vector<2x2xf32>
    %cst_289 = arith.constant 0.353553385 : f32
    %709 = vector.broadcast %cst_289 : f32 to vector<2x2xf32>
    %710 = arith.mulf %708, %709 : vector<2x2xf32>
    %cst_290 = arith.constant dense<0xFF800000> : vector<2xf32>
    %711 = vector.multi_reduction <maximumf>, %710, %cst_290 [1] : vector<2x2xf32> to vector<2xf32>
    %712 = vector.shape_cast %711 : vector<2xf32> to vector<2x1xf32>
    %713 = vector.broadcast %712 : vector<2x1xf32> to vector<2x2xf32>
    %714 = arith.subf %710, %713 : vector<2x2xf32>
    %715 = math.exp %714 : vector<2x2xf32>
    %cst_291 = arith.constant dense<0.000000e+00> : vector<2xf32>
    %716 = vector.multi_reduction <add>, %715, %cst_291 [1] : vector<2x2xf32> to vector<2xf32>
    %717 = vector.shape_cast %716 : vector<2xf32> to vector<2x1xf32>
    %718 = tpu.reciprocal %717 {approx = true} : vector<2x1xf32> -> vector<2x1xf32>
    %719 = vector.broadcast %718 : vector<2x1xf32> to vector<2x2xf32>
    %720 = arith.mulf %715, %719 : vector<2x2xf32>
    %cst_292 = arith.constant dense<0.000000e+00> : vector<2x8xf32>
    %721 = tpu.matmul %720, %707, %cst_292 {dimension_numbers = #tpu.dot_dimension_numbers<[1], [0], [0], [1], [0, 0, 1, 1], [], []>} : vector<2x2xf32>, vector<2x8xf32>, vector<2x8xf32> -> vector<2x8xf32>
    %722 = tpu.concatenate %670, %687, %704, %721 in 1 : vector<2x8xf32>, vector<2x8xf32>, vector<2x8xf32>, vector<2x8xf32> -> vector<2x32xf32>
    %723 = tpu.concatenate %652, %722 in 0 : vector<2x32xf32>, vector<2x32xf32> -> vector<4x32xf32>
    %cst_293 = arith.constant dense<0.000000e+00> : vector<4x32xf32>
    %724 = tpu.matmul %723, %28, %cst_293 {dimension_numbers = #tpu.dot_dimension_numbers<[1], [0], [0], [1], [0, 0, 1, 1], [], []>} : vector<4x32xf32>, vector<32x32xf32>, vector<4x32xf32> -> vector<4x32xf32>
    %725 = vector.broadcast %29 : vector<1x32xf32> to vector<4x32xf32>
    %726 = arith.addf %724, %725 : vector<4x32xf32>
    %727 = arith.addf %559, %726 : vector<4x32xf32>
    %cst_294 = arith.constant dense<0.000000e+00> : vector<4xf32>
    %728 = vector.multi_reduction <add>, %727, %cst_294 [1] : vector<4x32xf32> to vector<4xf32>
    %729 = vector.shape_cast %728 : vector<4xf32> to vector<4x1xf32>
    %cst_295 = arith.constant 3.200000e+01 : f32
    %730 = vector.broadcast %cst_295 : f32 to vector<4x1xf32>
    %731 = arith.divf %729, %730 : vector<4x1xf32>
    %732 = vector.broadcast %731 : vector<4x1xf32> to vector<4x32xf32>
    %733 = arith.subf %727, %732 : vector<4x32xf32>
    %734 = arith.mulf %733, %733 : vector<4x32xf32>
    %cst_296 = arith.constant dense<0.000000e+00> : vector<4xf32>
    %735 = vector.multi_reduction <add>, %734, %cst_296 [1] : vector<4x32xf32> to vector<4xf32>
    %736 = vector.shape_cast %735 : vector<4xf32> to vector<4x1xf32>
    %cst_297 = arith.constant 3.200000e+01 : f32
    %737 = vector.broadcast %cst_297 : f32 to vector<4x1xf32>
    %738 = arith.divf %736, %737 : vector<4x1xf32>
    %cst_298 = arith.constant 9.99999974E-6 : f32
    %739 = vector.broadcast %cst_298 : f32 to vector<4x1xf32>
    %740 = arith.addf %738, %739 : vector<4x1xf32>
    %741 = math.rsqrt %740 : vector<4x1xf32>
    %742 = vector.broadcast %741 : vector<4x1xf32> to vector<4x32xf32>
    %743 = arith.mulf %733, %742 : vector<4x32xf32>
    %744 = vector.broadcast %30 : vector<1x32xf32> to vector<4x32xf32>
    %745 = arith.mulf %743, %744 : vector<4x32xf32>
    %746 = vector.broadcast %31 : vector<1x32xf32> to vector<4x32xf32>
    %747 = arith.addf %745, %746 : vector<4x32xf32>
    %cst_299 = arith.constant dense<0.000000e+00> : vector<4x128xf32>
    %748 = tpu.matmul %747, %32, %cst_299 {dimension_numbers = #tpu.dot_dimension_numbers<[1], [0], [0], [1], [0, 0, 1, 1], [], []>} : vector<4x32xf32>, vector<32x128xf32>, vector<4x128xf32> -> vector<4x128xf32>
    %749 = vector.broadcast %33 : vector<1x128xf32> to vector<4x128xf32>
    %750 = arith.addf %748, %749 : vector<4x128xf32>
    %cst_300 = arith.constant 1.702000e+00 : f32
    %751 = vector.broadcast %cst_300 : f32 to vector<4x128xf32>
    %752 = arith.mulf %751, %750 : vector<4x128xf32>
    %753 = arith.negf %752 : vector<4x128xf32>
    %754 = math.exp %753 : vector<4x128xf32>
    %cst_301 = arith.constant 1.000000e+00 : f32
    %755 = vector.broadcast %cst_301 : f32 to vector<4x128xf32>
    %756 = arith.addf %755, %754 : vector<4x128xf32>
    %757 = arith.divf %755, %756 : vector<4x128xf32>
    %758 = arith.mulf %750, %757 : vector<4x128xf32>
    %cst_302 = arith.constant dense<0.000000e+00> : vector<4x32xf32>
    %759 = tpu.matmul %758, %34, %cst_302 {dimension_numbers = #tpu.dot_dimension_numbers<[1], [0], [0], [1], [0, 0, 1, 1], [], []>} : vector<4x128xf32>, vector<128x32xf32>, vector<4x32xf32> -> vector<4x32xf32>
    %760 = vector.broadcast %35 : vector<1x32xf32> to vector<4x32xf32>
    %761 = arith.addf %759, %760 : vector<4x32xf32>
    %762 = arith.addf %727, %761 : vector<4x32xf32>
    %763 = vector.extract_strided_slice %762 {offsets = [0, 0], sizes = [1, 32], strides = [1, 1]} : vector<4x32xf32> to vector<1x32xf32>
    %764 = vector.extract_strided_slice %762 {offsets = [2, 0], sizes = [1, 32], strides = [1, 1]} : vector<4x32xf32> to vector<1x32xf32>
    %765 = tpu.concatenate %763, %764 in 0 : vector<1x32xf32>, vector<1x32xf32> -> vector<2x32xf32>
    %766 = vector.extract_strided_slice %762 {offsets = [1, 0], sizes = [1, 32], strides = [1, 1]} : vector<4x32xf32> to vector<1x32xf32>
    %767 = vector.extract_strided_slice %762 {offsets = [3, 0], sizes = [1, 32], strides = [1, 1]} : vector<4x32xf32> to vector<1x32xf32>
    %768 = tpu.concatenate %766, %767 in 0 : vector<1x32xf32>, vector<1x32xf32> -> vector<2x32xf32>
    %cst_303 = arith.constant dense<0.000000e+00> : vector<2x64xf32>
    %769 = tpu.matmul %765, %36, %cst_303 {dimension_numbers = #tpu.dot_dimension_numbers<[1], [0], [0], [1], [0, 0, 1, 1], [], []>} : vector<2x32xf32>, vector<32x64xf32>, vector<2x64xf32> -> vector<2x64xf32>
    %770 = vector.broadcast %37 : vector<1x64xf32> to vector<2x64xf32>
    %771 = arith.addf %769, %770 : vector<2x64xf32>
    %772 = arith.mulf %771, %771 : vector<2x64xf32>
    %773 = arith.mulf %771, %772 : vector<2x64xf32>
    %cst_304 = arith.constant 4.471500e-02 : f32
    %774 = vector.broadcast %cst_304 : f32 to vector<2x64xf32>
    %775 = arith.mulf %774, %773 : vector<2x64xf32>
    %776 = arith.addf %771, %775 : vector<2x64xf32>
    %cst_305 = arith.constant 0.797884583 : f32
    %777 = vector.broadcast %cst_305 : f32 to vector<2x64xf32>
    %778 = arith.mulf %777, %776 : vector<2x64xf32>
    %779 = math.tanh %778 : vector<2x64xf32>
    %cst_306 = arith.constant 1.000000e+00 : f32
    %780 = vector.broadcast %cst_306 : f32 to vector<2x64xf32>
    %781 = arith.addf %780, %779 : vector<2x64xf32>
    %cst_307 = arith.constant 5.000000e-01 : f32
    %782 = vector.broadcast %cst_307 : f32 to vector<2x64xf32>
    %783 = arith.mulf %782, %781 : vector<2x64xf32>
    %784 = arith.mulf %771, %783 : vector<2x64xf32>
    %cst_308 = arith.constant dense<0.000000e+00> : vector<2x16xf32>
    %785 = tpu.matmul %784, %38, %cst_308 {dimension_numbers = #tpu.dot_dimension_numbers<[1], [0], [0], [1], [0, 0, 1, 1], [], []>} : vector<2x64xf32>, vector<64x16xf32>, vector<2x16xf32> -> vector<2x16xf32>
    %786 = vector.broadcast %39 : vector<1x16xf32> to vector<2x16xf32>
    %787 = arith.addf %785, %786 : vector<2x16xf32>
    %788 = math.tanh %787 : vector<2x16xf32>
    %c0_309 = arith.constant 0 : index
    %c0_310 = arith.constant 0 : index
    %c0_311 = arith.constant 0 : index
    %789 = vector.load %arg57[%c0_309, %c0_310, %c0_311] : memref<2x2x16xf32, #tpu.memory_space<vmem>>, vector<1x2x16xf32>
    %790 = vector.shape_cast %789 : vector<1x2x16xf32> to vector<2x16xf32>
    %791 = vector.shape_cast %788 : vector<2x16xf32> to vector<1x2x16xf32>
    tpu.vector_store %arg57[%c0_309, %c0_310, %c0_311], %791 {strides = array<i32>} : memref<2x2x16xf32, #tpu.memory_space<vmem>>, vector<1x2x16xf32>,
    %cst_312 = arith.constant dense<0.000000e+00> : vector<2x64xf32>
    %792 = tpu.matmul %768, %40, %cst_312 {dimension_numbers = #tpu.dot_dimension_numbers<[1], [0], [0], [1], [0, 0, 1, 1], [], []>} : vector<2x32xf32>, vector<32x64xf32>, vector<2x64xf32> -> vector<2x64xf32>
    %793 = vector.broadcast %41 : vector<1x64xf32> to vector<2x64xf32>
    %794 = arith.addf %792, %793 : vector<2x64xf32>
    %795 = arith.mulf %794, %794 : vector<2x64xf32>
    %796 = arith.mulf %794, %795 : vector<2x64xf32>
    %cst_313 = arith.constant 4.471500e-02 : f32
    %797 = vector.broadcast %cst_313 : f32 to vector<2x64xf32>
    %798 = arith.mulf %797, %796 : vector<2x64xf32>
    %799 = arith.addf %794, %798 : vector<2x64xf32>
    %cst_314 = arith.constant 0.797884583 : f32
    %800 = vector.broadcast %cst_314 : f32 to vector<2x64xf32>
    %801 = arith.mulf %800, %799 : vector<2x64xf32>
    %802 = math.tanh %801 : vector<2x64xf32>
    %cst_315 = arith.constant 1.000000e+00 : f32
    %803 = vector.broadcast %cst_315 : f32 to vector<2x64xf32>
    %804 = arith.addf %803, %802 : vector<2x64xf32>
    %cst_316 = arith.constant 5.000000e-01 : f32
    %805 = vector.broadcast %cst_316 : f32 to vector<2x64xf32>
    %806 = arith.mulf %805, %804 : vector<2x64xf32>
    %807 = arith.mulf %794, %806 : vector<2x64xf32>
    %cst_317 = arith.constant dense<0.000000e+00> : vector<2x16xf32>
    %808 = tpu.matmul %807, %42, %cst_317 {dimension_numbers = #tpu.dot_dimension_numbers<[1], [0], [0], [1], [0, 0, 1, 1], [], []>} : vector<2x64xf32>, vector<64x16xf32>, vector<2x16xf32> -> vector<2x16xf32>
    %809 = vector.broadcast %43 : vector<1x16xf32> to vector<2x16xf32>
    %810 = arith.addf %808, %809 : vector<2x16xf32>
    %811 = math.tanh %810 : vector<2x16xf32>
    %c1_318 = arith.constant 1 : index
    %c0_319 = arith.constant 0 : index
    %c0_320 = arith.constant 0 : index
    %812 = vector.load %arg57[%c1_318, %c0_319, %c0_320] : memref<2x2x16xf32, #tpu.memory_space<vmem>>, vector<1x2x16xf32>
    %813 = vector.shape_cast %812 : vector<1x2x16xf32> to vector<2x16xf32>
    %814 = vector.shape_cast %811 : vector<2x16xf32> to vector<1x2x16xf32>
    tpu.vector_store %arg57[%c1_318, %c0_319, %c0_320], %814 {strides = array<i32>} : memref<2x2x16xf32, #tpu.memory_space<vmem>>, vector<1x2x16xf32>,
    return
  }
}

</mosaic_0001>

<llo_original>
// kernel: tile.9
$region0: #{tile.9}
  %s0 = inlined_call_operand.vmem [shape: f32[2,5,32], index: 0, kind: input, shape index: {}]
  %s1 = inlined_call_operand.vmem [shape: f32[10,32], index: 1, kind: output, shape index: {}]
  %v2 = vld [vmem:[%s0] sm:$0x1f]
  %vm3 = vcmask 261120
  %4 = vst.msk [vmem:[%s1] sm:$0x1f] %vm3, %v2
  %s5 = scalar_lea.vmem %s0, 8
  %v6 = vld [vmem:[%s5] sm:$0x1f]
  %vm7 = vcmask 261120
  %s8 = scalar_lea.vmem %s1, 5
  %9 = vst.msk [vmem:[%s8] sm:$0x1f] %vm7, %v6

// kernel: cagmh_forward.1
$region0: #{cagmh_forward.1}
  #allocation0 [shape = 'u32[]', space=smem, size = 0x4, offset = 0x4, fixed_abs, tag = 'smem constant byte address 0x4 - core index']
  #allocation1 [shape = 'u32[144,128]{1,0:T(1,128)}', space=vmem, size = 0x12000, scoped, tag = 'internal scratch']
  #allocation2 [shape = 'f32[16,32]{1,0:T(8,128)}', space=vmem, size = 0x2000, scoped, tag = 'scratch operand']
  %s0 = inlined_call_operand.smem [shape: u32[58], index: -1, kind: input, shape index: {}]
  %s1 = sld [smem:[%s0]]
  %s2 = scalar_lea.smem %s0, 1
  %s3 = sld [smem:[%s2]]
  %s4 = scalar_lea.smem %s0, 2
  %s5 = sld [smem:[%s4]]
  %s6 = scalar_lea.smem %s0, 3
  %s7 = sld [smem:[%s6]]
  %s8 = scalar_lea.smem %s0, 4
  %s9 = sld [smem:[%s8]]
  %s10 = scalar_lea.smem %s0, 5
  %s11 = sld [smem:[%s10]]
  %s12 = scalar_lea.smem %s0, 6
  %s13 = sld [smem:[%s12]]
  %s14 = scalar_lea.smem %s0, 7
  %s15 = sld [smem:[%s14]]
  %s16 = scalar_lea.smem %s0, 8
  %s17 = sld [smem:[%s16]]
  %s18 = scalar_lea.smem %s0, 9
  %s19 = sld [smem:[%s18]]
  %s20 = scalar_lea.smem %s0, 10
  %s21 = sld [smem:[%s20]]
  %s22 = scalar_lea.smem %s0, 11
  %s23 = sld [smem:[%s22]]
  %s24 = scalar_lea.smem %s0, 12
  %s25 = sld [smem:[%s24]]
  %s26 = scalar_lea.smem %s0, 13
  %s27 = sld [smem:[%s26]]
  %s28 = scalar_lea.smem %s0, 14
  %s29 = sld [smem:[%s28]]
  %s30 = scalar_lea.smem %s0, 15
  %s31 = sld [smem:[%s30]]
  %s32 = scalar_lea.smem %s0, 16
  %s33 = sld [smem:[%s32]]
  %s34 = scalar_lea.smem %s0, 17
  %s35 = sld [smem:[%s34]]
  %s36 = scalar_lea.smem %s0, 18
  %s37 = sld [smem:[%s36]]
  %s38 = scalar_lea.smem %s0, 19
  %s39 = sld [smem:[%s38]]
  %s40 = scalar_lea.smem %s0, 20
  %s41 = sld [smem:[%s40]]
  %s42 = scalar_lea.smem %s0, 21
  %s43 = sld [smem:[%s42]]
  %s44 = scalar_lea.smem %s0, 22
  %s45 = sld [smem:[%s44]]
  %s46 = scalar_lea.smem %s0, 23
  %s47 = sld [smem:[%s46]]
  %s48 = scalar_lea.smem %s0, 24
  %s49 = sld [smem:[%s48]]
  %s50 = scalar_lea.smem %s0, 25
  %s51 = sld [smem:[%s50]]
  %s52 = scalar_lea.smem %s0, 26
  %s53 = sld [smem:[%s52]]
  %s54 = scalar_lea.smem %s0, 27
  %s55 = sld [smem:[%s54]]
  %s56 = scalar_lea.smem %s0, 28
  %s57 = sld [smem:[%s56]]
  %s58 = scalar_lea.smem %s0, 29
  %s59 = sld [smem:[%s58]]
  %s60 = scalar_lea.smem %s0, 30
  %s61 = sld [smem:[%s60]]
  %s62 = scalar_lea.smem %s0, 31
  %s63 = sld [smem:[%s62]]
  %s64 = scalar_lea.smem %s0, 32
  %s65 = sld [smem:[%s64]]
  %s66 = scalar_lea.smem %s0, 33
  %s67 = sld [smem:[%s66]]
  %s68 = scalar_lea.smem %s0, 34
  %s69 = sld [smem:[%s68]]
  %s70 = scalar_lea.smem %s0, 35
  %s71 = sld [smem:[%s70]]
  %s72 = scalar_lea.smem %s0, 36
  %s73 = sld [smem:[%s72]]
  %s74 = scalar_lea.smem %s0, 37
  %s75 = sld [smem:[%s74]]
  %s76 = scalar_lea.smem %s0, 38
  %s77 = sld [smem:[%s76]]
  %s78 = scalar_lea.smem %s0, 39
  %s79 = sld [smem:[%s78]]
  %s80 = scalar_lea.smem %s0, 40
  %s81 = sld [smem:[%s80]]
  %s82 = scalar_lea.smem %s0, 41
  %s83 = sld [smem:[%s82]]
  %s84 = scalar_lea.smem %s0, 42
  %s85 = sld [smem:[%s84]]
  %s86 = scalar_lea.smem %s0, 43
  %s87 = sld [smem:[%s86]]
  %s88 = scalar_lea.smem %s0, 44
  %s89 = sld [smem:[%s88]]
  %s90 = scalar_lea.smem %s0, 45
  %s91 = sld [smem:[%s90]]
  %s92 = scalar_lea.smem %s0, 46
  %s93 = sld [smem:[%s92]]
  %s94 = scalar_lea.smem %s0, 47
  %s95 = sld [smem:[%s94]]
  %s96 = scalar_lea.smem %s0, 48
  %s97 = sld [smem:[%s96]]
  %s98 = scalar_lea.smem %s0, 49
  %s99 = sld [smem:[%s98]]
  %s100 = scalar_lea.smem %s0, 50
  %s101 = sld [smem:[%s100]]
  %s102 = scalar_lea.smem %s0, 51
  %s103 = sld [smem:[%s102]]
  %s104 = scalar_lea.smem %s0, 52
  %s105 = sld [smem:[%s104]]
  %s106 = scalar_lea.smem %s0, 53
  %s107 = sld [smem:[%s106]]
  %s108 = scalar_lea.smem %s0, 54
  %s109 = sld [smem:[%s108]]
  %s110 = scalar_lea.smem %s0, 55
  %s111 = sld [smem:[%s110]]
  %s112 = scalar_lea.smem %s0, 56
  %s113 = sld [smem:[%s112]]
  %s114 = scalar_lea.smem %s0, 57
  %s115 = sld [smem:[%s114]]
  %s116 = sld [smem:[#allocation0]]
  $region274: #{cagmh_forward.1} parent=0
    _
  %s118 = ssub.s32 1, %s116
  %s119 = scalar_select 0, %s118, %s116
  $region1: #{cagmh_forward.1} parent=0
    #allocation3 [shape = 'u8[512]{0}', space=smem, size = 0x200, scoped, tag = 'input window, operand 21, single buffered']
    #allocation4 [shape = 's32[1]{0}', space=sflag, size = 0x4, scoped, tag = 'scoped memory for cagmh_forward.1']
    #allocation5 [shape = 's32[1]{0}', space=sflag, size = 0x4, scoped, tag = 'scoped memory for cagmh_forward.1']
    #allocation6 [shape = 'u8[512]{0}', space=vmem, size = 0x400, scoped, tag = 'input window, operand 43, single buffered']
    #allocation7 [shape = 'u8[512]{0}', space=vmem, size = 0x400, scoped, tag = 'input window, operand 44, single buffered']
    #allocation8 [shape = 's32[1]{0}', space=sflag, size = 0x4, scoped, tag = 'scoped memory for cagmh_forward.1']
    #allocation9 [shape = 'u8[512]{0}', space=vmem, size = 0x400, scoped, tag = 'input window, operand 46, single buffered']
    #allocation10 [shape = 'u8[512]{0}', space=vmem, size = 0x400, scoped, tag = 'input window, operand 48, single buffered']
    #allocation11 [shape = 's32[1]{0}', space=sflag, size = 0x4, scoped, tag = 'scoped memory for cagmh_forward.1']
    #allocation12 [shape = 'u8[512]{0}', space=vmem, size = 0x400, scoped, tag = 'input window, operand 50, single buffered']
    #allocation13 [shape = 'u8[512]{0}', space=vmem, size = 0x400, scoped, tag = 'input window, operand 52, single buffered']
    #allocation14 [shape = 's32[1]{0}', space=sflag, size = 0x4, scoped, tag = 'scoped memory for cagmh_forward.1']
    #allocation15 [shape = 'u8[512]{0}', space=vmem, size = 0x400, scoped, tag = 'input window, operand 54, single buffered']
    #allocation16 [shape = 'u8[512]{0}', space=vmem, size = 0x400, scoped, tag = 'input window, operand 56, single buffered']
    #allocation17 [shape = 's32[1]{0}', space=sflag, size = 0x4, scoped, tag = 'scoped memory for cagmh_forward.1']
    %120 = vsyncpa [#allocation5], 0
    %121 = vsyncpa [#allocation4], 0
    %122 = vsyncpa [#allocation8], 0
    %123 = vsyncpa [#allocation11], 0
    %124 = vsyncpa [#allocation14], 0
    %125 = vsyncpa [#allocation17], 0
    // Predicated region
    $region2: #{cagmh_forward.1} parent=1 // pred_check
      _
    $region3: #{cagmh_forward.1} parent=1 // pred_check_branch
      %127 = sbr.rel (0) target = $region5
    $region4: #{cagmh_forward.1} parent=1 // pred_region
      _
    $region5: #{cagmh_forward.1} parent=1 // pred_fallthru
      _
    // Predicated region
    $region6: #{cagmh_forward.1} parent=1 // pred_check
      _
    $region7: #{cagmh_forward.1} parent=1 // pred_check_branch
      %129 = sbr.rel (0) target = $region9
    $region8: #{cagmh_forward.1} parent=1 // pred_region
      _
    $region9: #{cagmh_forward.1} parent=1 // pred_fallthru
      _
    // Predicated region
    $region10: #{cagmh_forward.1} parent=1 // pred_check
      _
    $region11: #{cagmh_forward.1} parent=1 // pred_check_branch
      %131 = sbr.rel (0) target = $region13
    $region12: #{cagmh_forward.1} parent=1 // pred_region
      _
    $region13: #{cagmh_forward.1} parent=1 // pred_fallthru
      _
    // Predicated region
    $region14: #{cagmh_forward.1} parent=1 // pred_check
      _
    $region15: #{cagmh_forward.1} parent=1 // pred_check_branch
      %133 = sbr.rel (0) target = $region17
    $region16: #{cagmh_forward.1} parent=1 // pred_region
      _
    $region17: #{cagmh_forward.1} parent=1 // pred_fallthru
      _
    // Predicated region
    $region18: #{cagmh_forward.1} parent=1 // pred_check
      _
    $region19: #{cagmh_forward.1} parent=1 // pred_check_branch
      %135 = sbr.rel (0) target = $region21
    $region20: #{cagmh_forward.1} parent=1 // pred_region
      _
    $region21: #{cagmh_forward.1} parent=1 // pred_fallthru
      _
    // Predicated region
    $region22: #{cagmh_forward.1} parent=1 // pred_check
      _
    $region23: #{cagmh_forward.1} parent=1 // pred_check_branch
      %137 = sbr.rel (0) target = $region25
    $region24: #{cagmh_forward.1} parent=1 // pred_region
      _
    $region25: #{cagmh_forward.1} parent=1 // pred_fallthru
      _
    // Predicated region
    $region26: #{cagmh_forward.1} parent=1 // pred_check
      _
    $region27: #{cagmh_forward.1} parent=1 // pred_check_branch
      %139 = sbr.rel (0) target = $region29
    $region28: #{cagmh_forward.1} parent=1 // pred_region
      _
    $region29: #{cagmh_forward.1} parent=1 // pred_fallthru
      _
    // Predicated region
    $region30: #{cagmh_forward.1} parent=1 // pred_check
      _
    $region31: #{cagmh_forward.1} parent=1 // pred_check_branch
      %141 = sbr.rel (0) target = $region33
    $region32: #{cagmh_forward.1} parent=1 // pred_region
      _
    $region33: #{cagmh_forward.1} parent=1 // pred_fallthru
      _
    // Predicated region
    $region34: #{cagmh_forward.1} parent=1 // pred_check
      _
    $region35: #{cagmh_forward.1} parent=1 // pred_check_branch
      %143 = sbr.rel (0) target = $region37
    $region36: #{cagmh_forward.1} parent=1 // pred_region
      _
    $region37: #{cagmh_forward.1} parent=1 // pred_fallthru
      _
    // Predicated region
    $region38: #{cagmh_forward.1} parent=1 // pred_check
      _
    $region39: #{cagmh_forward.1} parent=1 // pred_check_branch
      %145 = sbr.rel (0) target = $region41
    $region40: #{cagmh_forward.1} parent=1 // pred_region
      _
    $region41: #{cagmh_forward.1} parent=1 // pred_fallthru
      _
    // Predicated region
    $region42: #{cagmh_forward.1} parent=1 // pred_check
      _
    $region43: #{cagmh_forward.1} parent=1 // pred_check_branch
      %147 = sbr.rel (0) target = $region45
    $region44: #{cagmh_forward.1} parent=1 // pred_region
      _
    $region45: #{cagmh_forward.1} parent=1 // pred_fallthru
      _
    // Predicated region
    $region46: #{cagmh_forward.1} parent=1 // pred_check
      _
    $region47: #{cagmh_forward.1} parent=1 // pred_check_branch
      %149 = sbr.rel (0) target = $region49
    $region48: #{cagmh_forward.1} parent=1 // pred_region
      _
    $region49: #{cagmh_forward.1} parent=1 // pred_fallthru
      _
    // Predicated region
    $region50: #{cagmh_forward.1} parent=1 // pred_check
      _
    $region51: #{cagmh_forward.1} parent=1 // pred_check_branch
      %151 = sbr.rel (0) target = $region53
    $region52: #{cagmh_forward.1} parent=1 // pred_region
      _
    $region53: #{cagmh_forward.1} parent=1 // pred_fallthru
      _
    // Predicated region
    $region54: #{cagmh_forward.1} parent=1 // pred_check
      _
    $region55: #{cagmh_forward.1} parent=1 // pred_check_branch
      %153 = sbr.rel (0) target = $region57
    $region56: #{cagmh_forward.1} parent=1 // pred_region
      _
    $region57: #{cagmh_forward.1} parent=1 // pred_fallthru
      _
    // Predicated region
    $region58: #{cagmh_forward.1} parent=1 // pred_check
      _
    $region59: #{cagmh_forward.1} parent=1 // pred_check_branch
      %155 = sbr.rel (0) target = $region61
    $region60: #{cagmh_forward.1} parent=1 // pred_region
      _
    $region61: #{cagmh_forward.1} parent=1 // pred_fallthru
      _
    // Predicated region
    $region62: #{cagmh_forward.1} parent=1 // pred_check
      _
    $region63: #{cagmh_forward.1} parent=1 // pred_check_branch
      %157 = sbr.rel (0) target = $region65
    $region64: #{cagmh_forward.1} parent=1 // pred_region
      _
    $region65: #{cagmh_forward.1} parent=1 // pred_fallthru
      _
    // Predicated region
    $region66: #{cagmh_forward.1} parent=1 // pred_check
      _
    $region67: #{cagmh_forward.1} parent=1 // pred_check_branch
      %159 = sbr.rel (0) target = $region69
    $region68: #{cagmh_forward.1} parent=1 // pred_region
      _
    $region69: #{cagmh_forward.1} parent=1 // pred_fallthru
      _
    // Predicated region
    $region70: #{cagmh_forward.1} parent=1 // pred_check
      _
    $region71: #{cagmh_forward.1} parent=1 // pred_check_branch
      %161 = sbr.rel (0) target = $region73
    $region72: #{cagmh_forward.1} parent=1 // pred_region
      _
    $region73: #{cagmh_forward.1} parent=1 // pred_fallthru
      _
    // Predicated region
    $region74: #{cagmh_forward.1} parent=1 // pred_check
      _
    $region75: #{cagmh_forward.1} parent=1 // pred_check_branch
      %163 = sbr.rel (0) target = $region77
    $region76: #{cagmh_forward.1} parent=1 // pred_region
      _
    $region77: #{cagmh_forward.1} parent=1 // pred_fallthru
      _
    // Predicated region
    $region78: #{cagmh_forward.1} parent=1 // pred_check
      _
    $region79: #{cagmh_forward.1} parent=1 // pred_check_branch
      %165 = sbr.rel (0) target = $region81
    $region80: #{cagmh_forward.1} parent=1 // pred_region
      _
    $region81: #{cagmh_forward.1} parent=1 // pred_fallthru
      _
    // Predicated region
    $region82: #{cagmh_forward.1} parent=1 // pred_check
      _
    $region83: #{cagmh_forward.1} parent=1 // pred_check_branch
      %167 = sbr.rel (0) target = $region85
    $region84: #{cagmh_forward.1} parent=1 // pred_region
      _
    $region85: #{cagmh_forward.1} parent=1 // pred_fallthru
      _
    // Predicated region
    $region86: #{cagmh_forward.1} parent=1 // pred_check
      _
    $region87: #{cagmh_forward.1} parent=1 // pred_check_branch
      %169 = sbr.rel (0) target = $region89
    $region88: #{cagmh_forward.1} parent=1 // pred_region
      %s171 = ssub.s32 16, 16
      %172 = vsyncadd [#allocation5], %s171
      %s174 = sshll.u32 %s43, 4
      %s175 = int_to_ptr.vmem [resolvable:$true] %s174
      %177 = dma.vmem_to_smem %s175, 16, [#allocation3], [#allocation5]
    $region89: #{cagmh_forward.1} parent=1 // pred_fallthru
      _
    // Predicated region
    $region90: #{cagmh_forward.1} parent=1 // pred_check
      _
    $region91: #{cagmh_forward.1} parent=1 // pred_check_branch
      %179 = sbr.rel (0) target = $region93
    $region92: #{cagmh_forward.1} parent=1 // pred_region
      _
    $region93: #{cagmh_forward.1} parent=1 // pred_fallthru
      _
    // Predicated region
    $region94: #{cagmh_forward.1} parent=1 // pred_check
      _
    $region95: #{cagmh_forward.1} parent=1 // pred_check_branch
      %181 = sbr.rel (0) target = $region97
    $region96: #{cagmh_forward.1} parent=1 // pred_region
      _
    $region97: #{cagmh_forward.1} parent=1 // pred_fallthru
      _
    // Predicated region
    $region98: #{cagmh_forward.1} parent=1 // pred_check
      _
    $region99: #{cagmh_forward.1} parent=1 // pred_check_branch
      %183 = sbr.rel (0) target = $region101
    $region100: #{cagmh_forward.1} parent=1 // pred_region
      _
    $region101: #{cagmh_forward.1} parent=1 // pred_fallthru
      _
    // Predicated region
    $region102: #{cagmh_forward.1} parent=1 // pred_check
      _
    $region103: #{cagmh_forward.1} parent=1 // pred_check_branch
      %185 = sbr.rel (0) target = $region105
    $region104: #{cagmh_forward.1} parent=1 // pred_region
      _
    $region105: #{cagmh_forward.1} parent=1 // pred_fallthru
      _
    // Predicated region
    $region106: #{cagmh_forward.1} parent=1 // pred_check
      _
    $region107: #{cagmh_forward.1} parent=1 // pred_check_branch
      %187 = sbr.rel (0) target = $region109
    $region108: #{cagmh_forward.1} parent=1 // pred_region
      _
    $region109: #{cagmh_forward.1} parent=1 // pred_fallthru
      _
    // Predicated region
    $region110: #{cagmh_forward.1} parent=1 // pred_check
      _
    $region111: #{cagmh_forward.1} parent=1 // pred_check_branch
      %189 = sbr.rel (0) target = $region113
    $region112: #{cagmh_forward.1} parent=1 // pred_region
      _
    $region113: #{cagmh_forward.1} parent=1 // pred_fallthru
      _
    // Predicated region
    $region114: #{cagmh_forward.1} parent=1 // pred_check
      _
    $region115: #{cagmh_forward.1} parent=1 // pred_check_branch
      %191 = sbr.rel (0) target = $region117
    $region116: #{cagmh_forward.1} parent=1 // pred_region
      _
    $region117: #{cagmh_forward.1} parent=1 // pred_fallthru
      _
    // Predicated region
    $region118: #{cagmh_forward.1} parent=1 // pred_check
      _
    $region119: #{cagmh_forward.1} parent=1 // pred_check_branch
      %193 = sbr.rel (0) target = $region121
    $region120: #{cagmh_forward.1} parent=1 // pred_region
      _
    $region121: #{cagmh_forward.1} parent=1 // pred_fallthru
      _
    // Predicated region
    $region122: #{cagmh_forward.1} parent=1 // pred_check
      _
    $region123: #{cagmh_forward.1} parent=1 // pred_check_branch
      %195 = sbr.rel (0) target = $region125
    $region124: #{cagmh_forward.1} parent=1 // pred_region
      _
    $region125: #{cagmh_forward.1} parent=1 // pred_fallthru
      _
    // Predicated region
    $region126: #{cagmh_forward.1} parent=1 // pred_check
      _
    $region127: #{cagmh_forward.1} parent=1 // pred_check_branch
      %197 = sbr.rel (0) target = $region129
    $region128: #{cagmh_forward.1} parent=1 // pred_region
      _
    $region129: #{cagmh_forward.1} parent=1 // pred_fallthru
      _
    // Predicated region
    $region130: #{cagmh_forward.1} parent=1 // pred_check
      _
    $region131: #{cagmh_forward.1} parent=1 // pred_check_branch
      %199 = sbr.rel (0) target = $region133
    $region132: #{cagmh_forward.1} parent=1 // pred_region
      _
    $region133: #{cagmh_forward.1} parent=1 // pred_fallthru
      _
    // Predicated region
    $region134: #{cagmh_forward.1} parent=1 // pred_check
      _
    $region135: #{cagmh_forward.1} parent=1 // pred_check_branch
      %201 = sbr.rel (0) target = $region137
    $region136: #{cagmh_forward.1} parent=1 // pred_region
      _
    $region137: #{cagmh_forward.1} parent=1 // pred_fallthru
      _
    // Predicated region
    $region138: #{cagmh_forward.1} parent=1 // pred_check
      _
    $region139: #{cagmh_forward.1} parent=1 // pred_check_branch
      %203 = sbr.rel (0) target = $region141
    $region140: #{cagmh_forward.1} parent=1 // pred_region
      _
    $region141: #{cagmh_forward.1} parent=1 // pred_fallthru
      _
    // Predicated region
    $region142: #{cagmh_forward.1} parent=1 // pred_check
      _
    $region143: #{cagmh_forward.1} parent=1 // pred_check_branch
      %205 = sbr.rel (0) target = $region145
    $region144: #{cagmh_forward.1} parent=1 // pred_region
      _
    $region145: #{cagmh_forward.1} parent=1 // pred_fallthru
      _
    // Predicated region
    $region146: #{cagmh_forward.1} parent=1 // pred_check
      _
    $region147: #{cagmh_forward.1} parent=1 // pred_check_branch
      %207 = sbr.rel (0) target = $region149
    $region148: #{cagmh_forward.1} parent=1 // pred_region
      _
    $region149: #{cagmh_forward.1} parent=1 // pred_fallthru
      _
    // Predicated region
    $region150: #{cagmh_forward.1} parent=1 // pred_check
      _
    $region151: #{cagmh_forward.1} parent=1 // pred_check_branch
      %209 = sbr.rel (0) target = $region153
    $region152: #{cagmh_forward.1} parent=1 // pred_region
      _
    $region153: #{cagmh_forward.1} parent=1 // pred_fallthru
      _
    // Predicated region
    $region154: #{cagmh_forward.1} parent=1 // pred_check
      _
    $region155: #{cagmh_forward.1} parent=1 // pred_check_branch
      %211 = sbr.rel (0) target = $region157
    $region156: #{cagmh_forward.1} parent=1 // pred_region
      _
    $region157: #{cagmh_forward.1} parent=1 // pred_fallthru
      _
    // Predicated region
    $region158: #{cagmh_forward.1} parent=1 // pred_check
      _
    $region159: #{cagmh_forward.1} parent=1 // pred_check_branch
      %213 = sbr.rel (0) target = $region161
    $region160: #{cagmh_forward.1} parent=1 // pred_region
      _
    $region161: #{cagmh_forward.1} parent=1 // pred_fallthru
      _
    // Predicated region
    $region162: #{cagmh_forward.1} parent=1 // pred_check
      _
    $region163: #{cagmh_forward.1} parent=1 // pred_check_branch
      %215 = sbr.rel (0) target = $region165
    $region164: #{cagmh_forward.1} parent=1 // pred_region
      _
    $region165: #{cagmh_forward.1} parent=1 // pred_fallthru
      _
    // Predicated region
    $region166: #{cagmh_forward.1} parent=1 // pred_check
      _
    $region167: #{cagmh_forward.1} parent=1 // pred_check_branch
      %217 = sbr.rel (0) target = $region169
    $region168: #{cagmh_forward.1} parent=1 // pred_region
      _
    $region169: #{cagmh_forward.1} parent=1 // pred_fallthru
      _
    // Predicated region
    $region170: #{cagmh_forward.1} parent=1 // pred_check
      _
    $region171: #{cagmh_forward.1} parent=1 // pred_check_branch
      %219 = sbr.rel (0) target = $region173
    $region172: #{cagmh_forward.1} parent=1 // pred_region
      _
    $region173: #{cagmh_forward.1} parent=1 // pred_fallthru
      _
    // Predicated region
    $region174: #{cagmh_forward.1} parent=1 // pred_check
      _
    $region175: #{cagmh_forward.1} parent=1 // pred_check_branch
      %221 = sbr.rel (0) target = $region177
    $region176: #{cagmh_forward.1} parent=1 // pred_region
      %s223 = ssub.s32 16, 16
      %224 = vsyncadd [#allocation4], %s223
      %s226 = sshll.u32 [#allocation6], 4
      %s227 = int_to_ptr.vmem [resolvable:$true] %s226
      %229 = dma.hbm_to_vmem [thread:$0]  %s87, 16, %s227, [#allocation4]
    $region177: #{cagmh_forward.1} parent=1 // pred_fallthru
      _
    // Predicated region
    $region178: #{cagmh_forward.1} parent=1 // pred_check
      _
    $region179: #{cagmh_forward.1} parent=1 // pred_check_branch
      %231 = sbr.rel (0) target = $region181
    $region180: #{cagmh_forward.1} parent=1 // pred_region
      %s233 = ssub.s32 16, 16
      %234 = vsyncadd [#allocation8], %s233
      %s236 = sshll.u32 [#allocation7], 4
      %s237 = int_to_ptr.vmem [resolvable:$true] %s236
      %239 = dma.hbm_to_vmem [thread:$0]  %s89, 16, %s237, [#allocation8]
    $region181: #{cagmh_forward.1} parent=1 // pred_fallthru
      _
    // Predicated region
    $region182: #{cagmh_forward.1} parent=1 // pred_check
      _
    $region183: #{cagmh_forward.1} parent=1 // pred_check_branch
      %241 = sbr.rel (0) target = $region185
    $region184: #{cagmh_forward.1} parent=1 // pred_region
      _
    $region185: #{cagmh_forward.1} parent=1 // pred_fallthru
      _
    // Predicated region
    $region186: #{cagmh_forward.1} parent=1 // pred_check
      _
    $region187: #{cagmh_forward.1} parent=1 // pred_check_branch
      %243 = sbr.rel (0) target = $region189
    $region188: #{cagmh_forward.1} parent=1 // pred_region
      %s245 = ssub.s32 16, 16
      %246 = vsyncadd [#allocation8], %s245
      %s248 = sshll.u32 [#allocation9], 4
      %s249 = int_to_ptr.vmem [resolvable:$true] %s248
      %251 = dma.hbm_to_vmem [thread:$0]  %s93, 16, %s249, [#allocation8]
    $region189: #{cagmh_forward.1} parent=1 // pred_fallthru
      _
    // Predicated region
    $region190: #{cagmh_forward.1} parent=1 // pred_check
      _
    $region191: #{cagmh_forward.1} parent=1 // pred_check_branch
      %253 = sbr.rel (0) target = $region193
    $region192: #{cagmh_forward.1} parent=1 // pred_region
      _
    $region193: #{cagmh_forward.1} parent=1 // pred_fallthru
      _
    // Predicated region
    $region194: #{cagmh_forward.1} parent=1 // pred_check
      _
    $region195: #{cagmh_forward.1} parent=1 // pred_check_branch
      %255 = sbr.rel (0) target = $region197
    $region196: #{cagmh_forward.1} parent=1 // pred_region
      %s257 = ssub.s32 16, 16
      %258 = vsyncadd [#allocation11], %s257
      %s260 = sshll.u32 [#allocation10], 4
      %s261 = int_to_ptr.vmem [resolvable:$true] %s260
      %263 = dma.hbm_to_vmem [thread:$0]  %s97, 16, %s261, [#allocation11]
    $region197: #{cagmh_forward.1} parent=1 // pred_fallthru
      _
    // Predicated region
    $region198: #{cagmh_forward.1} parent=1 // pred_check
      _
    $region199: #{cagmh_forward.1} parent=1 // pred_check_branch
      %265 = sbr.rel (0) target = $region201
    $region200: #{cagmh_forward.1} parent=1 // pred_region
      _
    $region201: #{cagmh_forward.1} parent=1 // pred_fallthru
      _
    // Predicated region
    $region202: #{cagmh_forward.1} parent=1 // pred_check
      _
    $region203: #{cagmh_forward.1} parent=1 // pred_check_branch
      %267 = sbr.rel (0) target = $region205
    $region204: #{cagmh_forward.1} parent=1 // pred_region
      %s269 = ssub.s32 16, 16
      %270 = vsyncadd [#allocation11], %s269
      %s272 = sshll.u32 [#allocation12], 4
      %s273 = int_to_ptr.vmem [resolvable:$true] %s272
      %275 = dma.hbm_to_vmem [thread:$0]  %s101, 16, %s273, [#allocation11]
    $region205: #{cagmh_forward.1} parent=1 // pred_fallthru
      _
    // Predicated region
    $region206: #{cagmh_forward.1} parent=1 // pred_check
      _
    $region207: #{cagmh_forward.1} parent=1 // pred_check_branch
      %277 = sbr.rel (0) target = $region209
    $region208: #{cagmh_forward.1} parent=1 // pred_region
      _
    $region209: #{cagmh_forward.1} parent=1 // pred_fallthru
      _
    // Predicated region
    $region210: #{cagmh_forward.1} parent=1 // pred_check
      _
    $region211: #{cagmh_forward.1} parent=1 // pred_check_branch
      %279 = sbr.rel (0) target = $region213
    $region212: #{cagmh_forward.1} parent=1 // pred_region
      %s281 = ssub.s32 16, 16
      %282 = vsyncadd [#allocation14], %s281
      %s284 = sshll.u32 [#allocation13], 4
      %s285 = int_to_ptr.vmem [resolvable:$true] %s284
      %287 = dma.hbm_to_vmem [thread:$0]  %s105, 16, %s285, [#allocation14]
    $region213: #{cagmh_forward.1} parent=1 // pred_fallthru
      _
    // Predicated region
    $region214: #{cagmh_forward.1} parent=1 // pred_check
      _
    $region215: #{cagmh_forward.1} parent=1 // pred_check_branch
      %289 = sbr.rel (0) target = $region217
    $region216: #{cagmh_forward.1} parent=1 // pred_region
      _
    $region217: #{cagmh_forward.1} parent=1 // pred_fallthru
      _
    // Predicated region
    $region218: #{cagmh_forward.1} parent=1 // pred_check
      _
    $region219: #{cagmh_forward.1} parent=1 // pred_check_branch
      %291 = sbr.rel (0) target = $region221
    $region220: #{cagmh_forward.1} parent=1 // pred_region
      %s293 = ssub.s32 16, 16
      %294 = vsyncadd [#allocation14], %s293
      %s296 = sshll.u32 [#allocation15], 4
      %s297 = int_to_ptr.vmem [resolvable:$true] %s296
      %299 = dma.hbm_to_vmem [thread:$0]  %s109, 16, %s297, [#allocation14]
    $region221: #{cagmh_forward.1} parent=1 // pred_fallthru
      _
    // Predicated region
    $region222: #{cagmh_forward.1} parent=1 // pred_check
      _
    $region223: #{cagmh_forward.1} parent=1 // pred_check_branch
      %301 = sbr.rel (0) target = $region225
    $region224: #{cagmh_forward.1} parent=1 // pred_region
      _
    $region225: #{cagmh_forward.1} parent=1 // pred_fallthru
      _
    // Predicated region
    $region226: #{cagmh_forward.1} parent=1 // pred_check
      _
    $region227: #{cagmh_forward.1} parent=1 // pred_check_branch
      %303 = sbr.rel (0) target = $region229
    $region228: #{cagmh_forward.1} parent=1 // pred_region
      %s305 = ssub.s32 16, 16
      %306 = vsyncadd [#allocation17], %s305
      %s308 = sshll.u32 [#allocation16], 4
      %s309 = int_to_ptr.vmem [resolvable:$true] %s308
      %311 = dma.hbm_to_vmem [thread:$0]  %s113, 16, %s309, [#allocation17]
    $region229: #{cagmh_forward.1} parent=1 // pred_fallthru
      _
    // Predicated region
    $region230: #{cagmh_forward.1} parent=1 // pred_check
      _
    $region231: #{cagmh_forward.1} parent=1 // pred_check_branch
      %313 = sbr.rel (0) target = $region233
    $region232: #{cagmh_forward.1} parent=1 // pred_region
      %314 = dma.done [#allocation5], 16
    $region233: #{cagmh_forward.1} parent=1 // pred_fallthru
      _
    // Predicated region
    $region234: #{cagmh_forward.1} parent=1 // pred_check
      _
    $region235: #{cagmh_forward.1} parent=1 // pred_check_branch
      %316 = sbr.rel (0) target = $region237
    $region236: #{cagmh_forward.1} parent=1 // pred_region
      %317 = dma.done [#allocation4], 16
    $region237: #{cagmh_forward.1} parent=1 // pred_fallthru
      _
    // Predicated region
    $region238: #{cagmh_forward.1} parent=1 // pred_check
      _
    $region239: #{cagmh_forward.1} parent=1 // pred_check_branch
      %319 = sbr.rel (0) target = $region241
    $region240: #{cagmh_forward.1} parent=1 // pred_region
      %320 = dma.done [#allocation8], 16
    $region241: #{cagmh_forward.1} parent=1 // pred_fallthru
      _
    // Predicated region
    $region242: #{cagmh_forward.1} parent=1 // pred_check
      _
    $region243: #{cagmh_forward.1} parent=1 // pred_check_branch
      %322 = sbr.rel (0) target = $region245
    $region244: #{cagmh_forward.1} parent=1 // pred_region
      %323 = dma.done [#allocation8], 16
    $region245: #{cagmh_forward.1} parent=1 // pred_fallthru
      _
    // Predicated region
    $region246: #{cagmh_forward.1} parent=1 // pred_check
      _
    $region247: #{cagmh_forward.1} parent=1 // pred_check_branch
      %325 = sbr.rel (0) target = $region249
    $region248: #{cagmh_forward.1} parent=1 // pred_region
      %326 = dma.done [#allocation11], 16
    $region249: #{cagmh_forward.1} parent=1 // pred_fallthru
      _
    // Predicated region
    $region250: #{cagmh_forward.1} parent=1 // pred_check
      _
    $region251: #{cagmh_forward.1} parent=1 // pred_check_branch
      %328 = sbr.rel (0) target = $region253
    $region252: #{cagmh_forward.1} parent=1 // pred_region
      %329 = dma.done [#allocation11], 16
    $region253: #{cagmh_forward.1} parent=1 // pred_fallthru
      _
    // Predicated region
    $region254: #{cagmh_forward.1} parent=1 // pred_check
      _
    $region255: #{cagmh_forward.1} parent=1 // pred_check_branch
      %331 = sbr.rel (0) target = $region257
    $region256: #{cagmh_forward.1} parent=1 // pred_region
      %332 = dma.done [#allocation14], 16
    $region257: #{cagmh_forward.1} parent=1 // pred_fallthru
      _
    // Predicated region
    $region258: #{cagmh_forward.1} parent=1 // pred_check
      _
    $region259: #{cagmh_forward.1} parent=1 // pred_check_branch
      %334 = sbr.rel (0) target = $region261
    $region260: #{cagmh_forward.1} parent=1 // pred_region
      %335 = dma.done [#allocation14], 16
    $region261: #{cagmh_forward.1} parent=1 // pred_fallthru
      _
    // Predicated region
    $region262: #{cagmh_forward.1} parent=1 // pred_check
      _
    $region263: #{cagmh_forward.1} parent=1 // pred_check_branch
      %337 = sbr.rel (0) target = $region265
    $region264: #{cagmh_forward.1} parent=1 // pred_region
      %338 = dma.done [#allocation17], 16
    $region265: #{cagmh_forward.1} parent=1 // pred_fallthru
      _
    %339 = sfence
    %v340 = vld [vmem:[%s11] sm:$0x1]
    %v341 = vld [vmem:[%s13] sm:$0x1]
    %v342 = vld [vmem:[%s15] sm:$0xff]
    %v343 = vld [vmem:[%s15 + $0x8] sm:$0xff]
    %v344 = vld [vmem:[%s15 + $0x10] sm:$0xff]
    %v345 = vld [vmem:[%s15 + $0x18] sm:$0xff]
    %v346 = vld [vmem:[%s17] sm:$0x1]
    %v347 = vld [vmem:[%s19] sm:$0xff]
    %v348 = vld [vmem:[%s19 + $0x8] sm:$0xff]
    %v349 = vld [vmem:[%s19 + $0x10] sm:$0xff]
    %v350 = vld [vmem:[%s19 + $0x18] sm:$0xff]
    %v351 = vld [vmem:[%s21] sm:$0x1]
    %v352 = vld [vmem:[%s23] sm:$0x1]
    %v353 = vld [vmem:[%s25] sm:$0x1]
    %v354 = vld [vmem:[%s27] sm:$0xff]
    %v355 = vld [vmem:[%s27 + $0x8] sm:$0xff]
    %v356 = vld [vmem:[%s27 + $0x10] sm:$0xff]
    %v357 = vld [vmem:[%s27 + $0x18] sm:$0xff]
    %v358 = vld [vmem:[%s29] sm:$0x1]
    %v359 = vld [vmem:[%s31] sm:$0xff]
    %v360 = vld [vmem:[%s31 + $0x8] sm:$0xff]
    %v361 = vld [vmem:[%s31 + $0x10] sm:$0xff]
    %v362 = vld [vmem:[%s31 + $0x18] sm:$0xff]
    %v363 = vld [vmem:[%s31 + $0x20] sm:$0xff]
    %v364 = vld [vmem:[%s31 + $0x28] sm:$0xff]
    %v365 = vld [vmem:[%s31 + $0x30] sm:$0xff]
    %v366 = vld [vmem:[%s31 + $0x38] sm:$0xff]
    %v367 = vld [vmem:[%s31 + $0x40] sm:$0xff]
    %v368 = vld [vmem:[%s31 + $0x48] sm:$0xff]
    %v369 = vld [vmem:[%s31 + $0x50] sm:$0xff]
    %v370 = vld [vmem:[%s31 + $0x58] sm:$0xff]
    %v371 = vld [vmem:[%s31 + $0x60] sm:$0xff]
    %v372 = vld [vmem:[%s31 + $0x68] sm:$0xff]
    %v373 = vld [vmem:[%s31 + $0x70] sm:$0xff]
    %v374 = vld [vmem:[%s31 + $0x78] sm:$0xff]
    %v375 = vld [vmem:[%s33] sm:$0x1]
    %v376 = vld [vmem:[%s45] sm:$0x1]
    %v377 = vld [vmem:[%s47] sm:$0x1]
    %v378 = vld [vmem:[%s49] sm:$0xff]
    %v379 = vld [vmem:[%s49 + $0x8] sm:$0xff]
    %v380 = vld [vmem:[%s49 + $0x10] sm:$0xff]
    %v381 = vld [vmem:[%s49 + $0x18] sm:$0xff]
    %v382 = vld [vmem:[%s51] sm:$0x1]
    %v383 = vld [vmem:[%s53] sm:$0xff]
    %v384 = vld [vmem:[%s53 + $0x8] sm:$0xff]
    %v385 = vld [vmem:[%s53 + $0x10] sm:$0xff]
    %v386 = vld [vmem:[%s53 + $0x18] sm:$0xff]
    %v387 = vld [vmem:[%s55] sm:$0x1]
    %v388 = vld [vmem:[%s57] sm:$0x1]
    %v389 = vld [vmem:[%s59] sm:$0x1]
    %v390 = vld [vmem:[%s61] sm:$0xff]
    %v391 = vld [vmem:[%s61 + $0x8] sm:$0xff]
    %v392 = vld [vmem:[%s61 + $0x10] sm:$0xff]
    %v393 = vld [vmem:[%s61 + $0x18] sm:$0xff]
    %v394 = vld [vmem:[%s63] sm:$0x1]
    %v395 = vld [vmem:[%s65] sm:$0xff]
    %v396 = vld [vmem:[%s65 + $0x8] sm:$0xff]
    %v397 = vld [vmem:[%s65 + $0x10] sm:$0xff]
    %v398 = vld [vmem:[%s65 + $0x18] sm:$0xff]
    %v399 = vld [vmem:[%s65 + $0x20] sm:$0xff]
    %v400 = vld [vmem:[%s65 + $0x28] sm:$0xff]
    %v401 = vld [vmem:[%s65 + $0x30] sm:$0xff]
    %v402 = vld [vmem:[%s65 + $0x38] sm:$0xff]
    %v403 = vld [vmem:[%s65 + $0x40] sm:$0xff]
    %v404 = vld [vmem:[%s65 + $0x48] sm:$0xff]
    %v405 = vld [vmem:[%s65 + $0x50] sm:$0xff]
    %v406 = vld [vmem:[%s65 + $0x58] sm:$0xff]
    %v407 = vld [vmem:[%s65 + $0x60] sm:$0xff]
    %v408 = vld [vmem:[%s65 + $0x68] sm:$0xff]
    %v409 = vld [vmem:[%s65 + $0x70] sm:$0xff]
    %v410 = vld [vmem:[%s65 + $0x78] sm:$0xff]
    %v411 = vld [vmem:[%s67] sm:$0x1]
    %v412 = vld [vmem:[%s75] sm:$0x1]
    %v413 = vld [vmem:[%s77] sm:$0x1]
    %v414 = vld [vmem:[%s79] sm:$0xff]
    %v415 = vld [vmem:[%s79 + $0x8] sm:$0xff]
    %v416 = vld [vmem:[%s79 + $0x10] sm:$0xff]
    %v417 = vld [vmem:[%s79 + $0x18] sm:$0xff]
    %v418 = vld [vmem:[%s81] sm:$0x1]
    %v419 = vld [vmem:[%s83] sm:$0xff]
    %v420 = vld [vmem:[%s83 + $0x8] sm:$0xff]
    %v421 = vld [vmem:[%s83 + $0x10] sm:$0xff]
    %v422 = vld [vmem:[%s83 + $0x18] sm:$0xff]
    %v423 = vld [vmem:[%s85] sm:$0x1]
    %v424 = vld [vmem:[#allocation6] sm:$0x1]
    %v425 = vld [vmem:[#allocation7] sm:$0x1]
    %v426 = vld [vmem:[%s91] sm:$0xff]
    %v427 = vld [vmem:[%s91 + $0x8] sm:$0xff]
    %v428 = vld [vmem:[%s91 + $0x10] sm:$0xff]
    %v429 = vld [vmem:[%s91 + $0x18] sm:$0xff]
    %v430 = vld [vmem:[#allocation9] sm:$0x1]
    %v431 = vld [vmem:[%s95] sm:$0xff]
    %v432 = vld [vmem:[%s95 + $0x8] sm:$0xff]
    %v433 = vld [vmem:[%s95 + $0x10] sm:$0xff]
    %v434 = vld [vmem:[%s95 + $0x18] sm:$0xff]
    %v435 = vld [vmem:[%s95 + $0x20] sm:$0xff]
    %v436 = vld [vmem:[%s95 + $0x28] sm:$0xff]
    %v437 = vld [vmem:[%s95 + $0x30] sm:$0xff]
    %v438 = vld [vmem:[%s95 + $0x38] sm:$0xff]
    %v439 = vld [vmem:[%s95 + $0x40] sm:$0xff]
    %v440 = vld [vmem:[%s95 + $0x48] sm:$0xff]
    %v441 = vld [vmem:[%s95 + $0x50] sm:$0xff]
    %v442 = vld [vmem:[%s95 + $0x58] sm:$0xff]
    %v443 = vld [vmem:[%s95 + $0x60] sm:$0xff]
    %v444 = vld [vmem:[%s95 + $0x68] sm:$0xff]
    %v445 = vld [vmem:[%s95 + $0x70] sm:$0xff]
    %v446 = vld [vmem:[%s95 + $0x78] sm:$0xff]
    %v447 = vld [vmem:[#allocation10] sm:$0x1]
    %v448 = vld [vmem:[%s99] sm:$0xff]
    %v449 = vld [vmem:[%s99 + $0x8] sm:$0xff]
    %v450 = vld [vmem:[%s99 + $0x10] sm:$0xff]
    %v451 = vld [vmem:[%s99 + $0x18] sm:$0xff]
    %v452 = vld [vmem:[#allocation12] sm:$0x1]
    %v453 = vld [vmem:[%s103] sm:$0xff]
    %v454 = vld [vmem:[%s103 + $0x8] sm:$0xff]
    %v455 = vld [vmem:[%s103 + $0x10] sm:$0xff]
    %v456 = vld [vmem:[%s103 + $0x18] sm:$0xff]
    %v457 = vld [vmem:[%s103 + $0x20] sm:$0xff]
    %v458 = vld [vmem:[%s103 + $0x28] sm:$0xff]
    %v459 = vld [vmem:[%s103 + $0x30] sm:$0xff]
    %v460 = vld [vmem:[%s103 + $0x38] sm:$0xff]
    %v461 = vld [vmem:[#allocation13] sm:$0x1]
    %v462 = vld [vmem:[%s107] sm:$0xff]
    %v463 = vld [vmem:[%s107 + $0x8] sm:$0xff]
    %v464 = vld [vmem:[%s107 + $0x10] sm:$0xff]
    %v465 = vld [vmem:[%s107 + $0x18] sm:$0xff]
    %v466 = vld [vmem:[#allocation15] sm:$0x1]
    %v467 = vld [vmem:[%s111] sm:$0xff]
    %v468 = vld [vmem:[%s111 + $0x8] sm:$0xff]
    %v469 = vld [vmem:[%s111 + $0x10] sm:$0xff]
    %v470 = vld [vmem:[%s111 + $0x18] sm:$0xff]
    %v471 = vld [vmem:[%s111 + $0x20] sm:$0xff]
    %v472 = vld [vmem:[%s111 + $0x28] sm:$0xff]
    %v473 = vld [vmem:[%s111 + $0x30] sm:$0xff]
    %v474 = vld [vmem:[%s111 + $0x38] sm:$0xff]
    %v475 = vld [vmem:[#allocation16] sm:$0x1]
    %v476 = vld [vmem:[%s1] sm:$0xff]
    %v477 = vld [vmem:[%s1 + $0x8] sm:$0xff]
    %v478 = vld [vmem:[%s1 + $0x10] sm:$0xff]
    %v479 = vld [vmem:[%s1 + $0x18] sm:$0xff]
    %v480 = vld [vmem:[%s1 + $0x20] sm:$0xff]
    %v481 = vld [vmem:[%s1 + $0x28] sm:$0xff]
    %v482 = vld [vmem:[%s1 + $0x30] sm:$0x3]
    %v483 = vld [vmem:[%s1 + $0x38] sm:$0x3]
    %v484 = vld [vmem:[%s1 + $0x40] sm:$0x3]
    %v485 = vld [vmem:[%s1 + $0x48] sm:$0x3]
    %v486 = vld [vmem:[%s1 + $0x50] sm:$0x3]
    %v487 = vld [vmem:[%s1 + $0x58] sm:$0x3]
    %v488 = vld [vmem:[%s5] sm:$0xff]
    %v489 = vld [vmem:[%s5 + $0x8] sm:$0xff]
    %v490 = vld [vmem:[%s5 + $0x10] sm:$0xff]
    %v491 = vld [vmem:[%s5 + $0x18] sm:$0xff]
    %v492 = vld [vmem:[%s5 + $0x20] sm:$0xff]
    %v493 = vld [vmem:[%s5 + $0x28] sm:$0xff]
    %v494 = vld [vmem:[%s5 + $0x30] sm:$0xff]
    %v495 = vld [vmem:[%s5 + $0x38] sm:$0xff]
    %v496 = vld [vmem:[%s5 + $0x40] sm:$0xff]
    %v497 = vld [vmem:[%s5 + $0x48] sm:$0xff]
    %v498 = vld [vmem:[%s5 + $0x50] sm:$0xff]
    %v499 = vld [vmem:[%s5 + $0x58] sm:$0xff]
    %v500 = vld [vmem:[%s5 + $0x60] sm:$0xff]
    %v501 = vld [vmem:[%s5 + $0x68] sm:$0xff]
    %v502 = vld [vmem:[%s5 + $0x70] sm:$0xff]
    %v503 = vld [vmem:[%s5 + $0x78] sm:$0xff]
    %v504 = vld [vmem:[%s5 + $0x80] sm:$0xff]
    %v505 = vld [vmem:[%s5 + $0x88] sm:$0xff]
    %v506 = vld [vmem:[%s5 + $0x90] sm:$0xff]
    %v507 = vld [vmem:[%s5 + $0x98] sm:$0xff]
    %v508 = vld [vmem:[%s5 + $0xa0] sm:$0xff]
    %v509 = vld [vmem:[%s5 + $0xa8] sm:$0xff]
    %v510 = vld [vmem:[%s5 + $0xb0] sm:$0xff]
    %v511 = vld [vmem:[%s5 + $0xb8] sm:$0xff]
    %v512 = vld [vmem:[%s5 + $0xc0] sm:$0xff]
    %v513 = vld [vmem:[%s5 + $0xc8] sm:$0xff]
    %v514 = vld [vmem:[%s5 + $0xd0] sm:$0xff]
    %v515 = vld [vmem:[%s5 + $0xd8] sm:$0xff]
    %v516 = vld [vmem:[%s5 + $0xe0] sm:$0xff]
    %v517 = vld [vmem:[%s5 + $0xe8] sm:$0xff]
    %v518 = vld [vmem:[%s5 + $0xf0] sm:$0xff]
    %v519 = vld [vmem:[%s5 + $0xf8] sm:$0xff]
    %v520 = vld [vmem:[%s5 + $0x100] sm:$0xff]
    %v521 = vld [vmem:[%s5 + $0x108] sm:$0xff]
    %v522 = vld [vmem:[%s5 + $0x110] sm:$0xff]
    %v523 = vld [vmem:[%s5 + $0x118] sm:$0xff]
    %v524 = vld [vmem:[%s5 + $0x120] sm:$0xff]
    %v525 = vld [vmem:[%s5 + $0x128] sm:$0xff]
    %v526 = vld [vmem:[%s5 + $0x130] sm:$0xff]
    %v527 = vld [vmem:[%s5 + $0x138] sm:$0xff]
    %v528 = vld [vmem:[%s5 + $0x140] sm:$0xff]
    %v529 = vld [vmem:[%s5 + $0x148] sm:$0xff]
    %v530 = vld [vmem:[%s5 + $0x150] sm:$0xff]
    %v531 = vld [vmem:[%s5 + $0x158] sm:$0xff]
    %v532 = vld [vmem:[%s5 + $0x160] sm:$0xff]
    %v533 = vld [vmem:[%s5 + $0x168] sm:$0xff]
    %v534 = vld [vmem:[%s5 + $0x170] sm:$0xff]
    %v535 = vld [vmem:[%s5 + $0x178] sm:$0xff]
    %v536 = vld [vmem:[%s5 + $0x180] sm:$0xff]
    %v537 = vld [vmem:[%s5 + $0x188] sm:$0xff]
    %v538 = vld [vmem:[%s5 + $0x190] sm:$0xff]
    %v539 = vld [vmem:[%s5 + $0x198] sm:$0xff]
    %v540 = vld [vmem:[%s5 + $0x1a0] sm:$0xff]
    %v541 = vld [vmem:[%s5 + $0x1a8] sm:$0xff]
    %v542 = vld [vmem:[%s5 + $0x1b0] sm:$0xff]
    %v543 = vld [vmem:[%s5 + $0x1b8] sm:$0xff]
    %v544 = vld [vmem:[%s5 + $0x1c0] sm:$0xff]
    %v545 = vld [vmem:[%s5 + $0x1c8] sm:$0xff]
    %v546 = vld [vmem:[%s5 + $0x1d0] sm:$0xff]
    %v547 = vld [vmem:[%s5 + $0x1d8] sm:$0xff]
    %v548 = vld [vmem:[%s5 + $0x1e0] sm:$0xff]
    %v549 = vld [vmem:[%s5 + $0x1e8] sm:$0xff]
    %v550 = vld [vmem:[%s5 + $0x1f0] sm:$0xff]
    %v551 = vld [vmem:[%s5 + $0x1f8] sm:$0xff]
    %v552 = vld [vmem:[%s5 + $0x200] sm:$0xff]
    %v553 = vld [vmem:[%s5 + $0x208] sm:$0xff]
    %v554 = vld [vmem:[%s5 + $0x210] sm:$0xff]
    %v555 = vld [vmem:[%s5 + $0x218] sm:$0xff]
    %v556 = vld [vmem:[%s5 + $0x220] sm:$0xff]
    %v557 = vld [vmem:[%s5 + $0x228] sm:$0xff]
    %v558 = vld [vmem:[%s5 + $0x230] sm:$0xff]
    %v559 = vld [vmem:[%s5 + $0x238] sm:$0xff]
    %v560 = vld [vmem:[%s5 + $0x240] sm:$0xff]
    %v561 = vld [vmem:[%s5 + $0x248] sm:$0xff]
    %v562 = vld [vmem:[%s5 + $0x250] sm:$0xff]
    %v563 = vld [vmem:[%s5 + $0x258] sm:$0xff]
    %v564 = vld [vmem:[%s5 + $0x260] sm:$0xff]
    %v565 = vld [vmem:[%s5 + $0x268] sm:$0xff]
    %v566 = vld [vmem:[%s5 + $0x270] sm:$0xff]
    %v567 = vld [vmem:[%s5 + $0x278] sm:$0xff]
    %v568 = vld [vmem:[%s5 + $0x280] sm:$0xff]
    %v569 = vld [vmem:[%s5 + $0x288] sm:$0xff]
    %v570 = vld [vmem:[%s5 + $0x290] sm:$0xff]
    %v571 = vld [vmem:[%s5 + $0x298] sm:$0xff]
    %v572 = vld [vmem:[%s5 + $0x2a0] sm:$0xff]
    %v573 = vld [vmem:[%s5 + $0x2a8] sm:$0xff]
    %v574 = vld [vmem:[%s5 + $0x2b0] sm:$0xff]
    %v575 = vld [vmem:[%s5 + $0x2b8] sm:$0xff]
    %v576 = vld [vmem:[%s5 + $0x2c0] sm:$0xff]
    %v577 = vld [vmem:[%s5 + $0x2c8] sm:$0xff]
    %v578 = vld [vmem:[%s5 + $0x2d0] sm:$0xff]
    %v579 = vld [vmem:[%s5 + $0x2d8] sm:$0xff]
    %v580 = vld [vmem:[%s5 + $0x2e0] sm:$0xff]
    %v581 = vld [vmem:[%s5 + $0x2e8] sm:$0xff]
    %v582 = vld [vmem:[%s5 + $0x2f0] sm:$0xff]
    %v583 = vld [vmem:[%s5 + $0x2f8] sm:$0xff]
    %v584 = vld [vmem:[%s3] sm:$0xff]
    %v585 = vld [vmem:[%s3 + $0x8] sm:$0x3]
    %586 = vmatprep.subr.mxu0 0.0
    %587 = vmatpush1.msra.mxu0 %v488
    %588 = vmatprep.subr.mxu0 0.0
    %589 = vmatpush1.msra.mxu0 %v489
    %590 = vmatprep.subr.mxu0 0.0
    %591 = vmatpush1.msra.mxu0 %v490
    %592 = vmatprep.subr.mxu0 0.0
    %593 = vmatpush1.msra.mxu0 %v491
    %594 = vmatprep.subr.mxu0 0.0
    %595 = vmatpush1.msra.mxu0 %v492
    %596 = vmatprep.subr.mxu0 0.0
    %597 = vmatpush1.msra.mxu0 %v493
    %598 = vmatprep.subr.mxu0 0.0
    %599 = vmatpush1.msra.mxu0 %v494
    %600 = vmatprep.subr.mxu0 0.0
    %601 = vmatpush1.msra.mxu0 %v495
    %602 = vmatprep.subr.mxu0 0.0
    %603 = vmatpush1.msra.mxu0 %v496
    %604 = vmatprep.subr.mxu0 0.0
    %605 = vmatpush1.msra.mxu0 %v497
    %606 = vmatprep.subr.mxu0 0.0
    %607 = vmatpush1.msra.mxu0 %v498
    %608 = vmatprep.subr.mxu0 0.0
    %609 = vmatpush1.msra.mxu0 %v499
    %610 = vmatprep.subr.mxu0 0.0
    %611 = vmatpush1.msra.mxu0 %v500
    %612 = vmatprep.subr.mxu0 0.0
    %613 = vmatpush1.msra.mxu0 %v501
    %614 = vmatprep.subr.mxu0 0.0
    %615 = vmatpush1.msra.mxu0 %v502
    %616 = vmatprep.subr.mxu0 0.0
    %617 = vmatpush1.msra.mxu0 %v503
    %618 = vmatprep.subr.mxu0 0.0
    %619 = vmatpush1.msra.mxu0 %v504
    %620 = vmatprep.subr.mxu0 0.0
    %621 = vmatpush1.msra.mxu0 %v505
    %622 = vmatprep.subr.mxu0 0.0
    %623 = vmatpush1.msra.mxu0 %v506
    %624 = vmatprep.subr.mxu0 0.0
    %625 = vmatpush1.msra.mxu0 %v507
    %626 = vmatprep.subr.mxu0 0.0
    %627 = vmatpush1.msra.mxu0 %v508
    %628 = vmatprep.subr.mxu0 0.0
    %629 = vmatpush1.msra.mxu0 %v509
    %630 = vmatprep.subr.mxu0 0.0
    %631 = vmatpush1.msra.mxu0 %v510
    %632 = vmatprep.subr.mxu0 0.0
    %633 = vmatpush1.msra.mxu0 %v511
    %634 = vmatprep.subr.mxu0 0.0
    %635 = vmatpush1.msra.mxu0 %v512
    %636 = vmatprep.subr.mxu0 0.0
    %637 = vmatpush1.msra.mxu0 %v513
    %638 = vmatprep.subr.mxu0 0.0
    %639 = vmatpush1.msra.mxu0 %v514
    %640 = vmatprep.subr.mxu0 0.0
    %641 = vmatpush1.msra.mxu0 %v515
    %642 = vmatprep.subr.mxu0 0.0
    %643 = vmatpush1.msra.mxu0 %v516
    %644 = vmatprep.subr.mxu0 0.0
    %645 = vmatpush1.msra.mxu0 %v517
    %646 = vmatprep.subr.mxu0 0.0
    %647 = vmatpush1.msra.mxu0 %v518
    %648 = vmatprep.subr.mxu0 0.0
    %649 = vmatpush1.msra.mxu0 %v519
    %650 = vmatprep.mubr.f32.mxu0 %v477
    %651 = vmatmul.mubr.f32.gmra.mrb[0].mxu0 %v476
    %v652 = vpop.f32.mrb[0].mxu0
    %v653 = vadd.f32 %v584, %v652
    %v654 = vpop.f32.mrb[0].mxu0
    %655 = vmatprep.mubr.f32.mxu0 %v483
    %656 = vmatmul.mubr.f32.gmra.mrb[0].mxu0 %v482
    %v657 = vpop.f32.mrb[0].mxu0
    %v658 = vadd.f32 %v585, %v657
    %v659 = vpop.f32.mrb[0].mxu0
    %660 = vdwg.mxu0
    %661 = vmatprep.subr.mxu0 0.0
    %662 = vmatpush1.msra.mxu0 %v520
    %663 = vmatprep.subr.mxu0 0.0
    %664 = vmatpush1.msra.mxu0 %v521
    %665 = vmatprep.subr.mxu0 0.0
    %666 = vmatpush1.msra.mxu0 %v522
    %667 = vmatprep.subr.mxu0 0.0
    %668 = vmatpush1.msra.mxu0 %v523
    %669 = vmatprep.subr.mxu0 0.0
    %670 = vmatpush1.msra.mxu0 %v524
    %671 = vmatprep.subr.mxu0 0.0
    %672 = vmatpush1.msra.mxu0 %v525
    %673 = vmatprep.subr.mxu0 0.0
    %674 = vmatpush1.msra.mxu0 %v526
    %675 = vmatprep.subr.mxu0 0.0
    %676 = vmatpush1.msra.mxu0 %v527
    %677 = vmatprep.subr.mxu0 0.0
    %678 = vmatpush1.msra.mxu0 %v528
    %679 = vmatprep.subr.mxu0 0.0
    %680 = vmatpush1.msra.mxu0 %v529
    %681 = vmatprep.subr.mxu0 0.0
    %682 = vmatpush1.msra.mxu0 %v530
    %683 = vmatprep.subr.mxu0 0.0
    %684 = vmatpush1.msra.mxu0 %v531
    %685 = vmatprep.subr.mxu0 0.0
    %686 = vmatpush1.msra.mxu0 %v532
    %687 = vmatprep.subr.mxu0 0.0
    %688 = vmatpush1.msra.mxu0 %v533
    %689 = vmatprep.subr.mxu0 0.0
    %690 = vmatpush1.msra.mxu0 %v534
    %691 = vmatprep.subr.mxu0 0.0
    %692 = vmatpush1.msra.mxu0 %v535
    %693 = vmatprep.subr.mxu0 0.0
    %694 = vmatpush1.msra.mxu0 %v536
    %695 = vmatprep.subr.mxu0 0.0
    %696 = vmatpush1.msra.mxu0 %v537
    %697 = vmatprep.subr.mxu0 0.0
    %698 = vmatpush1.msra.mxu0 %v538
    %699 = vmatprep.subr.mxu0 0.0
    %700 = vmatpush1.msra.mxu0 %v539
    %701 = vmatprep.subr.mxu0 0.0
    %702 = vmatpush1.msra.mxu0 %v540
    %703 = vmatprep.subr.mxu0 0.0
    %704 = vmatpush1.msra.mxu0 %v541
    %705 = vmatprep.subr.mxu0 0.0
    %706 = vmatpush1.msra.mxu0 %v542
    %707 = vmatprep.subr.mxu0 0.0
    %708 = vmatpush1.msra.mxu0 %v543
    %709 = vmatprep.subr.mxu0 0.0
    %710 = vmatpush1.msra.mxu0 %v544
    %711 = vmatprep.subr.mxu0 0.0
    %712 = vmatpush1.msra.mxu0 %v545
    %713 = vmatprep.subr.mxu0 0.0
    %714 = vmatpush1.msra.mxu0 %v546
    %715 = vmatprep.subr.mxu0 0.0
    %716 = vmatpush1.msra.mxu0 %v547
    %717 = vmatprep.subr.mxu0 0.0
    %718 = vmatpush1.msra.mxu0 %v548
    %719 = vmatprep.subr.mxu0 0.0
    %720 = vmatpush1.msra.mxu0 %v549
    %721 = vmatprep.subr.mxu0 0.0
    %722 = vmatpush1.msra.mxu0 %v550
    %723 = vmatprep.subr.mxu0 0.0
    %724 = vmatpush1.msra.mxu0 %v551
    %725 = vmatprep.mubr.f32.mxu0 %v479
    %726 = vmatmul.mubr.f32.gmra.mrb[0].mxu0 %v478
    %v727 = vpop.f32.mrb[0].mxu0
    %v728 = vadd.f32 %v653, %v727
    %v729 = vpop.f32.mrb[0].mxu0
    %730 = vmatprep.mubr.f32.mxu0 %v485
    %731 = vmatmul.mubr.f32.gmra.mrb[0].mxu0 %v484
    %v732 = vpop.f32.mrb[0].mxu0
    %v733 = vadd.f32 %v658, %v732
    %v734 = vpop.f32.mrb[0].mxu0
    %735 = vdwg.mxu0
    %736 = vmatprep.subr.mxu0 0.0
    %737 = vmatpush1.msra.mxu0 %v552
    %738 = vmatprep.subr.mxu0 0.0
    %739 = vmatpush1.msra.mxu0 %v553
    %740 = vmatprep.subr.mxu0 0.0
    %741 = vmatpush1.msra.mxu0 %v554
    %742 = vmatprep.subr.mxu0 0.0
    %743 = vmatpush1.msra.mxu0 %v555
    %744 = vmatprep.subr.mxu0 0.0
    %745 = vmatpush1.msra.mxu0 %v556
    %746 = vmatprep.subr.mxu0 0.0
    %747 = vmatpush1.msra.mxu0 %v557
    %748 = vmatprep.subr.mxu0 0.0
    %749 = vmatpush1.msra.mxu0 %v558
    %750 = vmatprep.subr.mxu0 0.0
    %751 = vmatpush1.msra.mxu0 %v559
    %752 = vmatprep.subr.mxu0 0.0
    %753 = vmatpush1.msra.mxu0 %v560
    %754 = vmatprep.subr.mxu0 0.0
    %755 = vmatpush1.msra.mxu0 %v561
    %756 = vmatprep.subr.mxu0 0.0
    %757 = vmatpush1.msra.mxu0 %v562
    %758 = vmatprep.subr.mxu0 0.0
    %759 = vmatpush1.msra.mxu0 %v563
    %760 = vmatprep.subr.mxu0 0.0
    %761 = vmatpush1.msra.mxu0 %v564
    %762 = vmatprep.subr.mxu0 0.0
    %763 = vmatpush1.msra.mxu0 %v565
    %764 = vmatprep.subr.mxu0 0.0
    %765 = vmatpush1.msra.mxu0 %v566
    %766 = vmatprep.subr.mxu0 0.0
    %767 = vmatpush1.msra.mxu0 %v567
    %768 = vmatprep.subr.mxu0 0.0
    %769 = vmatpush1.msra.mxu0 %v568
    %770 = vmatprep.subr.mxu0 0.0
    %771 = vmatpush1.msra.mxu0 %v569
    %772 = vmatprep.subr.mxu0 0.0
    %773 = vmatpush1.msra.mxu0 %v570
    %774 = vmatprep.subr.mxu0 0.0
    %775 = vmatpush1.msra.mxu0 %v571
    %776 = vmatprep.subr.mxu0 0.0
    %777 = vmatpush1.msra.mxu0 %v572
    %778 = vmatprep.subr.mxu0 0.0
    %779 = vmatpush1.msra.mxu0 %v573
    %780 = vmatprep.subr.mxu0 0.0
    %781 = vmatpush1.msra.mxu0 %v574
    %782 = vmatprep.subr.mxu0 0.0
    %783 = vmatpush1.msra.mxu0 %v575
    %784 = vmatprep.subr.mxu0 0.0
    %785 = vmatpush1.msra.mxu0 %v576
    %786 = vmatprep.subr.mxu0 0.0
    %787 = vmatpush1.msra.mxu0 %v577
    %788 = vmatprep.subr.mxu0 0.0
    %789 = vmatpush1.msra.mxu0 %v578
    %790 = vmatprep.subr.mxu0 0.0
    %791 = vmatpush1.msra.mxu0 %v579
    %792 = vmatprep.subr.mxu0 0.0
    %793 = vmatpush1.msra.mxu0 %v580
    %794 = vmatprep.subr.mxu0 0.0
    %795 = vmatpush1.msra.mxu0 %v581
    %796 = vmatprep.subr.mxu0 0.0
    %797 = vmatpush1.msra.mxu0 %v582
    %798 = vmatprep.subr.mxu0 0.0
    %799 = vmatpush1.msra.mxu0 %v583
    %800 = vmatprep.mubr.f32.mxu0 %v481
    %801 = vmatmul.mubr.f32.gmra.mrb[0].mxu0 %v480
    %v802 = vpop.f32.mrb[0].mxu0
    %v803 = vadd.f32 %v728, %v802
    %v804 = vpop.f32.mrb[0].mxu0
    %805 = vmatprep.mubr.f32.mxu0 %v487
    %806 = vmatmul.mubr.f32.gmra.mrb[0].mxu0 %v486
    %v807 = vpop.f32.mrb[0].mxu0
    %v808 = vadd.f32 %v733, %v807
    %v809 = vpop.f32.mrb[0].mxu0
    %810 = vdwg.mxu0
    %v811 = vld [vmem:[%s7] sm:$0x1]
    %v812 = vld [vmem:[%s9] sm:$0x1]
    %vm813 = vcmask 261120
    %v814 = vsel %vm813, %v803, 0.0
    %815 = vadd.xlane.f32.xlu0 %v814
    %v816 = vpop.xlane.xlu0 %815
    %vm817 = vcmask 254976
    %v818 = vsel %vm817, %v808, 0.0
    %819 = vadd.xlane.f32.xlu0 %v818
    %v820 = vpop.xlane.xlu0 %819
    %v821 = vrcp.pop 32.0
    %v822 = vmul.f32 %v816, %v821
    %v823 = vmul.f32 %v820, %v821
    %v824 = vsub.f32 %v803, %v822
    %v825 = vsub.f32 %v808, %v823
    %v826 = vmul.f32 %v824, %v824
    %v827 = vmul.f32 %v825, %v825
    %v828 = vsel %vm813, %v826, 0.0
    %829 = vadd.xlane.f32.xlu0 %v828
    %v830 = vpop.xlane.xlu0 %829
    %v831 = vsel %vm817, %v827, 0.0
    %832 = vadd.xlane.f32.xlu0 %v831
    %v833 = vpop.xlane.xlu0 %832
    %v834 = vmul.f32 %v830, %v821
    %v835 = vmul.f32 %v833, %v821
    %v836 = vadd.f32 %v834, 1e-05
    %v837 = vadd.f32 %v835, 1e-05
    %v838 = vrsqrt.pop %v836
    %v839 = vrsqrt.pop %v837
    %v840 = vmul.f32 %v824, %v838
    %v841 = vmul.f32 %v825, %v839
    %v843 = vlaneseq
    %v844 = vshrl.u32 %v843, 7
    %v845 = vsub.s32 0, %v844
    %v846 = vrot.slane %v811, %v845
    %v848 = vmul.f32 %v840, %v846
    %v849 = vmul.f32 %v841, %v846
    %v851 = vlaneseq
    %v852 = vshrl.u32 %v851, 7
    %v853 = vsub.s32 0, %v852
    %v854 = vrot.slane %v812, %v853
    %v856 = vadd.f32 %v848, %v854
    %v857 = vadd.f32 %v849, %v854
    %v858 = vsel %vm813, %v856, 0.0
    %859 = vadd.xlane.f32.xlu0 %v858
    %v860 = vpop.xlane.xlu0 %859
    %v861 = vsel %vm817, %v857, 0.0
    %862 = vadd.xlane.f32.xlu0 %v861
    %v863 = vpop.xlane.xlu0 %862
    %v864 = vmul.f32 %v860, %v821
    %v865 = vmul.f32 %v863, %v821
    %v866 = vsub.f32 %v856, %v864
    %v867 = vsub.f32 %v857, %v865
    %v868 = vmul.f32 %v866, %v866
    %v869 = vmul.f32 %v867, %v867
    %v870 = vsel %vm813, %v868, 0.0
    %871 = vadd.xlane.f32.xlu0 %v870
    %v872 = vpop.xlane.xlu0 %871
    %v873 = vsel %vm817, %v869, 0.0
    %874 = vadd.xlane.f32.xlu0 %v873
    %v875 = vpop.xlane.xlu0 %874
    %v876 = vmul.f32 %v872, %v821
    %v877 = vmul.f32 %v875, %v821
    %v878 = vadd.f32 %v876, 1e-05
    %v879 = vadd.f32 %v877, 1e-05
    %v880 = vrsqrt.pop %v878
    %v881 = vrsqrt.pop %v879
    %v882 = vmul.f32 %v866, %v880
    %v883 = vmul.f32 %v867, %v881
    %v885 = vlaneseq
    %v886 = vshrl.u32 %v885, 7
    %v887 = vsub.s32 0, %v886
    %v888 = vrot.slane %v340, %v887
    %v890 = vmul.f32 %v882, %v888
    %v891 = vmul.f32 %v883, %v888
    %v893 = vlaneseq
    %v894 = vshrl.u32 %v893, 7
    %v895 = vsub.s32 0, %v894
    %v896 = vrot.slane %v341, %v895
    %v898 = vadd.f32 %v890, %v896
    %v899 = vadd.f32 %v891, %v896
    %v901 = vlaneseq
    %v902 = vshrl.u32 %v901, 7
    %v903 = vsub.s32 0, %v902
    %v904 = vrot.slane %v346, %v903
    %v907 = vsel %vm813, %v898, 0
    %v910 = vsel %vm813, %v899, 0
    %912 = vmatprep.subr.mxu0 0.0
    %913 = vmatpush1.msra.mxu0 %v342
    %914 = vmatprep.subr.mxu0 0.0
    %915 = vmatpush1.msra.mxu0 %v343
    %916 = vmatprep.subr.mxu0 0.0
    %917 = vmatpush1.msra.mxu0 %v344
    %918 = vmatprep.subr.mxu0 0.0
    %919 = vmatpush1.msra.mxu0 %v345
    %920 = vmatprep.subr.mxu0 0.0
    %921 = vmatpush1.msra.mxu0 0.0
    %922 = vmatprep.subr.mxu0 0.0
    %923 = vmatpush1.msra.mxu0 0.0
    %924 = vmatprep.subr.mxu0 0.0
    %925 = vmatpush1.msra.mxu0 0.0
    %926 = vmatprep.subr.mxu0 0.0
    %927 = vmatpush1.msra.mxu0 0.0
    %928 = vmatprep.subr.mxu0 0.0
    %929 = vmatpush1.msra.mxu0 0.0
    %930 = vmatprep.subr.mxu0 0.0
    %931 = vmatpush1.msra.mxu0 0.0
    %932 = vmatprep.subr.mxu0 0.0
    %933 = vmatpush1.msra.mxu0 0.0
    %934 = vmatprep.subr.mxu0 0.0
    %935 = vmatpush1.msra.mxu0 0.0
    %936 = vmatprep.subr.mxu0 0.0
    %937 = vmatpush1.msra.mxu0 0.0
    %938 = vmatprep.subr.mxu0 0.0
    %939 = vmatpush1.msra.mxu0 0.0
    %940 = vmatprep.subr.mxu0 0.0
    %941 = vmatpush1.msra.mxu0 0.0
    %942 = vmatprep.subr.mxu0 0.0
    %943 = vmatpush1.msra.mxu0 0.0
    %944 = vmatprep.subr.mxu0 0.0
    %945 = vmatpush1.msra.mxu0 0.0
    %946 = vmatprep.subr.mxu0 0.0
    %947 = vmatpush1.msra.mxu0 0.0
    %948 = vmatprep.subr.mxu0 0.0
    %949 = vmatpush1.msra.mxu0 0.0
    %950 = vmatprep.subr.mxu0 0.0
    %951 = vmatpush1.msra.mxu0 0.0
    %952 = vmatprep.subr.mxu0 0.0
    %953 = vmatpush1.msra.mxu0 0.0
    %954 = vmatprep.subr.mxu0 0.0
    %955 = vmatpush1.msra.mxu0 0.0
    %956 = vmatprep.subr.mxu0 0.0
    %957 = vmatpush1.msra.mxu0 0.0
    %958 = vmatprep.subr.mxu0 0.0
    %959 = vmatpush1.msra.mxu0 0.0
    %960 = vmatprep.subr.mxu0 0.0
    %961 = vmatpush1.msra.mxu0 0.0
    %962 = vmatprep.subr.mxu0 0.0
    %963 = vmatpush1.msra.mxu0 0.0
    %964 = vmatprep.subr.mxu0 0.0
    %965 = vmatpush1.msra.mxu0 0.0
    %966 = vmatprep.subr.mxu0 0.0
    %967 = vmatpush1.msra.mxu0 0.0
    %968 = vmatprep.subr.mxu0 0.0
    %969 = vmatpush1.msra.mxu0 0.0
    %970 = vmatprep.subr.mxu0 0.0
    %971 = vmatpush1.msra.mxu0 0.0
    %972 = vmatprep.subr.mxu0 0.0
    %973 = vmatpush1.msra.mxu0 0.0
    %974 = vmatprep.subr.mxu0 0.0
    %975 = vmatpush1.msra.mxu0 0.0
    %976 = vmatprep.mubr.f32.mxu0 0.0
    %977 = vmatmul.mubr.f32.gmra.mrb[0].mxu0 %v907
    %v978 = vpop.f32.mrb[0].mxu0
    %v979 = vadd.f32 %v904, %v978
    %v980 = vpop.f32.mrb[0].mxu0
    %981 = vmatprep.mubr.f32.mxu0 0.0
    %982 = vmatmul.mubr.f32.gmra.mrb[0].mxu0 %v910
    %v983 = vpop.f32.mrb[0].mxu0
    %v984 = vadd.f32 %v904, %v983
    %v985 = vpop.f32.mrb[0].mxu0
    %986 = vdwg.mxu0
    %988 = vrot.lane.b32.xlu0 %v979, 96
    %v989 = vpop.permute.xlu0 %988
    %vm990 = vcmask 64512
    %v991 = vsel %vm990, %v979, 0
    %v993 = vsel %vm990, %v989, 0
    %995 = vmatprep.subr.mxu0 0.0
    %996 = vmatpush1.xpose.msra.mxu0 %v993
    %997 = vmatprep.subr.mxu0 0.0
    %998 = vmatpush1.xpose.msra.mxu0 0.0
    %999 = vmatprep.subr.mxu0 0.0
    %1000 = vmatpush1.xpose.msra.mxu0 0.0
    %1001 = vmatprep.subr.mxu0 0.0
    %1002 = vmatpush1.xpose.msra.mxu0 0.0
    %1003 = vmatprep.subr.mxu0 0.0
    %1004 = vmatpush1.xpose.msra.mxu0 0.0
    %1005 = vmatprep.subr.mxu0 0.0
    %1006 = vmatpush1.xpose.msra.mxu0 0.0
    %1007 = vmatprep.subr.mxu0 0.0
    %1008 = vmatpush1.xpose.msra.mxu0 0.0
    %1009 = vmatprep.subr.mxu0 0.0
    %1010 = vmatpush1.xpose.msra.mxu0 0.0
    %1011 = vmatprep.subr.mxu0 0.0
    %1012 = vmatpush1.xpose.msra.mxu0 0.0
    %1013 = vmatprep.subr.mxu0 0.0
    %1014 = vmatpush1.xpose.msra.mxu0 0.0
    %1015 = vmatprep.subr.mxu0 0.0
    %1016 = vmatpush1.xpose.msra.mxu0 0.0
    %1017 = vmatprep.subr.mxu0 0.0
    %1018 = vmatpush1.xpose.msra.mxu0 0.0
    %1019 = vmatprep.subr.mxu0 0.0
    %1020 = vmatpush1.xpose.msra.mxu0 0.0
    %1021 = vmatprep.subr.mxu0 0.0
    %1022 = vmatpush1.xpose.msra.mxu0 0.0
    %1023 = vmatprep.subr.mxu0 0.0
    %1024 = vmatpush1.xpose.msra.mxu0 0.0
    %1025 = vmatprep.subr.mxu0 0.0
    %1026 = vmatpush1.xpose.msra.mxu0 0.0
    %1027 = vmatprep.subr.mxu0 0.0
    %1028 = vmatpush1.xpose.msra.mxu0 0.0
    %1029 = vmatprep.subr.mxu0 0.0
    %1030 = vmatpush1.xpose.msra.mxu0 0.0
    %1031 = vmatprep.subr.mxu0 0.0
    %1032 = vmatpush1.xpose.msra.mxu0 0.0
    %1033 = vmatprep.subr.mxu0 0.0
    %1034 = vmatpush1.xpose.msra.mxu0 0.0
    %1035 = vmatprep.subr.mxu0 0.0
    %1036 = vmatpush1.xpose.msra.mxu0 0.0
    %1037 = vmatprep.subr.mxu0 0.0
    %1038 = vmatpush1.xpose.msra.mxu0 0.0
    %1039 = vmatprep.subr.mxu0 0.0
    %1040 = vmatpush1.xpose.msra.mxu0 0.0
    %1041 = vmatprep.subr.mxu0 0.0
    %1042 = vmatpush1.xpose.msra.mxu0 0.0
    %1043 = vmatprep.subr.mxu0 0.0
    %1044 = vmatpush1.xpose.msra.mxu0 0.0
    %1045 = vmatprep.subr.mxu0 0.0
    %1046 = vmatpush1.xpose.msra.mxu0 0.0
    %1047 = vmatprep.subr.mxu0 0.0
    %1048 = vmatpush1.xpose.msra.mxu0 0.0
    %1049 = vmatprep.subr.mxu0 0.0
    %1050 = vmatpush1.xpose.msra.mxu0 0.0
    %1051 = vmatprep.subr.mxu0 0.0
    %1052 = vmatpush1.xpose.msra.mxu0 0.0
    %1053 = vmatprep.subr.mxu0 0.0
    %1054 = vmatpush1.xpose.msra.mxu0 0.0
    %1055 = vmatprep.subr.mxu0 0.0
    %1056 = vmatpush1.xpose.msra.mxu0 0.0
    %1057 = vmatprep.subr.mxu0 0.0
    %1058 = vmatpush1.xpose.msra.mxu0 0.0
    %1059 = vmatprep.mubr.f32.mxu0 0.0
    %1060 = vmatmul.mubr.f32.gmra.mrb[0].mxu0 %v991
    %v1061 = vpop.f32.mrb[0].mxu0
    %v1062 = vadd.f32 0.0, %v1061
    %v1063 = vpop.f32.mrb[0].mxu0
    %1064 = vdwg.mxu0
    %v1065 = vmul.f32 %v1062, 0.35355338
    %vm1066 = vcmask 36864
    %v1067 = vsel %vm1066, %v1065, -inf
    %1068 = vmax.xlane.f32.xlu0 %v1067
    %v1069 = vpop.xlane.xlu0 %1068
    %v1070 = vsub.f32 %v1065, %v1069
    %v1071 = vmul.f32 %v1070, 1.442695
    %v1072 = vpow.pop %v1071
    %v1073 = vsel %vm1066, %v1072, 0.0
    %1074 = vadd.xlane.f32.xlu0 %v1073
    %v1075 = vpop.xlane.xlu0 %1074
    %v1076 = vrcp.pop %v1075
    %v1077 = vmul.f32 %v1072, %v1076
    %1078 = vrot.lane.b32.xlu0 %v979, 64
    %v1079 = vpop.permute.xlu0 %1078
    %vm1080 = vcmask 39936
    %v1082 = vsel %vm1080, %v1077, 0
    %vm1084 = vcmask 1044480
    %v1085 = vsel %vm1084, %v1079, 0
    %1087 = vmatprep.subr.mxu0 0.0
    %1088 = vmatpush1.msra.mxu0 %v1085
    %1089 = vmatprep.subr.mxu0 0.0
    %1090 = vmatpush1.msra.mxu0 0.0
    %1091 = vmatprep.subr.mxu0 0.0
    %1092 = vmatpush1.msra.mxu0 0.0
    %1093 = vmatprep.subr.mxu0 0.0
    %1094 = vmatpush1.msra.mxu0 0.0
    %1095 = vmatprep.subr.mxu0 0.0
    %1096 = vmatpush1.msra.mxu0 0.0
    %1097 = vmatprep.subr.mxu0 0.0
    %1098 = vmatpush1.msra.mxu0 0.0
    %1099 = vmatprep.subr.mxu0 0.0
    %1100 = vmatpush1.msra.mxu0 0.0
    %1101 = vmatprep.subr.mxu0 0.0
    %1102 = vmatpush1.msra.mxu0 0.0
    %1103 = vmatprep.subr.mxu0 0.0
    %1104 = vmatpush1.msra.mxu0 0.0
    %1105 = vmatprep.subr.mxu0 0.0
    %1106 = vmatpush1.msra.mxu0 0.0
    %1107 = vmatprep.subr.mxu0 0.0
    %1108 = vmatpush1.msra.mxu0 0.0
    %1109 = vmatprep.subr.mxu0 0.0
    %1110 = vmatpush1.msra.mxu0 0.0
    %1111 = vmatprep.subr.mxu0 0.0
    %1112 = vmatpush1.msra.mxu0 0.0
    %1113 = vmatprep.subr.mxu0 0.0
    %1114 = vmatpush1.msra.mxu0 0.0
    %1115 = vmatprep.subr.mxu0 0.0
    %1116 = vmatpush1.msra.mxu0 0.0
    %1117 = vmatprep.subr.mxu0 0.0
    %1118 = vmatpush1.msra.mxu0 0.0
    %1119 = vmatprep.subr.mxu0 0.0
    %1120 = vmatpush1.msra.mxu0 0.0
    %1121 = vmatprep.subr.mxu0 0.0
    %1122 = vmatpush1.msra.mxu0 0.0
    %1123 = vmatprep.subr.mxu0 0.0
    %1124 = vmatpush1.msra.mxu0 0.0
    %1125 = vmatprep.subr.mxu0 0.0
    %1126 = vmatpush1.msra.mxu0 0.0
    %1127 = vmatprep.subr.mxu0 0.0
    %1128 = vmatpush1.msra.mxu0 0.0
    %1129 = vmatprep.subr.mxu0 0.0
    %1130 = vmatpush1.msra.mxu0 0.0
    %1131 = vmatprep.subr.mxu0 0.0
    %1132 = vmatpush1.msra.mxu0 0.0
    %1133 = vmatprep.subr.mxu0 0.0
    %1134 = vmatpush1.msra.mxu0 0.0
    %1135 = vmatprep.subr.mxu0 0.0
    %1136 = vmatpush1.msra.mxu0 0.0
    %1137 = vmatprep.subr.mxu0 0.0
    %1138 = vmatpush1.msra.mxu0 0.0
    %1139 = vmatprep.subr.mxu0 0.0
    %1140 = vmatpush1.msra.mxu0 0.0
    %1141 = vmatprep.subr.mxu0 0.0
    %1142 = vmatpush1.msra.mxu0 0.0
    %1143 = vmatprep.subr.mxu0 0.0
    %1144 = vmatpush1.msra.mxu0 0.0
    %1145 = vmatprep.subr.mxu0 0.0
    %1146 = vmatpush1.msra.mxu0 0.0
    %1147 = vmatprep.subr.mxu0 0.0
    %1148 = vmatpush1.msra.mxu0 0.0
    %1149 = vmatprep.subr.mxu0 0.0
    %1150 = vmatpush1.msra.mxu0 0.0
    %1151 = vmatprep.mubr.f32.mxu0 0.0
    %1152 = vmatmul.mubr.f32.gmra.mrb[0].mxu0 %v1082
    %v1153 = vpop.f32.mrb[0].mxu0
    %v1154 = vadd.f32 0.0, %v1153
    %v1155 = vpop.f32.mrb[0].mxu0
    %1156 = vdwg.mxu0
    %1157 = vrot.lane.b32.xlu0 %v979, 120
    %v1158 = vpop.permute.xlu0 %1157
    %1159 = vrot.lane.b32.xlu0 %v979, 88
    %v1160 = vpop.permute.xlu0 %1159
    %v1161 = vsel %vm990, %v1158, 0
    %v1163 = vsel %vm990, %v1160, 0
    %1165 = vmatprep.subr.mxu0 0.0
    %1166 = vmatpush1.xpose.msra.mxu0 %v1163
    %1167 = vmatprep.subr.mxu0 0.0
    %1168 = vmatpush1.xpose.msra.mxu0 0.0
    %1169 = vmatprep.subr.mxu0 0.0
    %1170 = vmatpush1.xpose.msra.mxu0 0.0
    %1171 = vmatprep.subr.mxu0 0.0
    %1172 = vmatpush1.xpose.msra.mxu0 0.0
    %1173 = vmatprep.subr.mxu0 0.0
    %1174 = vmatpush1.xpose.msra.mxu0 0.0
    %1175 = vmatprep.subr.mxu0 0.0
    %1176 = vmatpush1.xpose.msra.mxu0 0.0
    %1177 = vmatprep.subr.mxu0 0.0
    %1178 = vmatpush1.xpose.msra.mxu0 0.0
    %1179 = vmatprep.subr.mxu0 0.0
    %1180 = vmatpush1.xpose.msra.mxu0 0.0
    %1181 = vmatprep.subr.mxu0 0.0
    %1182 = vmatpush1.xpose.msra.mxu0 0.0
    %1183 = vmatprep.subr.mxu0 0.0
    %1184 = vmatpush1.xpose.msra.mxu0 0.0
    %1185 = vmatprep.subr.mxu0 0.0
    %1186 = vmatpush1.xpose.msra.mxu0 0.0
    %1187 = vmatprep.subr.mxu0 0.0
    %1188 = vmatpush1.xpose.msra.mxu0 0.0
    %1189 = vmatprep.subr.mxu0 0.0
    %1190 = vmatpush1.xpose.msra.mxu0 0.0
    %1191 = vmatprep.subr.mxu0 0.0
    %1192 = vmatpush1.xpose.msra.mxu0 0.0
    %1193 = vmatprep.subr.mxu0 0.0
    %1194 = vmatpush1.xpose.msra.mxu0 0.0
    %1195 = vmatprep.subr.mxu0 0.0
    %1196 = vmatpush1.xpose.msra.mxu0 0.0
    %1197 = vmatprep.subr.mxu0 0.0
    %1198 = vmatpush1.xpose.msra.mxu0 0.0
    %1199 = vmatprep.subr.mxu0 0.0
    %1200 = vmatpush1.xpose.msra.mxu0 0.0
    %1201 = vmatprep.subr.mxu0 0.0
    %1202 = vmatpush1.xpose.msra.mxu0 0.0
    %1203 = vmatprep.subr.mxu0 0.0
    %1204 = vmatpush1.xpose.msra.mxu0 0.0
    %1205 = vmatprep.subr.mxu0 0.0
    %1206 = vmatpush1.xpose.msra.mxu0 0.0
    %1207 = vmatprep.subr.mxu0 0.0
    %1208 = vmatpush1.xpose.msra.mxu0 0.0
    %1209 = vmatprep.subr.mxu0 0.0
    %1210 = vmatpush1.xpose.msra.mxu0 0.0
    %1211 = vmatprep.subr.mxu0 0.0
    %1212 = vmatpush1.xpose.msra.mxu0 0.0
    %1213 = vmatprep.subr.mxu0 0.0
    %1214 = vmatpush1.xpose.msra.mxu0 0.0
    %1215 = vmatprep.subr.mxu0 0.0
    %1216 = vmatpush1.xpose.msra.mxu0 0.0
    %1217 = vmatprep.subr.mxu0 0.0
    %1218 = vmatpush1.xpose.msra.mxu0 0.0
    %1219 = vmatprep.subr.mxu0 0.0
    %1220 = vmatpush1.xpose.msra.mxu0 0.0
    %1221 = vmatprep.subr.mxu0 0.0
    %1222 = vmatpush1.xpose.msra.mxu0 0.0
    %1223 = vmatprep.subr.mxu0 0.0
    %1224 = vmatpush1.xpose.msra.mxu0 0.0
    %1225 = vmatprep.subr.mxu0 0.0
    %1226 = vmatpush1.xpose.msra.mxu0 0.0
    %1227 = vmatprep.subr.mxu0 0.0
    %1228 = vmatpush1.xpose.msra.mxu0 0.0
    %1229 = vmatprep.mubr.f32.mxu0 0.0
    %1230 = vmatmul.mubr.f32.gmra.mrb[0].mxu0 %v1161
    %v1231 = vpop.f32.mrb[0].mxu0
    %v1232 = vadd.f32 0.0, %v1231
    %v1233 = vpop.f32.mrb[0].mxu0
    %1234 = vdwg.mxu0
    %v1235 = vmul.f32 %v1232, 0.35355338
    %v1236 = vsel %vm1066, %v1235, -inf
    %1237 = vmax.xlane.f32.xlu0 %v1236
    %v1238 = vpop.xlane.xlu0 %1237
    %v1239 = vsub.f32 %v1235, %v1238
    %v1240 = vmul.f32 %v1239, 1.442695
    %v1241 = vpow.pop %v1240
    %v1242 = vsel %vm1066, %v1241, 0.0
    %1243 = vadd.xlane.f32.xlu0 %v1242
    %v1244 = vpop.xlane.xlu0 %1243
    %v1245 = vrcp.pop %v1244
    %v1246 = vmul.f32 %v1241, %v1245
    %1247 = vrot.lane.b32.xlu0 %v979, 56
    %v1248 = vpop.permute.xlu0 %1247
    %v1250 = vsel %vm1080, %v1246, 0
    %v1252 = vsel %vm1084, %v1248, 0
    %1254 = vmatprep.subr.mxu0 0.0
    %1255 = vmatpush1.msra.mxu0 %v1252
    %1256 = vmatprep.subr.mxu0 0.0
    %1257 = vmatpush1.msra.mxu0 0.0
    %1258 = vmatprep.subr.mxu0 0.0
    %1259 = vmatpush1.msra.mxu0 0.0
    %1260 = vmatprep.subr.mxu0 0.0
    %1261 = vmatpush1.msra.mxu0 0.0
    %1262 = vmatprep.subr.mxu0 0.0
    %1263 = vmatpush1.msra.mxu0 0.0
    %1264 = vmatprep.subr.mxu0 0.0
    %1265 = vmatpush1.msra.mxu0 0.0
    %1266 = vmatprep.subr.mxu0 0.0
    %1267 = vmatpush1.msra.mxu0 0.0
    %1268 = vmatprep.subr.mxu0 0.0
    %1269 = vmatpush1.msra.mxu0 0.0
    %1270 = vmatprep.subr.mxu0 0.0
    %1271 = vmatpush1.msra.mxu0 0.0
    %1272 = vmatprep.subr.mxu0 0.0
    %1273 = vmatpush1.msra.mxu0 0.0
    %1274 = vmatprep.subr.mxu0 0.0
    %1275 = vmatpush1.msra.mxu0 0.0
    %1276 = vmatprep.subr.mxu0 0.0
    %1277 = vmatpush1.msra.mxu0 0.0
    %1278 = vmatprep.subr.mxu0 0.0
    %1279 = vmatpush1.msra.mxu0 0.0
    %1280 = vmatprep.subr.mxu0 0.0
    %1281 = vmatpush1.msra.mxu0 0.0
    %1282 = vmatprep.subr.mxu0 0.0
    %1283 = vmatpush1.msra.mxu0 0.0
    %1284 = vmatprep.subr.mxu0 0.0
    %1285 = vmatpush1.msra.mxu0 0.0
    %1286 = vmatprep.subr.mxu0 0.0
    %1287 = vmatpush1.msra.mxu0 0.0
    %1288 = vmatprep.subr.mxu0 0.0
    %1289 = vmatpush1.msra.mxu0 0.0
    %1290 = vmatprep.subr.mxu0 0.0
    %1291 = vmatpush1.msra.mxu0 0.0
    %1292 = vmatprep.subr.mxu0 0.0
    %1293 = vmatpush1.msra.mxu0 0.0
    %1294 = vmatprep.subr.mxu0 0.0
    %1295 = vmatpush1.msra.mxu0 0.0
    %1296 = vmatprep.subr.mxu0 0.0
    %1297 = vmatpush1.msra.mxu0 0.0
    %1298 = vmatprep.subr.mxu0 0.0
    %1299 = vmatpush1.msra.mxu0 0.0
    %1300 = vmatprep.subr.mxu0 0.0
    %1301 = vmatpush1.msra.mxu0 0.0
    %1302 = vmatprep.subr.mxu0 0.0
    %1303 = vmatpush1.msra.mxu0 0.0
    %1304 = vmatprep.subr.mxu0 0.0
    %1305 = vmatpush1.msra.mxu0 0.0
    %1306 = vmatprep.subr.mxu0 0.0
    %1307 = vmatpush1.msra.mxu0 0.0
    %1308 = vmatprep.subr.mxu0 0.0
    %1309 = vmatpush1.msra.mxu0 0.0
    %1310 = vmatprep.subr.mxu0 0.0
    %1311 = vmatpush1.msra.mxu0 0.0
    %1312 = vmatprep.subr.mxu0 0.0
    %1313 = vmatpush1.msra.mxu0 0.0
    %1314 = vmatprep.subr.mxu0 0.0
    %1315 = vmatpush1.msra.mxu0 0.0
    %1316 = vmatprep.subr.mxu0 0.0
    %1317 = vmatpush1.msra.mxu0 0.0
    %1318 = vmatprep.mubr.f32.mxu0 0.0
    %1319 = vmatmul.mubr.f32.gmra.mrb[0].mxu0 %v1250
    %v1320 = vpop.f32.mrb[0].mxu0
    %v1321 = vadd.f32 0.0, %v1320
    %v1322 = vpop.f32.mrb[0].mxu0
    %1323 = vdwg.mxu0
    %1324 = vrot.lane.b32.xlu0 %v979, 112
    %v1325 = vpop.permute.xlu0 %1324
    %1326 = vrot.lane.b32.xlu0 %v979, 80
    %v1327 = vpop.permute.xlu0 %1326
    %v1328 = vsel %vm990, %v1325, 0
    %v1330 = vsel %vm990, %v1327, 0
    %1332 = vmatprep.subr.mxu0 0.0
    %1333 = vmatpush1.xpose.msra.mxu0 %v1330
    %1334 = vmatprep.subr.mxu0 0.0
    %1335 = vmatpush1.xpose.msra.mxu0 0.0
    %1336 = vmatprep.subr.mxu0 0.0
    %1337 = vmatpush1.xpose.msra.mxu0 0.0
    %1338 = vmatprep.subr.mxu0 0.0
    %1339 = vmatpush1.xpose.msra.mxu0 0.0
    %1340 = vmatprep.subr.mxu0 0.0
    %1341 = vmatpush1.xpose.msra.mxu0 0.0
    %1342 = vmatprep.subr.mxu0 0.0
    %1343 = vmatpush1.xpose.msra.mxu0 0.0
    %1344 = vmatprep.subr.mxu0 0.0
    %1345 = vmatpush1.xpose.msra.mxu0 0.0
    %1346 = vmatprep.subr.mxu0 0.0
    %1347 = vmatpush1.xpose.msra.mxu0 0.0
    %1348 = vmatprep.subr.mxu0 0.0
    %1349 = vmatpush1.xpose.msra.mxu0 0.0
    %1350 = vmatprep.subr.mxu0 0.0
    %1351 = vmatpush1.xpose.msra.mxu0 0.0
    %1352 = vmatprep.subr.mxu0 0.0
    %1353 = vmatpush1.xpose.msra.mxu0 0.0
    %1354 = vmatprep.subr.mxu0 0.0
    %1355 = vmatpush1.xpose.msra.mxu0 0.0
    %1356 = vmatprep.subr.mxu0 0.0
    %1357 = vmatpush1.xpose.msra.mxu0 0.0
    %1358 = vmatprep.subr.mxu0 0.0
    %1359 = vmatpush1.xpose.msra.mxu0 0.0
    %1360 = vmatprep.subr.mxu0 0.0
    %1361 = vmatpush1.xpose.msra.mxu0 0.0
    %1362 = vmatprep.subr.mxu0 0.0
    %1363 = vmatpush1.xpose.msra.mxu0 0.0
    %1364 = vmatprep.subr.mxu0 0.0
    %1365 = vmatpush1.xpose.msra.mxu0 0.0
    %1366 = vmatprep.subr.mxu0 0.0
    %1367 = vmatpush1.xpose.msra.mxu0 0.0
    %1368 = vmatprep.subr.mxu0 0.0
    %1369 = vmatpush1.xpose.msra.mxu0 0.0
    %1370 = vmatprep.subr.mxu0 0.0
    %1371 = vmatpush1.xpose.msra.mxu0 0.0
    %1372 = vmatprep.subr.mxu0 0.0
    %1373 = vmatpush1.xpose.msra.mxu0 0.0
    %1374 = vmatprep.subr.mxu0 0.0
    %1375 = vmatpush1.xpose.msra.mxu0 0.0
    %1376 = vmatprep.subr.mxu0 0.0
    %1377 = vmatpush1.xpose.msra.mxu0 0.0
    %1378 = vmatprep.subr.mxu0 0.0
    %1379 = vmatpush1.xpose.msra.mxu0 0.0
    %1380 = vmatprep.subr.mxu0 0.0
    %1381 = vmatpush1.xpose.msra.mxu0 0.0
    %1382 = vmatprep.subr.mxu0 0.0
    %1383 = vmatpush1.xpose.msra.mxu0 0.0
    %1384 = vmatprep.subr.mxu0 0.0
    %1385 = vmatpush1.xpose.msra.mxu0 0.0
    %1386 = vmatprep.subr.mxu0 0.0
    %1387 = vmatpush1.xpose.msra.mxu0 0.0
    %1388 = vmatprep.subr.mxu0 0.0
    %1389 = vmatpush1.xpose.msra.mxu0 0.0
    %1390 = vmatprep.subr.mxu0 0.0
    %1391 = vmatpush1.xpose.msra.mxu0 0.0
    %1392 = vmatprep.subr.mxu0 0.0
    %1393 = vmatpush1.xpose.msra.mxu0 0.0
    %1394 = vmatprep.subr.mxu0 0.0
    %1395 = vmatpush1.xpose.msra.mxu0 0.0
    %1396 = vmatprep.mubr.f32.mxu0 0.0
    %1397 = vmatmul.mubr.f32.gmra.mrb[0].mxu0 %v1328
    %v1398 = vpop.f32.mrb[0].mxu0
    %v1399 = vadd.f32 0.0, %v1398
    %v1400 = vpop.f32.mrb[0].mxu0
    %1401 = vdwg.mxu0
    %v1402 = vmul.f32 %v1399, 0.35355338
    %v1403 = vsel %vm1066, %v1402, -inf
    %1404 = vmax.xlane.f32.xlu0 %v1403
    %v1405 = vpop.xlane.xlu0 %1404
    %v1406 = vsub.f32 %v1402, %v1405
    %v1407 = vmul.f32 %v1406, 1.442695
    %v1408 = vpow.pop %v1407
    %v1409 = vsel %vm1066, %v1408, 0.0
    %1410 = vadd.xlane.f32.xlu0 %v1409
    %v1411 = vpop.xlane.xlu0 %1410
    %v1412 = vrcp.pop %v1411
    %v1413 = vmul.f32 %v1408, %v1412
    %1414 = vrot.lane.b32.xlu0 %v979, 48
    %v1415 = vpop.permute.xlu0 %1414
    %v1417 = vsel %vm1080, %v1413, 0
    %v1419 = vsel %vm1084, %v1415, 0
    %1421 = vmatprep.subr.mxu0 0.0
    %1422 = vmatpush1.msra.mxu0 %v1419
    %1423 = vmatprep.subr.mxu0 0.0
    %1424 = vmatpush1.msra.mxu0 0.0
    %1425 = vmatprep.subr.mxu0 0.0
    %1426 = vmatpush1.msra.mxu0 0.0
    %1427 = vmatprep.subr.mxu0 0.0
    %1428 = vmatpush1.msra.mxu0 0.0
    %1429 = vmatprep.subr.mxu0 0.0
    %1430 = vmatpush1.msra.mxu0 0.0
    %1431 = vmatprep.subr.mxu0 0.0
    %1432 = vmatpush1.msra.mxu0 0.0
    %1433 = vmatprep.subr.mxu0 0.0
    %1434 = vmatpush1.msra.mxu0 0.0
    %1435 = vmatprep.subr.mxu0 0.0
    %1436 = vmatpush1.msra.mxu0 0.0
    %1437 = vmatprep.subr.mxu0 0.0
    %1438 = vmatpush1.msra.mxu0 0.0
    %1439 = vmatprep.subr.mxu0 0.0
    %1440 = vmatpush1.msra.mxu0 0.0
    %1441 = vmatprep.subr.mxu0 0.0
    %1442 = vmatpush1.msra.mxu0 0.0
    %1443 = vmatprep.subr.mxu0 0.0
    %1444 = vmatpush1.msra.mxu0 0.0
    %1445 = vmatprep.subr.mxu0 0.0
    %1446 = vmatpush1.msra.mxu0 0.0
    %1447 = vmatprep.subr.mxu0 0.0
    %1448 = vmatpush1.msra.mxu0 0.0
    %1449 = vmatprep.subr.mxu0 0.0
    %1450 = vmatpush1.msra.mxu0 0.0
    %1451 = vmatprep.subr.mxu0 0.0
    %1452 = vmatpush1.msra.mxu0 0.0
    %1453 = vmatprep.subr.mxu0 0.0
    %1454 = vmatpush1.msra.mxu0 0.0
    %1455 = vmatprep.subr.mxu0 0.0
    %1456 = vmatpush1.msra.mxu0 0.0
    %1457 = vmatprep.subr.mxu0 0.0
    %1458 = vmatpush1.msra.mxu0 0.0
    %1459 = vmatprep.subr.mxu0 0.0
    %1460 = vmatpush1.msra.mxu0 0.0
    %1461 = vmatprep.subr.mxu0 0.0
    %1462 = vmatpush1.msra.mxu0 0.0
    %1463 = vmatprep.subr.mxu0 0.0
    %1464 = vmatpush1.msra.mxu0 0.0
    %1465 = vmatprep.subr.mxu0 0.0
    %1466 = vmatpush1.msra.mxu0 0.0
    %1467 = vmatprep.subr.mxu0 0.0
    %1468 = vmatpush1.msra.mxu0 0.0
    %1469 = vmatprep.subr.mxu0 0.0
    %1470 = vmatpush1.msra.mxu0 0.0
    %1471 = vmatprep.subr.mxu0 0.0
    %1472 = vmatpush1.msra.mxu0 0.0
    %1473 = vmatprep.subr.mxu0 0.0
    %1474 = vmatpush1.msra.mxu0 0.0
    %1475 = vmatprep.subr.mxu0 0.0
    %1476 = vmatpush1.msra.mxu0 0.0
    %1477 = vmatprep.subr.mxu0 0.0
    %1478 = vmatpush1.msra.mxu0 0.0
    %1479 = vmatprep.subr.mxu0 0.0
    %1480 = vmatpush1.msra.mxu0 0.0
    %1481 = vmatprep.subr.mxu0 0.0
    %1482 = vmatpush1.msra.mxu0 0.0
    %1483 = vmatprep.subr.mxu0 0.0
    %1484 = vmatpush1.msra.mxu0 0.0
    %1485 = vmatprep.mubr.f32.mxu0 0.0
    %1486 = vmatmul.mubr.f32.gmra.mrb[0].mxu0 %v1417
    %v1487 = vpop.f32.mrb[0].mxu0
    %v1488 = vadd.f32 0.0, %v1487
    %v1489 = vpop.f32.mrb[0].mxu0
    %1490 = vdwg.mxu0
    %1491 = vrot.lane.b32.xlu0 %v979, 104
    %v1492 = vpop.permute.xlu0 %1491
    %1493 = vrot.lane.b32.xlu0 %v979, 72
    %v1494 = vpop.permute.xlu0 %1493
    %v1495 = vsel %vm990, %v1492, 0
    %v1497 = vsel %vm990, %v1494, 0
    %1499 = vmatprep.subr.mxu0 0.0
    %1500 = vmatpush1.xpose.msra.mxu0 %v1497
    %1501 = vmatprep.subr.mxu0 0.0
    %1502 = vmatpush1.xpose.msra.mxu0 0.0
    %1503 = vmatprep.subr.mxu0 0.0
    %1504 = vmatpush1.xpose.msra.mxu0 0.0
    %1505 = vmatprep.subr.mxu0 0.0
    %1506 = vmatpush1.xpose.msra.mxu0 0.0
    %1507 = vmatprep.subr.mxu0 0.0
    %1508 = vmatpush1.xpose.msra.mxu0 0.0
    %1509 = vmatprep.subr.mxu0 0.0
    %1510 = vmatpush1.xpose.msra.mxu0 0.0
    %1511 = vmatprep.subr.mxu0 0.0
    %1512 = vmatpush1.xpose.msra.mxu0 0.0
    %1513 = vmatprep.subr.mxu0 0.0
    %1514 = vmatpush1.xpose.msra.mxu0 0.0
    %1515 = vmatprep.subr.mxu0 0.0
    %1516 = vmatpush1.xpose.msra.mxu0 0.0
    %1517 = vmatprep.subr.mxu0 0.0
    %1518 = vmatpush1.xpose.msra.mxu0 0.0
    %1519 = vmatprep.subr.mxu0 0.0
    %1520 = vmatpush1.xpose.msra.mxu0 0.0
    %1521 = vmatprep.subr.mxu0 0.0
    %1522 = vmatpush1.xpose.msra.mxu0 0.0
    %1523 = vmatprep.subr.mxu0 0.0
    %1524 = vmatpush1.xpose.msra.mxu0 0.0
    %1525 = vmatprep.subr.mxu0 0.0
    %1526 = vmatpush1.xpose.msra.mxu0 0.0
    %1527 = vmatprep.subr.mxu0 0.0
    %1528 = vmatpush1.xpose.msra.mxu0 0.0
    %1529 = vmatprep.subr.mxu0 0.0
    %1530 = vmatpush1.xpose.msra.mxu0 0.0
    %1531 = vmatprep.subr.mxu0 0.0
    %1532 = vmatpush1.xpose.msra.mxu0 0.0
    %1533 = vmatprep.subr.mxu0 0.0
    %1534 = vmatpush1.xpose.msra.mxu0 0.0
    %1535 = vmatprep.subr.mxu0 0.0
    %1536 = vmatpush1.xpose.msra.mxu0 0.0
    %1537 = vmatprep.subr.mxu0 0.0
    %1538 = vmatpush1.xpose.msra.mxu0 0.0
    %1539 = vmatprep.subr.mxu0 0.0
    %1540 = vmatpush1.xpose.msra.mxu0 0.0
    %1541 = vmatprep.subr.mxu0 0.0
    %1542 = vmatpush1.xpose.msra.mxu0 0.0
    %1543 = vmatprep.subr.mxu0 0.0
    %1544 = vmatpush1.xpose.msra.mxu0 0.0
    %1545 = vmatprep.subr.mxu0 0.0
    %1546 = vmatpush1.xpose.msra.mxu0 0.0
    %1547 = vmatprep.subr.mxu0 0.0
    %1548 = vmatpush1.xpose.msra.mxu0 0.0
    %1549 = vmatprep.subr.mxu0 0.0
    %1550 = vmatpush1.xpose.msra.mxu0 0.0
    %1551 = vmatprep.subr.mxu0 0.0
    %1552 = vmatpush1.xpose.msra.mxu0 0.0
    %1553 = vmatprep.subr.mxu0 0.0
    %1554 = vmatpush1.xpose.msra.mxu0 0.0
    %1555 = vmatprep.subr.mxu0 0.0
    %1556 = vmatpush1.xpose.msra.mxu0 0.0
    %1557 = vmatprep.subr.mxu0 0.0
    %1558 = vmatpush1.xpose.msra.mxu0 0.0
    %1559 = vmatprep.subr.mxu0 0.0
    %1560 = vmatpush1.xpose.msra.mxu0 0.0
    %1561 = vmatprep.subr.mxu0 0.0
    %1562 = vmatpush1.xpose.msra.mxu0 0.0
    %1563 = vmatprep.mubr.f32.mxu0 0.0
    %1564 = vmatmul.mubr.f32.gmra.mrb[0].mxu0 %v1495
    %v1565 = vpop.f32.mrb[0].mxu0
    %v1566 = vadd.f32 0.0, %v1565
    %v1567 = vpop.f32.mrb[0].mxu0
    %1568 = vdwg.mxu0
    %v1569 = vmul.f32 %v1566, 0.35355338
    %v1570 = vsel %vm1066, %v1569, -inf
    %1571 = vmax.xlane.f32.xlu0 %v1570
    %v1572 = vpop.xlane.xlu0 %1571
    %v1573 = vsub.f32 %v1569, %v1572
    %v1574 = vmul.f32 %v1573, 1.442695
    %v1575 = vpow.pop %v1574
    %v1576 = vsel %vm1066, %v1575, 0.0
    %1577 = vadd.xlane.f32.xlu0 %v1576
    %v1578 = vpop.xlane.xlu0 %1577
    %v1579 = vrcp.pop %v1578
    %v1580 = vmul.f32 %v1575, %v1579
    %1581 = vrot.lane.b32.xlu0 %v979, 40
    %v1582 = vpop.permute.xlu0 %1581
    %v1584 = vsel %vm1080, %v1580, 0
    %v1586 = vsel %vm1084, %v1582, 0
    %1588 = vmatprep.subr.mxu0 0.0
    %1589 = vmatpush1.msra.mxu0 %v1586
    %1590 = vmatprep.subr.mxu0 0.0
    %1591 = vmatpush1.msra.mxu0 0.0
    %1592 = vmatprep.subr.mxu0 0.0
    %1593 = vmatpush1.msra.mxu0 0.0
    %1594 = vmatprep.subr.mxu0 0.0
    %1595 = vmatpush1.msra.mxu0 0.0
    %1596 = vmatprep.subr.mxu0 0.0
    %1597 = vmatpush1.msra.mxu0 0.0
    %1598 = vmatprep.subr.mxu0 0.0
    %1599 = vmatpush1.msra.mxu0 0.0
    %1600 = vmatprep.subr.mxu0 0.0
    %1601 = vmatpush1.msra.mxu0 0.0
    %1602 = vmatprep.subr.mxu0 0.0
    %1603 = vmatpush1.msra.mxu0 0.0
    %1604 = vmatprep.subr.mxu0 0.0
    %1605 = vmatpush1.msra.mxu0 0.0
    %1606 = vmatprep.subr.mxu0 0.0
    %1607 = vmatpush1.msra.mxu0 0.0
    %1608 = vmatprep.subr.mxu0 0.0
    %1609 = vmatpush1.msra.mxu0 0.0
    %1610 = vmatprep.subr.mxu0 0.0
    %1611 = vmatpush1.msra.mxu0 0.0
    %1612 = vmatprep.subr.mxu0 0.0
    %1613 = vmatpush1.msra.mxu0 0.0
    %1614 = vmatprep.subr.mxu0 0.0
    %1615 = vmatpush1.msra.mxu0 0.0
    %1616 = vmatprep.subr.mxu0 0.0
    %1617 = vmatpush1.msra.mxu0 0.0
    %1618 = vmatprep.subr.mxu0 0.0
    %1619 = vmatpush1.msra.mxu0 0.0
    %1620 = vmatprep.subr.mxu0 0.0
    %1621 = vmatpush1.msra.mxu0 0.0
    %1622 = vmatprep.subr.mxu0 0.0
    %1623 = vmatpush1.msra.mxu0 0.0
    %1624 = vmatprep.subr.mxu0 0.0
    %1625 = vmatpush1.msra.mxu0 0.0
    %1626 = vmatprep.subr.mxu0 0.0
    %1627 = vmatpush1.msra.mxu0 0.0
    %1628 = vmatprep.subr.mxu0 0.0
    %1629 = vmatpush1.msra.mxu0 0.0
    %1630 = vmatprep.subr.mxu0 0.0
    %1631 = vmatpush1.msra.mxu0 0.0
    %1632 = vmatprep.subr.mxu0 0.0
    %1633 = vmatpush1.msra.mxu0 0.0
    %1634 = vmatprep.subr.mxu0 0.0
    %1635 = vmatpush1.msra.mxu0 0.0
    %1636 = vmatprep.subr.mxu0 0.0
    %1637 = vmatpush1.msra.mxu0 0.0
    %1638 = vmatprep.subr.mxu0 0.0
    %1639 = vmatpush1.msra.mxu0 0.0
    %1640 = vmatprep.subr.mxu0 0.0
    %1641 = vmatpush1.msra.mxu0 0.0
    %1642 = vmatprep.subr.mxu0 0.0
    %1643 = vmatpush1.msra.mxu0 0.0
    %1644 = vmatprep.subr.mxu0 0.0
    %1645 = vmatpush1.msra.mxu0 0.0
    %1646 = vmatprep.subr.mxu0 0.0
    %1647 = vmatpush1.msra.mxu0 0.0
    %1648 = vmatprep.subr.mxu0 0.0
    %1649 = vmatpush1.msra.mxu0 0.0
    %1650 = vmatprep.subr.mxu0 0.0
    %1651 = vmatpush1.msra.mxu0 0.0
    %1652 = vmatprep.mubr.f32.mxu0 0.0
    %1653 = vmatmul.mubr.f32.gmra.mrb[0].mxu0 %v1584
    %v1654 = vpop.f32.mrb[0].mxu0
    %v1655 = vadd.f32 0.0, %v1654
    %v1656 = vpop.f32.mrb[0].mxu0
    %1657 = vdwg.mxu0
    %1659 = vrot.lane.b32.xlu0 %v1321, 8
    %v1660 = vpop.permute.xlu0 %1659
    %1663 = vrot.lane.b32.xlu0 %v1488, 16
    %v1664 = vpop.permute.xlu0 %1663
    %1667 = vrot.lane.b32.xlu0 %v1655, 24
    %v1668 = vpop.permute.xlu0 %1667
    %v1670 = vsel %vm990, %v1154, %v1660
    %vm1671 = vcmask 130048
    %v1672 = vsel %vm1671, %v1670, %v1664
    %vm1673 = vcmask 195584
    %v1674 = vsel %vm1673, %v1672, %v1668
    %vm1676 = vcmask 1042432
    %v1677 = vrot.slane %v979, 5
    %v1678 = vrot.slane %v984, 5
    %v1679 = vsel %vm1676, %v1677, %v1678
    %1680 = vrot.lane.b32.xlu0 %v1679, 96
    %v1681 = vpop.permute.xlu0 %1680
    %v1682 = vsel %vm990, %v1679, 0
    %v1684 = vsel %vm990, %v1681, 0
    %1686 = vmatprep.subr.mxu0 0.0
    %1687 = vmatpush1.xpose.msra.mxu0 %v1684
    %1688 = vmatprep.subr.mxu0 0.0
    %1689 = vmatpush1.xpose.msra.mxu0 0.0
    %1690 = vmatprep.subr.mxu0 0.0
    %1691 = vmatpush1.xpose.msra.mxu0 0.0
    %1692 = vmatprep.subr.mxu0 0.0
    %1693 = vmatpush1.xpose.msra.mxu0 0.0
    %1694 = vmatprep.subr.mxu0 0.0
    %1695 = vmatpush1.xpose.msra.mxu0 0.0
    %1696 = vmatprep.subr.mxu0 0.0
    %1697 = vmatpush1.xpose.msra.mxu0 0.0
    %1698 = vmatprep.subr.mxu0 0.0
    %1699 = vmatpush1.xpose.msra.mxu0 0.0
    %1700 = vmatprep.subr.mxu0 0.0
    %1701 = vmatpush1.xpose.msra.mxu0 0.0
    %1702 = vmatprep.subr.mxu0 0.0
    %1703 = vmatpush1.xpose.msra.mxu0 0.0
    %1704 = vmatprep.subr.mxu0 0.0
    %1705 = vmatpush1.xpose.msra.mxu0 0.0
    %1706 = vmatprep.subr.mxu0 0.0
    %1707 = vmatpush1.xpose.msra.mxu0 0.0
    %1708 = vmatprep.subr.mxu0 0.0
    %1709 = vmatpush1.xpose.msra.mxu0 0.0
    %1710 = vmatprep.subr.mxu0 0.0
    %1711 = vmatpush1.xpose.msra.mxu0 0.0
    %1712 = vmatprep.subr.mxu0 0.0
    %1713 = vmatpush1.xpose.msra.mxu0 0.0
    %1714 = vmatprep.subr.mxu0 0.0
    %1715 = vmatpush1.xpose.msra.mxu0 0.0
    %1716 = vmatprep.subr.mxu0 0.0
    %1717 = vmatpush1.xpose.msra.mxu0 0.0
    %1718 = vmatprep.subr.mxu0 0.0
    %1719 = vmatpush1.xpose.msra.mxu0 0.0
    %1720 = vmatprep.subr.mxu0 0.0
    %1721 = vmatpush1.xpose.msra.mxu0 0.0
    %1722 = vmatprep.subr.mxu0 0.0
    %1723 = vmatpush1.xpose.msra.mxu0 0.0
    %1724 = vmatprep.subr.mxu0 0.0
    %1725 = vmatpush1.xpose.msra.mxu0 0.0
    %1726 = vmatprep.subr.mxu0 0.0
    %1727 = vmatpush1.xpose.msra.mxu0 0.0
    %1728 = vmatprep.subr.mxu0 0.0
    %1729 = vmatpush1.xpose.msra.mxu0 0.0
    %1730 = vmatprep.subr.mxu0 0.0
    %1731 = vmatpush1.xpose.msra.mxu0 0.0
    %1732 = vmatprep.subr.mxu0 0.0
    %1733 = vmatpush1.xpose.msra.mxu0 0.0
    %1734 = vmatprep.subr.mxu0 0.0
    %1735 = vmatpush1.xpose.msra.mxu0 0.0
    %1736 = vmatprep.subr.mxu0 0.0
    %1737 = vmatpush1.xpose.msra.mxu0 0.0
    %1738 = vmatprep.subr.mxu0 0.0
    %1739 = vmatpush1.xpose.msra.mxu0 0.0
    %1740 = vmatprep.subr.mxu0 0.0
    %1741 = vmatpush1.xpose.msra.mxu0 0.0
    %1742 = vmatprep.subr.mxu0 0.0
    %1743 = vmatpush1.xpose.msra.mxu0 0.0
    %1744 = vmatprep.subr.mxu0 0.0
    %1745 = vmatpush1.xpose.msra.mxu0 0.0
    %1746 = vmatprep.subr.mxu0 0.0
    %1747 = vmatpush1.xpose.msra.mxu0 0.0
    %1748 = vmatprep.subr.mxu0 0.0
    %1749 = vmatpush1.xpose.msra.mxu0 0.0
    %1750 = vmatprep.mubr.f32.mxu0 0.0
    %1751 = vmatmul.mubr.f32.gmra.mrb[0].mxu0 %v1682
    %v1752 = vpop.f32.mrb[0].mxu0
    %v1753 = vadd.f32 0.0, %v1752
    %v1754 = vpop.f32.mrb[0].mxu0
    %1755 = vdwg.mxu0
    %v1756 = vmul.f32 %v1753, 0.35355338
    %v1757 = vsel %vm1066, %v1756, -inf
    %1758 = vmax.xlane.f32.xlu0 %v1757
    %v1759 = vpop.xlane.xlu0 %1758
    %v1760 = vsub.f32 %v1756, %v1759
    %v1761 = vmul.f32 %v1760, 1.442695
    %v1762 = vpow.pop %v1761
    %v1763 = vsel %vm1066, %v1762, 0.0
    %1764 = vadd.xlane.f32.xlu0 %v1763
    %v1765 = vpop.xlane.xlu0 %1764
    %v1766 = vrcp.pop %v1765
    %v1767 = vmul.f32 %v1762, %v1766
    %1768 = vrot.lane.b32.xlu0 %v1679, 64
    %v1769 = vpop.permute.xlu0 %1768
    %v1771 = vsel %vm1080, %v1767, 0
    %v1773 = vsel %vm1084, %v1769, 0
    %1775 = vmatprep.subr.mxu0 0.0
    %1776 = vmatpush1.msra.mxu0 %v1773
    %1777 = vmatprep.subr.mxu0 0.0
    %1778 = vmatpush1.msra.mxu0 0.0
    %1779 = vmatprep.subr.mxu0 0.0
    %1780 = vmatpush1.msra.mxu0 0.0
    %1781 = vmatprep.subr.mxu0 0.0
    %1782 = vmatpush1.msra.mxu0 0.0
    %1783 = vmatprep.subr.mxu0 0.0
    %1784 = vmatpush1.msra.mxu0 0.0
    %1785 = vmatprep.subr.mxu0 0.0
    %1786 = vmatpush1.msra.mxu0 0.0
    %1787 = vmatprep.subr.mxu0 0.0
    %1788 = vmatpush1.msra.mxu0 0.0
    %1789 = vmatprep.subr.mxu0 0.0
    %1790 = vmatpush1.msra.mxu0 0.0
    %1791 = vmatprep.subr.mxu0 0.0
    %1792 = vmatpush1.msra.mxu0 0.0
    %1793 = vmatprep.subr.mxu0 0.0
    %1794 = vmatpush1.msra.mxu0 0.0
    %1795 = vmatprep.subr.mxu0 0.0
    %1796 = vmatpush1.msra.mxu0 0.0
    %1797 = vmatprep.subr.mxu0 0.0
    %1798 = vmatpush1.msra.mxu0 0.0
    %1799 = vmatprep.subr.mxu0 0.0
    %1800 = vmatpush1.msra.mxu0 0.0
    %1801 = vmatprep.subr.mxu0 0.0
    %1802 = vmatpush1.msra.mxu0 0.0
    %1803 = vmatprep.subr.mxu0 0.0
    %1804 = vmatpush1.msra.mxu0 0.0
    %1805 = vmatprep.subr.mxu0 0.0
    %1806 = vmatpush1.msra.mxu0 0.0
    %1807 = vmatprep.subr.mxu0 0.0
    %1808 = vmatpush1.msra.mxu0 0.0
    %1809 = vmatprep.subr.mxu0 0.0
    %1810 = vmatpush1.msra.mxu0 0.0
    %1811 = vmatprep.subr.mxu0 0.0
    %1812 = vmatpush1.msra.mxu0 0.0
    %1813 = vmatprep.subr.mxu0 0.0
    %1814 = vmatpush1.msra.mxu0 0.0
    %1815 = vmatprep.subr.mxu0 0.0
    %1816 = vmatpush1.msra.mxu0 0.0
    %1817 = vmatprep.subr.mxu0 0.0
    %1818 = vmatpush1.msra.mxu0 0.0
    %1819 = vmatprep.subr.mxu0 0.0
    %1820 = vmatpush1.msra.mxu0 0.0
    %1821 = vmatprep.subr.mxu0 0.0
    %1822 = vmatpush1.msra.mxu0 0.0
    %1823 = vmatprep.subr.mxu0 0.0
    %1824 = vmatpush1.msra.mxu0 0.0
    %1825 = vmatprep.subr.mxu0 0.0
    %1826 = vmatpush1.msra.mxu0 0.0
    %1827 = vmatprep.subr.mxu0 0.0
    %1828 = vmatpush1.msra.mxu0 0.0
    %1829 = vmatprep.subr.mxu0 0.0
    %1830 = vmatpush1.msra.mxu0 0.0
    %1831 = vmatprep.subr.mxu0 0.0
    %1832 = vmatpush1.msra.mxu0 0.0
    %1833 = vmatprep.subr.mxu0 0.0
    %1834 = vmatpush1.msra.mxu0 0.0
    %1835 = vmatprep.subr.mxu0 0.0
    %1836 = vmatpush1.msra.mxu0 0.0
    %1837 = vmatprep.subr.mxu0 0.0
    %1838 = vmatpush1.msra.mxu0 0.0
    %1839 = vmatprep.mubr.f32.mxu0 0.0
    %1840 = vmatmul.mubr.f32.gmra.mrb[0].mxu0 %v1771
    %v1841 = vpop.f32.mrb[0].mxu0
    %v1842 = vadd.f32 0.0, %v1841
    %v1843 = vpop.f32.mrb[0].mxu0
    %1844 = vdwg.mxu0
    %1845 = vrot.lane.b32.xlu0 %v1679, 120
    %v1846 = vpop.permute.xlu0 %1845
    %1847 = vrot.lane.b32.xlu0 %v1679, 88
    %v1848 = vpop.permute.xlu0 %1847
    %v1849 = vsel %vm990, %v1846, 0
    %v1851 = vsel %vm990, %v1848, 0
    %1853 = vmatprep.subr.mxu0 0.0
    %1854 = vmatpush1.xpose.msra.mxu0 %v1851
    %1855 = vmatprep.subr.mxu0 0.0
    %1856 = vmatpush1.xpose.msra.mxu0 0.0
    %1857 = vmatprep.subr.mxu0 0.0
    %1858 = vmatpush1.xpose.msra.mxu0 0.0
    %1859 = vmatprep.subr.mxu0 0.0
    %1860 = vmatpush1.xpose.msra.mxu0 0.0
    %1861 = vmatprep.subr.mxu0 0.0
    %1862 = vmatpush1.xpose.msra.mxu0 0.0
    %1863 = vmatprep.subr.mxu0 0.0
    %1864 = vmatpush1.xpose.msra.mxu0 0.0
    %1865 = vmatprep.subr.mxu0 0.0
    %1866 = vmatpush1.xpose.msra.mxu0 0.0
    %1867 = vmatprep.subr.mxu0 0.0
    %1868 = vmatpush1.xpose.msra.mxu0 0.0
    %1869 = vmatprep.subr.mxu0 0.0
    %1870 = vmatpush1.xpose.msra.mxu0 0.0
    %1871 = vmatprep.subr.mxu0 0.0
    %1872 = vmatpush1.xpose.msra.mxu0 0.0
    %1873 = vmatprep.subr.mxu0 0.0
    %1874 = vmatpush1.xpose.msra.mxu0 0.0
    %1875 = vmatprep.subr.mxu0 0.0
    %1876 = vmatpush1.xpose.msra.mxu0 0.0
    %1877 = vmatprep.subr.mxu0 0.0
    %1878 = vmatpush1.xpose.msra.mxu0 0.0
    %1879 = vmatprep.subr.mxu0 0.0
    %1880 = vmatpush1.xpose.msra.mxu0 0.0
    %1881 = vmatprep.subr.mxu0 0.0
    %1882 = vmatpush1.xpose.msra.mxu0 0.0
    %1883 = vmatprep.subr.mxu0 0.0
    %1884 = vmatpush1.xpose.msra.mxu0 0.0
    %1885 = vmatprep.subr.mxu0 0.0
    %1886 = vmatpush1.xpose.msra.mxu0 0.0
    %1887 = vmatprep.subr.mxu0 0.0
    %1888 = vmatpush1.xpose.msra.mxu0 0.0
    %1889 = vmatprep.subr.mxu0 0.0
    %1890 = vmatpush1.xpose.msra.mxu0 0.0
    %1891 = vmatprep.subr.mxu0 0.0
    %1892 = vmatpush1.xpose.msra.mxu0 0.0
    %1893 = vmatprep.subr.mxu0 0.0
    %1894 = vmatpush1.xpose.msra.mxu0 0.0
    %1895 = vmatprep.subr.mxu0 0.0
    %1896 = vmatpush1.xpose.msra.mxu0 0.0
    %1897 = vmatprep.subr.mxu0 0.0
    %1898 = vmatpush1.xpose.msra.mxu0 0.0
    %1899 = vmatprep.subr.mxu0 0.0
    %1900 = vmatpush1.xpose.msra.mxu0 0.0
    %1901 = vmatprep.subr.mxu0 0.0
    %1902 = vmatpush1.xpose.msra.mxu0 0.0
    %1903 = vmatprep.subr.mxu0 0.0
    %1904 = vmatpush1.xpose.msra.mxu0 0.0
    %1905 = vmatprep.subr.mxu0 0.0
    %1906 = vmatpush1.xpose.msra.mxu0 0.0
    %1907 = vmatprep.subr.mxu0 0.0
    %1908 = vmatpush1.xpose.msra.mxu0 0.0
    %1909 = vmatprep.subr.mxu0 0.0
    %1910 = vmatpush1.xpose.msra.mxu0 0.0
    %1911 = vmatprep.subr.mxu0 0.0
    %1912 = vmatpush1.xpose.msra.mxu0 0.0
    %1913 = vmatprep.subr.mxu0 0.0
    %1914 = vmatpush1.xpose.msra.mxu0 0.0
    %1915 = vmatprep.subr.mxu0 0.0
    %1916 = vmatpush1.xpose.msra.mxu0 0.0
    %1917 = vmatprep.mubr.f32.mxu0 0.0
    %1918 = vmatmul.mubr.f32.gmra.mrb[0].mxu0 %v1849
    %v1919 = vpop.f32.mrb[0].mxu0
    %v1920 = vadd.f32 0.0, %v1919
    %v1921 = vpop.f32.mrb[0].mxu0
    %1922 = vdwg.mxu0
    %v1923 = vmul.f32 %v1920, 0.35355338
    %v1924 = vsel %vm1066, %v1923, -inf
    %1925 = vmax.xlane.f32.xlu0 %v1924
    %v1926 = vpop.xlane.xlu0 %1925
    %v1927 = vsub.f32 %v1923, %v1926
    %v1928 = vmul.f32 %v1927, 1.442695
    %v1929 = vpow.pop %v1928
    %v1930 = vsel %vm1066, %v1929, 0.0
    %1931 = vadd.xlane.f32.xlu0 %v1930
    %v1932 = vpop.xlane.xlu0 %1931
    %v1933 = vrcp.pop %v1932
    %v1934 = vmul.f32 %v1929, %v1933
    %1935 = vrot.lane.b32.xlu0 %v1679, 56
    %v1936 = vpop.permute.xlu0 %1935
    %v1938 = vsel %vm1080, %v1934, 0
    %v1940 = vsel %vm1084, %v1936, 0
    %1942 = vmatprep.subr.mxu0 0.0
    %1943 = vmatpush1.msra.mxu0 %v1940
    %1944 = vmatprep.subr.mxu0 0.0
    %1945 = vmatpush1.msra.mxu0 0.0
    %1946 = vmatprep.subr.mxu0 0.0
    %1947 = vmatpush1.msra.mxu0 0.0
    %1948 = vmatprep.subr.mxu0 0.0
    %1949 = vmatpush1.msra.mxu0 0.0
    %1950 = vmatprep.subr.mxu0 0.0
    %1951 = vmatpush1.msra.mxu0 0.0
    %1952 = vmatprep.subr.mxu0 0.0
    %1953 = vmatpush1.msra.mxu0 0.0
    %1954 = vmatprep.subr.mxu0 0.0
    %1955 = vmatpush1.msra.mxu0 0.0
    %1956 = vmatprep.subr.mxu0 0.0
    %1957 = vmatpush1.msra.mxu0 0.0
    %1958 = vmatprep.subr.mxu0 0.0
    %1959 = vmatpush1.msra.mxu0 0.0
    %1960 = vmatprep.subr.mxu0 0.0
    %1961 = vmatpush1.msra.mxu0 0.0
    %1962 = vmatprep.subr.mxu0 0.0
    %1963 = vmatpush1.msra.mxu0 0.0
    %1964 = vmatprep.subr.mxu0 0.0
    %1965 = vmatpush1.msra.mxu0 0.0
    %1966 = vmatprep.subr.mxu0 0.0
    %1967 = vmatpush1.msra.mxu0 0.0
    %1968 = vmatprep.subr.mxu0 0.0
    %1969 = vmatpush1.msra.mxu0 0.0
    %1970 = vmatprep.subr.mxu0 0.0
    %1971 = vmatpush1.msra.mxu0 0.0
    %1972 = vmatprep.subr.mxu0 0.0
    %1973 = vmatpush1.msra.mxu0 0.0
    %1974 = vmatprep.subr.mxu0 0.0
    %1975 = vmatpush1.msra.mxu0 0.0
    %1976 = vmatprep.subr.mxu0 0.0
    %1977 = vmatpush1.msra.mxu0 0.0
    %1978 = vmatprep.subr.mxu0 0.0
    %1979 = vmatpush1.msra.mxu0 0.0
    %1980 = vmatprep.subr.mxu0 0.0
    %1981 = vmatpush1.msra.mxu0 0.0
    %1982 = vmatprep.subr.mxu0 0.0
    %1983 = vmatpush1.msra.mxu0 0.0
    %1984 = vmatprep.subr.mxu0 0.0
    %1985 = vmatpush1.msra.mxu0 0.0
    %1986 = vmatprep.subr.mxu0 0.0
    %1987 = vmatpush1.msra.mxu0 0.0
    %1988 = vmatprep.subr.mxu0 0.0
    %1989 = vmatpush1.msra.mxu0 0.0
    %1990 = vmatprep.subr.mxu0 0.0
    %1991 = vmatpush1.msra.mxu0 0.0
    %1992 = vmatprep.subr.mxu0 0.0
    %1993 = vmatpush1.msra.mxu0 0.0
    %1994 = vmatprep.subr.mxu0 0.0
    %1995 = vmatpush1.msra.mxu0 0.0
    %1996 = vmatprep.subr.mxu0 0.0
    %1997 = vmatpush1.msra.mxu0 0.0
    %1998 = vmatprep.subr.mxu0 0.0
    %1999 = vmatpush1.msra.mxu0 0.0
    %2000 = vmatprep.subr.mxu0 0.0
    %2001 = vmatpush1.msra.mxu0 0.0
    %2002 = vmatprep.subr.mxu0 0.0
    %2003 = vmatpush1.msra.mxu0 0.0
    %2004 = vmatprep.subr.mxu0 0.0
    %2005 = vmatpush1.msra.mxu0 0.0
    %2006 = vmatprep.mubr.f32.mxu0 0.0
    %2007 = vmatmul.mubr.f32.gmra.mrb[0].mxu0 %v1938
    %v2008 = vpop.f32.mrb[0].mxu0
    %v2009 = vadd.f32 0.0, %v2008
    %v2010 = vpop.f32.mrb[0].mxu0
    %2011 = vdwg.mxu0
    %2012 = vrot.lane.b32.xlu0 %v1679, 112
    %v2013 = vpop.permute.xlu0 %2012
    %2014 = vrot.lane.b32.xlu0 %v1679, 80
    %v2015 = vpop.permute.xlu0 %2014
    %v2016 = vsel %vm990, %v2013, 0
    %v2018 = vsel %vm990, %v2015, 0
    %2020 = vmatprep.subr.mxu0 0.0
    %2021 = vmatpush1.xpose.msra.mxu0 %v2018
    %2022 = vmatprep.subr.mxu0 0.0
    %2023 = vmatpush1.xpose.msra.mxu0 0.0
    %2024 = vmatprep.subr.mxu0 0.0
    %2025 = vmatpush1.xpose.msra.mxu0 0.0
    %2026 = vmatprep.subr.mxu0 0.0
    %2027 = vmatpush1.xpose.msra.mxu0 0.0
    %2028 = vmatprep.subr.mxu0 0.0
    %2029 = vmatpush1.xpose.msra.mxu0 0.0
    %2030 = vmatprep.subr.mxu0 0.0
    %2031 = vmatpush1.xpose.msra.mxu0 0.0
    %2032 = vmatprep.subr.mxu0 0.0
    %2033 = vmatpush1.xpose.msra.mxu0 0.0
    %2034 = vmatprep.subr.mxu0 0.0
    %2035 = vmatpush1.xpose.msra.mxu0 0.0
    %2036 = vmatprep.subr.mxu0 0.0
    %2037 = vmatpush1.xpose.msra.mxu0 0.0
    %2038 = vmatprep.subr.mxu0 0.0
    %2039 = vmatpush1.xpose.msra.mxu0 0.0
    %2040 = vmatprep.subr.mxu0 0.0
    %2041 = vmatpush1.xpose.msra.mxu0 0.0
    %2042 = vmatprep.subr.mxu0 0.0
    %2043 = vmatpush1.xpose.msra.mxu0 0.0
    %2044 = vmatprep.subr.mxu0 0.0
    %2045 = vmatpush1.xpose.msra.mxu0 0.0
    %2046 = vmatprep.subr.mxu0 0.0
    %2047 = vmatpush1.xpose.msra.mxu0 0.0
    %2048 = vmatprep.subr.mxu0 0.0
    %2049 = vmatpush1.xpose.msra.mxu0 0.0
    %2050 = vmatprep.subr.mxu0 0.0
    %2051 = vmatpush1.xpose.msra.mxu0 0.0
    %2052 = vmatprep.subr.mxu0 0.0
    %2053 = vmatpush1.xpose.msra.mxu0 0.0
    %2054 = vmatprep.subr.mxu0 0.0
    %2055 = vmatpush1.xpose.msra.mxu0 0.0
    %2056 = vmatprep.subr.mxu0 0.0
    %2057 = vmatpush1.xpose.msra.mxu0 0.0
    %2058 = vmatprep.subr.mxu0 0.0
    %2059 = vmatpush1.xpose.msra.mxu0 0.0
    %2060 = vmatprep.subr.mxu0 0.0
    %2061 = vmatpush1.xpose.msra.mxu0 0.0
    %2062 = vmatprep.subr.mxu0 0.0
    %2063 = vmatpush1.xpose.msra.mxu0 0.0
    %2064 = vmatprep.subr.mxu0 0.0
    %2065 = vmatpush1.xpose.msra.mxu0 0.0
    %2066 = vmatprep.subr.mxu0 0.0
    %2067 = vmatpush1.xpose.msra.mxu0 0.0
    %2068 = vmatprep.subr.mxu0 0.0
    %2069 = vmatpush1.xpose.msra.mxu0 0.0
    %2070 = vmatprep.subr.mxu0 0.0
    %2071 = vmatpush1.xpose.msra.mxu0 0.0
    %2072 = vmatprep.subr.mxu0 0.0
    %2073 = vmatpush1.xpose.msra.mxu0 0.0
    %2074 = vmatprep.subr.mxu0 0.0
    %2075 = vmatpush1.xpose.msra.mxu0 0.0
    %2076 = vmatprep.subr.mxu0 0.0
    %2077 = vmatpush1.xpose.msra.mxu0 0.0
    %2078 = vmatprep.subr.mxu0 0.0
    %2079 = vmatpush1.xpose.msra.mxu0 0.0
    %2080 = vmatprep.subr.mxu0 0.0
    %2081 = vmatpush1.xpose.msra.mxu0 0.0
    %2082 = vmatprep.subr.mxu0 0.0
    %2083 = vmatpush1.xpose.msra.mxu0 0.0
    %2084 = vmatprep.mubr.f32.mxu0 0.0
    %2085 = vmatmul.mubr.f32.gmra.mrb[0].mxu0 %v2016
    %v2086 = vpop.f32.mrb[0].mxu0
    %v2087 = vadd.f32 0.0, %v2086
    %v2088 = vpop.f32.mrb[0].mxu0
    %2089 = vdwg.mxu0
    %v2090 = vmul.f32 %v2087, 0.35355338
    %v2091 = vsel %vm1066, %v2090, -inf
    %2092 = vmax.xlane.f32.xlu0 %v2091
    %v2093 = vpop.xlane.xlu0 %2092
    %v2094 = vsub.f32 %v2090, %v2093
    %v2095 = vmul.f32 %v2094, 1.442695
    %v2096 = vpow.pop %v2095
    %v2097 = vsel %vm1066, %v2096, 0.0
    %2098 = vadd.xlane.f32.xlu0 %v2097
    %v2099 = vpop.xlane.xlu0 %2098
    %v2100 = vrcp.pop %v2099
    %v2101 = vmul.f32 %v2096, %v2100
    %2102 = vrot.lane.b32.xlu0 %v1679, 48
    %v2103 = vpop.permute.xlu0 %2102
    %v2105 = vsel %vm1080, %v2101, 0
    %v2107 = vsel %vm1084, %v2103, 0
    %2109 = vmatprep.subr.mxu0 0.0
    %2110 = vmatpush1.msra.mxu0 %v2107
    %2111 = vmatprep.subr.mxu0 0.0
    %2112 = vmatpush1.msra.mxu0 0.0
    %2113 = vmatprep.subr.mxu0 0.0
    %2114 = vmatpush1.msra.mxu0 0.0
    %2115 = vmatprep.subr.mxu0 0.0
    %2116 = vmatpush1.msra.mxu0 0.0
    %2117 = vmatprep.subr.mxu0 0.0
    %2118 = vmatpush1.msra.mxu0 0.0
    %2119 = vmatprep.subr.mxu0 0.0
    %2120 = vmatpush1.msra.mxu0 0.0
    %2121 = vmatprep.subr.mxu0 0.0
    %2122 = vmatpush1.msra.mxu0 0.0
    %2123 = vmatprep.subr.mxu0 0.0
    %2124 = vmatpush1.msra.mxu0 0.0
    %2125 = vmatprep.subr.mxu0 0.0
    %2126 = vmatpush1.msra.mxu0 0.0
    %2127 = vmatprep.subr.mxu0 0.0
    %2128 = vmatpush1.msra.mxu0 0.0
    %2129 = vmatprep.subr.mxu0 0.0
    %2130 = vmatpush1.msra.mxu0 0.0
    %2131 = vmatprep.subr.mxu0 0.0
    %2132 = vmatpush1.msra.mxu0 0.0
    %2133 = vmatprep.subr.mxu0 0.0
    %2134 = vmatpush1.msra.mxu0 0.0
    %2135 = vmatprep.subr.mxu0 0.0
    %2136 = vmatpush1.msra.mxu0 0.0
    %2137 = vmatprep.subr.mxu0 0.0
    %2138 = vmatpush1.msra.mxu0 0.0
    %2139 = vmatprep.subr.mxu0 0.0
    %2140 = vmatpush1.msra.mxu0 0.0
    %2141 = vmatprep.subr.mxu0 0.0
    %2142 = vmatpush1.msra.mxu0 0.0
    %2143 = vmatprep.subr.mxu0 0.0
    %2144 = vmatpush1.msra.mxu0 0.0
    %2145 = vmatprep.subr.mxu0 0.0
    %2146 = vmatpush1.msra.mxu0 0.0
    %2147 = vmatprep.subr.mxu0 0.0
    %2148 = vmatpush1.msra.mxu0 0.0
    %2149 = vmatprep.subr.mxu0 0.0
    %2150 = vmatpush1.msra.mxu0 0.0
    %2151 = vmatprep.subr.mxu0 0.0
    %2152 = vmatpush1.msra.mxu0 0.0
    %2153 = vmatprep.subr.mxu0 0.0
    %2154 = vmatpush1.msra.mxu0 0.0
    %2155 = vmatprep.subr.mxu0 0.0
    %2156 = vmatpush1.msra.mxu0 0.0
    %2157 = vmatprep.subr.mxu0 0.0
    %2158 = vmatpush1.msra.mxu0 0.0
    %2159 = vmatprep.subr.mxu0 0.0
    %2160 = vmatpush1.msra.mxu0 0.0
    %2161 = vmatprep.subr.mxu0 0.0
    %2162 = vmatpush1.msra.mxu0 0.0
    %2163 = vmatprep.subr.mxu0 0.0
    %2164 = vmatpush1.msra.mxu0 0.0
    %2165 = vmatprep.subr.mxu0 0.0
    %2166 = vmatpush1.msra.mxu0 0.0
    %2167 = vmatprep.subr.mxu0 0.0
    %2168 = vmatpush1.msra.mxu0 0.0
    %2169 = vmatprep.subr.mxu0 0.0
    %2170 = vmatpush1.msra.mxu0 0.0
    %2171 = vmatprep.subr.mxu0 0.0
    %2172 = vmatpush1.msra.mxu0 0.0
    %2173 = vmatprep.mubr.f32.mxu0 0.0
    %2174 = vmatmul.mubr.f32.gmra.mrb[0].mxu0 %v2105
    %v2175 = vpop.f32.mrb[0].mxu0
    %v2176 = vadd.f32 0.0, %v2175
    %v2177 = vpop.f32.mrb[0].mxu0
    %2178 = vdwg.mxu0
    %2179 = vrot.lane.b32.xlu0 %v1679, 104
    %v2180 = vpop.permute.xlu0 %2179
    %2181 = vrot.lane.b32.xlu0 %v1679, 72
    %v2182 = vpop.permute.xlu0 %2181
    %v2183 = vsel %vm990, %v2180, 0
    %v2185 = vsel %vm990, %v2182, 0
    %2187 = vmatprep.subr.mxu0 0.0
    %2188 = vmatpush1.xpose.msra.mxu0 %v2185
    %2189 = vmatprep.subr.mxu0 0.0
    %2190 = vmatpush1.xpose.msra.mxu0 0.0
    %2191 = vmatprep.subr.mxu0 0.0
    %2192 = vmatpush1.xpose.msra.mxu0 0.0
    %2193 = vmatprep.subr.mxu0 0.0
    %2194 = vmatpush1.xpose.msra.mxu0 0.0
    %2195 = vmatprep.subr.mxu0 0.0
    %2196 = vmatpush1.xpose.msra.mxu0 0.0
    %2197 = vmatprep.subr.mxu0 0.0
    %2198 = vmatpush1.xpose.msra.mxu0 0.0
    %2199 = vmatprep.subr.mxu0 0.0
    %2200 = vmatpush1.xpose.msra.mxu0 0.0
    %2201 = vmatprep.subr.mxu0 0.0
    %2202 = vmatpush1.xpose.msra.mxu0 0.0
    %2203 = vmatprep.subr.mxu0 0.0
    %2204 = vmatpush1.xpose.msra.mxu0 0.0
    %2205 = vmatprep.subr.mxu0 0.0
    %2206 = vmatpush1.xpose.msra.mxu0 0.0
    %2207 = vmatprep.subr.mxu0 0.0
    %2208 = vmatpush1.xpose.msra.mxu0 0.0
    %2209 = vmatprep.subr.mxu0 0.0
    %2210 = vmatpush1.xpose.msra.mxu0 0.0
    %2211 = vmatprep.subr.mxu0 0.0
    %2212 = vmatpush1.xpose.msra.mxu0 0.0
    %2213 = vmatprep.subr.mxu0 0.0
    %2214 = vmatpush1.xpose.msra.mxu0 0.0
    %2215 = vmatprep.subr.mxu0 0.0
    %2216 = vmatpush1.xpose.msra.mxu0 0.0
    %2217 = vmatprep.subr.mxu0 0.0
    %2218 = vmatpush1.xpose.msra.mxu0 0.0
    %2219 = vmatprep.subr.mxu0 0.0
    %2220 = vmatpush1.xpose.msra.mxu0 0.0
    %2221 = vmatprep.subr.mxu0 0.0
    %2222 = vmatpush1.xpose.msra.mxu0 0.0
    %2223 = vmatprep.subr.mxu0 0.0
    %2224 = vmatpush1.xpose.msra.mxu0 0.0
    %2225 = vmatprep.subr.mxu0 0.0
    %2226 = vmatpush1.xpose.msra.mxu0 0.0
    %2227 = vmatprep.subr.mxu0 0.0
    %2228 = vmatpush1.xpose.msra.mxu0 0.0
    %2229 = vmatprep.subr.mxu0 0.0
    %2230 = vmatpush1.xpose.msra.mxu0 0.0
    %2231 = vmatprep.subr.mxu0 0.0
    %2232 = vmatpush1.xpose.msra.mxu0 0.0
    %2233 = vmatprep.subr.mxu0 0.0
    %2234 = vmatpush1.xpose.msra.mxu0 0.0
    %2235 = vmatprep.subr.mxu0 0.0
    %2236 = vmatpush1.xpose.msra.mxu0 0.0
    %2237 = vmatprep.subr.mxu0 0.0
    %2238 = vmatpush1.xpose.msra.mxu0 0.0
    %2239 = vmatprep.subr.mxu0 0.0
    %2240 = vmatpush1.xpose.msra.mxu0 0.0
    %2241 = vmatprep.subr.mxu0 0.0
    %2242 = vmatpush1.xpose.msra.mxu0 0.0
    %2243 = vmatprep.subr.mxu0 0.0
    %2244 = vmatpush1.xpose.msra.mxu0 0.0
    %2245 = vmatprep.subr.mxu0 0.0
    %2246 = vmatpush1.xpose.msra.mxu0 0.0
    %2247 = vmatprep.subr.mxu0 0.0
    %2248 = vmatpush1.xpose.msra.mxu0 0.0
    %2249 = vmatprep.subr.mxu0 0.0
    %2250 = vmatpush1.xpose.msra.mxu0 0.0
    %2251 = vmatprep.mubr.f32.mxu0 0.0
    %2252 = vmatmul.mubr.f32.gmra.mrb[0].mxu0 %v2183
    %v2253 = vpop.f32.mrb[0].mxu0
    %v2254 = vadd.f32 0.0, %v2253
    %v2255 = vpop.f32.mrb[0].mxu0
    %2256 = vdwg.mxu0
    %v2257 = vmul.f32 %v2254, 0.35355338
    %v2258 = vsel %vm1066, %v2257, -inf
    %2259 = vmax.xlane.f32.xlu0 %v2258
    %v2260 = vpop.xlane.xlu0 %2259
    %v2261 = vsub.f32 %v2257, %v2260
    %v2262 = vmul.f32 %v2261, 1.442695
    %v2263 = vpow.pop %v2262
    %v2264 = vsel %vm1066, %v2263, 0.0
    %2265 = vadd.xlane.f32.xlu0 %v2264
    %v2266 = vpop.xlane.xlu0 %2265
    %v2267 = vrcp.pop %v2266
    %v2268 = vmul.f32 %v2263, %v2267
    %2269 = vrot.lane.b32.xlu0 %v1679, 40
    %v2270 = vpop.permute.xlu0 %2269
    %v2272 = vsel %vm1080, %v2268, 0
    %v2274 = vsel %vm1084, %v2270, 0
    %2276 = vmatprep.subr.mxu0 0.0
    %2277 = vmatpush1.msra.mxu0 %v2274
    %2278 = vmatprep.subr.mxu0 0.0
    %2279 = vmatpush1.msra.mxu0 0.0
    %2280 = vmatprep.subr.mxu0 0.0
    %2281 = vmatpush1.msra.mxu0 0.0
    %2282 = vmatprep.subr.mxu0 0.0
    %2283 = vmatpush1.msra.mxu0 0.0
    %2284 = vmatprep.subr.mxu0 0.0
    %2285 = vmatpush1.msra.mxu0 0.0
    %2286 = vmatprep.subr.mxu0 0.0
    %2287 = vmatpush1.msra.mxu0 0.0
    %2288 = vmatprep.subr.mxu0 0.0
    %2289 = vmatpush1.msra.mxu0 0.0
    %2290 = vmatprep.subr.mxu0 0.0
    %2291 = vmatpush1.msra.mxu0 0.0
    %2292 = vmatprep.subr.mxu0 0.0
    %2293 = vmatpush1.msra.mxu0 0.0
    %2294 = vmatprep.subr.mxu0 0.0
    %2295 = vmatpush1.msra.mxu0 0.0
    %2296 = vmatprep.subr.mxu0 0.0
    %2297 = vmatpush1.msra.mxu0 0.0
    %2298 = vmatprep.subr.mxu0 0.0
    %2299 = vmatpush1.msra.mxu0 0.0
    %2300 = vmatprep.subr.mxu0 0.0
    %2301 = vmatpush1.msra.mxu0 0.0
    %2302 = vmatprep.subr.mxu0 0.0
    %2303 = vmatpush1.msra.mxu0 0.0
    %2304 = vmatprep.subr.mxu0 0.0
    %2305 = vmatpush1.msra.mxu0 0.0
    %2306 = vmatprep.subr.mxu0 0.0
    %2307 = vmatpush1.msra.mxu0 0.0
    %2308 = vmatprep.subr.mxu0 0.0
    %2309 = vmatpush1.msra.mxu0 0.0
    %2310 = vmatprep.subr.mxu0 0.0
    %2311 = vmatpush1.msra.mxu0 0.0
    %2312 = vmatprep.subr.mxu0 0.0
    %2313 = vmatpush1.msra.mxu0 0.0
    %2314 = vmatprep.subr.mxu0 0.0
    %2315 = vmatpush1.msra.mxu0 0.0
    %2316 = vmatprep.subr.mxu0 0.0
    %2317 = vmatpush1.msra.mxu0 0.0
    %2318 = vmatprep.subr.mxu0 0.0
    %2319 = vmatpush1.msra.mxu0 0.0
    %2320 = vmatprep.subr.mxu0 0.0
    %2321 = vmatpush1.msra.mxu0 0.0
    %2322 = vmatprep.subr.mxu0 0.0
    %2323 = vmatpush1.msra.mxu0 0.0
    %2324 = vmatprep.subr.mxu0 0.0
    %2325 = vmatpush1.msra.mxu0 0.0
    %2326 = vmatprep.subr.mxu0 0.0
    %2327 = vmatpush1.msra.mxu0 0.0
    %2328 = vmatprep.subr.mxu0 0.0
    %2329 = vmatpush1.msra.mxu0 0.0
    %2330 = vmatprep.subr.mxu0 0.0
    %2331 = vmatpush1.msra.mxu0 0.0
    %2332 = vmatprep.subr.mxu0 0.0
    %2333 = vmatpush1.msra.mxu0 0.0
    %2334 = vmatprep.subr.mxu0 0.0
    %2335 = vmatpush1.msra.mxu0 0.0
    %2336 = vmatprep.subr.mxu0 0.0
    %2337 = vmatpush1.msra.mxu0 0.0
    %2338 = vmatprep.subr.mxu0 0.0
    %2339 = vmatpush1.msra.mxu0 0.0
    %2340 = vmatprep.mubr.f32.mxu0 0.0
    %2341 = vmatmul.mubr.f32.gmra.mrb[0].mxu0 %v2272
    %v2342 = vpop.f32.mrb[0].mxu0
    %v2343 = vadd.f32 0.0, %v2342
    %v2344 = vpop.f32.mrb[0].mxu0
    %2345 = vdwg.mxu0
    %2347 = vrot.lane.b32.xlu0 %v2009, 8
    %v2348 = vpop.permute.xlu0 %2347
    %2351 = vrot.lane.b32.xlu0 %v2176, 16
    %v2352 = vpop.permute.xlu0 %2351
    %2355 = vrot.lane.b32.xlu0 %v2343, 24
    %v2356 = vpop.permute.xlu0 %2355
    %v2358 = vsel %vm990, %v1842, %v2348
    %v2359 = vsel %vm1671, %v2358, %v2352
    %v2360 = vsel %vm1673, %v2359, %v2356
    %v2362 = vrot.slane %v2360, 3
    %v2364 = vsel %vm1084, %v1674, %v2362
    %v2366 = vlaneseq
    %v2367 = vshrl.u32 %v2366, 7
    %v2368 = vsub.s32 0, %v2367
    %v2369 = vrot.slane %v351, %v2368
    %v2372 = vsel %vm813, %v2364, 0
    %v2374 = vsel %vm813, %v2362, 0
    %2376 = vmatprep.subr.mxu0 0.0
    %2377 = vmatpush1.msra.mxu0 %v347
    %2378 = vmatprep.subr.mxu0 0.0
    %2379 = vmatpush1.msra.mxu0 %v348
    %2380 = vmatprep.subr.mxu0 0.0
    %2381 = vmatpush1.msra.mxu0 %v349
    %2382 = vmatprep.subr.mxu0 0.0
    %2383 = vmatpush1.msra.mxu0 %v350
    %2384 = vmatprep.subr.mxu0 0.0
    %2385 = vmatpush1.msra.mxu0 0.0
    %2386 = vmatprep.subr.mxu0 0.0
    %2387 = vmatpush1.msra.mxu0 0.0
    %2388 = vmatprep.subr.mxu0 0.0
    %2389 = vmatpush1.msra.mxu0 0.0
    %2390 = vmatprep.subr.mxu0 0.0
    %2391 = vmatpush1.msra.mxu0 0.0
    %2392 = vmatprep.subr.mxu0 0.0
    %2393 = vmatpush1.msra.mxu0 0.0
    %2394 = vmatprep.subr.mxu0 0.0
    %2395 = vmatpush1.msra.mxu0 0.0
    %2396 = vmatprep.subr.mxu0 0.0
    %2397 = vmatpush1.msra.mxu0 0.0
    %2398 = vmatprep.subr.mxu0 0.0
    %2399 = vmatpush1.msra.mxu0 0.0
    %2400 = vmatprep.subr.mxu0 0.0
    %2401 = vmatpush1.msra.mxu0 0.0
    %2402 = vmatprep.subr.mxu0 0.0
    %2403 = vmatpush1.msra.mxu0 0.0
    %2404 = vmatprep.subr.mxu0 0.0
    %2405 = vmatpush1.msra.mxu0 0.0
    %2406 = vmatprep.subr.mxu0 0.0
    %2407 = vmatpush1.msra.mxu0 0.0
    %2408 = vmatprep.subr.mxu0 0.0
    %2409 = vmatpush1.msra.mxu0 0.0
    %2410 = vmatprep.subr.mxu0 0.0
    %2411 = vmatpush1.msra.mxu0 0.0
    %2412 = vmatprep.subr.mxu0 0.0
    %2413 = vmatpush1.msra.mxu0 0.0
    %2414 = vmatprep.subr.mxu0 0.0
    %2415 = vmatpush1.msra.mxu0 0.0
    %2416 = vmatprep.subr.mxu0 0.0
    %2417 = vmatpush1.msra.mxu0 0.0
    %2418 = vmatprep.subr.mxu0 0.0
    %2419 = vmatpush1.msra.mxu0 0.0
    %2420 = vmatprep.subr.mxu0 0.0
    %2421 = vmatpush1.msra.mxu0 0.0
    %2422 = vmatprep.subr.mxu0 0.0
    %2423 = vmatpush1.msra.mxu0 0.0
    %2424 = vmatprep.subr.mxu0 0.0
    %2425 = vmatpush1.msra.mxu0 0.0
    %2426 = vmatprep.subr.mxu0 0.0
    %2427 = vmatpush1.msra.mxu0 0.0
    %2428 = vmatprep.subr.mxu0 0.0
    %2429 = vmatpush1.msra.mxu0 0.0
    %2430 = vmatprep.subr.mxu0 0.0
    %2431 = vmatpush1.msra.mxu0 0.0
    %2432 = vmatprep.subr.mxu0 0.0
    %2433 = vmatpush1.msra.mxu0 0.0
    %2434 = vmatprep.subr.mxu0 0.0
    %2435 = vmatpush1.msra.mxu0 0.0
    %2436 = vmatprep.subr.mxu0 0.0
    %2437 = vmatpush1.msra.mxu0 0.0
    %2438 = vmatprep.subr.mxu0 0.0
    %2439 = vmatpush1.msra.mxu0 0.0
    %2440 = vmatprep.mubr.f32.mxu0 0.0
    %2441 = vmatmul.mubr.f32.gmra.mrb[0].mxu0 %v2372
    %v2442 = vpop.f32.mrb[0].mxu0
    %v2443 = vadd.f32 %v2369, %v2442
    %v2444 = vpop.f32.mrb[0].mxu0
    %2445 = vmatprep.mubr.f32.mxu0 0.0
    %2446 = vmatmul.mubr.f32.gmra.mrb[0].mxu0 %v2374
    %v2447 = vpop.f32.mrb[0].mxu0
    %v2448 = vadd.f32 %v2369, %v2447
    %v2449 = vpop.f32.mrb[0].mxu0
    %2450 = vdwg.mxu0
    %v2451 = vadd.f32 %v856, %v2443
    %v2452 = vadd.f32 %v857, %v2448
    %v2453 = vsel %vm813, %v2451, 0.0
    %2454 = vadd.xlane.f32.xlu0 %v2453
    %v2455 = vpop.xlane.xlu0 %2454
    %v2456 = vsel %vm817, %v2452, 0.0
    %2457 = vadd.xlane.f32.xlu0 %v2456
    %v2458 = vpop.xlane.xlu0 %2457
    %v2459 = vmul.f32 %v2455, %v821
    %v2460 = vmul.f32 %v2458, %v821
    %v2461 = vsub.f32 %v2451, %v2459
    %v2462 = vsub.f32 %v2452, %v2460
    %v2463 = vmul.f32 %v2461, %v2461
    %v2464 = vmul.f32 %v2462, %v2462
    %v2465 = vsel %vm813, %v2463, 0.0
    %2466 = vadd.xlane.f32.xlu0 %v2465
    %v2467 = vpop.xlane.xlu0 %2466
    %v2468 = vsel %vm817, %v2464, 0.0
    %2469 = vadd.xlane.f32.xlu0 %v2468
    %v2470 = vpop.xlane.xlu0 %2469
    %v2471 = vmul.f32 %v2467, %v821
    %v2472 = vmul.f32 %v2470, %v821
    %v2473 = vadd.f32 %v2471, 1e-05
    %v2474 = vadd.f32 %v2472, 1e-05
    %v2475 = vrsqrt.pop %v2473
    %v2476 = vrsqrt.pop %v2474
    %v2477 = vmul.f32 %v2461, %v2475
    %v2478 = vmul.f32 %v2462, %v2476
    %v2480 = vlaneseq
    %v2481 = vshrl.u32 %v2480, 7
    %v2482 = vsub.s32 0, %v2481
    %v2483 = vrot.slane %v352, %v2482
    %v2485 = vmul.f32 %v2477, %v2483
    %v2486 = vmul.f32 %v2478, %v2483
    %v2488 = vlaneseq
    %v2489 = vshrl.u32 %v2488, 7
    %v2490 = vsub.s32 0, %v2489
    %v2491 = vrot.slane %v353, %v2490
    %v2493 = vadd.f32 %v2485, %v2491
    %v2494 = vadd.f32 %v2486, %v2491
    %v2496 = vlaneseq
    %v2497 = vshrl.u32 %v2496, 7
    %v2498 = vsub.s32 0, %v2497
    %v2499 = vrot.slane %v358, %v2498
    %v2502 = vsel %vm813, %v2493, 0
    %v2505 = vsel %vm813, %v2494, 0
    %2507 = vmatprep.subr.mxu0 0.0
    %2508 = vmatpush1.msra.mxu0 %v354
    %2509 = vmatprep.subr.mxu0 0.0
    %2510 = vmatpush1.msra.mxu0 %v355
    %2511 = vmatprep.subr.mxu0 0.0
    %2512 = vmatpush1.msra.mxu0 %v356
    %2513 = vmatprep.subr.mxu0 0.0
    %2514 = vmatpush1.msra.mxu0 %v357
    %2515 = vmatprep.subr.mxu0 0.0
    %2516 = vmatpush1.msra.mxu0 0.0
    %2517 = vmatprep.subr.mxu0 0.0
    %2518 = vmatpush1.msra.mxu0 0.0
    %2519 = vmatprep.subr.mxu0 0.0
    %2520 = vmatpush1.msra.mxu0 0.0
    %2521 = vmatprep.subr.mxu0 0.0
    %2522 = vmatpush1.msra.mxu0 0.0
    %2523 = vmatprep.subr.mxu0 0.0
    %2524 = vmatpush1.msra.mxu0 0.0
    %2525 = vmatprep.subr.mxu0 0.0
    %2526 = vmatpush1.msra.mxu0 0.0
    %2527 = vmatprep.subr.mxu0 0.0
    %2528 = vmatpush1.msra.mxu0 0.0
    %2529 = vmatprep.subr.mxu0 0.0
    %2530 = vmatpush1.msra.mxu0 0.0
    %2531 = vmatprep.subr.mxu0 0.0
    %2532 = vmatpush1.msra.mxu0 0.0
    %2533 = vmatprep.subr.mxu0 0.0
    %2534 = vmatpush1.msra.mxu0 0.0
    %2535 = vmatprep.subr.mxu0 0.0
    %2536 = vmatpush1.msra.mxu0 0.0
    %2537 = vmatprep.subr.mxu0 0.0
    %2538 = vmatpush1.msra.mxu0 0.0
    %2539 = vmatprep.subr.mxu0 0.0
    %2540 = vmatpush1.msra.mxu0 0.0
    %2541 = vmatprep.subr.mxu0 0.0
    %2542 = vmatpush1.msra.mxu0 0.0
    %2543 = vmatprep.subr.mxu0 0.0
    %2544 = vmatpush1.msra.mxu0 0.0
    %2545 = vmatprep.subr.mxu0 0.0
    %2546 = vmatpush1.msra.mxu0 0.0
    %2547 = vmatprep.subr.mxu0 0.0
    %2548 = vmatpush1.msra.mxu0 0.0
    %2549 = vmatprep.subr.mxu0 0.0
    %2550 = vmatpush1.msra.mxu0 0.0
    %2551 = vmatprep.subr.mxu0 0.0
    %2552 = vmatpush1.msra.mxu0 0.0
    %2553 = vmatprep.subr.mxu0 0.0
    %2554 = vmatpush1.msra.mxu0 0.0
    %2555 = vmatprep.subr.mxu0 0.0
    %2556 = vmatpush1.msra.mxu0 0.0
    %2557 = vmatprep.subr.mxu0 0.0
    %2558 = vmatpush1.msra.mxu0 0.0
    %2559 = vmatprep.subr.mxu0 0.0
    %2560 = vmatpush1.msra.mxu0 0.0
    %2561 = vmatprep.subr.mxu0 0.0
    %2562 = vmatpush1.msra.mxu0 0.0
    %2563 = vmatprep.subr.mxu0 0.0
    %2564 = vmatpush1.msra.mxu0 0.0
    %2565 = vmatprep.subr.mxu0 0.0
    %2566 = vmatpush1.msra.mxu0 0.0
    %2567 = vmatprep.subr.mxu0 0.0
    %2568 = vmatpush1.msra.mxu0 0.0
    %2569 = vmatprep.subr.mxu0 0.0
    %2570 = vmatpush1.msra.mxu0 0.0
    %2571 = vmatprep.mubr.f32.mxu0 0.0
    %2572 = vmatmul.mubr.f32.gmra.mrb[0].mxu0 %v2502
    %v2573 = vpop.f32.mrb[0].mxu0
    %v2574 = vadd.f32 %v2499, %v2573
    %v2575 = vpop.f32.mrb[0].mxu0
    %2576 = vmatprep.mubr.f32.mxu0 0.0
    %2577 = vmatmul.mubr.f32.gmra.mrb[0].mxu0 %v2505
    %v2578 = vpop.f32.mrb[0].mxu0
    %v2579 = vadd.f32 %v2499, %v2578
    %v2580 = vpop.f32.mrb[0].mxu0
    %2581 = vdwg.mxu0
    %v2582 = vmul.f32 %v2574, 1.702
    %v2583 = vmul.f32 %v2579, 1.702
    %v2584 = vxor.u32 %v2582, 2147483648
    %v2585 = vxor.u32 %v2583, 2147483648
    %v2586 = vmul.f32 %v2584, 1.442695
    %v2587 = vpow.pop %v2586
    %v2588 = vmul.f32 %v2585, 1.442695
    %v2589 = vpow.pop %v2588
    %v2590 = vadd.f32 %v2587, 1.0
    %v2591 = vadd.f32 %v2589, 1.0
    %v2592 = vrcp.pop %v2590
    %v2593 = vmul.f32 1.0, %v2592
    %v2594 = vrcp.pop %v2591
    %v2595 = vmul.f32 1.0, %v2594
    %v2596 = vmul.f32 %v2574, %v2593
    %v2597 = vmul.f32 %v2579, %v2595
    %v2599 = vlaneseq
    %v2600 = vshrl.u32 %v2599, 7
    %v2601 = vsub.s32 0, %v2600
    %v2602 = vrot.slane %v375, %v2601
    %2604 = vmatprep.subr.mxu0 0.0
    %2605 = vmatpush1.msra.mxu0 %v359
    %2606 = vmatprep.subr.mxu0 0.0
    %2607 = vmatpush1.msra.mxu0 %v360
    %2608 = vmatprep.subr.mxu0 0.0
    %2609 = vmatpush1.msra.mxu0 %v361
    %2610 = vmatprep.subr.mxu0 0.0
    %2611 = vmatpush1.msra.mxu0 %v362
    %2612 = vmatprep.subr.mxu0 0.0
    %2613 = vmatpush1.msra.mxu0 %v363
    %2614 = vmatprep.subr.mxu0 0.0
    %2615 = vmatpush1.msra.mxu0 %v364
    %2616 = vmatprep.subr.mxu0 0.0
    %2617 = vmatpush1.msra.mxu0 %v365
    %2618 = vmatprep.subr.mxu0 0.0
    %2619 = vmatpush1.msra.mxu0 %v366
    %2620 = vmatprep.subr.mxu0 0.0
    %2621 = vmatpush1.msra.mxu0 %v367
    %2622 = vmatprep.subr.mxu0 0.0
    %2623 = vmatpush1.msra.mxu0 %v368
    %2624 = vmatprep.subr.mxu0 0.0
    %2625 = vmatpush1.msra.mxu0 %v369
    %2626 = vmatprep.subr.mxu0 0.0
    %2627 = vmatpush1.msra.mxu0 %v370
    %2628 = vmatprep.subr.mxu0 0.0
    %2629 = vmatpush1.msra.mxu0 %v371
    %2630 = vmatprep.subr.mxu0 0.0
    %2631 = vmatpush1.msra.mxu0 %v372
    %2632 = vmatprep.subr.mxu0 0.0
    %2633 = vmatpush1.msra.mxu0 %v373
    %2634 = vmatprep.subr.mxu0 0.0
    %2635 = vmatpush1.msra.mxu0 %v374
    %2636 = vmatprep.subr.mxu0 0.0
    %2637 = vmatpush1.msra.mxu0 0.0
    %2638 = vmatprep.subr.mxu0 0.0
    %2639 = vmatpush1.msra.mxu0 0.0
    %2640 = vmatprep.subr.mxu0 0.0
    %2641 = vmatpush1.msra.mxu0 0.0
    %2642 = vmatprep.subr.mxu0 0.0
    %2643 = vmatpush1.msra.mxu0 0.0
    %2644 = vmatprep.subr.mxu0 0.0
    %2645 = vmatpush1.msra.mxu0 0.0
    %2646 = vmatprep.subr.mxu0 0.0
    %2647 = vmatpush1.msra.mxu0 0.0
    %2648 = vmatprep.subr.mxu0 0.0
    %2649 = vmatpush1.msra.mxu0 0.0
    %2650 = vmatprep.subr.mxu0 0.0
    %2651 = vmatpush1.msra.mxu0 0.0
    %2652 = vmatprep.subr.mxu0 0.0
    %2653 = vmatpush1.msra.mxu0 0.0
    %2654 = vmatprep.subr.mxu0 0.0
    %2655 = vmatpush1.msra.mxu0 0.0
    %2656 = vmatprep.subr.mxu0 0.0
    %2657 = vmatpush1.msra.mxu0 0.0
    %2658 = vmatprep.subr.mxu0 0.0
    %2659 = vmatpush1.msra.mxu0 0.0
    %2660 = vmatprep.subr.mxu0 0.0
    %2661 = vmatpush1.msra.mxu0 0.0
    %2662 = vmatprep.subr.mxu0 0.0
    %2663 = vmatpush1.msra.mxu0 0.0
    %2664 = vmatprep.subr.mxu0 0.0
    %2665 = vmatpush1.msra.mxu0 0.0
    %2666 = vmatprep.subr.mxu0 0.0
    %2667 = vmatpush1.msra.mxu0 0.0
    %2668 = vmatprep.mubr.f32.mxu0 0.0
    %2669 = vmatmul.mubr.f32.gmra.mrb[0].mxu0 %v2596
    %v2670 = vpop.f32.mrb[0].mxu0
    %v2671 = vadd.f32 %v2602, %v2670
    %v2672 = vpop.f32.mrb[0].mxu0
    %2673 = vmatprep.mubr.f32.mxu0 0.0
    %2674 = vmatmul.mubr.f32.gmra.mrb[0].mxu0 %v2597
    %v2675 = vpop.f32.mrb[0].mxu0
    %v2676 = vpop.f32.mrb[0].mxu0
    %2677 = vdwg.mxu0
    %v2678 = vadd.f32 %v2451, %v2671
    %v2680 = vrot.slane %v2678, 4
    %vm2682 = vcmask 1040384
    %v2683 = vsel %vm2682, %v2678, %v2680
    %v2684 = vld [vmem:[%s35] sm:$0x1]
    %v2685 = vld [vmem:[%s37] sm:$0x1]
    %v2686 = vsel %vm817, %v2683, 0.0
    %2687 = vadd.xlane.f32.xlu0 %v2686
    %v2688 = vpop.xlane.xlu0 %2687
    %v2689 = vmul.f32 %v2688, %v821
    %v2690 = vsub.f32 %v2683, %v2689
    %v2691 = vmul.f32 %v2690, %v2690
    %v2692 = vsel %vm817, %v2691, 0.0
    %2693 = vadd.xlane.f32.xlu0 %v2692
    %v2694 = vpop.xlane.xlu0 %2693
    %v2695 = vmul.f32 %v2694, %v821
    %v2696 = vadd.f32 %v2695, 1e-05
    %v2697 = vrsqrt.pop %v2696
    %v2698 = vmul.f32 %v2690, %v2697
    %v2700 = vlaneseq
    %v2701 = vshrl.u32 %v2700, 7
    %v2702 = vsub.s32 0, %v2701
    %v2703 = vrot.slane %v2684, %v2702
    %v2705 = vmul.f32 %v2698, %v2703
    %v2707 = vlaneseq
    %v2708 = vshrl.u32 %v2707, 7
    %v2709 = vsub.s32 0, %v2708
    %v2710 = vrot.slane %v2685, %v2709
    %v2712 = vadd.f32 %v2705, %v2710
    %v2713 = vld [vmem:[%s39] sm:$0xff]
    %v2714 = vld [vmem:[%s39 + $0x8] sm:$0xff]
    %v2715 = vld [vmem:[%s39 + $0x10] sm:$0xff]
    %v2716 = vld [vmem:[%s39 + $0x18] sm:$0xff]
    %v2718 = vsel %vm813, %v2712, 0
    %2720 = vmatprep.subr.mxu0 0.0
    %2721 = vmatpush1.msra.mxu0 %v2713
    %2722 = vmatprep.subr.mxu0 0.0
    %2723 = vmatpush1.msra.mxu0 %v2714
    %2724 = vmatprep.subr.mxu0 0.0
    %2725 = vmatpush1.msra.mxu0 %v2715
    %2726 = vmatprep.subr.mxu0 0.0
    %2727 = vmatpush1.msra.mxu0 %v2716
    %2728 = vmatprep.subr.mxu0 0.0
    %2729 = vmatpush1.msra.mxu0 0.0
    %2730 = vmatprep.subr.mxu0 0.0
    %2731 = vmatpush1.msra.mxu0 0.0
    %2732 = vmatprep.subr.mxu0 0.0
    %2733 = vmatpush1.msra.mxu0 0.0
    %2734 = vmatprep.subr.mxu0 0.0
    %2735 = vmatpush1.msra.mxu0 0.0
    %2736 = vmatprep.subr.mxu0 0.0
    %2737 = vmatpush1.msra.mxu0 0.0
    %2738 = vmatprep.subr.mxu0 0.0
    %2739 = vmatpush1.msra.mxu0 0.0
    %2740 = vmatprep.subr.mxu0 0.0
    %2741 = vmatpush1.msra.mxu0 0.0
    %2742 = vmatprep.subr.mxu0 0.0
    %2743 = vmatpush1.msra.mxu0 0.0
    %2744 = vmatprep.subr.mxu0 0.0
    %2745 = vmatpush1.msra.mxu0 0.0
    %2746 = vmatprep.subr.mxu0 0.0
    %2747 = vmatpush1.msra.mxu0 0.0
    %2748 = vmatprep.subr.mxu0 0.0
    %2749 = vmatpush1.msra.mxu0 0.0
    %2750 = vmatprep.subr.mxu0 0.0
    %2751 = vmatpush1.msra.mxu0 0.0
    %2752 = vmatprep.subr.mxu0 0.0
    %2753 = vmatpush1.msra.mxu0 0.0
    %2754 = vmatprep.subr.mxu0 0.0
    %2755 = vmatpush1.msra.mxu0 0.0
    %2756 = vmatprep.subr.mxu0 0.0
    %2757 = vmatpush1.msra.mxu0 0.0
    %2758 = vmatprep.subr.mxu0 0.0
    %2759 = vmatpush1.msra.mxu0 0.0
    %2760 = vmatprep.subr.mxu0 0.0
    %2761 = vmatpush1.msra.mxu0 0.0
    %2762 = vmatprep.subr.mxu0 0.0
    %2763 = vmatpush1.msra.mxu0 0.0
    %2764 = vmatprep.subr.mxu0 0.0
    %2765 = vmatpush1.msra.mxu0 0.0
    %2766 = vmatprep.subr.mxu0 0.0
    %2767 = vmatpush1.msra.mxu0 0.0
    %2768 = vmatprep.subr.mxu0 0.0
    %2769 = vmatpush1.msra.mxu0 0.0
    %2770 = vmatprep.subr.mxu0 0.0
    %2771 = vmatpush1.msra.mxu0 0.0
    %2772 = vmatprep.subr.mxu0 0.0
    %2773 = vmatpush1.msra.mxu0 0.0
    %2774 = vmatprep.subr.mxu0 0.0
    %2775 = vmatpush1.msra.mxu0 0.0
    %2776 = vmatprep.subr.mxu0 0.0
    %2777 = vmatpush1.msra.mxu0 0.0
    %2778 = vmatprep.subr.mxu0 0.0
    %2779 = vmatpush1.msra.mxu0 0.0
    %2780 = vmatprep.subr.mxu0 0.0
    %2781 = vmatpush1.msra.mxu0 0.0
    %2782 = vmatprep.subr.mxu0 0.0
    %2783 = vmatpush1.msra.mxu0 0.0
    %2784 = vmatprep.mubr.f32.mxu0 0.0
    %2785 = vmatmul.mubr.f32.gmra.mrb[0].mxu0 %v2718
    %v2786 = vpop.f32.mrb[0].mxu0
    %v2787 = vadd.f32 0.0, %v2786
    %v2788 = vpop.f32.mrb[0].mxu0
    %2789 = vdwg.mxu0
    %v2790 = vld [vmem:[%s41] sm:$0xff]
    %v2791 = vld [vmem:[%s41 + $0x8] sm:$0xff]
    %v2792 = vlaneseq
    %v2793 = vshrl.u32 %v2792, 7
    %v2794 = vlaneseq
    %v2795 = vand.u32 %v2794, 127
    %vm2796 = vcmp.gt.s32.totalorder %v2795, %v2793
    %v2797 = vsel %vm2796, -1e+09, 0.0
    %v2798 = vsel %vm813, %v2790, 0.0
    %2799 = vadd.xlane.f32.xlu0 %v2798
    %v2800 = vpop.xlane.xlu0 %2799
    %v2801 = vsel %vm813, %v2791, 0.0
    %2802 = vadd.xlane.f32.xlu0 %v2801
    %v2803 = vpop.xlane.xlu0 %2802
    %v2804 = vmul.f32 %v2800, %v821
    %v2805 = vmul.f32 %v2803, %v821
    %v2806 = vsub.f32 %v2790, %v2804
    %v2807 = vsub.f32 %v2791, %v2805
    %v2808 = vmul.f32 %v2806, %v2806
    %v2809 = vmul.f32 %v2807, %v2807
    %v2810 = vsel %vm813, %v2808, 0.0
    %2811 = vadd.xlane.f32.xlu0 %v2810
    %v2812 = vpop.xlane.xlu0 %2811
    %v2813 = vsel %vm813, %v2809, 0.0
    %2814 = vadd.xlane.f32.xlu0 %v2813
    %v2815 = vpop.xlane.xlu0 %2814
    %v2816 = vmul.f32 %v2812, %v821
    %v2817 = vmul.f32 %v2815, %v821
    %v2818 = vadd.f32 %v2816, 1e-05
    %v2819 = vadd.f32 %v2817, 1e-05
    %v2820 = vrsqrt.pop %v2818
    %v2821 = vrsqrt.pop %v2819
    %v2822 = vmul.f32 %v2806, %v2820
    %v2823 = vmul.f32 %v2807, %v2821
    %v2825 = vlaneseq
    %v2826 = vshrl.u32 %v2825, 7
    %v2827 = vsub.s32 0, %v2826
    %v2828 = vrot.slane %v376, %v2827
    %v2830 = vmul.f32 %v2822, %v2828
    %v2831 = vmul.f32 %v2823, %v2828
    %v2833 = vlaneseq
    %v2834 = vshrl.u32 %v2833, 7
    %v2835 = vsub.s32 0, %v2834
    %v2836 = vrot.slane %v377, %v2835
    %v2838 = vadd.f32 %v2830, %v2836
    %v2839 = vadd.f32 %v2831, %v2836
    %v2841 = vlaneseq
    %v2842 = vshrl.u32 %v2841, 7
    %v2843 = vsub.s32 0, %v2842
    %v2844 = vrot.slane %v382, %v2843
    %v2847 = vsel %vm813, %v2838, 0
    %v2850 = vsel %vm813, %v2839, 0
    %2852 = vmatprep.subr.mxu0 0.0
    %2853 = vmatpush1.msra.mxu0 %v378
    %2854 = vmatprep.subr.mxu0 0.0
    %2855 = vmatpush1.msra.mxu0 %v379
    %2856 = vmatprep.subr.mxu0 0.0
    %2857 = vmatpush1.msra.mxu0 %v380
    %2858 = vmatprep.subr.mxu0 0.0
    %2859 = vmatpush1.msra.mxu0 %v381
    %2860 = vmatprep.subr.mxu0 0.0
    %2861 = vmatpush1.msra.mxu0 0.0
    %2862 = vmatprep.subr.mxu0 0.0
    %2863 = vmatpush1.msra.mxu0 0.0
    %2864 = vmatprep.subr.mxu0 0.0
    %2865 = vmatpush1.msra.mxu0 0.0
    %2866 = vmatprep.subr.mxu0 0.0
    %2867 = vmatpush1.msra.mxu0 0.0
    %2868 = vmatprep.subr.mxu0 0.0
    %2869 = vmatpush1.msra.mxu0 0.0
    %2870 = vmatprep.subr.mxu0 0.0
    %2871 = vmatpush1.msra.mxu0 0.0
    %2872 = vmatprep.subr.mxu0 0.0
    %2873 = vmatpush1.msra.mxu0 0.0
    %2874 = vmatprep.subr.mxu0 0.0
    %2875 = vmatpush1.msra.mxu0 0.0
    %2876 = vmatprep.subr.mxu0 0.0
    %2877 = vmatpush1.msra.mxu0 0.0
    %2878 = vmatprep.subr.mxu0 0.0
    %2879 = vmatpush1.msra.mxu0 0.0
    %2880 = vmatprep.subr.mxu0 0.0
    %2881 = vmatpush1.msra.mxu0 0.0
    %2882 = vmatprep.subr.mxu0 0.0
    %2883 = vmatpush1.msra.mxu0 0.0
    %2884 = vmatprep.subr.mxu0 0.0
    %2885 = vmatpush1.msra.mxu0 0.0
    %2886 = vmatprep.subr.mxu0 0.0
    %2887 = vmatpush1.msra.mxu0 0.0
    %2888 = vmatprep.subr.mxu0 0.0
    %2889 = vmatpush1.msra.mxu0 0.0
    %2890 = vmatprep.subr.mxu0 0.0
    %2891 = vmatpush1.msra.mxu0 0.0
    %2892 = vmatprep.subr.mxu0 0.0
    %2893 = vmatpush1.msra.mxu0 0.0
    %2894 = vmatprep.subr.mxu0 0.0
    %2895 = vmatpush1.msra.mxu0 0.0
    %2896 = vmatprep.subr.mxu0 0.0
    %2897 = vmatpush1.msra.mxu0 0.0
    %2898 = vmatprep.subr.mxu0 0.0
    %2899 = vmatpush1.msra.mxu0 0.0
    %2900 = vmatprep.subr.mxu0 0.0
    %2901 = vmatpush1.msra.mxu0 0.0
    %2902 = vmatprep.subr.mxu0 0.0
    %2903 = vmatpush1.msra.mxu0 0.0
    %2904 = vmatprep.subr.mxu0 0.0
    %2905 = vmatpush1.msra.mxu0 0.0
    %2906 = vmatprep.subr.mxu0 0.0
    %2907 = vmatpush1.msra.mxu0 0.0
    %2908 = vmatprep.subr.mxu0 0.0
    %2909 = vmatpush1.msra.mxu0 0.0
    %2910 = vmatprep.subr.mxu0 0.0
    %2911 = vmatpush1.msra.mxu0 0.0
    %2912 = vmatprep.subr.mxu0 0.0
    %2913 = vmatpush1.msra.mxu0 0.0
    %2914 = vmatprep.subr.mxu0 0.0
    %2915 = vmatpush1.msra.mxu0 0.0
    %2916 = vmatprep.mubr.f32.mxu0 0.0
    %2917 = vmatmul.mubr.f32.gmra.mrb[0].mxu0 %v2847
    %v2918 = vpop.f32.mrb[0].mxu0
    %v2919 = vadd.f32 %v2844, %v2918
    %v2920 = vpop.f32.mrb[0].mxu0
    %2921 = vmatprep.mubr.f32.mxu0 0.0
    %2922 = vmatmul.mubr.f32.gmra.mrb[0].mxu0 %v2850
    %v2923 = vpop.f32.mrb[0].mxu0
    %v2924 = vadd.f32 %v2844, %v2923
    %v2925 = vpop.f32.mrb[0].mxu0
    %2926 = vdwg.mxu0
    %2928 = vrot.lane.b32.xlu0 %v2919, 96
    %v2929 = vpop.permute.xlu0 %2928
    %v2930 = vsel %vm990, %v2919, 0
    %v2932 = vsel %vm990, %v2929, 0
    %2934 = vmatprep.subr.mxu0 0.0
    %2935 = vmatpush1.xpose.msra.mxu0 %v2932
    %2936 = vmatprep.subr.mxu0 0.0
    %2937 = vmatpush1.xpose.msra.mxu0 0.0
    %2938 = vmatprep.subr.mxu0 0.0
    %2939 = vmatpush1.xpose.msra.mxu0 0.0
    %2940 = vmatprep.subr.mxu0 0.0
    %2941 = vmatpush1.xpose.msra.mxu0 0.0
    %2942 = vmatprep.subr.mxu0 0.0
    %2943 = vmatpush1.xpose.msra.mxu0 0.0
    %2944 = vmatprep.subr.mxu0 0.0
    %2945 = vmatpush1.xpose.msra.mxu0 0.0
    %2946 = vmatprep.subr.mxu0 0.0
    %2947 = vmatpush1.xpose.msra.mxu0 0.0
    %2948 = vmatprep.subr.mxu0 0.0
    %2949 = vmatpush1.xpose.msra.mxu0 0.0
    %2950 = vmatprep.subr.mxu0 0.0
    %2951 = vmatpush1.xpose.msra.mxu0 0.0
    %2952 = vmatprep.subr.mxu0 0.0
    %2953 = vmatpush1.xpose.msra.mxu0 0.0
    %2954 = vmatprep.subr.mxu0 0.0
    %2955 = vmatpush1.xpose.msra.mxu0 0.0
    %2956 = vmatprep.subr.mxu0 0.0
    %2957 = vmatpush1.xpose.msra.mxu0 0.0
    %2958 = vmatprep.subr.mxu0 0.0
    %2959 = vmatpush1.xpose.msra.mxu0 0.0
    %2960 = vmatprep.subr.mxu0 0.0
    %2961 = vmatpush1.xpose.msra.mxu0 0.0
    %2962 = vmatprep.subr.mxu0 0.0
    %2963 = vmatpush1.xpose.msra.mxu0 0.0
    %2964 = vmatprep.subr.mxu0 0.0
    %2965 = vmatpush1.xpose.msra.mxu0 0.0
    %2966 = vmatprep.subr.mxu0 0.0
    %2967 = vmatpush1.xpose.msra.mxu0 0.0
    %2968 = vmatprep.subr.mxu0 0.0
    %2969 = vmatpush1.xpose.msra.mxu0 0.0
    %2970 = vmatprep.subr.mxu0 0.0
    %2971 = vmatpush1.xpose.msra.mxu0 0.0
    %2972 = vmatprep.subr.mxu0 0.0
    %2973 = vmatpush1.xpose.msra.mxu0 0.0
    %2974 = vmatprep.subr.mxu0 0.0
    %2975 = vmatpush1.xpose.msra.mxu0 0.0
    %2976 = vmatprep.subr.mxu0 0.0
    %2977 = vmatpush1.xpose.msra.mxu0 0.0
    %2978 = vmatprep.subr.mxu0 0.0
    %2979 = vmatpush1.xpose.msra.mxu0 0.0
    %2980 = vmatprep.subr.mxu0 0.0
    %2981 = vmatpush1.xpose.msra.mxu0 0.0
    %2982 = vmatprep.subr.mxu0 0.0
    %2983 = vmatpush1.xpose.msra.mxu0 0.0
    %2984 = vmatprep.subr.mxu0 0.0
    %2985 = vmatpush1.xpose.msra.mxu0 0.0
    %2986 = vmatprep.subr.mxu0 0.0
    %2987 = vmatpush1.xpose.msra.mxu0 0.0
    %2988 = vmatprep.subr.mxu0 0.0
    %2989 = vmatpush1.xpose.msra.mxu0 0.0
    %2990 = vmatprep.subr.mxu0 0.0
    %2991 = vmatpush1.xpose.msra.mxu0 0.0
    %2992 = vmatprep.subr.mxu0 0.0
    %2993 = vmatpush1.xpose.msra.mxu0 0.0
    %2994 = vmatprep.subr.mxu0 0.0
    %2995 = vmatpush1.xpose.msra.mxu0 0.0
    %2996 = vmatprep.subr.mxu0 0.0
    %2997 = vmatpush1.xpose.msra.mxu0 0.0
    %2998 = vmatprep.mubr.f32.mxu0 0.0
    %2999 = vmatmul.mubr.f32.gmra.mrb[0].mxu0 %v2930
    %v3000 = vpop.f32.mrb[0].mxu0
    %v3001 = vadd.f32 0.0, %v3000
    %v3002 = vpop.f32.mrb[0].mxu0
    %3003 = vdwg.mxu0
    %v3004 = vmul.f32 %v3001, 0.35355338
    %v3005 = vadd.f32 %v3004, %v2797
    %v3006 = vsel %vm990, %v3005, -inf
    %3007 = vmax.xlane.f32.xlu0 %v3006
    %v3008 = vpop.xlane.xlu0 %3007
    %v3009 = vsub.f32 %v3005, %v3008
    %v3010 = vmul.f32 %v3009, 1.442695
    %v3011 = vpow.pop %v3010
    %v3012 = vsel %vm990, %v3011, 0.0
    %3013 = vadd.xlane.f32.xlu0 %v3012
    %v3014 = vpop.xlane.xlu0 %3013
    %v3015 = vrcp.pop %v3014
    %v3016 = vmul.f32 %v3011, %v3015
    %3017 = vrot.lane.b32.xlu0 %v2919, 64
    %v3018 = vpop.permute.xlu0 %3017
    %v3021 = vsel %vm990, %v3016, 0
    %3023 = vmatprep.subr.mxu0 0.0
    %3024 = vmatpush1.msra.mxu0 %v3018
    %3025 = vmatprep.subr.mxu0 0.0
    %3026 = vmatpush1.msra.mxu0 0.0
    %3027 = vmatprep.subr.mxu0 0.0
    %3028 = vmatpush1.msra.mxu0 0.0
    %3029 = vmatprep.subr.mxu0 0.0
    %3030 = vmatpush1.msra.mxu0 0.0
    %3031 = vmatprep.subr.mxu0 0.0
    %3032 = vmatpush1.msra.mxu0 0.0
    %3033 = vmatprep.subr.mxu0 0.0
    %3034 = vmatpush1.msra.mxu0 0.0
    %3035 = vmatprep.subr.mxu0 0.0
    %3036 = vmatpush1.msra.mxu0 0.0
    %3037 = vmatprep.subr.mxu0 0.0
    %3038 = vmatpush1.msra.mxu0 0.0
    %3039 = vmatprep.subr.mxu0 0.0
    %3040 = vmatpush1.msra.mxu0 0.0
    %3041 = vmatprep.subr.mxu0 0.0
    %3042 = vmatpush1.msra.mxu0 0.0
    %3043 = vmatprep.subr.mxu0 0.0
    %3044 = vmatpush1.msra.mxu0 0.0
    %3045 = vmatprep.subr.mxu0 0.0
    %3046 = vmatpush1.msra.mxu0 0.0
    %3047 = vmatprep.subr.mxu0 0.0
    %3048 = vmatpush1.msra.mxu0 0.0
    %3049 = vmatprep.subr.mxu0 0.0
    %3050 = vmatpush1.msra.mxu0 0.0
    %3051 = vmatprep.subr.mxu0 0.0
    %3052 = vmatpush1.msra.mxu0 0.0
    %3053 = vmatprep.subr.mxu0 0.0
    %3054 = vmatpush1.msra.mxu0 0.0
    %3055 = vmatprep.subr.mxu0 0.0
    %3056 = vmatpush1.msra.mxu0 0.0
    %3057 = vmatprep.subr.mxu0 0.0
    %3058 = vmatpush1.msra.mxu0 0.0
    %3059 = vmatprep.subr.mxu0 0.0
    %3060 = vmatpush1.msra.mxu0 0.0
    %3061 = vmatprep.subr.mxu0 0.0
    %3062 = vmatpush1.msra.mxu0 0.0
    %3063 = vmatprep.subr.mxu0 0.0
    %3064 = vmatpush1.msra.mxu0 0.0
    %3065 = vmatprep.subr.mxu0 0.0
    %3066 = vmatpush1.msra.mxu0 0.0
    %3067 = vmatprep.subr.mxu0 0.0
    %3068 = vmatpush1.msra.mxu0 0.0
    %3069 = vmatprep.subr.mxu0 0.0
    %3070 = vmatpush1.msra.mxu0 0.0
    %3071 = vmatprep.subr.mxu0 0.0
    %3072 = vmatpush1.msra.mxu0 0.0
    %3073 = vmatprep.subr.mxu0 0.0
    %3074 = vmatpush1.msra.mxu0 0.0
    %3075 = vmatprep.subr.mxu0 0.0
    %3076 = vmatpush1.msra.mxu0 0.0
    %3077 = vmatprep.subr.mxu0 0.0
    %3078 = vmatpush1.msra.mxu0 0.0
    %3079 = vmatprep.subr.mxu0 0.0
    %3080 = vmatpush1.msra.mxu0 0.0
    %3081 = vmatprep.subr.mxu0 0.0
    %3082 = vmatpush1.msra.mxu0 0.0
    %3083 = vmatprep.subr.mxu0 0.0
    %3084 = vmatpush1.msra.mxu0 0.0
    %3085 = vmatprep.subr.mxu0 0.0
    %3086 = vmatpush1.msra.mxu0 0.0
    %3087 = vmatprep.mubr.f32.mxu0 0.0
    %3088 = vmatmul.mubr.f32.gmra.mrb[0].mxu0 %v3021
    %v3089 = vpop.f32.mrb[0].mxu0
    %v3090 = vadd.f32 0.0, %v3089
    %v3091 = vpop.f32.mrb[0].mxu0
    %3092 = vdwg.mxu0
    %3093 = vrot.lane.b32.xlu0 %v2919, 120
    %v3094 = vpop.permute.xlu0 %3093
    %3095 = vrot.lane.b32.xlu0 %v2919, 88
    %v3096 = vpop.permute.xlu0 %3095
    %v3097 = vsel %vm990, %v3094, 0
    %v3099 = vsel %vm990, %v3096, 0
    %3101 = vmatprep.subr.mxu0 0.0
    %3102 = vmatpush1.xpose.msra.mxu0 %v3099
    %3103 = vmatprep.subr.mxu0 0.0
    %3104 = vmatpush1.xpose.msra.mxu0 0.0
    %3105 = vmatprep.subr.mxu0 0.0
    %3106 = vmatpush1.xpose.msra.mxu0 0.0
    %3107 = vmatprep.subr.mxu0 0.0
    %3108 = vmatpush1.xpose.msra.mxu0 0.0
    %3109 = vmatprep.subr.mxu0 0.0
    %3110 = vmatpush1.xpose.msra.mxu0 0.0
    %3111 = vmatprep.subr.mxu0 0.0
    %3112 = vmatpush1.xpose.msra.mxu0 0.0
    %3113 = vmatprep.subr.mxu0 0.0
    %3114 = vmatpush1.xpose.msra.mxu0 0.0
    %3115 = vmatprep.subr.mxu0 0.0
    %3116 = vmatpush1.xpose.msra.mxu0 0.0
    %3117 = vmatprep.subr.mxu0 0.0
    %3118 = vmatpush1.xpose.msra.mxu0 0.0
    %3119 = vmatprep.subr.mxu0 0.0
    %3120 = vmatpush1.xpose.msra.mxu0 0.0
    %3121 = vmatprep.subr.mxu0 0.0
    %3122 = vmatpush1.xpose.msra.mxu0 0.0
    %3123 = vmatprep.subr.mxu0 0.0
    %3124 = vmatpush1.xpose.msra.mxu0 0.0
    %3125 = vmatprep.subr.mxu0 0.0
    %3126 = vmatpush1.xpose.msra.mxu0 0.0
    %3127 = vmatprep.subr.mxu0 0.0
    %3128 = vmatpush1.xpose.msra.mxu0 0.0
    %3129 = vmatprep.subr.mxu0 0.0
    %3130 = vmatpush1.xpose.msra.mxu0 0.0
    %3131 = vmatprep.subr.mxu0 0.0
    %3132 = vmatpush1.xpose.msra.mxu0 0.0
    %3133 = vmatprep.subr.mxu0 0.0
    %3134 = vmatpush1.xpose.msra.mxu0 0.0
    %3135 = vmatprep.subr.mxu0 0.0
    %3136 = vmatpush1.xpose.msra.mxu0 0.0
    %3137 = vmatprep.subr.mxu0 0.0
    %3138 = vmatpush1.xpose.msra.mxu0 0.0
    %3139 = vmatprep.subr.mxu0 0.0
    %3140 = vmatpush1.xpose.msra.mxu0 0.0
    %3141 = vmatprep.subr.mxu0 0.0
    %3142 = vmatpush1.xpose.msra.mxu0 0.0
    %3143 = vmatprep.subr.mxu0 0.0
    %3144 = vmatpush1.xpose.msra.mxu0 0.0
    %3145 = vmatprep.subr.mxu0 0.0
    %3146 = vmatpush1.xpose.msra.mxu0 0.0
    %3147 = vmatprep.subr.mxu0 0.0
    %3148 = vmatpush1.xpose.msra.mxu0 0.0
    %3149 = vmatprep.subr.mxu0 0.0
    %3150 = vmatpush1.xpose.msra.mxu0 0.0
    %3151 = vmatprep.subr.mxu0 0.0
    %3152 = vmatpush1.xpose.msra.mxu0 0.0
    %3153 = vmatprep.subr.mxu0 0.0
    %3154 = vmatpush1.xpose.msra.mxu0 0.0
    %3155 = vmatprep.subr.mxu0 0.0
    %3156 = vmatpush1.xpose.msra.mxu0 0.0
    %3157 = vmatprep.subr.mxu0 0.0
    %3158 = vmatpush1.xpose.msra.mxu0 0.0
    %3159 = vmatprep.subr.mxu0 0.0
    %3160 = vmatpush1.xpose.msra.mxu0 0.0
    %3161 = vmatprep.subr.mxu0 0.0
    %3162 = vmatpush1.xpose.msra.mxu0 0.0
    %3163 = vmatprep.subr.mxu0 0.0
    %3164 = vmatpush1.xpose.msra.mxu0 0.0
    %3165 = vmatprep.mubr.f32.mxu0 0.0
    %3166 = vmatmul.mubr.f32.gmra.mrb[0].mxu0 %v3097
    %v3167 = vpop.f32.mrb[0].mxu0
    %v3168 = vadd.f32 0.0, %v3167
    %v3169 = vpop.f32.mrb[0].mxu0
    %3170 = vdwg.mxu0
    %v3171 = vmul.f32 %v3168, 0.35355338
    %v3172 = vadd.f32 %v3171, %v2797
    %v3173 = vsel %vm990, %v3172, -inf
    %3174 = vmax.xlane.f32.xlu0 %v3173
    %v3175 = vpop.xlane.xlu0 %3174
    %v3176 = vsub.f32 %v3172, %v3175
    %v3177 = vmul.f32 %v3176, 1.442695
    %v3178 = vpow.pop %v3177
    %v3179 = vsel %vm990, %v3178, 0.0
    %3180 = vadd.xlane.f32.xlu0 %v3179
    %v3181 = vpop.xlane.xlu0 %3180
    %v3182 = vrcp.pop %v3181
    %v3183 = vmul.f32 %v3178, %v3182
    %3184 = vrot.lane.b32.xlu0 %v2919, 56
    %v3185 = vpop.permute.xlu0 %3184
    %v3188 = vsel %vm990, %v3183, 0
    %3190 = vmatprep.subr.mxu0 0.0
    %3191 = vmatpush1.msra.mxu0 %v3185
    %3192 = vmatprep.subr.mxu0 0.0
    %3193 = vmatpush1.msra.mxu0 0.0
    %3194 = vmatprep.subr.mxu0 0.0
    %3195 = vmatpush1.msra.mxu0 0.0
    %3196 = vmatprep.subr.mxu0 0.0
    %3197 = vmatpush1.msra.mxu0 0.0
    %3198 = vmatprep.subr.mxu0 0.0
    %3199 = vmatpush1.msra.mxu0 0.0
    %3200 = vmatprep.subr.mxu0 0.0
    %3201 = vmatpush1.msra.mxu0 0.0
    %3202 = vmatprep.subr.mxu0 0.0
    %3203 = vmatpush1.msra.mxu0 0.0
    %3204 = vmatprep.subr.mxu0 0.0
    %3205 = vmatpush1.msra.mxu0 0.0
    %3206 = vmatprep.subr.mxu0 0.0
    %3207 = vmatpush1.msra.mxu0 0.0
    %3208 = vmatprep.subr.mxu0 0.0
    %3209 = vmatpush1.msra.mxu0 0.0
    %3210 = vmatprep.subr.mxu0 0.0
    %3211 = vmatpush1.msra.mxu0 0.0
    %3212 = vmatprep.subr.mxu0 0.0
    %3213 = vmatpush1.msra.mxu0 0.0
    %3214 = vmatprep.subr.mxu0 0.0
    %3215 = vmatpush1.msra.mxu0 0.0
    %3216 = vmatprep.subr.mxu0 0.0
    %3217 = vmatpush1.msra.mxu0 0.0
    %3218 = vmatprep.subr.mxu0 0.0
    %3219 = vmatpush1.msra.mxu0 0.0
    %3220 = vmatprep.subr.mxu0 0.0
    %3221 = vmatpush1.msra.mxu0 0.0
    %3222 = vmatprep.subr.mxu0 0.0
    %3223 = vmatpush1.msra.mxu0 0.0
    %3224 = vmatprep.subr.mxu0 0.0
    %3225 = vmatpush1.msra.mxu0 0.0
    %3226 = vmatprep.subr.mxu0 0.0
    %3227 = vmatpush1.msra.mxu0 0.0
    %3228 = vmatprep.subr.mxu0 0.0
    %3229 = vmatpush1.msra.mxu0 0.0
    %3230 = vmatprep.subr.mxu0 0.0
    %3231 = vmatpush1.msra.mxu0 0.0
    %3232 = vmatprep.subr.mxu0 0.0
    %3233 = vmatpush1.msra.mxu0 0.0
    %3234 = vmatprep.subr.mxu0 0.0
    %3235 = vmatpush1.msra.mxu0 0.0
    %3236 = vmatprep.subr.mxu0 0.0
    %3237 = vmatpush1.msra.mxu0 0.0
    %3238 = vmatprep.subr.mxu0 0.0
    %3239 = vmatpush1.msra.mxu0 0.0
    %3240 = vmatprep.subr.mxu0 0.0
    %3241 = vmatpush1.msra.mxu0 0.0
    %3242 = vmatprep.subr.mxu0 0.0
    %3243 = vmatpush1.msra.mxu0 0.0
    %3244 = vmatprep.subr.mxu0 0.0
    %3245 = vmatpush1.msra.mxu0 0.0
    %3246 = vmatprep.subr.mxu0 0.0
    %3247 = vmatpush1.msra.mxu0 0.0
    %3248 = vmatprep.subr.mxu0 0.0
    %3249 = vmatpush1.msra.mxu0 0.0
    %3250 = vmatprep.subr.mxu0 0.0
    %3251 = vmatpush1.msra.mxu0 0.0
    %3252 = vmatprep.subr.mxu0 0.0
    %3253 = vmatpush1.msra.mxu0 0.0
    %3254 = vmatprep.mubr.f32.mxu0 0.0
    %3255 = vmatmul.mubr.f32.gmra.mrb[0].mxu0 %v3188
    %v3256 = vpop.f32.mrb[0].mxu0
    %v3257 = vadd.f32 0.0, %v3256
    %v3258 = vpop.f32.mrb[0].mxu0
    %3259 = vdwg.mxu0
    %3260 = vrot.lane.b32.xlu0 %v2919, 112
    %v3261 = vpop.permute.xlu0 %3260
    %3262 = vrot.lane.b32.xlu0 %v2919, 80
    %v3263 = vpop.permute.xlu0 %3262
    %v3264 = vsel %vm990, %v3261, 0
    %v3266 = vsel %vm990, %v3263, 0
    %3268 = vmatprep.subr.mxu0 0.0
    %3269 = vmatpush1.xpose.msra.mxu0 %v3266
    %3270 = vmatprep.subr.mxu0 0.0
    %3271 = vmatpush1.xpose.msra.mxu0 0.0
    %3272 = vmatprep.subr.mxu0 0.0
    %3273 = vmatpush1.xpose.msra.mxu0 0.0
    %3274 = vmatprep.subr.mxu0 0.0
    %3275 = vmatpush1.xpose.msra.mxu0 0.0
    %3276 = vmatprep.subr.mxu0 0.0
    %3277 = vmatpush1.xpose.msra.mxu0 0.0
    %3278 = vmatprep.subr.mxu0 0.0
    %3279 = vmatpush1.xpose.msra.mxu0 0.0
    %3280 = vmatprep.subr.mxu0 0.0
    %3281 = vmatpush1.xpose.msra.mxu0 0.0
    %3282 = vmatprep.subr.mxu0 0.0
    %3283 = vmatpush1.xpose.msra.mxu0 0.0
    %3284 = vmatprep.subr.mxu0 0.0
    %3285 = vmatpush1.xpose.msra.mxu0 0.0
    %3286 = vmatprep.subr.mxu0 0.0
    %3287 = vmatpush1.xpose.msra.mxu0 0.0
    %3288 = vmatprep.subr.mxu0 0.0
    %3289 = vmatpush1.xpose.msra.mxu0 0.0
    %3290 = vmatprep.subr.mxu0 0.0
    %3291 = vmatpush1.xpose.msra.mxu0 0.0
    %3292 = vmatprep.subr.mxu0 0.0
    %3293 = vmatpush1.xpose.msra.mxu0 0.0
    %3294 = vmatprep.subr.mxu0 0.0
    %3295 = vmatpush1.xpose.msra.mxu0 0.0
    %3296 = vmatprep.subr.mxu0 0.0
    %3297 = vmatpush1.xpose.msra.mxu0 0.0
    %3298 = vmatprep.subr.mxu0 0.0
    %3299 = vmatpush1.xpose.msra.mxu0 0.0
    %3300 = vmatprep.subr.mxu0 0.0
    %3301 = vmatpush1.xpose.msra.mxu0 0.0
    %3302 = vmatprep.subr.mxu0 0.0
    %3303 = vmatpush1.xpose.msra.mxu0 0.0
    %3304 = vmatprep.subr.mxu0 0.0
    %3305 = vmatpush1.xpose.msra.mxu0 0.0
    %3306 = vmatprep.subr.mxu0 0.0
    %3307 = vmatpush1.xpose.msra.mxu0 0.0
    %3308 = vmatprep.subr.mxu0 0.0
    %3309 = vmatpush1.xpose.msra.mxu0 0.0
    %3310 = vmatprep.subr.mxu0 0.0
    %3311 = vmatpush1.xpose.msra.mxu0 0.0
    %3312 = vmatprep.subr.mxu0 0.0
    %3313 = vmatpush1.xpose.msra.mxu0 0.0
    %3314 = vmatprep.subr.mxu0 0.0
    %3315 = vmatpush1.xpose.msra.mxu0 0.0
    %3316 = vmatprep.subr.mxu0 0.0
    %3317 = vmatpush1.xpose.msra.mxu0 0.0
    %3318 = vmatprep.subr.mxu0 0.0
    %3319 = vmatpush1.xpose.msra.mxu0 0.0
    %3320 = vmatprep.subr.mxu0 0.0
    %3321 = vmatpush1.xpose.msra.mxu0 0.0
    %3322 = vmatprep.subr.mxu0 0.0
    %3323 = vmatpush1.xpose.msra.mxu0 0.0
    %3324 = vmatprep.subr.mxu0 0.0
    %3325 = vmatpush1.xpose.msra.mxu0 0.0
    %3326 = vmatprep.subr.mxu0 0.0
    %3327 = vmatpush1.xpose.msra.mxu0 0.0
    %3328 = vmatprep.subr.mxu0 0.0
    %3329 = vmatpush1.xpose.msra.mxu0 0.0
    %3330 = vmatprep.subr.mxu0 0.0
    %3331 = vmatpush1.xpose.msra.mxu0 0.0
    %3332 = vmatprep.mubr.f32.mxu0 0.0
    %3333 = vmatmul.mubr.f32.gmra.mrb[0].mxu0 %v3264
    %v3334 = vpop.f32.mrb[0].mxu0
    %v3335 = vadd.f32 0.0, %v3334
    %v3336 = vpop.f32.mrb[0].mxu0
    %3337 = vdwg.mxu0
    %v3338 = vmul.f32 %v3335, 0.35355338
    %v3339 = vadd.f32 %v3338, %v2797
    %v3340 = vsel %vm990, %v3339, -inf
    %3341 = vmax.xlane.f32.xlu0 %v3340
    %v3342 = vpop.xlane.xlu0 %3341
    %v3343 = vsub.f32 %v3339, %v3342
    %v3344 = vmul.f32 %v3343, 1.442695
    %v3345 = vpow.pop %v3344
    %v3346 = vsel %vm990, %v3345, 0.0
    %3347 = vadd.xlane.f32.xlu0 %v3346
    %v3348 = vpop.xlane.xlu0 %3347
    %v3349 = vrcp.pop %v3348
    %v3350 = vmul.f32 %v3345, %v3349
    %3351 = vrot.lane.b32.xlu0 %v2919, 48
    %v3352 = vpop.permute.xlu0 %3351
    %v3355 = vsel %vm990, %v3350, 0
    %3357 = vmatprep.subr.mxu0 0.0
    %3358 = vmatpush1.msra.mxu0 %v3352
    %3359 = vmatprep.subr.mxu0 0.0
    %3360 = vmatpush1.msra.mxu0 0.0
    %3361 = vmatprep.subr.mxu0 0.0
    %3362 = vmatpush1.msra.mxu0 0.0
    %3363 = vmatprep.subr.mxu0 0.0
    %3364 = vmatpush1.msra.mxu0 0.0
    %3365 = vmatprep.subr.mxu0 0.0
    %3366 = vmatpush1.msra.mxu0 0.0
    %3367 = vmatprep.subr.mxu0 0.0
    %3368 = vmatpush1.msra.mxu0 0.0
    %3369 = vmatprep.subr.mxu0 0.0
    %3370 = vmatpush1.msra.mxu0 0.0
    %3371 = vmatprep.subr.mxu0 0.0
    %3372 = vmatpush1.msra.mxu0 0.0
    %3373 = vmatprep.subr.mxu0 0.0
    %3374 = vmatpush1.msra.mxu0 0.0
    %3375 = vmatprep.subr.mxu0 0.0
    %3376 = vmatpush1.msra.mxu0 0.0
    %3377 = vmatprep.subr.mxu0 0.0
    %3378 = vmatpush1.msra.mxu0 0.0
    %3379 = vmatprep.subr.mxu0 0.0
    %3380 = vmatpush1.msra.mxu0 0.0
    %3381 = vmatprep.subr.mxu0 0.0
    %3382 = vmatpush1.msra.mxu0 0.0
    %3383 = vmatprep.subr.mxu0 0.0
    %3384 = vmatpush1.msra.mxu0 0.0
    %3385 = vmatprep.subr.mxu0 0.0
    %3386 = vmatpush1.msra.mxu0 0.0
    %3387 = vmatprep.subr.mxu0 0.0
    %3388 = vmatpush1.msra.mxu0 0.0
    %3389 = vmatprep.subr.mxu0 0.0
    %3390 = vmatpush1.msra.mxu0 0.0
    %3391 = vmatprep.subr.mxu0 0.0
    %3392 = vmatpush1.msra.mxu0 0.0
    %3393 = vmatprep.subr.mxu0 0.0
    %3394 = vmatpush1.msra.mxu0 0.0
    %3395 = vmatprep.subr.mxu0 0.0
    %3396 = vmatpush1.msra.mxu0 0.0
    %3397 = vmatprep.subr.mxu0 0.0
    %3398 = vmatpush1.msra.mxu0 0.0
    %3399 = vmatprep.subr.mxu0 0.0
    %3400 = vmatpush1.msra.mxu0 0.0
    %3401 = vmatprep.subr.mxu0 0.0
    %3402 = vmatpush1.msra.mxu0 0.0
    %3403 = vmatprep.subr.mxu0 0.0
    %3404 = vmatpush1.msra.mxu0 0.0
    %3405 = vmatprep.subr.mxu0 0.0
    %3406 = vmatpush1.msra.mxu0 0.0
    %3407 = vmatprep.subr.mxu0 0.0
    %3408 = vmatpush1.msra.mxu0 0.0
    %3409 = vmatprep.subr.mxu0 0.0
    %3410 = vmatpush1.msra.mxu0 0.0
    %3411 = vmatprep.subr.mxu0 0.0
    %3412 = vmatpush1.msra.mxu0 0.0
    %3413 = vmatprep.subr.mxu0 0.0
    %3414 = vmatpush1.msra.mxu0 0.0
    %3415 = vmatprep.subr.mxu0 0.0
    %3416 = vmatpush1.msra.mxu0 0.0
    %3417 = vmatprep.subr.mxu0 0.0
    %3418 = vmatpush1.msra.mxu0 0.0
    %3419 = vmatprep.subr.mxu0 0.0
    %3420 = vmatpush1.msra.mxu0 0.0
    %3421 = vmatprep.mubr.f32.mxu0 0.0
    %3422 = vmatmul.mubr.f32.gmra.mrb[0].mxu0 %v3355
    %v3423 = vpop.f32.mrb[0].mxu0
    %v3424 = vadd.f32 0.0, %v3423
    %v3425 = vpop.f32.mrb[0].mxu0
    %3426 = vdwg.mxu0
    %3427 = vrot.lane.b32.xlu0 %v2919, 104
    %v3428 = vpop.permute.xlu0 %3427
    %3429 = vrot.lane.b32.xlu0 %v2919, 72
    %v3430 = vpop.permute.xlu0 %3429
    %v3431 = vsel %vm990, %v3428, 0
    %v3433 = vsel %vm990, %v3430, 0
    %3435 = vmatprep.subr.mxu0 0.0
    %3436 = vmatpush1.xpose.msra.mxu0 %v3433
    %3437 = vmatprep.subr.mxu0 0.0
    %3438 = vmatpush1.xpose.msra.mxu0 0.0
    %3439 = vmatprep.subr.mxu0 0.0
    %3440 = vmatpush1.xpose.msra.mxu0 0.0
    %3441 = vmatprep.subr.mxu0 0.0
    %3442 = vmatpush1.xpose.msra.mxu0 0.0
    %3443 = vmatprep.subr.mxu0 0.0
    %3444 = vmatpush1.xpose.msra.mxu0 0.0
    %3445 = vmatprep.subr.mxu0 0.0
    %3446 = vmatpush1.xpose.msra.mxu0 0.0
    %3447 = vmatprep.subr.mxu0 0.0
    %3448 = vmatpush1.xpose.msra.mxu0 0.0
    %3449 = vmatprep.subr.mxu0 0.0
    %3450 = vmatpush1.xpose.msra.mxu0 0.0
    %3451 = vmatprep.subr.mxu0 0.0
    %3452 = vmatpush1.xpose.msra.mxu0 0.0
    %3453 = vmatprep.subr.mxu0 0.0
    %3454 = vmatpush1.xpose.msra.mxu0 0.0
    %3455 = vmatprep.subr.mxu0 0.0
    %3456 = vmatpush1.xpose.msra.mxu0 0.0
    %3457 = vmatprep.subr.mxu0 0.0
    %3458 = vmatpush1.xpose.msra.mxu0 0.0
    %3459 = vmatprep.subr.mxu0 0.0
    %3460 = vmatpush1.xpose.msra.mxu0 0.0
    %3461 = vmatprep.subr.mxu0 0.0
    %3462 = vmatpush1.xpose.msra.mxu0 0.0
    %3463 = vmatprep.subr.mxu0 0.0
    %3464 = vmatpush1.xpose.msra.mxu0 0.0
    %3465 = vmatprep.subr.mxu0 0.0
    %3466 = vmatpush1.xpose.msra.mxu0 0.0
    %3467 = vmatprep.subr.mxu0 0.0
    %3468 = vmatpush1.xpose.msra.mxu0 0.0
    %3469 = vmatprep.subr.mxu0 0.0
    %3470 = vmatpush1.xpose.msra.mxu0 0.0
    %3471 = vmatprep.subr.mxu0 0.0
    %3472 = vmatpush1.xpose.msra.mxu0 0.0
    %3473 = vmatprep.subr.mxu0 0.0
    %3474 = vmatpush1.xpose.msra.mxu0 0.0
    %3475 = vmatprep.subr.mxu0 0.0
    %3476 = vmatpush1.xpose.msra.mxu0 0.0
    %3477 = vmatprep.subr.mxu0 0.0
    %3478 = vmatpush1.xpose.msra.mxu0 0.0
    %3479 = vmatprep.subr.mxu0 0.0
    %3480 = vmatpush1.xpose.msra.mxu0 0.0
    %3481 = vmatprep.subr.mxu0 0.0
    %3482 = vmatpush1.xpose.msra.mxu0 0.0
    %3483 = vmatprep.subr.mxu0 0.0
    %3484 = vmatpush1.xpose.msra.mxu0 0.0
    %3485 = vmatprep.subr.mxu0 0.0
    %3486 = vmatpush1.xpose.msra.mxu0 0.0
    %3487 = vmatprep.subr.mxu0 0.0
    %3488 = vmatpush1.xpose.msra.mxu0 0.0
    %3489 = vmatprep.subr.mxu0 0.0
    %3490 = vmatpush1.xpose.msra.mxu0 0.0
    %3491 = vmatprep.subr.mxu0 0.0
    %3492 = vmatpush1.xpose.msra.mxu0 0.0
    %3493 = vmatprep.subr.mxu0 0.0
    %3494 = vmatpush1.xpose.msra.mxu0 0.0
    %3495 = vmatprep.subr.mxu0 0.0
    %3496 = vmatpush1.xpose.msra.mxu0 0.0
    %3497 = vmatprep.subr.mxu0 0.0
    %3498 = vmatpush1.xpose.msra.mxu0 0.0
    %3499 = vmatprep.mubr.f32.mxu0 0.0
    %3500 = vmatmul.mubr.f32.gmra.mrb[0].mxu0 %v3431
    %v3501 = vpop.f32.mrb[0].mxu0
    %v3502 = vadd.f32 0.0, %v3501
    %v3503 = vpop.f32.mrb[0].mxu0
    %3504 = vdwg.mxu0
    %v3505 = vmul.f32 %v3502, 0.35355338
    %v3506 = vadd.f32 %v3505, %v2797
    %v3507 = vsel %vm990, %v3506, -inf
    %3508 = vmax.xlane.f32.xlu0 %v3507
    %v3509 = vpop.xlane.xlu0 %3508
    %v3510 = vsub.f32 %v3506, %v3509
    %v3511 = vmul.f32 %v3510, 1.442695
    %v3512 = vpow.pop %v3511
    %v3513 = vsel %vm990, %v3512, 0.0
    %3514 = vadd.xlane.f32.xlu0 %v3513
    %v3515 = vpop.xlane.xlu0 %3514
    %v3516 = vrcp.pop %v3515
    %v3517 = vmul.f32 %v3512, %v3516
    %3518 = vrot.lane.b32.xlu0 %v2919, 40
    %v3519 = vpop.permute.xlu0 %3518
    %v3522 = vsel %vm990, %v3517, 0
    %3524 = vmatprep.subr.mxu0 0.0
    %3525 = vmatpush1.msra.mxu0 %v3519
    %3526 = vmatprep.subr.mxu0 0.0
    %3527 = vmatpush1.msra.mxu0 0.0
    %3528 = vmatprep.subr.mxu0 0.0
    %3529 = vmatpush1.msra.mxu0 0.0
    %3530 = vmatprep.subr.mxu0 0.0
    %3531 = vmatpush1.msra.mxu0 0.0
    %3532 = vmatprep.subr.mxu0 0.0
    %3533 = vmatpush1.msra.mxu0 0.0
    %3534 = vmatprep.subr.mxu0 0.0
    %3535 = vmatpush1.msra.mxu0 0.0
    %3536 = vmatprep.subr.mxu0 0.0
    %3537 = vmatpush1.msra.mxu0 0.0
    %3538 = vmatprep.subr.mxu0 0.0
    %3539 = vmatpush1.msra.mxu0 0.0
    %3540 = vmatprep.subr.mxu0 0.0
    %3541 = vmatpush1.msra.mxu0 0.0
    %3542 = vmatprep.subr.mxu0 0.0
    %3543 = vmatpush1.msra.mxu0 0.0
    %3544 = vmatprep.subr.mxu0 0.0
    %3545 = vmatpush1.msra.mxu0 0.0
    %3546 = vmatprep.subr.mxu0 0.0
    %3547 = vmatpush1.msra.mxu0 0.0
    %3548 = vmatprep.subr.mxu0 0.0
    %3549 = vmatpush1.msra.mxu0 0.0
    %3550 = vmatprep.subr.mxu0 0.0
    %3551 = vmatpush1.msra.mxu0 0.0
    %3552 = vmatprep.subr.mxu0 0.0
    %3553 = vmatpush1.msra.mxu0 0.0
    %3554 = vmatprep.subr.mxu0 0.0
    %3555 = vmatpush1.msra.mxu0 0.0
    %3556 = vmatprep.subr.mxu0 0.0
    %3557 = vmatpush1.msra.mxu0 0.0
    %3558 = vmatprep.subr.mxu0 0.0
    %3559 = vmatpush1.msra.mxu0 0.0
    %3560 = vmatprep.subr.mxu0 0.0
    %3561 = vmatpush1.msra.mxu0 0.0
    %3562 = vmatprep.subr.mxu0 0.0
    %3563 = vmatpush1.msra.mxu0 0.0
    %3564 = vmatprep.subr.mxu0 0.0
    %3565 = vmatpush1.msra.mxu0 0.0
    %3566 = vmatprep.subr.mxu0 0.0
    %3567 = vmatpush1.msra.mxu0 0.0
    %3568 = vmatprep.subr.mxu0 0.0
    %3569 = vmatpush1.msra.mxu0 0.0
    %3570 = vmatprep.subr.mxu0 0.0
    %3571 = vmatpush1.msra.mxu0 0.0
    %3572 = vmatprep.subr.mxu0 0.0
    %3573 = vmatpush1.msra.mxu0 0.0
    %3574 = vmatprep.subr.mxu0 0.0
    %3575 = vmatpush1.msra.mxu0 0.0
    %3576 = vmatprep.subr.mxu0 0.0
    %3577 = vmatpush1.msra.mxu0 0.0
    %3578 = vmatprep.subr.mxu0 0.0
    %3579 = vmatpush1.msra.mxu0 0.0
    %3580 = vmatprep.subr.mxu0 0.0
    %3581 = vmatpush1.msra.mxu0 0.0
    %3582 = vmatprep.subr.mxu0 0.0
    %3583 = vmatpush1.msra.mxu0 0.0
    %3584 = vmatprep.subr.mxu0 0.0
    %3585 = vmatpush1.msra.mxu0 0.0
    %3586 = vmatprep.subr.mxu0 0.0
    %3587 = vmatpush1.msra.mxu0 0.0
    %3588 = vmatprep.mubr.f32.mxu0 0.0
    %3589 = vmatmul.mubr.f32.gmra.mrb[0].mxu0 %v3522
    %v3590 = vpop.f32.mrb[0].mxu0
    %v3591 = vadd.f32 0.0, %v3590
    %v3592 = vpop.f32.mrb[0].mxu0
    %3593 = vdwg.mxu0
    %3595 = vrot.lane.b32.xlu0 %v3257, 8
    %v3596 = vpop.permute.xlu0 %3595
    %3599 = vrot.lane.b32.xlu0 %v3424, 16
    %v3600 = vpop.permute.xlu0 %3599
    %3603 = vrot.lane.b32.xlu0 %v3591, 24
    %v3604 = vpop.permute.xlu0 %3603
    %v3606 = vsel %vm990, %v3090, %v3596
    %v3607 = vsel %vm1671, %v3606, %v3600
    %v3608 = vsel %vm1673, %v3607, %v3604
    %3610 = vrot.lane.b32.xlu0 %v2924, 96
    %v3611 = vpop.permute.xlu0 %3610
    %v3612 = vsel %vm990, %v2924, 0
    %v3614 = vsel %vm990, %v3611, 0
    %3616 = vmatprep.subr.mxu0 0.0
    %3617 = vmatpush1.xpose.msra.mxu0 %v3614
    %3618 = vmatprep.subr.mxu0 0.0
    %3619 = vmatpush1.xpose.msra.mxu0 0.0
    %3620 = vmatprep.subr.mxu0 0.0
    %3621 = vmatpush1.xpose.msra.mxu0 0.0
    %3622 = vmatprep.subr.mxu0 0.0
    %3623 = vmatpush1.xpose.msra.mxu0 0.0
    %3624 = vmatprep.subr.mxu0 0.0
    %3625 = vmatpush1.xpose.msra.mxu0 0.0
    %3626 = vmatprep.subr.mxu0 0.0
    %3627 = vmatpush1.xpose.msra.mxu0 0.0
    %3628 = vmatprep.subr.mxu0 0.0
    %3629 = vmatpush1.xpose.msra.mxu0 0.0
    %3630 = vmatprep.subr.mxu0 0.0
    %3631 = vmatpush1.xpose.msra.mxu0 0.0
    %3632 = vmatprep.subr.mxu0 0.0
    %3633 = vmatpush1.xpose.msra.mxu0 0.0
    %3634 = vmatprep.subr.mxu0 0.0
    %3635 = vmatpush1.xpose.msra.mxu0 0.0
    %3636 = vmatprep.subr.mxu0 0.0
    %3637 = vmatpush1.xpose.msra.mxu0 0.0
    %3638 = vmatprep.subr.mxu0 0.0
    %3639 = vmatpush1.xpose.msra.mxu0 0.0
    %3640 = vmatprep.subr.mxu0 0.0
    %3641 = vmatpush1.xpose.msra.mxu0 0.0
    %3642 = vmatprep.subr.mxu0 0.0
    %3643 = vmatpush1.xpose.msra.mxu0 0.0
    %3644 = vmatprep.subr.mxu0 0.0
    %3645 = vmatpush1.xpose.msra.mxu0 0.0
    %3646 = vmatprep.subr.mxu0 0.0
    %3647 = vmatpush1.xpose.msra.mxu0 0.0
    %3648 = vmatprep.subr.mxu0 0.0
    %3649 = vmatpush1.xpose.msra.mxu0 0.0
    %3650 = vmatprep.subr.mxu0 0.0
    %3651 = vmatpush1.xpose.msra.mxu0 0.0
    %3652 = vmatprep.subr.mxu0 0.0
    %3653 = vmatpush1.xpose.msra.mxu0 0.0
    %3654 = vmatprep.subr.mxu0 0.0
    %3655 = vmatpush1.xpose.msra.mxu0 0.0
    %3656 = vmatprep.subr.mxu0 0.0
    %3657 = vmatpush1.xpose.msra.mxu0 0.0
    %3658 = vmatprep.subr.mxu0 0.0
    %3659 = vmatpush1.xpose.msra.mxu0 0.0
    %3660 = vmatprep.subr.mxu0 0.0
    %3661 = vmatpush1.xpose.msra.mxu0 0.0
    %3662 = vmatprep.subr.mxu0 0.0
    %3663 = vmatpush1.xpose.msra.mxu0 0.0
    %3664 = vmatprep.subr.mxu0 0.0
    %3665 = vmatpush1.xpose.msra.mxu0 0.0
    %3666 = vmatprep.subr.mxu0 0.0
    %3667 = vmatpush1.xpose.msra.mxu0 0.0
    %3668 = vmatprep.subr.mxu0 0.0
    %3669 = vmatpush1.xpose.msra.mxu0 0.0
    %3670 = vmatprep.subr.mxu0 0.0
    %3671 = vmatpush1.xpose.msra.mxu0 0.0
    %3672 = vmatprep.subr.mxu0 0.0
    %3673 = vmatpush1.xpose.msra.mxu0 0.0
    %3674 = vmatprep.subr.mxu0 0.0
    %3675 = vmatpush1.xpose.msra.mxu0 0.0
    %3676 = vmatprep.subr.mxu0 0.0
    %3677 = vmatpush1.xpose.msra.mxu0 0.0
    %3678 = vmatprep.subr.mxu0 0.0
    %3679 = vmatpush1.xpose.msra.mxu0 0.0
    %3680 = vmatprep.mubr.f32.mxu0 0.0
    %3681 = vmatmul.mubr.f32.gmra.mrb[0].mxu0 %v3612
    %v3682 = vpop.f32.mrb[0].mxu0
    %v3683 = vadd.f32 0.0, %v3682
    %v3684 = vpop.f32.mrb[0].mxu0
    %3685 = vdwg.mxu0
    %v3686 = vmul.f32 %v3683, 0.35355338
    %v3687 = vadd.f32 %v3686, %v2797
    %v3688 = vsel %vm990, %v3687, -inf
    %3689 = vmax.xlane.f32.xlu0 %v3688
    %v3690 = vpop.xlane.xlu0 %3689
    %v3691 = vsub.f32 %v3687, %v3690
    %v3692 = vmul.f32 %v3691, 1.442695
    %v3693 = vpow.pop %v3692
    %v3694 = vsel %vm990, %v3693, 0.0
    %3695 = vadd.xlane.f32.xlu0 %v3694
    %v3696 = vpop.xlane.xlu0 %3695
    %v3697 = vrcp.pop %v3696
    %v3698 = vmul.f32 %v3693, %v3697
    %3699 = vrot.lane.b32.xlu0 %v2924, 64
    %v3700 = vpop.permute.xlu0 %3699
    %v3703 = vsel %vm990, %v3698, 0
    %3705 = vmatprep.subr.mxu0 0.0
    %3706 = vmatpush1.msra.mxu0 %v3700
    %3707 = vmatprep.subr.mxu0 0.0
    %3708 = vmatpush1.msra.mxu0 0.0
    %3709 = vmatprep.subr.mxu0 0.0
    %3710 = vmatpush1.msra.mxu0 0.0
    %3711 = vmatprep.subr.mxu0 0.0
    %3712 = vmatpush1.msra.mxu0 0.0
    %3713 = vmatprep.subr.mxu0 0.0
    %3714 = vmatpush1.msra.mxu0 0.0
    %3715 = vmatprep.subr.mxu0 0.0
    %3716 = vmatpush1.msra.mxu0 0.0
    %3717 = vmatprep.subr.mxu0 0.0
    %3718 = vmatpush1.msra.mxu0 0.0
    %3719 = vmatprep.subr.mxu0 0.0
    %3720 = vmatpush1.msra.mxu0 0.0
    %3721 = vmatprep.subr.mxu0 0.0
    %3722 = vmatpush1.msra.mxu0 0.0
    %3723 = vmatprep.subr.mxu0 0.0
    %3724 = vmatpush1.msra.mxu0 0.0
    %3725 = vmatprep.subr.mxu0 0.0
    %3726 = vmatpush1.msra.mxu0 0.0
    %3727 = vmatprep.subr.mxu0 0.0
    %3728 = vmatpush1.msra.mxu0 0.0
    %3729 = vmatprep.subr.mxu0 0.0
    %3730 = vmatpush1.msra.mxu0 0.0
    %3731 = vmatprep.subr.mxu0 0.0
    %3732 = vmatpush1.msra.mxu0 0.0
    %3733 = vmatprep.subr.mxu0 0.0
    %3734 = vmatpush1.msra.mxu0 0.0
    %3735 = vmatprep.subr.mxu0 0.0
    %3736 = vmatpush1.msra.mxu0 0.0
    %3737 = vmatprep.subr.mxu0 0.0
    %3738 = vmatpush1.msra.mxu0 0.0
    %3739 = vmatprep.subr.mxu0 0.0
    %3740 = vmatpush1.msra.mxu0 0.0
    %3741 = vmatprep.subr.mxu0 0.0
    %3742 = vmatpush1.msra.mxu0 0.0
    %3743 = vmatprep.subr.mxu0 0.0
    %3744 = vmatpush1.msra.mxu0 0.0
    %3745 = vmatprep.subr.mxu0 0.0
    %3746 = vmatpush1.msra.mxu0 0.0
    %3747 = vmatprep.subr.mxu0 0.0
    %3748 = vmatpush1.msra.mxu0 0.0
    %3749 = vmatprep.subr.mxu0 0.0
    %3750 = vmatpush1.msra.mxu0 0.0
    %3751 = vmatprep.subr.mxu0 0.0
    %3752 = vmatpush1.msra.mxu0 0.0
    %3753 = vmatprep.subr.mxu0 0.0
    %3754 = vmatpush1.msra.mxu0 0.0
    %3755 = vmatprep.subr.mxu0 0.0
    %3756 = vmatpush1.msra.mxu0 0.0
    %3757 = vmatprep.subr.mxu0 0.0
    %3758 = vmatpush1.msra.mxu0 0.0
    %3759 = vmatprep.subr.mxu0 0.0
    %3760 = vmatpush1.msra.mxu0 0.0
    %3761 = vmatprep.subr.mxu0 0.0
    %3762 = vmatpush1.msra.mxu0 0.0
    %3763 = vmatprep.subr.mxu0 0.0
    %3764 = vmatpush1.msra.mxu0 0.0
    %3765 = vmatprep.subr.mxu0 0.0
    %3766 = vmatpush1.msra.mxu0 0.0
    %3767 = vmatprep.subr.mxu0 0.0
    %3768 = vmatpush1.msra.mxu0 0.0
    %3769 = vmatprep.mubr.f32.mxu0 0.0
    %3770 = vmatmul.mubr.f32.gmra.mrb[0].mxu0 %v3703
    %v3771 = vpop.f32.mrb[0].mxu0
    %v3772 = vadd.f32 0.0, %v3771
    %v3773 = vpop.f32.mrb[0].mxu0
    %3774 = vdwg.mxu0
    %3775 = vrot.lane.b32.xlu0 %v2924, 120
    %v3776 = vpop.permute.xlu0 %3775
    %3777 = vrot.lane.b32.xlu0 %v2924, 88
    %v3778 = vpop.permute.xlu0 %3777
    %v3779 = vsel %vm990, %v3776, 0
    %v3781 = vsel %vm990, %v3778, 0
    %3783 = vmatprep.subr.mxu0 0.0
    %3784 = vmatpush1.xpose.msra.mxu0 %v3781
    %3785 = vmatprep.subr.mxu0 0.0
    %3786 = vmatpush1.xpose.msra.mxu0 0.0
    %3787 = vmatprep.subr.mxu0 0.0
    %3788 = vmatpush1.xpose.msra.mxu0 0.0
    %3789 = vmatprep.subr.mxu0 0.0
    %3790 = vmatpush1.xpose.msra.mxu0 0.0
    %3791 = vmatprep.subr.mxu0 0.0
    %3792 = vmatpush1.xpose.msra.mxu0 0.0
    %3793 = vmatprep.subr.mxu0 0.0
    %3794 = vmatpush1.xpose.msra.mxu0 0.0
    %3795 = vmatprep.subr.mxu0 0.0
    %3796 = vmatpush1.xpose.msra.mxu0 0.0
    %3797 = vmatprep.subr.mxu0 0.0
    %3798 = vmatpush1.xpose.msra.mxu0 0.0
    %3799 = vmatprep.subr.mxu0 0.0
    %3800 = vmatpush1.xpose.msra.mxu0 0.0
    %3801 = vmatprep.subr.mxu0 0.0
    %3802 = vmatpush1.xpose.msra.mxu0 0.0
    %3803 = vmatprep.subr.mxu0 0.0
    %3804 = vmatpush1.xpose.msra.mxu0 0.0
    %3805 = vmatprep.subr.mxu0 0.0
    %3806 = vmatpush1.xpose.msra.mxu0 0.0
    %3807 = vmatprep.subr.mxu0 0.0
    %3808 = vmatpush1.xpose.msra.mxu0 0.0
    %3809 = vmatprep.subr.mxu0 0.0
    %3810 = vmatpush1.xpose.msra.mxu0 0.0
    %3811 = vmatprep.subr.mxu0 0.0
    %3812 = vmatpush1.xpose.msra.mxu0 0.0
    %3813 = vmatprep.subr.mxu0 0.0
    %3814 = vmatpush1.xpose.msra.mxu0 0.0
    %3815 = vmatprep.subr.mxu0 0.0
    %3816 = vmatpush1.xpose.msra.mxu0 0.0
    %3817 = vmatprep.subr.mxu0 0.0
    %3818 = vmatpush1.xpose.msra.mxu0 0.0
    %3819 = vmatprep.subr.mxu0 0.0
    %3820 = vmatpush1.xpose.msra.mxu0 0.0
    %3821 = vmatprep.subr.mxu0 0.0
    %3822 = vmatpush1.xpose.msra.mxu0 0.0
    %3823 = vmatprep.subr.mxu0 0.0
    %3824 = vmatpush1.xpose.msra.mxu0 0.0
    %3825 = vmatprep.subr.mxu0 0.0
    %3826 = vmatpush1.xpose.msra.mxu0 0.0
    %3827 = vmatprep.subr.mxu0 0.0
    %3828 = vmatpush1.xpose.msra.mxu0 0.0
    %3829 = vmatprep.subr.mxu0 0.0
    %3830 = vmatpush1.xpose.msra.mxu0 0.0
    %3831 = vmatprep.subr.mxu0 0.0
    %3832 = vmatpush1.xpose.msra.mxu0 0.0
    %3833 = vmatprep.subr.mxu0 0.0
    %3834 = vmatpush1.xpose.msra.mxu0 0.0
    %3835 = vmatprep.subr.mxu0 0.0
    %3836 = vmatpush1.xpose.msra.mxu0 0.0
    %3837 = vmatprep.subr.mxu0 0.0
    %3838 = vmatpush1.xpose.msra.mxu0 0.0
    %3839 = vmatprep.subr.mxu0 0.0
    %3840 = vmatpush1.xpose.msra.mxu0 0.0
    %3841 = vmatprep.subr.mxu0 0.0
    %3842 = vmatpush1.xpose.msra.mxu0 0.0
    %3843 = vmatprep.subr.mxu0 0.0
    %3844 = vmatpush1.xpose.msra.mxu0 0.0
    %3845 = vmatprep.subr.mxu0 0.0
    %3846 = vmatpush1.xpose.msra.mxu0 0.0
    %3847 = vmatprep.mubr.f32.mxu0 0.0
    %3848 = vmatmul.mubr.f32.gmra.mrb[0].mxu0 %v3779
    %v3849 = vpop.f32.mrb[0].mxu0
    %v3850 = vadd.f32 0.0, %v3849
    %v3851 = vpop.f32.mrb[0].mxu0
    %3852 = vdwg.mxu0
    %v3853 = vmul.f32 %v3850, 0.35355338
    %v3854 = vadd.f32 %v3853, %v2797
    %v3855 = vsel %vm990, %v3854, -inf
    %3856 = vmax.xlane.f32.xlu0 %v3855
    %v3857 = vpop.xlane.xlu0 %3856
    %v3858 = vsub.f32 %v3854, %v3857
    %v3859 = vmul.f32 %v3858, 1.442695
    %v3860 = vpow.pop %v3859
    %v3861 = vsel %vm990, %v3860, 0.0
    %3862 = vadd.xlane.f32.xlu0 %v3861
    %v3863 = vpop.xlane.xlu0 %3862
    %v3864 = vrcp.pop %v3863
    %v3865 = vmul.f32 %v3860, %v3864
    %3866 = vrot.lane.b32.xlu0 %v2924, 56
    %v3867 = vpop.permute.xlu0 %3866
    %v3870 = vsel %vm990, %v3865, 0
    %3872 = vmatprep.subr.mxu0 0.0
    %3873 = vmatpush1.msra.mxu0 %v3867
    %3874 = vmatprep.subr.mxu0 0.0
    %3875 = vmatpush1.msra.mxu0 0.0
    %3876 = vmatprep.subr.mxu0 0.0
    %3877 = vmatpush1.msra.mxu0 0.0
    %3878 = vmatprep.subr.mxu0 0.0
    %3879 = vmatpush1.msra.mxu0 0.0
    %3880 = vmatprep.subr.mxu0 0.0
    %3881 = vmatpush1.msra.mxu0 0.0
    %3882 = vmatprep.subr.mxu0 0.0
    %3883 = vmatpush1.msra.mxu0 0.0
    %3884 = vmatprep.subr.mxu0 0.0
    %3885 = vmatpush1.msra.mxu0 0.0
    %3886 = vmatprep.subr.mxu0 0.0
    %3887 = vmatpush1.msra.mxu0 0.0
    %3888 = vmatprep.subr.mxu0 0.0
    %3889 = vmatpush1.msra.mxu0 0.0
    %3890 = vmatprep.subr.mxu0 0.0
    %3891 = vmatpush1.msra.mxu0 0.0
    %3892 = vmatprep.subr.mxu0 0.0
    %3893 = vmatpush1.msra.mxu0 0.0
    %3894 = vmatprep.subr.mxu0 0.0
    %3895 = vmatpush1.msra.mxu0 0.0
    %3896 = vmatprep.subr.mxu0 0.0
    %3897 = vmatpush1.msra.mxu0 0.0
    %3898 = vmatprep.subr.mxu0 0.0
    %3899 = vmatpush1.msra.mxu0 0.0
    %3900 = vmatprep.subr.mxu0 0.0
    %3901 = vmatpush1.msra.mxu0 0.0
    %3902 = vmatprep.subr.mxu0 0.0
    %3903 = vmatpush1.msra.mxu0 0.0
    %3904 = vmatprep.subr.mxu0 0.0
    %3905 = vmatpush1.msra.mxu0 0.0
    %3906 = vmatprep.subr.mxu0 0.0
    %3907 = vmatpush1.msra.mxu0 0.0
    %3908 = vmatprep.subr.mxu0 0.0
    %3909 = vmatpush1.msra.mxu0 0.0
    %3910 = vmatprep.subr.mxu0 0.0
    %3911 = vmatpush1.msra.mxu0 0.0
    %3912 = vmatprep.subr.mxu0 0.0
    %3913 = vmatpush1.msra.mxu0 0.0
    %3914 = vmatprep.subr.mxu0 0.0
    %3915 = vmatpush1.msra.mxu0 0.0
    %3916 = vmatprep.subr.mxu0 0.0
    %3917 = vmatpush1.msra.mxu0 0.0
    %3918 = vmatprep.subr.mxu0 0.0
    %3919 = vmatpush1.msra.mxu0 0.0
    %3920 = vmatprep.subr.mxu0 0.0
    %3921 = vmatpush1.msra.mxu0 0.0
    %3922 = vmatprep.subr.mxu0 0.0
    %3923 = vmatpush1.msra.mxu0 0.0
    %3924 = vmatprep.subr.mxu0 0.0
    %3925 = vmatpush1.msra.mxu0 0.0
    %3926 = vmatprep.subr.mxu0 0.0
    %3927 = vmatpush1.msra.mxu0 0.0
    %3928 = vmatprep.subr.mxu0 0.0
    %3929 = vmatpush1.msra.mxu0 0.0
    %3930 = vmatprep.subr.mxu0 0.0
    %3931 = vmatpush1.msra.mxu0 0.0
    %3932 = vmatprep.subr.mxu0 0.0
    %3933 = vmatpush1.msra.mxu0 0.0
    %3934 = vmatprep.subr.mxu0 0.0
    %3935 = vmatpush1.msra.mxu0 0.0
    %3936 = vmatprep.mubr.f32.mxu0 0.0
    %3937 = vmatmul.mubr.f32.gmra.mrb[0].mxu0 %v3870
    %v3938 = vpop.f32.mrb[0].mxu0
    %v3939 = vadd.f32 0.0, %v3938
    %v3940 = vpop.f32.mrb[0].mxu0
    %3941 = vdwg.mxu0
    %3942 = vrot.lane.b32.xlu0 %v2924, 112
    %v3943 = vpop.permute.xlu0 %3942
    %3944 = vrot.lane.b32.xlu0 %v2924, 80
    %v3945 = vpop.permute.xlu0 %3944
    %v3946 = vsel %vm990, %v3943, 0
    %v3948 = vsel %vm990, %v3945, 0
    %3950 = vmatprep.subr.mxu0 0.0
    %3951 = vmatpush1.xpose.msra.mxu0 %v3948
    %3952 = vmatprep.subr.mxu0 0.0
    %3953 = vmatpush1.xpose.msra.mxu0 0.0
    %3954 = vmatprep.subr.mxu0 0.0
    %3955 = vmatpush1.xpose.msra.mxu0 0.0
    %3956 = vmatprep.subr.mxu0 0.0
    %3957 = vmatpush1.xpose.msra.mxu0 0.0
    %3958 = vmatprep.subr.mxu0 0.0
    %3959 = vmatpush1.xpose.msra.mxu0 0.0
    %3960 = vmatprep.subr.mxu0 0.0
    %3961 = vmatpush1.xpose.msra.mxu0 0.0
    %3962 = vmatprep.subr.mxu0 0.0
    %3963 = vmatpush1.xpose.msra.mxu0 0.0
    %3964 = vmatprep.subr.mxu0 0.0
    %3965 = vmatpush1.xpose.msra.mxu0 0.0
    %3966 = vmatprep.subr.mxu0 0.0
    %3967 = vmatpush1.xpose.msra.mxu0 0.0
    %3968 = vmatprep.subr.mxu0 0.0
    %3969 = vmatpush1.xpose.msra.mxu0 0.0
    %3970 = vmatprep.subr.mxu0 0.0
    %3971 = vmatpush1.xpose.msra.mxu0 0.0
    %3972 = vmatprep.subr.mxu0 0.0
    %3973 = vmatpush1.xpose.msra.mxu0 0.0
    %3974 = vmatprep.subr.mxu0 0.0
    %3975 = vmatpush1.xpose.msra.mxu0 0.0
    %3976 = vmatprep.subr.mxu0 0.0
    %3977 = vmatpush1.xpose.msra.mxu0 0.0
    %3978 = vmatprep.subr.mxu0 0.0
    %3979 = vmatpush1.xpose.msra.mxu0 0.0
    %3980 = vmatprep.subr.mxu0 0.0
    %3981 = vmatpush1.xpose.msra.mxu0 0.0
    %3982 = vmatprep.subr.mxu0 0.0
    %3983 = vmatpush1.xpose.msra.mxu0 0.0
    %3984 = vmatprep.subr.mxu0 0.0
    %3985 = vmatpush1.xpose.msra.mxu0 0.0
    %3986 = vmatprep.subr.mxu0 0.0
    %3987 = vmatpush1.xpose.msra.mxu0 0.0
    %3988 = vmatprep.subr.mxu0 0.0
    %3989 = vmatpush1.xpose.msra.mxu0 0.0
    %3990 = vmatprep.subr.mxu0 0.0
    %3991 = vmatpush1.xpose.msra.mxu0 0.0
    %3992 = vmatprep.subr.mxu0 0.0
    %3993 = vmatpush1.xpose.msra.mxu0 0.0
    %3994 = vmatprep.subr.mxu0 0.0
    %3995 = vmatpush1.xpose.msra.mxu0 0.0
    %3996 = vmatprep.subr.mxu0 0.0
    %3997 = vmatpush1.xpose.msra.mxu0 0.0
    %3998 = vmatprep.subr.mxu0 0.0
    %3999 = vmatpush1.xpose.msra.mxu0 0.0
    %4000 = vmatprep.subr.mxu0 0.0
    %4001 = vmatpush1.xpose.msra.mxu0 0.0
    %4002 = vmatprep.subr.mxu0 0.0
    %4003 = vmatpush1.xpose.msra.mxu0 0.0
    %4004 = vmatprep.subr.mxu0 0.0
    %4005 = vmatpush1.xpose.msra.mxu0 0.0
    %4006 = vmatprep.subr.mxu0 0.0
    %4007 = vmatpush1.xpose.msra.mxu0 0.0
    %4008 = vmatprep.subr.mxu0 0.0
    %4009 = vmatpush1.xpose.msra.mxu0 0.0
    %4010 = vmatprep.subr.mxu0 0.0
    %4011 = vmatpush1.xpose.msra.mxu0 0.0
    %4012 = vmatprep.subr.mxu0 0.0
    %4013 = vmatpush1.xpose.msra.mxu0 0.0
    %4014 = vmatprep.mubr.f32.mxu0 0.0
    %4015 = vmatmul.mubr.f32.gmra.mrb[0].mxu0 %v3946
    %v4016 = vpop.f32.mrb[0].mxu0
    %v4017 = vadd.f32 0.0, %v4016
    %v4018 = vpop.f32.mrb[0].mxu0
    %4019 = vdwg.mxu0
    %v4020 = vmul.f32 %v4017, 0.35355338
    %v4021 = vadd.f32 %v4020, %v2797
    %v4022 = vsel %vm990, %v4021, -inf
    %4023 = vmax.xlane.f32.xlu0 %v4022
    %v4024 = vpop.xlane.xlu0 %4023
    %v4025 = vsub.f32 %v4021, %v4024
    %v4026 = vmul.f32 %v4025, 1.442695
    %v4027 = vpow.pop %v4026
    %v4028 = vsel %vm990, %v4027, 0.0
    %4029 = vadd.xlane.f32.xlu0 %v4028
    %v4030 = vpop.xlane.xlu0 %4029
    %v4031 = vrcp.pop %v4030
    %v4032 = vmul.f32 %v4027, %v4031
    %4033 = vrot.lane.b32.xlu0 %v2924, 48
    %v4034 = vpop.permute.xlu0 %4033
    %v4037 = vsel %vm990, %v4032, 0
    %4039 = vmatprep.subr.mxu0 0.0
    %4040 = vmatpush1.msra.mxu0 %v4034
    %4041 = vmatprep.subr.mxu0 0.0
    %4042 = vmatpush1.msra.mxu0 0.0
    %4043 = vmatprep.subr.mxu0 0.0
    %4044 = vmatpush1.msra.mxu0 0.0
    %4045 = vmatprep.subr.mxu0 0.0
    %4046 = vmatpush1.msra.mxu0 0.0
    %4047 = vmatprep.subr.mxu0 0.0
    %4048 = vmatpush1.msra.mxu0 0.0
    %4049 = vmatprep.subr.mxu0 0.0
    %4050 = vmatpush1.msra.mxu0 0.0
    %4051 = vmatprep.subr.mxu0 0.0
    %4052 = vmatpush1.msra.mxu0 0.0
    %4053 = vmatprep.subr.mxu0 0.0
    %4054 = vmatpush1.msra.mxu0 0.0
    %4055 = vmatprep.subr.mxu0 0.0
    %4056 = vmatpush1.msra.mxu0 0.0
    %4057 = vmatprep.subr.mxu0 0.0
    %4058 = vmatpush1.msra.mxu0 0.0
    %4059 = vmatprep.subr.mxu0 0.0
    %4060 = vmatpush1.msra.mxu0 0.0
    %4061 = vmatprep.subr.mxu0 0.0
    %4062 = vmatpush1.msra.mxu0 0.0
    %4063 = vmatprep.subr.mxu0 0.0
    %4064 = vmatpush1.msra.mxu0 0.0
    %4065 = vmatprep.subr.mxu0 0.0
    %4066 = vmatpush1.msra.mxu0 0.0
    %4067 = vmatprep.subr.mxu0 0.0
    %4068 = vmatpush1.msra.mxu0 0.0
    %4069 = vmatprep.subr.mxu0 0.0
    %4070 = vmatpush1.msra.mxu0 0.0
    %4071 = vmatprep.subr.mxu0 0.0
    %4072 = vmatpush1.msra.mxu0 0.0
    %4073 = vmatprep.subr.mxu0 0.0
    %4074 = vmatpush1.msra.mxu0 0.0
    %4075 = vmatprep.subr.mxu0 0.0
    %4076 = vmatpush1.msra.mxu0 0.0
    %4077 = vmatprep.subr.mxu0 0.0
    %4078 = vmatpush1.msra.mxu0 0.0
    %4079 = vmatprep.subr.mxu0 0.0
    %4080 = vmatpush1.msra.mxu0 0.0
    %4081 = vmatprep.subr.mxu0 0.0
    %4082 = vmatpush1.msra.mxu0 0.0
    %4083 = vmatprep.subr.mxu0 0.0
    %4084 = vmatpush1.msra.mxu0 0.0
    %4085 = vmatprep.subr.mxu0 0.0
    %4086 = vmatpush1.msra.mxu0 0.0
    %4087 = vmatprep.subr.mxu0 0.0
    %4088 = vmatpush1.msra.mxu0 0.0
    %4089 = vmatprep.subr.mxu0 0.0
    %4090 = vmatpush1.msra.mxu0 0.0
    %4091 = vmatprep.subr.mxu0 0.0
    %4092 = vmatpush1.msra.mxu0 0.0
    %4093 = vmatprep.subr.mxu0 0.0
    %4094 = vmatpush1.msra.mxu0 0.0
    %4095 = vmatprep.subr.mxu0 0.0
    %4096 = vmatpush1.msra.mxu0 0.0
    %4097 = vmatprep.subr.mxu0 0.0
    %4098 = vmatpush1.msra.mxu0 0.0
    %4099 = vmatprep.subr.mxu0 0.0
    %4100 = vmatpush1.msra.mxu0 0.0
    %4101 = vmatprep.subr.mxu0 0.0
    %4102 = vmatpush1.msra.mxu0 0.0
    %4103 = vmatprep.mubr.f32.mxu0 0.0
    %4104 = vmatmul.mubr.f32.gmra.mrb[0].mxu0 %v4037
    %v4105 = vpop.f32.mrb[0].mxu0
    %v4106 = vadd.f32 0.0, %v4105
    %v4107 = vpop.f32.mrb[0].mxu0
    %4108 = vdwg.mxu0
    %4109 = vrot.lane.b32.xlu0 %v2924, 104
    %v4110 = vpop.permute.xlu0 %4109
    %4111 = vrot.lane.b32.xlu0 %v2924, 72
    %v4112 = vpop.permute.xlu0 %4111
    %v4113 = vsel %vm990, %v4110, 0
    %v4115 = vsel %vm990, %v4112, 0
    %4117 = vmatprep.subr.mxu0 0.0
    %4118 = vmatpush1.xpose.msra.mxu0 %v4115
    %4119 = vmatprep.subr.mxu0 0.0
    %4120 = vmatpush1.xpose.msra.mxu0 0.0
    %4121 = vmatprep.subr.mxu0 0.0
    %4122 = vmatpush1.xpose.msra.mxu0 0.0
    %4123 = vmatprep.subr.mxu0 0.0
    %4124 = vmatpush1.xpose.msra.mxu0 0.0
    %4125 = vmatprep.subr.mxu0 0.0
    %4126 = vmatpush1.xpose.msra.mxu0 0.0
    %4127 = vmatprep.subr.mxu0 0.0
    %4128 = vmatpush1.xpose.msra.mxu0 0.0
    %4129 = vmatprep.subr.mxu0 0.0
    %4130 = vmatpush1.xpose.msra.mxu0 0.0
    %4131 = vmatprep.subr.mxu0 0.0
    %4132 = vmatpush1.xpose.msra.mxu0 0.0
    %4133 = vmatprep.subr.mxu0 0.0
    %4134 = vmatpush1.xpose.msra.mxu0 0.0
    %4135 = vmatprep.subr.mxu0 0.0
    %4136 = vmatpush1.xpose.msra.mxu0 0.0
    %4137 = vmatprep.subr.mxu0 0.0
    %4138 = vmatpush1.xpose.msra.mxu0 0.0
    %4139 = vmatprep.subr.mxu0 0.0
    %4140 = vmatpush1.xpose.msra.mxu0 0.0
    %4141 = vmatprep.subr.mxu0 0.0
    %4142 = vmatpush1.xpose.msra.mxu0 0.0
    %4143 = vmatprep.subr.mxu0 0.0
    %4144 = vmatpush1.xpose.msra.mxu0 0.0
    %4145 = vmatprep.subr.mxu0 0.0
    %4146 = vmatpush1.xpose.msra.mxu0 0.0
    %4147 = vmatprep.subr.mxu0 0.0
    %4148 = vmatpush1.xpose.msra.mxu0 0.0
    %4149 = vmatprep.subr.mxu0 0.0
    %4150 = vmatpush1.xpose.msra.mxu0 0.0
    %4151 = vmatprep.subr.mxu0 0.0
    %4152 = vmatpush1.xpose.msra.mxu0 0.0
    %4153 = vmatprep.subr.mxu0 0.0
    %4154 = vmatpush1.xpose.msra.mxu0 0.0
    %4155 = vmatprep.subr.mxu0 0.0
    %4156 = vmatpush1.xpose.msra.mxu0 0.0
    %4157 = vmatprep.subr.mxu0 0.0
    %4158 = vmatpush1.xpose.msra.mxu0 0.0
    %4159 = vmatprep.subr.mxu0 0.0
    %4160 = vmatpush1.xpose.msra.mxu0 0.0
    %4161 = vmatprep.subr.mxu0 0.0
    %4162 = vmatpush1.xpose.msra.mxu0 0.0
    %4163 = vmatprep.subr.mxu0 0.0
    %4164 = vmatpush1.xpose.msra.mxu0 0.0
    %4165 = vmatprep.subr.mxu0 0.0
    %4166 = vmatpush1.xpose.msra.mxu0 0.0
    %4167 = vmatprep.subr.mxu0 0.0
    %4168 = vmatpush1.xpose.msra.mxu0 0.0
    %4169 = vmatprep.subr.mxu0 0.0
    %4170 = vmatpush1.xpose.msra.mxu0 0.0
    %4171 = vmatprep.subr.mxu0 0.0
    %4172 = vmatpush1.xpose.msra.mxu0 0.0
    %4173 = vmatprep.subr.mxu0 0.0
    %4174 = vmatpush1.xpose.msra.mxu0 0.0
    %4175 = vmatprep.subr.mxu0 0.0
    %4176 = vmatpush1.xpose.msra.mxu0 0.0
    %4177 = vmatprep.subr.mxu0 0.0
    %4178 = vmatpush1.xpose.msra.mxu0 0.0
    %4179 = vmatprep.subr.mxu0 0.0
    %4180 = vmatpush1.xpose.msra.mxu0 0.0
    %4181 = vmatprep.mubr.f32.mxu0 0.0
    %4182 = vmatmul.mubr.f32.gmra.mrb[0].mxu0 %v4113
    %v4183 = vpop.f32.mrb[0].mxu0
    %v4184 = vadd.f32 0.0, %v4183
    %v4185 = vpop.f32.mrb[0].mxu0
    %4186 = vdwg.mxu0
    %v4187 = vmul.f32 %v4184, 0.35355338
    %v4188 = vadd.f32 %v4187, %v2797
    %v4189 = vsel %vm990, %v4188, -inf
    %4190 = vmax.xlane.f32.xlu0 %v4189
    %v4191 = vpop.xlane.xlu0 %4190
    %v4192 = vsub.f32 %v4188, %v4191
    %v4193 = vmul.f32 %v4192, 1.442695
    %v4194 = vpow.pop %v4193
    %v4195 = vsel %vm990, %v4194, 0.0
    %4196 = vadd.xlane.f32.xlu0 %v4195
    %v4197 = vpop.xlane.xlu0 %4196
    %v4198 = vrcp.pop %v4197
    %v4199 = vmul.f32 %v4194, %v4198
    %4200 = vrot.lane.b32.xlu0 %v2924, 40
    %v4201 = vpop.permute.xlu0 %4200
    %v4204 = vsel %vm990, %v4199, 0
    %4206 = vmatprep.subr.mxu0 0.0
    %4207 = vmatpush1.msra.mxu0 %v4201
    %4208 = vmatprep.subr.mxu0 0.0
    %4209 = vmatpush1.msra.mxu0 0.0
    %4210 = vmatprep.subr.mxu0 0.0
    %4211 = vmatpush1.msra.mxu0 0.0
    %4212 = vmatprep.subr.mxu0 0.0
    %4213 = vmatpush1.msra.mxu0 0.0
    %4214 = vmatprep.subr.mxu0 0.0
    %4215 = vmatpush1.msra.mxu0 0.0
    %4216 = vmatprep.subr.mxu0 0.0
    %4217 = vmatpush1.msra.mxu0 0.0
    %4218 = vmatprep.subr.mxu0 0.0
    %4219 = vmatpush1.msra.mxu0 0.0
    %4220 = vmatprep.subr.mxu0 0.0
    %4221 = vmatpush1.msra.mxu0 0.0
    %4222 = vmatprep.subr.mxu0 0.0
    %4223 = vmatpush1.msra.mxu0 0.0
    %4224 = vmatprep.subr.mxu0 0.0
    %4225 = vmatpush1.msra.mxu0 0.0
    %4226 = vmatprep.subr.mxu0 0.0
    %4227 = vmatpush1.msra.mxu0 0.0
    %4228 = vmatprep.subr.mxu0 0.0
    %4229 = vmatpush1.msra.mxu0 0.0
    %4230 = vmatprep.subr.mxu0 0.0
    %4231 = vmatpush1.msra.mxu0 0.0
    %4232 = vmatprep.subr.mxu0 0.0
    %4233 = vmatpush1.msra.mxu0 0.0
    %4234 = vmatprep.subr.mxu0 0.0
    %4235 = vmatpush1.msra.mxu0 0.0
    %4236 = vmatprep.subr.mxu0 0.0
    %4237 = vmatpush1.msra.mxu0 0.0
    %4238 = vmatprep.subr.mxu0 0.0
    %4239 = vmatpush1.msra.mxu0 0.0
    %4240 = vmatprep.subr.mxu0 0.0
    %4241 = vmatpush1.msra.mxu0 0.0
    %4242 = vmatprep.subr.mxu0 0.0
    %4243 = vmatpush1.msra.mxu0 0.0
    %4244 = vmatprep.subr.mxu0 0.0
    %4245 = vmatpush1.msra.mxu0 0.0
    %4246 = vmatprep.subr.mxu0 0.0
    %4247 = vmatpush1.msra.mxu0 0.0
    %4248 = vmatprep.subr.mxu0 0.0
    %4249 = vmatpush1.msra.mxu0 0.0
    %4250 = vmatprep.subr.mxu0 0.0
    %4251 = vmatpush1.msra.mxu0 0.0
    %4252 = vmatprep.subr.mxu0 0.0
    %4253 = vmatpush1.msra.mxu0 0.0
    %4254 = vmatprep.subr.mxu0 0.0
    %4255 = vmatpush1.msra.mxu0 0.0
    %4256 = vmatprep.subr.mxu0 0.0
    %4257 = vmatpush1.msra.mxu0 0.0
    %4258 = vmatprep.subr.mxu0 0.0
    %4259 = vmatpush1.msra.mxu0 0.0
    %4260 = vmatprep.subr.mxu0 0.0
    %4261 = vmatpush1.msra.mxu0 0.0
    %4262 = vmatprep.subr.mxu0 0.0
    %4263 = vmatpush1.msra.mxu0 0.0
    %4264 = vmatprep.subr.mxu0 0.0
    %4265 = vmatpush1.msra.mxu0 0.0
    %4266 = vmatprep.subr.mxu0 0.0
    %4267 = vmatpush1.msra.mxu0 0.0
    %4268 = vmatprep.subr.mxu0 0.0
    %4269 = vmatpush1.msra.mxu0 0.0
    %4270 = vmatprep.mubr.f32.mxu0 0.0
    %4271 = vmatmul.mubr.f32.gmra.mrb[0].mxu0 %v4204
    %v4272 = vpop.f32.mrb[0].mxu0
    %v4273 = vadd.f32 0.0, %v4272
    %v4274 = vpop.f32.mrb[0].mxu0
    %4275 = vdwg.mxu0
    %4277 = vrot.lane.b32.xlu0 %v3939, 8
    %v4278 = vpop.permute.xlu0 %4277
    %4281 = vrot.lane.b32.xlu0 %v4106, 16
    %v4282 = vpop.permute.xlu0 %4281
    %4285 = vrot.lane.b32.xlu0 %v4273, 24
    %v4286 = vpop.permute.xlu0 %4285
    %v4288 = vsel %vm990, %v3772, %v4278
    %v4289 = vsel %vm1671, %v4288, %v4282
    %v4290 = vsel %vm1673, %v4289, %v4286
    %v4292 = vlaneseq
    %v4293 = vshrl.u32 %v4292, 7
    %v4294 = vsub.s32 0, %v4293
    %v4295 = vrot.slane %v387, %v4294
    %v4298 = vsel %vm813, %v3608, 0
    %v4301 = vsel %vm813, %v4290, 0
    %4303 = vmatprep.subr.mxu0 0.0
    %4304 = vmatpush1.msra.mxu0 %v383
    %4305 = vmatprep.subr.mxu0 0.0
    %4306 = vmatpush1.msra.mxu0 %v384
    %4307 = vmatprep.subr.mxu0 0.0
    %4308 = vmatpush1.msra.mxu0 %v385
    %4309 = vmatprep.subr.mxu0 0.0
    %4310 = vmatpush1.msra.mxu0 %v386
    %4311 = vmatprep.subr.mxu0 0.0
    %4312 = vmatpush1.msra.mxu0 0.0
    %4313 = vmatprep.subr.mxu0 0.0
    %4314 = vmatpush1.msra.mxu0 0.0
    %4315 = vmatprep.subr.mxu0 0.0
    %4316 = vmatpush1.msra.mxu0 0.0
    %4317 = vmatprep.subr.mxu0 0.0
    %4318 = vmatpush1.msra.mxu0 0.0
    %4319 = vmatprep.subr.mxu0 0.0
    %4320 = vmatpush1.msra.mxu0 0.0
    %4321 = vmatprep.subr.mxu0 0.0
    %4322 = vmatpush1.msra.mxu0 0.0
    %4323 = vmatprep.subr.mxu0 0.0
    %4324 = vmatpush1.msra.mxu0 0.0
    %4325 = vmatprep.subr.mxu0 0.0
    %4326 = vmatpush1.msra.mxu0 0.0
    %4327 = vmatprep.subr.mxu0 0.0
    %4328 = vmatpush1.msra.mxu0 0.0
    %4329 = vmatprep.subr.mxu0 0.0
    %4330 = vmatpush1.msra.mxu0 0.0
    %4331 = vmatprep.subr.mxu0 0.0
    %4332 = vmatpush1.msra.mxu0 0.0
    %4333 = vmatprep.subr.mxu0 0.0
    %4334 = vmatpush1.msra.mxu0 0.0
    %4335 = vmatprep.subr.mxu0 0.0
    %4336 = vmatpush1.msra.mxu0 0.0
    %4337 = vmatprep.subr.mxu0 0.0
    %4338 = vmatpush1.msra.mxu0 0.0
    %4339 = vmatprep.subr.mxu0 0.0
    %4340 = vmatpush1.msra.mxu0 0.0
    %4341 = vmatprep.subr.mxu0 0.0
    %4342 = vmatpush1.msra.mxu0 0.0
    %4343 = vmatprep.subr.mxu0 0.0
    %4344 = vmatpush1.msra.mxu0 0.0
    %4345 = vmatprep.subr.mxu0 0.0
    %4346 = vmatpush1.msra.mxu0 0.0
    %4347 = vmatprep.subr.mxu0 0.0
    %4348 = vmatpush1.msra.mxu0 0.0
    %4349 = vmatprep.subr.mxu0 0.0
    %4350 = vmatpush1.msra.mxu0 0.0
    %4351 = vmatprep.subr.mxu0 0.0
    %4352 = vmatpush1.msra.mxu0 0.0
    %4353 = vmatprep.subr.mxu0 0.0
    %4354 = vmatpush1.msra.mxu0 0.0
    %4355 = vmatprep.subr.mxu0 0.0
    %4356 = vmatpush1.msra.mxu0 0.0
    %4357 = vmatprep.subr.mxu0 0.0
    %4358 = vmatpush1.msra.mxu0 0.0
    %4359 = vmatprep.subr.mxu0 0.0
    %4360 = vmatpush1.msra.mxu0 0.0
    %4361 = vmatprep.subr.mxu0 0.0
    %4362 = vmatpush1.msra.mxu0 0.0
    %4363 = vmatprep.subr.mxu0 0.0
    %4364 = vmatpush1.msra.mxu0 0.0
    %4365 = vmatprep.subr.mxu0 0.0
    %4366 = vmatpush1.msra.mxu0 0.0
    %4367 = vmatprep.mubr.f32.mxu0 0.0
    %4368 = vmatmul.mubr.f32.gmra.mrb[0].mxu0 %v4298
    %v4369 = vpop.f32.mrb[0].mxu0
    %v4370 = vadd.f32 %v4295, %v4369
    %v4371 = vpop.f32.mrb[0].mxu0
    %4372 = vmatprep.mubr.f32.mxu0 0.0
    %4373 = vmatmul.mubr.f32.gmra.mrb[0].mxu0 %v4301
    %v4374 = vpop.f32.mrb[0].mxu0
    %v4375 = vadd.f32 %v4295, %v4374
    %v4376 = vpop.f32.mrb[0].mxu0
    %4377 = vdwg.mxu0
    %v4378 = vadd.f32 %v2790, %v4370
    %v4379 = vadd.f32 %v2791, %v4375
    %v4380 = vsel %vm813, %v4378, 0.0
    %4381 = vadd.xlane.f32.xlu0 %v4380
    %v4382 = vpop.xlane.xlu0 %4381
    %v4383 = vsel %vm813, %v4379, 0.0
    %4384 = vadd.xlane.f32.xlu0 %v4383
    %v4385 = vpop.xlane.xlu0 %4384
    %v4386 = vmul.f32 %v4382, %v821
    %v4387 = vmul.f32 %v4385, %v821
    %v4388 = vsub.f32 %v4378, %v4386
    %v4389 = vsub.f32 %v4379, %v4387
    %v4390 = vmul.f32 %v4388, %v4388
    %v4391 = vmul.f32 %v4389, %v4389
    %v4392 = vsel %vm813, %v4390, 0.0
    %4393 = vadd.xlane.f32.xlu0 %v4392
    %v4394 = vpop.xlane.xlu0 %4393
    %v4395 = vsel %vm813, %v4391, 0.0
    %4396 = vadd.xlane.f32.xlu0 %v4395
    %v4397 = vpop.xlane.xlu0 %4396
    %v4398 = vmul.f32 %v4394, %v821
    %v4399 = vmul.f32 %v4397, %v821
    %v4400 = vadd.f32 %v4398, 1e-05
    %v4401 = vadd.f32 %v4399, 1e-05
    %v4402 = vrsqrt.pop %v4400
    %v4403 = vrsqrt.pop %v4401
    %v4404 = vmul.f32 %v4388, %v4402
    %v4405 = vmul.f32 %v4389, %v4403
    %v4407 = vlaneseq
    %v4408 = vshrl.u32 %v4407, 7
    %v4409 = vsub.s32 0, %v4408
    %v4410 = vrot.slane %v388, %v4409
    %v4412 = vmul.f32 %v4404, %v4410
    %v4413 = vmul.f32 %v4405, %v4410
    %v4415 = vlaneseq
    %v4416 = vshrl.u32 %v4415, 7
    %v4417 = vsub.s32 0, %v4416
    %v4418 = vrot.slane %v389, %v4417
    %v4420 = vadd.f32 %v4412, %v4418
    %v4421 = vadd.f32 %v4413, %v4418
    %v4423 = vlaneseq
    %v4424 = vshrl.u32 %v4423, 7
    %v4425 = vsub.s32 0, %v4424
    %v4426 = vrot.slane %v394, %v4425
    %v4429 = vsel %vm813, %v4420, 0
    %v4432 = vsel %vm813, %v4421, 0
    %4434 = vmatprep.subr.mxu0 0.0
    %4435 = vmatpush1.msra.mxu0 %v390
    %4436 = vmatprep.subr.mxu0 0.0
    %4437 = vmatpush1.msra.mxu0 %v391
    %4438 = vmatprep.subr.mxu0 0.0
    %4439 = vmatpush1.msra.mxu0 %v392
    %4440 = vmatprep.subr.mxu0 0.0
    %4441 = vmatpush1.msra.mxu0 %v393
    %4442 = vmatprep.subr.mxu0 0.0
    %4443 = vmatpush1.msra.mxu0 0.0
    %4444 = vmatprep.subr.mxu0 0.0
    %4445 = vmatpush1.msra.mxu0 0.0
    %4446 = vmatprep.subr.mxu0 0.0
    %4447 = vmatpush1.msra.mxu0 0.0
    %4448 = vmatprep.subr.mxu0 0.0
    %4449 = vmatpush1.msra.mxu0 0.0
    %4450 = vmatprep.subr.mxu0 0.0
    %4451 = vmatpush1.msra.mxu0 0.0
    %4452 = vmatprep.subr.mxu0 0.0
    %4453 = vmatpush1.msra.mxu0 0.0
    %4454 = vmatprep.subr.mxu0 0.0
    %4455 = vmatpush1.msra.mxu0 0.0
    %4456 = vmatprep.subr.mxu0 0.0
    %4457 = vmatpush1.msra.mxu0 0.0
    %4458 = vmatprep.subr.mxu0 0.0
    %4459 = vmatpush1.msra.mxu0 0.0
    %4460 = vmatprep.subr.mxu0 0.0
    %4461 = vmatpush1.msra.mxu0 0.0
    %4462 = vmatprep.subr.mxu0 0.0
    %4463 = vmatpush1.msra.mxu0 0.0
    %4464 = vmatprep.subr.mxu0 0.0
    %4465 = vmatpush1.msra.mxu0 0.0
    %4466 = vmatprep.subr.mxu0 0.0
    %4467 = vmatpush1.msra.mxu0 0.0
    %4468 = vmatprep.subr.mxu0 0.0
    %4469 = vmatpush1.msra.mxu0 0.0
    %4470 = vmatprep.subr.mxu0 0.0
    %4471 = vmatpush1.msra.mxu0 0.0
    %4472 = vmatprep.subr.mxu0 0.0
    %4473 = vmatpush1.msra.mxu0 0.0
    %4474 = vmatprep.subr.mxu0 0.0
    %4475 = vmatpush1.msra.mxu0 0.0
    %4476 = vmatprep.subr.mxu0 0.0
    %4477 = vmatpush1.msra.mxu0 0.0
    %4478 = vmatprep.subr.mxu0 0.0
    %4479 = vmatpush1.msra.mxu0 0.0
    %4480 = vmatprep.subr.mxu0 0.0
    %4481 = vmatpush1.msra.mxu0 0.0
    %4482 = vmatprep.subr.mxu0 0.0
    %4483 = vmatpush1.msra.mxu0 0.0
    %4484 = vmatprep.subr.mxu0 0.0
    %4485 = vmatpush1.msra.mxu0 0.0
    %4486 = vmatprep.subr.mxu0 0.0
    %4487 = vmatpush1.msra.mxu0 0.0
    %4488 = vmatprep.subr.mxu0 0.0
    %4489 = vmatpush1.msra.mxu0 0.0
    %4490 = vmatprep.subr.mxu0 0.0
    %4491 = vmatpush1.msra.mxu0 0.0
    %4492 = vmatprep.subr.mxu0 0.0
    %4493 = vmatpush1.msra.mxu0 0.0
    %4494 = vmatprep.subr.mxu0 0.0
    %4495 = vmatpush1.msra.mxu0 0.0
    %4496 = vmatprep.subr.mxu0 0.0
    %4497 = vmatpush1.msra.mxu0 0.0
    %4498 = vmatprep.mubr.f32.mxu0 0.0
    %4499 = vmatmul.mubr.f32.gmra.mrb[0].mxu0 %v4429
    %v4500 = vpop.f32.mrb[0].mxu0
    %v4501 = vadd.f32 %v4426, %v4500
    %v4502 = vpop.f32.mrb[0].mxu0
    %4503 = vmatprep.mubr.f32.mxu0 0.0
    %4504 = vmatmul.mubr.f32.gmra.mrb[0].mxu0 %v4432
    %v4505 = vpop.f32.mrb[0].mxu0
    %v4506 = vadd.f32 %v4426, %v4505
    %v4507 = vpop.f32.mrb[0].mxu0
    %4508 = vdwg.mxu0
    %v4509 = vmul.f32 %v4501, 1.702
    %v4510 = vmul.f32 %v4506, 1.702
    %v4511 = vxor.u32 %v4509, 2147483648
    %v4512 = vxor.u32 %v4510, 2147483648
    %v4513 = vmul.f32 %v4511, 1.442695
    %v4514 = vpow.pop %v4513
    %v4515 = vmul.f32 %v4512, 1.442695
    %v4516 = vpow.pop %v4515
    %v4517 = vadd.f32 %v4514, 1.0
    %v4518 = vadd.f32 %v4516, 1.0
    %v4519 = vrcp.pop %v4517
    %v4520 = vmul.f32 1.0, %v4519
    %v4521 = vrcp.pop %v4518
    %v4522 = vmul.f32 1.0, %v4521
    %v4523 = vmul.f32 %v4501, %v4520
    %v4524 = vmul.f32 %v4506, %v4522
    %v4526 = vlaneseq
    %v4527 = vshrl.u32 %v4526, 7
    %v4528 = vsub.s32 0, %v4527
    %v4529 = vrot.slane %v411, %v4528
    %4531 = vmatprep.subr.mxu0 0.0
    %4532 = vmatpush1.msra.mxu0 %v395
    %4533 = vmatprep.subr.mxu0 0.0
    %4534 = vmatpush1.msra.mxu0 %v396
    %4535 = vmatprep.subr.mxu0 0.0
    %4536 = vmatpush1.msra.mxu0 %v397
    %4537 = vmatprep.subr.mxu0 0.0
    %4538 = vmatpush1.msra.mxu0 %v398
    %4539 = vmatprep.subr.mxu0 0.0
    %4540 = vmatpush1.msra.mxu0 %v399
    %4541 = vmatprep.subr.mxu0 0.0
    %4542 = vmatpush1.msra.mxu0 %v400
    %4543 = vmatprep.subr.mxu0 0.0
    %4544 = vmatpush1.msra.mxu0 %v401
    %4545 = vmatprep.subr.mxu0 0.0
    %4546 = vmatpush1.msra.mxu0 %v402
    %4547 = vmatprep.subr.mxu0 0.0
    %4548 = vmatpush1.msra.mxu0 %v403
    %4549 = vmatprep.subr.mxu0 0.0
    %4550 = vmatpush1.msra.mxu0 %v404
    %4551 = vmatprep.subr.mxu0 0.0
    %4552 = vmatpush1.msra.mxu0 %v405
    %4553 = vmatprep.subr.mxu0 0.0
    %4554 = vmatpush1.msra.mxu0 %v406
    %4555 = vmatprep.subr.mxu0 0.0
    %4556 = vmatpush1.msra.mxu0 %v407
    %4557 = vmatprep.subr.mxu0 0.0
    %4558 = vmatpush1.msra.mxu0 %v408
    %4559 = vmatprep.subr.mxu0 0.0
    %4560 = vmatpush1.msra.mxu0 %v409
    %4561 = vmatprep.subr.mxu0 0.0
    %4562 = vmatpush1.msra.mxu0 %v410
    %4563 = vmatprep.subr.mxu0 0.0
    %4564 = vmatpush1.msra.mxu0 0.0
    %4565 = vmatprep.subr.mxu0 0.0
    %4566 = vmatpush1.msra.mxu0 0.0
    %4567 = vmatprep.subr.mxu0 0.0
    %4568 = vmatpush1.msra.mxu0 0.0
    %4569 = vmatprep.subr.mxu0 0.0
    %4570 = vmatpush1.msra.mxu0 0.0
    %4571 = vmatprep.subr.mxu0 0.0
    %4572 = vmatpush1.msra.mxu0 0.0
    %4573 = vmatprep.subr.mxu0 0.0
    %4574 = vmatpush1.msra.mxu0 0.0
    %4575 = vmatprep.subr.mxu0 0.0
    %4576 = vmatpush1.msra.mxu0 0.0
    %4577 = vmatprep.subr.mxu0 0.0
    %4578 = vmatpush1.msra.mxu0 0.0
    %4579 = vmatprep.subr.mxu0 0.0
    %4580 = vmatpush1.msra.mxu0 0.0
    %4581 = vmatprep.subr.mxu0 0.0
    %4582 = vmatpush1.msra.mxu0 0.0
    %4583 = vmatprep.subr.mxu0 0.0
    %4584 = vmatpush1.msra.mxu0 0.0
    %4585 = vmatprep.subr.mxu0 0.0
    %4586 = vmatpush1.msra.mxu0 0.0
    %4587 = vmatprep.subr.mxu0 0.0
    %4588 = vmatpush1.msra.mxu0 0.0
    %4589 = vmatprep.subr.mxu0 0.0
    %4590 = vmatpush1.msra.mxu0 0.0
    %4591 = vmatprep.subr.mxu0 0.0
    %4592 = vmatpush1.msra.mxu0 0.0
    %4593 = vmatprep.subr.mxu0 0.0
    %4594 = vmatpush1.msra.mxu0 0.0
    %4595 = vmatprep.mubr.f32.mxu0 0.0
    %4596 = vmatmul.mubr.f32.gmra.mrb[0].mxu0 %v4523
    %v4597 = vpop.f32.mrb[0].mxu0
    %v4598 = vadd.f32 %v4529, %v4597
    %v4599 = vpop.f32.mrb[0].mxu0
    %4600 = vmatprep.mubr.f32.mxu0 0.0
    %4601 = vmatmul.mubr.f32.gmra.mrb[0].mxu0 %v4524
    %v4602 = vpop.f32.mrb[0].mxu0
    %v4603 = vadd.f32 %v4529, %v4602
    %v4604 = vpop.f32.mrb[0].mxu0
    %4605 = vdwg.mxu0
    %v4606 = vadd.f32 %v4378, %v4598
    %v4607 = vadd.f32 %v4379, %v4603
    %v4608 = vld [vmem:[%s69] sm:$0x1]
    %v4609 = vld [vmem:[%s71] sm:$0x1]
    %v4610 = vsel %vm813, %v4606, 0.0
    %4611 = vadd.xlane.f32.xlu0 %v4610
    %v4612 = vpop.xlane.xlu0 %4611
    %v4613 = vsel %vm813, %v4607, 0.0
    %4614 = vadd.xlane.f32.xlu0 %v4613
    %v4615 = vpop.xlane.xlu0 %4614
    %v4616 = vmul.f32 %v4612, %v821
    %v4617 = vmul.f32 %v4615, %v821
    %v4618 = vsub.f32 %v4606, %v4616
    %v4619 = vsub.f32 %v4607, %v4617
    %v4620 = vmul.f32 %v4618, %v4618
    %v4621 = vmul.f32 %v4619, %v4619
    %v4622 = vsel %vm813, %v4620, 0.0
    %4623 = vadd.xlane.f32.xlu0 %v4622
    %v4624 = vpop.xlane.xlu0 %4623
    %v4625 = vsel %vm813, %v4621, 0.0
    %4626 = vadd.xlane.f32.xlu0 %v4625
    %v4627 = vpop.xlane.xlu0 %4626
    %v4628 = vmul.f32 %v4624, %v821
    %v4629 = vmul.f32 %v4627, %v821
    %v4630 = vadd.f32 %v4628, 1e-05
    %v4631 = vadd.f32 %v4629, 1e-05
    %v4632 = vrsqrt.pop %v4630
    %v4633 = vrsqrt.pop %v4631
    %v4634 = vmul.f32 %v4618, %v4632
    %v4635 = vmul.f32 %v4619, %v4633
    %v4637 = vlaneseq
    %v4638 = vshrl.u32 %v4637, 7
    %v4639 = vsub.s32 0, %v4638
    %v4640 = vrot.slane %v4608, %v4639
    %v4642 = vmul.f32 %v4634, %v4640
    %v4643 = vmul.f32 %v4635, %v4640
    %v4645 = vlaneseq
    %v4646 = vshrl.u32 %v4645, 7
    %v4647 = vsub.s32 0, %v4646
    %v4648 = vrot.slane %v4609, %v4647
    %v4650 = vadd.f32 %v4642, %v4648
    %v4651 = vadd.f32 %v4643, %v4648
    %4652 = vst.msk [vmem:[#allocation2] sm:$0xff] %vm813, %v4650
    %4653 = vst.msk [vmem:[#allocation2 + $0x8] sm:$0xff] %vm813, %v4651
    %s4654 = sld [smem:[#allocation3]]
    %s4655 = scalar_lea.vmem [#allocation2], %s4654
    %v4656 = vld [vmem:[%s4655] sm:$0x1]
    %s4657 = sld [smem:[#allocation3 + $0x1]]
    %s4658 = sadd.s32 %s4657, 8
    %s4659 = scalar_lea.vmem [#allocation2], %s4658
    %v4660 = vld [vmem:[%s4659] sm:$0x1]
    %v4662 = vrot.slane %v4660, 7
    %v4664 = vsel %vm2682, %v4656, %v4662
    %v4665 = vld [vmem:[%s73] sm:$0xff]
    %v4666 = vld [vmem:[%s73 + $0x8] sm:$0xff]
    %v4667 = vld [vmem:[%s73 + $0x10] sm:$0xff]
    %v4668 = vld [vmem:[%s73 + $0x18] sm:$0xff]
    %v4670 = vsel %vm813, %v4664, 0
    %4672 = vmatprep.subr.mxu0 0.0
    %4673 = vmatpush1.msra.mxu0 %v4665
    %4674 = vmatprep.subr.mxu0 0.0
    %4675 = vmatpush1.msra.mxu0 %v4666
    %4676 = vmatprep.subr.mxu0 0.0
    %4677 = vmatpush1.msra.mxu0 %v4667
    %4678 = vmatprep.subr.mxu0 0.0
    %4679 = vmatpush1.msra.mxu0 %v4668
    %4680 = vmatprep.subr.mxu0 0.0
    %4681 = vmatpush1.msra.mxu0 0.0
    %4682 = vmatprep.subr.mxu0 0.0
    %4683 = vmatpush1.msra.mxu0 0.0
    %4684 = vmatprep.subr.mxu0 0.0
    %4685 = vmatpush1.msra.mxu0 0.0
    %4686 = vmatprep.subr.mxu0 0.0
    %4687 = vmatpush1.msra.mxu0 0.0
    %4688 = vmatprep.subr.mxu0 0.0
    %4689 = vmatpush1.msra.mxu0 0.0
    %4690 = vmatprep.subr.mxu0 0.0
    %4691 = vmatpush1.msra.mxu0 0.0
    %4692 = vmatprep.subr.mxu0 0.0
    %4693 = vmatpush1.msra.mxu0 0.0
    %4694 = vmatprep.subr.mxu0 0.0
    %4695 = vmatpush1.msra.mxu0 0.0
    %4696 = vmatprep.subr.mxu0 0.0
    %4697 = vmatpush1.msra.mxu0 0.0
    %4698 = vmatprep.subr.mxu0 0.0
    %4699 = vmatpush1.msra.mxu0 0.0
    %4700 = vmatprep.subr.mxu0 0.0
    %4701 = vmatpush1.msra.mxu0 0.0
    %4702 = vmatprep.subr.mxu0 0.0
    %4703 = vmatpush1.msra.mxu0 0.0
    %4704 = vmatprep.subr.mxu0 0.0
    %4705 = vmatpush1.msra.mxu0 0.0
    %4706 = vmatprep.subr.mxu0 0.0
    %4707 = vmatpush1.msra.mxu0 0.0
    %4708 = vmatprep.subr.mxu0 0.0
    %4709 = vmatpush1.msra.mxu0 0.0
    %4710 = vmatprep.subr.mxu0 0.0
    %4711 = vmatpush1.msra.mxu0 0.0
    %4712 = vmatprep.subr.mxu0 0.0
    %4713 = vmatpush1.msra.mxu0 0.0
    %4714 = vmatprep.subr.mxu0 0.0
    %4715 = vmatpush1.msra.mxu0 0.0
    %4716 = vmatprep.subr.mxu0 0.0
    %4717 = vmatpush1.msra.mxu0 0.0
    %4718 = vmatprep.subr.mxu0 0.0
    %4719 = vmatpush1.msra.mxu0 0.0
    %4720 = vmatprep.subr.mxu0 0.0
    %4721 = vmatpush1.msra.mxu0 0.0
    %4722 = vmatprep.subr.mxu0 0.0
    %4723 = vmatpush1.msra.mxu0 0.0
    %4724 = vmatprep.subr.mxu0 0.0
    %4725 = vmatpush1.msra.mxu0 0.0
    %4726 = vmatprep.subr.mxu0 0.0
    %4727 = vmatpush1.msra.mxu0 0.0
    %4728 = vmatprep.subr.mxu0 0.0
    %4729 = vmatpush1.msra.mxu0 0.0
    %4730 = vmatprep.subr.mxu0 0.0
    %4731 = vmatpush1.msra.mxu0 0.0
    %4732 = vmatprep.subr.mxu0 0.0
    %4733 = vmatpush1.msra.mxu0 0.0
    %4734 = vmatprep.subr.mxu0 0.0
    %4735 = vmatpush1.msra.mxu0 0.0
    %4736 = vmatprep.mubr.f32.mxu0 0.0
    %4737 = vmatmul.mubr.f32.gmra.mrb[0].mxu0 %v4670
    %v4738 = vpop.f32.mrb[0].mxu0
    %v4739 = vadd.f32 0.0, %v4738
    %v4740 = vpop.f32.mrb[0].mxu0
    %4741 = vdwg.mxu0
    %v4743 = vrot.slane %v4739, 7
    %v4745 = vsel %vm2682, %v2787, %v4743
    %v4747 = vrot.slane %v2787, 1
    %v4749 = vsel %vm2682, %v4747, %v4739
    %v4751 = vrot.slane %v4749, 6
    %vm4753 = vcmask 1041408
    %v4754 = vsel %vm4753, %v4745, %v4751
    %vm4755 = vcmask 257024
    %v4756 = vsel %vm4755, %v4754, 0.0
    %4757 = vadd.xlane.f32.xlu0 %v4756
    %v4758 = vpop.xlane.xlu0 %4757
    %v4759 = vmul.f32 %v4758, %v821
    %v4760 = vsub.f32 %v4754, %v4759
    %v4761 = vmul.f32 %v4760, %v4760
    %v4762 = vsel %vm4755, %v4761, 0.0
    %4763 = vadd.xlane.f32.xlu0 %v4762
    %v4764 = vpop.xlane.xlu0 %4763
    %v4765 = vmul.f32 %v4764, %v821
    %v4766 = vadd.f32 %v4765, 1e-05
    %v4767 = vrsqrt.pop %v4766
    %v4768 = vmul.f32 %v4760, %v4767
    %v4770 = vlaneseq
    %v4771 = vshrl.u32 %v4770, 7
    %v4772 = vsub.s32 0, %v4771
    %v4773 = vrot.slane %v412, %v4772
    %v4775 = vmul.f32 %v4768, %v4773
    %v4777 = vlaneseq
    %v4778 = vshrl.u32 %v4777, 7
    %v4779 = vsub.s32 0, %v4778
    %v4780 = vrot.slane %v413, %v4779
    %v4782 = vadd.f32 %v4775, %v4780
    %v4784 = vlaneseq
    %v4785 = vshrl.u32 %v4784, 7
    %v4786 = vsub.s32 0, %v4785
    %v4787 = vrot.slane %v418, %v4786
    %v4790 = vsel %vm813, %v4782, 0
    %4792 = vmatprep.subr.mxu0 0.0
    %4793 = vmatpush1.msra.mxu0 %v414
    %4794 = vmatprep.subr.mxu0 0.0
    %4795 = vmatpush1.msra.mxu0 %v415
    %4796 = vmatprep.subr.mxu0 0.0
    %4797 = vmatpush1.msra.mxu0 %v416
    %4798 = vmatprep.subr.mxu0 0.0
    %4799 = vmatpush1.msra.mxu0 %v417
    %4800 = vmatprep.subr.mxu0 0.0
    %4801 = vmatpush1.msra.mxu0 0.0
    %4802 = vmatprep.subr.mxu0 0.0
    %4803 = vmatpush1.msra.mxu0 0.0
    %4804 = vmatprep.subr.mxu0 0.0
    %4805 = vmatpush1.msra.mxu0 0.0
    %4806 = vmatprep.subr.mxu0 0.0
    %4807 = vmatpush1.msra.mxu0 0.0
    %4808 = vmatprep.subr.mxu0 0.0
    %4809 = vmatpush1.msra.mxu0 0.0
    %4810 = vmatprep.subr.mxu0 0.0
    %4811 = vmatpush1.msra.mxu0 0.0
    %4812 = vmatprep.subr.mxu0 0.0
    %4813 = vmatpush1.msra.mxu0 0.0
    %4814 = vmatprep.subr.mxu0 0.0
    %4815 = vmatpush1.msra.mxu0 0.0
    %4816 = vmatprep.subr.mxu0 0.0
    %4817 = vmatpush1.msra.mxu0 0.0
    %4818 = vmatprep.subr.mxu0 0.0
    %4819 = vmatpush1.msra.mxu0 0.0
    %4820 = vmatprep.subr.mxu0 0.0
    %4821 = vmatpush1.msra.mxu0 0.0
    %4822 = vmatprep.subr.mxu0 0.0
    %4823 = vmatpush1.msra.mxu0 0.0
    %4824 = vmatprep.subr.mxu0 0.0
    %4825 = vmatpush1.msra.mxu0 0.0
    %4826 = vmatprep.subr.mxu0 0.0
    %4827 = vmatpush1.msra.mxu0 0.0
    %4828 = vmatprep.subr.mxu0 0.0
    %4829 = vmatpush1.msra.mxu0 0.0
    %4830 = vmatprep.subr.mxu0 0.0
    %4831 = vmatpush1.msra.mxu0 0.0
    %4832 = vmatprep.subr.mxu0 0.0
    %4833 = vmatpush1.msra.mxu0 0.0
    %4834 = vmatprep.subr.mxu0 0.0
    %4835 = vmatpush1.msra.mxu0 0.0
    %4836 = vmatprep.subr.mxu0 0.0
    %4837 = vmatpush1.msra.mxu0 0.0
    %4838 = vmatprep.subr.mxu0 0.0
    %4839 = vmatpush1.msra.mxu0 0.0
    %4840 = vmatprep.subr.mxu0 0.0
    %4841 = vmatpush1.msra.mxu0 0.0
    %4842 = vmatprep.subr.mxu0 0.0
    %4843 = vmatpush1.msra.mxu0 0.0
    %4844 = vmatprep.subr.mxu0 0.0
    %4845 = vmatpush1.msra.mxu0 0.0
    %4846 = vmatprep.subr.mxu0 0.0
    %4847 = vmatpush1.msra.mxu0 0.0
    %4848 = vmatprep.subr.mxu0 0.0
    %4849 = vmatpush1.msra.mxu0 0.0
    %4850 = vmatprep.subr.mxu0 0.0
    %4851 = vmatpush1.msra.mxu0 0.0
    %4852 = vmatprep.subr.mxu0 0.0
    %4853 = vmatpush1.msra.mxu0 0.0
    %4854 = vmatprep.subr.mxu0 0.0
    %4855 = vmatpush1.msra.mxu0 0.0
    %4856 = vmatprep.mubr.f32.mxu0 0.0
    %4857 = vmatmul.mubr.f32.gmra.mrb[0].mxu0 %v4790
    %v4858 = vpop.f32.mrb[0].mxu0
    %v4859 = vadd.f32 %v4787, %v4858
    %v4860 = vpop.f32.mrb[0].mxu0
    %4861 = vdwg.mxu0
    %4863 = vrot.lane.b32.xlu0 %v4859, 96
    %v4864 = vpop.permute.xlu0 %4863
    %v4865 = vsel %vm990, %v4859, 0
    %v4867 = vsel %vm990, %v4864, 0
    %4869 = vmatprep.subr.mxu0 0.0
    %4870 = vmatpush1.xpose.msra.mxu0 %v4867
    %4871 = vmatprep.subr.mxu0 0.0
    %4872 = vmatpush1.xpose.msra.mxu0 0.0
    %4873 = vmatprep.subr.mxu0 0.0
    %4874 = vmatpush1.xpose.msra.mxu0 0.0
    %4875 = vmatprep.subr.mxu0 0.0
    %4876 = vmatpush1.xpose.msra.mxu0 0.0
    %4877 = vmatprep.subr.mxu0 0.0
    %4878 = vmatpush1.xpose.msra.mxu0 0.0
    %4879 = vmatprep.subr.mxu0 0.0
    %4880 = vmatpush1.xpose.msra.mxu0 0.0
    %4881 = vmatprep.subr.mxu0 0.0
    %4882 = vmatpush1.xpose.msra.mxu0 0.0
    %4883 = vmatprep.subr.mxu0 0.0
    %4884 = vmatpush1.xpose.msra.mxu0 0.0
    %4885 = vmatprep.subr.mxu0 0.0
    %4886 = vmatpush1.xpose.msra.mxu0 0.0
    %4887 = vmatprep.subr.mxu0 0.0
    %4888 = vmatpush1.xpose.msra.mxu0 0.0
    %4889 = vmatprep.subr.mxu0 0.0
    %4890 = vmatpush1.xpose.msra.mxu0 0.0
    %4891 = vmatprep.subr.mxu0 0.0
    %4892 = vmatpush1.xpose.msra.mxu0 0.0
    %4893 = vmatprep.subr.mxu0 0.0
    %4894 = vmatpush1.xpose.msra.mxu0 0.0
    %4895 = vmatprep.subr.mxu0 0.0
    %4896 = vmatpush1.xpose.msra.mxu0 0.0
    %4897 = vmatprep.subr.mxu0 0.0
    %4898 = vmatpush1.xpose.msra.mxu0 0.0
    %4899 = vmatprep.subr.mxu0 0.0
    %4900 = vmatpush1.xpose.msra.mxu0 0.0
    %4901 = vmatprep.subr.mxu0 0.0
    %4902 = vmatpush1.xpose.msra.mxu0 0.0
    %4903 = vmatprep.subr.mxu0 0.0
    %4904 = vmatpush1.xpose.msra.mxu0 0.0
    %4905 = vmatprep.subr.mxu0 0.0
    %4906 = vmatpush1.xpose.msra.mxu0 0.0
    %4907 = vmatprep.subr.mxu0 0.0
    %4908 = vmatpush1.xpose.msra.mxu0 0.0
    %4909 = vmatprep.subr.mxu0 0.0
    %4910 = vmatpush1.xpose.msra.mxu0 0.0
    %4911 = vmatprep.subr.mxu0 0.0
    %4912 = vmatpush1.xpose.msra.mxu0 0.0
    %4913 = vmatprep.subr.mxu0 0.0
    %4914 = vmatpush1.xpose.msra.mxu0 0.0
    %4915 = vmatprep.subr.mxu0 0.0
    %4916 = vmatpush1.xpose.msra.mxu0 0.0
    %4917 = vmatprep.subr.mxu0 0.0
    %4918 = vmatpush1.xpose.msra.mxu0 0.0
    %4919 = vmatprep.subr.mxu0 0.0
    %4920 = vmatpush1.xpose.msra.mxu0 0.0
    %4921 = vmatprep.subr.mxu0 0.0
    %4922 = vmatpush1.xpose.msra.mxu0 0.0
    %4923 = vmatprep.subr.mxu0 0.0
    %4924 = vmatpush1.xpose.msra.mxu0 0.0
    %4925 = vmatprep.subr.mxu0 0.0
    %4926 = vmatpush1.xpose.msra.mxu0 0.0
    %4927 = vmatprep.subr.mxu0 0.0
    %4928 = vmatpush1.xpose.msra.mxu0 0.0
    %4929 = vmatprep.subr.mxu0 0.0
    %4930 = vmatpush1.xpose.msra.mxu0 0.0
    %4931 = vmatprep.subr.mxu0 0.0
    %4932 = vmatpush1.xpose.msra.mxu0 0.0
    %4933 = vmatprep.mubr.f32.mxu0 0.0
    %4934 = vmatmul.mubr.f32.gmra.mrb[0].mxu0 %v4865
    %v4935 = vpop.f32.mrb[0].mxu0
    %v4936 = vadd.f32 0.0, %v4935
    %v4937 = vpop.f32.mrb[0].mxu0
    %4938 = vdwg.mxu0
    %v4939 = vmul.f32 %v4936, 0.35355338
    %vm4940 = vcmask 9216
    %v4941 = vsel %vm4940, %v4939, -inf
    %4942 = vmax.xlane.f32.xlu0 %v4941
    %v4943 = vpop.xlane.xlu0 %4942
    %v4944 = vsub.f32 %v4939, %v4943
    %v4945 = vmul.f32 %v4944, 1.442695
    %v4946 = vpow.pop %v4945
    %v4947 = vsel %vm4940, %v4946, 0.0
    %4948 = vadd.xlane.f32.xlu0 %v4947
    %v4949 = vpop.xlane.xlu0 %4948
    %v4950 = vrcp.pop %v4949
    %v4951 = vmul.f32 %v4946, %v4950
    %4952 = vrot.lane.b32.xlu0 %v4859, 64
    %v4953 = vpop.permute.xlu0 %4952
    %vm4954 = vcmask 15360
    %v4956 = vsel %vm4954, %v4951, 0
    %v4958 = vsel %vm4753, %v4953, 0
    %4960 = vmatprep.subr.mxu0 0.0
    %4961 = vmatpush1.msra.mxu0 %v4958
    %4962 = vmatprep.subr.mxu0 0.0
    %4963 = vmatpush1.msra.mxu0 0.0
    %4964 = vmatprep.subr.mxu0 0.0
    %4965 = vmatpush1.msra.mxu0 0.0
    %4966 = vmatprep.subr.mxu0 0.0
    %4967 = vmatpush1.msra.mxu0 0.0
    %4968 = vmatprep.subr.mxu0 0.0
    %4969 = vmatpush1.msra.mxu0 0.0
    %4970 = vmatprep.subr.mxu0 0.0
    %4971 = vmatpush1.msra.mxu0 0.0
    %4972 = vmatprep.subr.mxu0 0.0
    %4973 = vmatpush1.msra.mxu0 0.0
    %4974 = vmatprep.subr.mxu0 0.0
    %4975 = vmatpush1.msra.mxu0 0.0
    %4976 = vmatprep.subr.mxu0 0.0
    %4977 = vmatpush1.msra.mxu0 0.0
    %4978 = vmatprep.subr.mxu0 0.0
    %4979 = vmatpush1.msra.mxu0 0.0
    %4980 = vmatprep.subr.mxu0 0.0
    %4981 = vmatpush1.msra.mxu0 0.0
    %4982 = vmatprep.subr.mxu0 0.0
    %4983 = vmatpush1.msra.mxu0 0.0
    %4984 = vmatprep.subr.mxu0 0.0
    %4985 = vmatpush1.msra.mxu0 0.0
    %4986 = vmatprep.subr.mxu0 0.0
    %4987 = vmatpush1.msra.mxu0 0.0
    %4988 = vmatprep.subr.mxu0 0.0
    %4989 = vmatpush1.msra.mxu0 0.0
    %4990 = vmatprep.subr.mxu0 0.0
    %4991 = vmatpush1.msra.mxu0 0.0
    %4992 = vmatprep.subr.mxu0 0.0
    %4993 = vmatpush1.msra.mxu0 0.0
    %4994 = vmatprep.subr.mxu0 0.0
    %4995 = vmatpush1.msra.mxu0 0.0
    %4996 = vmatprep.subr.mxu0 0.0
    %4997 = vmatpush1.msra.mxu0 0.0
    %4998 = vmatprep.subr.mxu0 0.0
    %4999 = vmatpush1.msra.mxu0 0.0
    %5000 = vmatprep.subr.mxu0 0.0
    %5001 = vmatpush1.msra.mxu0 0.0
    %5002 = vmatprep.subr.mxu0 0.0
    %5003 = vmatpush1.msra.mxu0 0.0
    %5004 = vmatprep.subr.mxu0 0.0
    %5005 = vmatpush1.msra.mxu0 0.0
    %5006 = vmatprep.subr.mxu0 0.0
    %5007 = vmatpush1.msra.mxu0 0.0
    %5008 = vmatprep.subr.mxu0 0.0
    %5009 = vmatpush1.msra.mxu0 0.0
    %5010 = vmatprep.subr.mxu0 0.0
    %5011 = vmatpush1.msra.mxu0 0.0
    %5012 = vmatprep.subr.mxu0 0.0
    %5013 = vmatpush1.msra.mxu0 0.0
    %5014 = vmatprep.subr.mxu0 0.0
    %5015 = vmatpush1.msra.mxu0 0.0
    %5016 = vmatprep.subr.mxu0 0.0
    %5017 = vmatpush1.msra.mxu0 0.0
    %5018 = vmatprep.subr.mxu0 0.0
    %5019 = vmatpush1.msra.mxu0 0.0
    %5020 = vmatprep.subr.mxu0 0.0
    %5021 = vmatpush1.msra.mxu0 0.0
    %5022 = vmatprep.subr.mxu0 0.0
    %5023 = vmatpush1.msra.mxu0 0.0
    %5024 = vmatprep.mubr.f32.mxu0 0.0
    %5025 = vmatmul.mubr.f32.gmra.mrb[0].mxu0 %v4956
    %v5026 = vpop.f32.mrb[0].mxu0
    %v5027 = vadd.f32 0.0, %v5026
    %v5028 = vpop.f32.mrb[0].mxu0
    %5029 = vdwg.mxu0
    %5030 = vrot.lane.b32.xlu0 %v4859, 120
    %v5031 = vpop.permute.xlu0 %5030
    %5032 = vrot.lane.b32.xlu0 %v4859, 88
    %v5033 = vpop.permute.xlu0 %5032
    %v5034 = vsel %vm990, %v5031, 0
    %v5036 = vsel %vm990, %v5033, 0
    %5038 = vmatprep.subr.mxu0 0.0
    %5039 = vmatpush1.xpose.msra.mxu0 %v5036
    %5040 = vmatprep.subr.mxu0 0.0
    %5041 = vmatpush1.xpose.msra.mxu0 0.0
    %5042 = vmatprep.subr.mxu0 0.0
    %5043 = vmatpush1.xpose.msra.mxu0 0.0
    %5044 = vmatprep.subr.mxu0 0.0
    %5045 = vmatpush1.xpose.msra.mxu0 0.0
    %5046 = vmatprep.subr.mxu0 0.0
    %5047 = vmatpush1.xpose.msra.mxu0 0.0
    %5048 = vmatprep.subr.mxu0 0.0
    %5049 = vmatpush1.xpose.msra.mxu0 0.0
    %5050 = vmatprep.subr.mxu0 0.0
    %5051 = vmatpush1.xpose.msra.mxu0 0.0
    %5052 = vmatprep.subr.mxu0 0.0
    %5053 = vmatpush1.xpose.msra.mxu0 0.0
    %5054 = vmatprep.subr.mxu0 0.0
    %5055 = vmatpush1.xpose.msra.mxu0 0.0
    %5056 = vmatprep.subr.mxu0 0.0
    %5057 = vmatpush1.xpose.msra.mxu0 0.0
    %5058 = vmatprep.subr.mxu0 0.0
    %5059 = vmatpush1.xpose.msra.mxu0 0.0
    %5060 = vmatprep.subr.mxu0 0.0
    %5061 = vmatpush1.xpose.msra.mxu0 0.0
    %5062 = vmatprep.subr.mxu0 0.0
    %5063 = vmatpush1.xpose.msra.mxu0 0.0
    %5064 = vmatprep.subr.mxu0 0.0
    %5065 = vmatpush1.xpose.msra.mxu0 0.0
    %5066 = vmatprep.subr.mxu0 0.0
    %5067 = vmatpush1.xpose.msra.mxu0 0.0
    %5068 = vmatprep.subr.mxu0 0.0
    %5069 = vmatpush1.xpose.msra.mxu0 0.0
    %5070 = vmatprep.subr.mxu0 0.0
    %5071 = vmatpush1.xpose.msra.mxu0 0.0
    %5072 = vmatprep.subr.mxu0 0.0
    %5073 = vmatpush1.xpose.msra.mxu0 0.0
    %5074 = vmatprep.subr.mxu0 0.0
    %5075 = vmatpush1.xpose.msra.mxu0 0.0
    %5076 = vmatprep.subr.mxu0 0.0
    %5077 = vmatpush1.xpose.msra.mxu0 0.0
    %5078 = vmatprep.subr.mxu0 0.0
    %5079 = vmatpush1.xpose.msra.mxu0 0.0
    %5080 = vmatprep.subr.mxu0 0.0
    %5081 = vmatpush1.xpose.msra.mxu0 0.0
    %5082 = vmatprep.subr.mxu0 0.0
    %5083 = vmatpush1.xpose.msra.mxu0 0.0
    %5084 = vmatprep.subr.mxu0 0.0
    %5085 = vmatpush1.xpose.msra.mxu0 0.0
    %5086 = vmatprep.subr.mxu0 0.0
    %5087 = vmatpush1.xpose.msra.mxu0 0.0
    %5088 = vmatprep.subr.mxu0 0.0
    %5089 = vmatpush1.xpose.msra.mxu0 0.0
    %5090 = vmatprep.subr.mxu0 0.0
    %5091 = vmatpush1.xpose.msra.mxu0 0.0
    %5092 = vmatprep.subr.mxu0 0.0
    %5093 = vmatpush1.xpose.msra.mxu0 0.0
    %5094 = vmatprep.subr.mxu0 0.0
    %5095 = vmatpush1.xpose.msra.mxu0 0.0
    %5096 = vmatprep.subr.mxu0 0.0
    %5097 = vmatpush1.xpose.msra.mxu0 0.0
    %5098 = vmatprep.subr.mxu0 0.0
    %5099 = vmatpush1.xpose.msra.mxu0 0.0
    %5100 = vmatprep.subr.mxu0 0.0
    %5101 = vmatpush1.xpose.msra.mxu0 0.0
    %5102 = vmatprep.mubr.f32.mxu0 0.0
    %5103 = vmatmul.mubr.f32.gmra.mrb[0].mxu0 %v5034
    %v5104 = vpop.f32.mrb[0].mxu0
    %v5105 = vadd.f32 0.0, %v5104
    %v5106 = vpop.f32.mrb[0].mxu0
    %5107 = vdwg.mxu0
    %v5108 = vmul.f32 %v5105, 0.35355338
    %v5109 = vsel %vm4940, %v5108, -inf
    %5110 = vmax.xlane.f32.xlu0 %v5109
    %v5111 = vpop.xlane.xlu0 %5110
    %v5112 = vsub.f32 %v5108, %v5111
    %v5113 = vmul.f32 %v5112, 1.442695
    %v5114 = vpow.pop %v5113
    %v5115 = vsel %vm4940, %v5114, 0.0
    %5116 = vadd.xlane.f32.xlu0 %v5115
    %v5117 = vpop.xlane.xlu0 %5116
    %v5118 = vrcp.pop %v5117
    %v5119 = vmul.f32 %v5114, %v5118
    %5120 = vrot.lane.b32.xlu0 %v4859, 56
    %v5121 = vpop.permute.xlu0 %5120
    %v5123 = vsel %vm4954, %v5119, 0
    %v5125 = vsel %vm4753, %v5121, 0
    %5127 = vmatprep.subr.mxu0 0.0
    %5128 = vmatpush1.msra.mxu0 %v5125
    %5129 = vmatprep.subr.mxu0 0.0
    %5130 = vmatpush1.msra.mxu0 0.0
    %5131 = vmatprep.subr.mxu0 0.0
    %5132 = vmatpush1.msra.mxu0 0.0
    %5133 = vmatprep.subr.mxu0 0.0
    %5134 = vmatpush1.msra.mxu0 0.0
    %5135 = vmatprep.subr.mxu0 0.0
    %5136 = vmatpush1.msra.mxu0 0.0
    %5137 = vmatprep.subr.mxu0 0.0
    %5138 = vmatpush1.msra.mxu0 0.0
    %5139 = vmatprep.subr.mxu0 0.0
    %5140 = vmatpush1.msra.mxu0 0.0
    %5141 = vmatprep.subr.mxu0 0.0
    %5142 = vmatpush1.msra.mxu0 0.0
    %5143 = vmatprep.subr.mxu0 0.0
    %5144 = vmatpush1.msra.mxu0 0.0
    %5145 = vmatprep.subr.mxu0 0.0
    %5146 = vmatpush1.msra.mxu0 0.0
    %5147 = vmatprep.subr.mxu0 0.0
    %5148 = vmatpush1.msra.mxu0 0.0
    %5149 = vmatprep.subr.mxu0 0.0
    %5150 = vmatpush1.msra.mxu0 0.0
    %5151 = vmatprep.subr.mxu0 0.0
    %5152 = vmatpush1.msra.mxu0 0.0
    %5153 = vmatprep.subr.mxu0 0.0
    %5154 = vmatpush1.msra.mxu0 0.0
    %5155 = vmatprep.subr.mxu0 0.0
    %5156 = vmatpush1.msra.mxu0 0.0
    %5157 = vmatprep.subr.mxu0 0.0
    %5158 = vmatpush1.msra.mxu0 0.0
    %5159 = vmatprep.subr.mxu0 0.0
    %5160 = vmatpush1.msra.mxu0 0.0
    %5161 = vmatprep.subr.mxu0 0.0
    %5162 = vmatpush1.msra.mxu0 0.0
    %5163 = vmatprep.subr.mxu0 0.0
    %5164 = vmatpush1.msra.mxu0 0.0
    %5165 = vmatprep.subr.mxu0 0.0
    %5166 = vmatpush1.msra.mxu0 0.0
    %5167 = vmatprep.subr.mxu0 0.0
    %5168 = vmatpush1.msra.mxu0 0.0
    %5169 = vmatprep.subr.mxu0 0.0
    %5170 = vmatpush1.msra.mxu0 0.0
    %5171 = vmatprep.subr.mxu0 0.0
    %5172 = vmatpush1.msra.mxu0 0.0
    %5173 = vmatprep.subr.mxu0 0.0
    %5174 = vmatpush1.msra.mxu0 0.0
    %5175 = vmatprep.subr.mxu0 0.0
    %5176 = vmatpush1.msra.mxu0 0.0
    %5177 = vmatprep.subr.mxu0 0.0
    %5178 = vmatpush1.msra.mxu0 0.0
    %5179 = vmatprep.subr.mxu0 0.0
    %5180 = vmatpush1.msra.mxu0 0.0
    %5181 = vmatprep.subr.mxu0 0.0
    %5182 = vmatpush1.msra.mxu0 0.0
    %5183 = vmatprep.subr.mxu0 0.0
    %5184 = vmatpush1.msra.mxu0 0.0
    %5185 = vmatprep.subr.mxu0 0.0
    %5186 = vmatpush1.msra.mxu0 0.0
    %5187 = vmatprep.subr.mxu0 0.0
    %5188 = vmatpush1.msra.mxu0 0.0
    %5189 = vmatprep.subr.mxu0 0.0
    %5190 = vmatpush1.msra.mxu0 0.0
    %5191 = vmatprep.mubr.f32.mxu0 0.0
    %5192 = vmatmul.mubr.f32.gmra.mrb[0].mxu0 %v5123
    %v5193 = vpop.f32.mrb[0].mxu0
    %v5194 = vadd.f32 0.0, %v5193
    %v5195 = vpop.f32.mrb[0].mxu0
    %5196 = vdwg.mxu0
    %5197 = vrot.lane.b32.xlu0 %v4859, 112
    %v5198 = vpop.permute.xlu0 %5197
    %5199 = vrot.lane.b32.xlu0 %v4859, 80
    %v5200 = vpop.permute.xlu0 %5199
    %v5201 = vsel %vm990, %v5198, 0
    %v5203 = vsel %vm990, %v5200, 0
    %5205 = vmatprep.subr.mxu0 0.0
    %5206 = vmatpush1.xpose.msra.mxu0 %v5203
    %5207 = vmatprep.subr.mxu0 0.0
    %5208 = vmatpush1.xpose.msra.mxu0 0.0
    %5209 = vmatprep.subr.mxu0 0.0
    %5210 = vmatpush1.xpose.msra.mxu0 0.0
    %5211 = vmatprep.subr.mxu0 0.0
    %5212 = vmatpush1.xpose.msra.mxu0 0.0
    %5213 = vmatprep.subr.mxu0 0.0
    %5214 = vmatpush1.xpose.msra.mxu0 0.0
    %5215 = vmatprep.subr.mxu0 0.0
    %5216 = vmatpush1.xpose.msra.mxu0 0.0
    %5217 = vmatprep.subr.mxu0 0.0
    %5218 = vmatpush1.xpose.msra.mxu0 0.0
    %5219 = vmatprep.subr.mxu0 0.0
    %5220 = vmatpush1.xpose.msra.mxu0 0.0
    %5221 = vmatprep.subr.mxu0 0.0
    %5222 = vmatpush1.xpose.msra.mxu0 0.0
    %5223 = vmatprep.subr.mxu0 0.0
    %5224 = vmatpush1.xpose.msra.mxu0 0.0
    %5225 = vmatprep.subr.mxu0 0.0
    %5226 = vmatpush1.xpose.msra.mxu0 0.0
    %5227 = vmatprep.subr.mxu0 0.0
    %5228 = vmatpush1.xpose.msra.mxu0 0.0
    %5229 = vmatprep.subr.mxu0 0.0
    %5230 = vmatpush1.xpose.msra.mxu0 0.0
    %5231 = vmatprep.subr.mxu0 0.0
    %5232 = vmatpush1.xpose.msra.mxu0 0.0
    %5233 = vmatprep.subr.mxu0 0.0
    %5234 = vmatpush1.xpose.msra.mxu0 0.0
    %5235 = vmatprep.subr.mxu0 0.0
    %5236 = vmatpush1.xpose.msra.mxu0 0.0
    %5237 = vmatprep.subr.mxu0 0.0
    %5238 = vmatpush1.xpose.msra.mxu0 0.0
    %5239 = vmatprep.subr.mxu0 0.0
    %5240 = vmatpush1.xpose.msra.mxu0 0.0
    %5241 = vmatprep.subr.mxu0 0.0
    %5242 = vmatpush1.xpose.msra.mxu0 0.0
    %5243 = vmatprep.subr.mxu0 0.0
    %5244 = vmatpush1.xpose.msra.mxu0 0.0
    %5245 = vmatprep.subr.mxu0 0.0
    %5246 = vmatpush1.xpose.msra.mxu0 0.0
    %5247 = vmatprep.subr.mxu0 0.0
    %5248 = vmatpush1.xpose.msra.mxu0 0.0
    %5249 = vmatprep.subr.mxu0 0.0
    %5250 = vmatpush1.xpose.msra.mxu0 0.0
    %5251 = vmatprep.subr.mxu0 0.0
    %5252 = vmatpush1.xpose.msra.mxu0 0.0
    %5253 = vmatprep.subr.mxu0 0.0
    %5254 = vmatpush1.xpose.msra.mxu0 0.0
    %5255 = vmatprep.subr.mxu0 0.0
    %5256 = vmatpush1.xpose.msra.mxu0 0.0
    %5257 = vmatprep.subr.mxu0 0.0
    %5258 = vmatpush1.xpose.msra.mxu0 0.0
    %5259 = vmatprep.subr.mxu0 0.0
    %5260 = vmatpush1.xpose.msra.mxu0 0.0
    %5261 = vmatprep.subr.mxu0 0.0
    %5262 = vmatpush1.xpose.msra.mxu0 0.0
    %5263 = vmatprep.subr.mxu0 0.0
    %5264 = vmatpush1.xpose.msra.mxu0 0.0
    %5265 = vmatprep.subr.mxu0 0.0
    %5266 = vmatpush1.xpose.msra.mxu0 0.0
    %5267 = vmatprep.subr.mxu0 0.0
    %5268 = vmatpush1.xpose.msra.mxu0 0.0
    %5269 = vmatprep.mubr.f32.mxu0 0.0
    %5270 = vmatmul.mubr.f32.gmra.mrb[0].mxu0 %v5201
    %v5271 = vpop.f32.mrb[0].mxu0
    %v5272 = vadd.f32 0.0, %v5271
    %v5273 = vpop.f32.mrb[0].mxu0
    %5274 = vdwg.mxu0
    %v5275 = vmul.f32 %v5272, 0.35355338
    %v5276 = vsel %vm4940, %v5275, -inf
    %5277 = vmax.xlane.f32.xlu0 %v5276
    %v5278 = vpop.xlane.xlu0 %5277
    %v5279 = vsub.f32 %v5275, %v5278
    %v5280 = vmul.f32 %v5279, 1.442695
    %v5281 = vpow.pop %v5280
    %v5282 = vsel %vm4940, %v5281, 0.0
    %5283 = vadd.xlane.f32.xlu0 %v5282
    %v5284 = vpop.xlane.xlu0 %5283
    %v5285 = vrcp.pop %v5284
    %v5286 = vmul.f32 %v5281, %v5285
    %5287 = vrot.lane.b32.xlu0 %v4859, 48
    %v5288 = vpop.permute.xlu0 %5287
    %v5290 = vsel %vm4954, %v5286, 0
    %v5292 = vsel %vm4753, %v5288, 0
    %5294 = vmatprep.subr.mxu0 0.0
    %5295 = vmatpush1.msra.mxu0 %v5292
    %5296 = vmatprep.subr.mxu0 0.0
    %5297 = vmatpush1.msra.mxu0 0.0
    %5298 = vmatprep.subr.mxu0 0.0
    %5299 = vmatpush1.msra.mxu0 0.0
    %5300 = vmatprep.subr.mxu0 0.0
    %5301 = vmatpush1.msra.mxu0 0.0
    %5302 = vmatprep.subr.mxu0 0.0
    %5303 = vmatpush1.msra.mxu0 0.0
    %5304 = vmatprep.subr.mxu0 0.0
    %5305 = vmatpush1.msra.mxu0 0.0
    %5306 = vmatprep.subr.mxu0 0.0
    %5307 = vmatpush1.msra.mxu0 0.0
    %5308 = vmatprep.subr.mxu0 0.0
    %5309 = vmatpush1.msra.mxu0 0.0
    %5310 = vmatprep.subr.mxu0 0.0
    %5311 = vmatpush1.msra.mxu0 0.0
    %5312 = vmatprep.subr.mxu0 0.0
    %5313 = vmatpush1.msra.mxu0 0.0
    %5314 = vmatprep.subr.mxu0 0.0
    %5315 = vmatpush1.msra.mxu0 0.0
    %5316 = vmatprep.subr.mxu0 0.0
    %5317 = vmatpush1.msra.mxu0 0.0
    %5318 = vmatprep.subr.mxu0 0.0
    %5319 = vmatpush1.msra.mxu0 0.0
    %5320 = vmatprep.subr.mxu0 0.0
    %5321 = vmatpush1.msra.mxu0 0.0
    %5322 = vmatprep.subr.mxu0 0.0
    %5323 = vmatpush1.msra.mxu0 0.0
    %5324 = vmatprep.subr.mxu0 0.0
    %5325 = vmatpush1.msra.mxu0 0.0
    %5326 = vmatprep.subr.mxu0 0.0
    %5327 = vmatpush1.msra.mxu0 0.0
    %5328 = vmatprep.subr.mxu0 0.0
    %5329 = vmatpush1.msra.mxu0 0.0
    %5330 = vmatprep.subr.mxu0 0.0
    %5331 = vmatpush1.msra.mxu0 0.0
    %5332 = vmatprep.subr.mxu0 0.0
    %5333 = vmatpush1.msra.mxu0 0.0
    %5334 = vmatprep.subr.mxu0 0.0
    %5335 = vmatpush1.msra.mxu0 0.0
    %5336 = vmatprep.subr.mxu0 0.0
    %5337 = vmatpush1.msra.mxu0 0.0
    %5338 = vmatprep.subr.mxu0 0.0
    %5339 = vmatpush1.msra.mxu0 0.0
    %5340 = vmatprep.subr.mxu0 0.0
    %5341 = vmatpush1.msra.mxu0 0.0
    %5342 = vmatprep.subr.mxu0 0.0
    %5343 = vmatpush1.msra.mxu0 0.0
    %5344 = vmatprep.subr.mxu0 0.0
    %5345 = vmatpush1.msra.mxu0 0.0
    %5346 = vmatprep.subr.mxu0 0.0
    %5347 = vmatpush1.msra.mxu0 0.0
    %5348 = vmatprep.subr.mxu0 0.0
    %5349 = vmatpush1.msra.mxu0 0.0
    %5350 = vmatprep.subr.mxu0 0.0
    %5351 = vmatpush1.msra.mxu0 0.0
    %5352 = vmatprep.subr.mxu0 0.0
    %5353 = vmatpush1.msra.mxu0 0.0
    %5354 = vmatprep.subr.mxu0 0.0
    %5355 = vmatpush1.msra.mxu0 0.0
    %5356 = vmatprep.subr.mxu0 0.0
    %5357 = vmatpush1.msra.mxu0 0.0
    %5358 = vmatprep.mubr.f32.mxu0 0.0
    %5359 = vmatmul.mubr.f32.gmra.mrb[0].mxu0 %v5290
    %v5360 = vpop.f32.mrb[0].mxu0
    %v5361 = vadd.f32 0.0, %v5360
    %v5362 = vpop.f32.mrb[0].mxu0
    %5363 = vdwg.mxu0
    %5364 = vrot.lane.b32.xlu0 %v4859, 104
    %v5365 = vpop.permute.xlu0 %5364
    %5366 = vrot.lane.b32.xlu0 %v4859, 72
    %v5367 = vpop.permute.xlu0 %5366
    %v5368 = vsel %vm990, %v5365, 0
    %v5370 = vsel %vm990, %v5367, 0
    %5372 = vmatprep.subr.mxu0 0.0
    %5373 = vmatpush1.xpose.msra.mxu0 %v5370
    %5374 = vmatprep.subr.mxu0 0.0
    %5375 = vmatpush1.xpose.msra.mxu0 0.0
    %5376 = vmatprep.subr.mxu0 0.0
    %5377 = vmatpush1.xpose.msra.mxu0 0.0
    %5378 = vmatprep.subr.mxu0 0.0
    %5379 = vmatpush1.xpose.msra.mxu0 0.0
    %5380 = vmatprep.subr.mxu0 0.0
    %5381 = vmatpush1.xpose.msra.mxu0 0.0
    %5382 = vmatprep.subr.mxu0 0.0
    %5383 = vmatpush1.xpose.msra.mxu0 0.0
    %5384 = vmatprep.subr.mxu0 0.0
    %5385 = vmatpush1.xpose.msra.mxu0 0.0
    %5386 = vmatprep.subr.mxu0 0.0
    %5387 = vmatpush1.xpose.msra.mxu0 0.0
    %5388 = vmatprep.subr.mxu0 0.0
    %5389 = vmatpush1.xpose.msra.mxu0 0.0
    %5390 = vmatprep.subr.mxu0 0.0
    %5391 = vmatpush1.xpose.msra.mxu0 0.0
    %5392 = vmatprep.subr.mxu0 0.0
    %5393 = vmatpush1.xpose.msra.mxu0 0.0
    %5394 = vmatprep.subr.mxu0 0.0
    %5395 = vmatpush1.xpose.msra.mxu0 0.0
    %5396 = vmatprep.subr.mxu0 0.0
    %5397 = vmatpush1.xpose.msra.mxu0 0.0
    %5398 = vmatprep.subr.mxu0 0.0
    %5399 = vmatpush1.xpose.msra.mxu0 0.0
    %5400 = vmatprep.subr.mxu0 0.0
    %5401 = vmatpush1.xpose.msra.mxu0 0.0
    %5402 = vmatprep.subr.mxu0 0.0
    %5403 = vmatpush1.xpose.msra.mxu0 0.0
    %5404 = vmatprep.subr.mxu0 0.0
    %5405 = vmatpush1.xpose.msra.mxu0 0.0
    %5406 = vmatprep.subr.mxu0 0.0
    %5407 = vmatpush1.xpose.msra.mxu0 0.0
    %5408 = vmatprep.subr.mxu0 0.0
    %5409 = vmatpush1.xpose.msra.mxu0 0.0
    %5410 = vmatprep.subr.mxu0 0.0
    %5411 = vmatpush1.xpose.msra.mxu0 0.0
    %5412 = vmatprep.subr.mxu0 0.0
    %5413 = vmatpush1.xpose.msra.mxu0 0.0
    %5414 = vmatprep.subr.mxu0 0.0
    %5415 = vmatpush1.xpose.msra.mxu0 0.0
    %5416 = vmatprep.subr.mxu0 0.0
    %5417 = vmatpush1.xpose.msra.mxu0 0.0
    %5418 = vmatprep.subr.mxu0 0.0
    %5419 = vmatpush1.xpose.msra.mxu0 0.0
    %5420 = vmatprep.subr.mxu0 0.0
    %5421 = vmatpush1.xpose.msra.mxu0 0.0
    %5422 = vmatprep.subr.mxu0 0.0
    %5423 = vmatpush1.xpose.msra.mxu0 0.0
    %5424 = vmatprep.subr.mxu0 0.0
    %5425 = vmatpush1.xpose.msra.mxu0 0.0
    %5426 = vmatprep.subr.mxu0 0.0
    %5427 = vmatpush1.xpose.msra.mxu0 0.0
    %5428 = vmatprep.subr.mxu0 0.0
    %5429 = vmatpush1.xpose.msra.mxu0 0.0
    %5430 = vmatprep.subr.mxu0 0.0
    %5431 = vmatpush1.xpose.msra.mxu0 0.0
    %5432 = vmatprep.subr.mxu0 0.0
    %5433 = vmatpush1.xpose.msra.mxu0 0.0
    %5434 = vmatprep.subr.mxu0 0.0
    %5435 = vmatpush1.xpose.msra.mxu0 0.0
    %5436 = vmatprep.mubr.f32.mxu0 0.0
    %5437 = vmatmul.mubr.f32.gmra.mrb[0].mxu0 %v5368
    %v5438 = vpop.f32.mrb[0].mxu0
    %v5439 = vadd.f32 0.0, %v5438
    %v5440 = vpop.f32.mrb[0].mxu0
    %5441 = vdwg.mxu0
    %v5442 = vmul.f32 %v5439, 0.35355338
    %v5443 = vsel %vm4940, %v5442, -inf
    %5444 = vmax.xlane.f32.xlu0 %v5443
    %v5445 = vpop.xlane.xlu0 %5444
    %v5446 = vsub.f32 %v5442, %v5445
    %v5447 = vmul.f32 %v5446, 1.442695
    %v5448 = vpow.pop %v5447
    %v5449 = vsel %vm4940, %v5448, 0.0
    %5450 = vadd.xlane.f32.xlu0 %v5449
    %v5451 = vpop.xlane.xlu0 %5450
    %v5452 = vrcp.pop %v5451
    %v5453 = vmul.f32 %v5448, %v5452
    %5454 = vrot.lane.b32.xlu0 %v4859, 40
    %v5455 = vpop.permute.xlu0 %5454
    %v5457 = vsel %vm4954, %v5453, 0
    %v5459 = vsel %vm4753, %v5455, 0
    %5461 = vmatprep.subr.mxu0 0.0
    %5462 = vmatpush1.msra.mxu0 %v5459
    %5463 = vmatprep.subr.mxu0 0.0
    %5464 = vmatpush1.msra.mxu0 0.0
    %5465 = vmatprep.subr.mxu0 0.0
    %5466 = vmatpush1.msra.mxu0 0.0
    %5467 = vmatprep.subr.mxu0 0.0
    %5468 = vmatpush1.msra.mxu0 0.0
    %5469 = vmatprep.subr.mxu0 0.0
    %5470 = vmatpush1.msra.mxu0 0.0
    %5471 = vmatprep.subr.mxu0 0.0
    %5472 = vmatpush1.msra.mxu0 0.0
    %5473 = vmatprep.subr.mxu0 0.0
    %5474 = vmatpush1.msra.mxu0 0.0
    %5475 = vmatprep.subr.mxu0 0.0
    %5476 = vmatpush1.msra.mxu0 0.0
    %5477 = vmatprep.subr.mxu0 0.0
    %5478 = vmatpush1.msra.mxu0 0.0
    %5479 = vmatprep.subr.mxu0 0.0
    %5480 = vmatpush1.msra.mxu0 0.0
    %5481 = vmatprep.subr.mxu0 0.0
    %5482 = vmatpush1.msra.mxu0 0.0
    %5483 = vmatprep.subr.mxu0 0.0
    %5484 = vmatpush1.msra.mxu0 0.0
    %5485 = vmatprep.subr.mxu0 0.0
    %5486 = vmatpush1.msra.mxu0 0.0
    %5487 = vmatprep.subr.mxu0 0.0
    %5488 = vmatpush1.msra.mxu0 0.0
    %5489 = vmatprep.subr.mxu0 0.0
    %5490 = vmatpush1.msra.mxu0 0.0
    %5491 = vmatprep.subr.mxu0 0.0
    %5492 = vmatpush1.msra.mxu0 0.0
    %5493 = vmatprep.subr.mxu0 0.0
    %5494 = vmatpush1.msra.mxu0 0.0
    %5495 = vmatprep.subr.mxu0 0.0
    %5496 = vmatpush1.msra.mxu0 0.0
    %5497 = vmatprep.subr.mxu0 0.0
    %5498 = vmatpush1.msra.mxu0 0.0
    %5499 = vmatprep.subr.mxu0 0.0
    %5500 = vmatpush1.msra.mxu0 0.0
    %5501 = vmatprep.subr.mxu0 0.0
    %5502 = vmatpush1.msra.mxu0 0.0
    %5503 = vmatprep.subr.mxu0 0.0
    %5504 = vmatpush1.msra.mxu0 0.0
    %5505 = vmatprep.subr.mxu0 0.0
    %5506 = vmatpush1.msra.mxu0 0.0
    %5507 = vmatprep.subr.mxu0 0.0
    %5508 = vmatpush1.msra.mxu0 0.0
    %5509 = vmatprep.subr.mxu0 0.0
    %5510 = vmatpush1.msra.mxu0 0.0
    %5511 = vmatprep.subr.mxu0 0.0
    %5512 = vmatpush1.msra.mxu0 0.0
    %5513 = vmatprep.subr.mxu0 0.0
    %5514 = vmatpush1.msra.mxu0 0.0
    %5515 = vmatprep.subr.mxu0 0.0
    %5516 = vmatpush1.msra.mxu0 0.0
    %5517 = vmatprep.subr.mxu0 0.0
    %5518 = vmatpush1.msra.mxu0 0.0
    %5519 = vmatprep.subr.mxu0 0.0
    %5520 = vmatpush1.msra.mxu0 0.0
    %5521 = vmatprep.subr.mxu0 0.0
    %5522 = vmatpush1.msra.mxu0 0.0
    %5523 = vmatprep.subr.mxu0 0.0
    %5524 = vmatpush1.msra.mxu0 0.0
    %5525 = vmatprep.mubr.f32.mxu0 0.0
    %5526 = vmatmul.mubr.f32.gmra.mrb[0].mxu0 %v5457
    %v5527 = vpop.f32.mrb[0].mxu0
    %v5528 = vadd.f32 0.0, %v5527
    %v5529 = vpop.f32.mrb[0].mxu0
    %5530 = vdwg.mxu0
    %5532 = vrot.lane.b32.xlu0 %v5194, 8
    %v5533 = vpop.permute.xlu0 %5532
    %5536 = vrot.lane.b32.xlu0 %v5361, 16
    %v5537 = vpop.permute.xlu0 %5536
    %5540 = vrot.lane.b32.xlu0 %v5528, 24
    %v5541 = vpop.permute.xlu0 %5540
    %v5543 = vsel %vm990, %v5027, %v5533
    %v5544 = vsel %vm1671, %v5543, %v5537
    %v5545 = vsel %vm1673, %v5544, %v5541
    %v5546 = vrot.slane %v4859, 2
    %5547 = vrot.lane.b32.xlu0 %v5546, 96
    %v5548 = vpop.permute.xlu0 %5547
    %v5549 = vsel %vm990, %v5546, 0
    %v5551 = vsel %vm990, %v5548, 0
    %5553 = vmatprep.subr.mxu0 0.0
    %5554 = vmatpush1.xpose.msra.mxu0 %v5551
    %5555 = vmatprep.subr.mxu0 0.0
    %5556 = vmatpush1.xpose.msra.mxu0 0.0
    %5557 = vmatprep.subr.mxu0 0.0
    %5558 = vmatpush1.xpose.msra.mxu0 0.0
    %5559 = vmatprep.subr.mxu0 0.0
    %5560 = vmatpush1.xpose.msra.mxu0 0.0
    %5561 = vmatprep.subr.mxu0 0.0
    %5562 = vmatpush1.xpose.msra.mxu0 0.0
    %5563 = vmatprep.subr.mxu0 0.0
    %5564 = vmatpush1.xpose.msra.mxu0 0.0
    %5565 = vmatprep.subr.mxu0 0.0
    %5566 = vmatpush1.xpose.msra.mxu0 0.0
    %5567 = vmatprep.subr.mxu0 0.0
    %5568 = vmatpush1.xpose.msra.mxu0 0.0
    %5569 = vmatprep.subr.mxu0 0.0
    %5570 = vmatpush1.xpose.msra.mxu0 0.0
    %5571 = vmatprep.subr.mxu0 0.0
    %5572 = vmatpush1.xpose.msra.mxu0 0.0
    %5573 = vmatprep.subr.mxu0 0.0
    %5574 = vmatpush1.xpose.msra.mxu0 0.0
    %5575 = vmatprep.subr.mxu0 0.0
    %5576 = vmatpush1.xpose.msra.mxu0 0.0
    %5577 = vmatprep.subr.mxu0 0.0
    %5578 = vmatpush1.xpose.msra.mxu0 0.0
    %5579 = vmatprep.subr.mxu0 0.0
    %5580 = vmatpush1.xpose.msra.mxu0 0.0
    %5581 = vmatprep.subr.mxu0 0.0
    %5582 = vmatpush1.xpose.msra.mxu0 0.0
    %5583 = vmatprep.subr.mxu0 0.0
    %5584 = vmatpush1.xpose.msra.mxu0 0.0
    %5585 = vmatprep.subr.mxu0 0.0
    %5586 = vmatpush1.xpose.msra.mxu0 0.0
    %5587 = vmatprep.subr.mxu0 0.0
    %5588 = vmatpush1.xpose.msra.mxu0 0.0
    %5589 = vmatprep.subr.mxu0 0.0
    %5590 = vmatpush1.xpose.msra.mxu0 0.0
    %5591 = vmatprep.subr.mxu0 0.0
    %5592 = vmatpush1.xpose.msra.mxu0 0.0
    %5593 = vmatprep.subr.mxu0 0.0
    %5594 = vmatpush1.xpose.msra.mxu0 0.0
    %5595 = vmatprep.subr.mxu0 0.0
    %5596 = vmatpush1.xpose.msra.mxu0 0.0
    %5597 = vmatprep.subr.mxu0 0.0
    %5598 = vmatpush1.xpose.msra.mxu0 0.0
    %5599 = vmatprep.subr.mxu0 0.0
    %5600 = vmatpush1.xpose.msra.mxu0 0.0
    %5601 = vmatprep.subr.mxu0 0.0
    %5602 = vmatpush1.xpose.msra.mxu0 0.0
    %5603 = vmatprep.subr.mxu0 0.0
    %5604 = vmatpush1.xpose.msra.mxu0 0.0
    %5605 = vmatprep.subr.mxu0 0.0
    %5606 = vmatpush1.xpose.msra.mxu0 0.0
    %5607 = vmatprep.subr.mxu0 0.0
    %5608 = vmatpush1.xpose.msra.mxu0 0.0
    %5609 = vmatprep.subr.mxu0 0.0
    %5610 = vmatpush1.xpose.msra.mxu0 0.0
    %5611 = vmatprep.subr.mxu0 0.0
    %5612 = vmatpush1.xpose.msra.mxu0 0.0
    %5613 = vmatprep.subr.mxu0 0.0
    %5614 = vmatpush1.xpose.msra.mxu0 0.0
    %5615 = vmatprep.subr.mxu0 0.0
    %5616 = vmatpush1.xpose.msra.mxu0 0.0
    %5617 = vmatprep.mubr.f32.mxu0 0.0
    %5618 = vmatmul.mubr.f32.gmra.mrb[0].mxu0 %v5549
    %v5619 = vpop.f32.mrb[0].mxu0
    %v5620 = vadd.f32 0.0, %v5619
    %v5621 = vpop.f32.mrb[0].mxu0
    %5622 = vdwg.mxu0
    %v5623 = vmul.f32 %v5620, 0.35355338
    %v5624 = vsel %vm4940, %v5623, -inf
    %5625 = vmax.xlane.f32.xlu0 %v5624
    %v5626 = vpop.xlane.xlu0 %5625
    %v5627 = vsub.f32 %v5623, %v5626
    %v5628 = vmul.f32 %v5627, 1.442695
    %v5629 = vpow.pop %v5628
    %v5630 = vsel %vm4940, %v5629, 0.0
    %5631 = vadd.xlane.f32.xlu0 %v5630
    %v5632 = vpop.xlane.xlu0 %5631
    %v5633 = vrcp.pop %v5632
    %v5634 = vmul.f32 %v5629, %v5633
    %5635 = vrot.lane.b32.xlu0 %v5546, 64
    %v5636 = vpop.permute.xlu0 %5635
    %v5638 = vsel %vm4954, %v5634, 0
    %v5640 = vsel %vm4753, %v5636, 0
    %5642 = vmatprep.subr.mxu0 0.0
    %5643 = vmatpush1.msra.mxu0 %v5640
    %5644 = vmatprep.subr.mxu0 0.0
    %5645 = vmatpush1.msra.mxu0 0.0
    %5646 = vmatprep.subr.mxu0 0.0
    %5647 = vmatpush1.msra.mxu0 0.0
    %5648 = vmatprep.subr.mxu0 0.0
    %5649 = vmatpush1.msra.mxu0 0.0
    %5650 = vmatprep.subr.mxu0 0.0
    %5651 = vmatpush1.msra.mxu0 0.0
    %5652 = vmatprep.subr.mxu0 0.0
    %5653 = vmatpush1.msra.mxu0 0.0
    %5654 = vmatprep.subr.mxu0 0.0
    %5655 = vmatpush1.msra.mxu0 0.0
    %5656 = vmatprep.subr.mxu0 0.0
    %5657 = vmatpush1.msra.mxu0 0.0
    %5658 = vmatprep.subr.mxu0 0.0
    %5659 = vmatpush1.msra.mxu0 0.0
    %5660 = vmatprep.subr.mxu0 0.0
    %5661 = vmatpush1.msra.mxu0 0.0
    %5662 = vmatprep.subr.mxu0 0.0
    %5663 = vmatpush1.msra.mxu0 0.0
    %5664 = vmatprep.subr.mxu0 0.0
    %5665 = vmatpush1.msra.mxu0 0.0
    %5666 = vmatprep.subr.mxu0 0.0
    %5667 = vmatpush1.msra.mxu0 0.0
    %5668 = vmatprep.subr.mxu0 0.0
    %5669 = vmatpush1.msra.mxu0 0.0
    %5670 = vmatprep.subr.mxu0 0.0
    %5671 = vmatpush1.msra.mxu0 0.0
    %5672 = vmatprep.subr.mxu0 0.0
    %5673 = vmatpush1.msra.mxu0 0.0
    %5674 = vmatprep.subr.mxu0 0.0
    %5675 = vmatpush1.msra.mxu0 0.0
    %5676 = vmatprep.subr.mxu0 0.0
    %5677 = vmatpush1.msra.mxu0 0.0
    %5678 = vmatprep.subr.mxu0 0.0
    %5679 = vmatpush1.msra.mxu0 0.0
    %5680 = vmatprep.subr.mxu0 0.0
    %5681 = vmatpush1.msra.mxu0 0.0
    %5682 = vmatprep.subr.mxu0 0.0
    %5683 = vmatpush1.msra.mxu0 0.0
    %5684 = vmatprep.subr.mxu0 0.0
    %5685 = vmatpush1.msra.mxu0 0.0
    %5686 = vmatprep.subr.mxu0 0.0
    %5687 = vmatpush1.msra.mxu0 0.0
    %5688 = vmatprep.subr.mxu0 0.0
    %5689 = vmatpush1.msra.mxu0 0.0
    %5690 = vmatprep.subr.mxu0 0.0
    %5691 = vmatpush1.msra.mxu0 0.0
    %5692 = vmatprep.subr.mxu0 0.0
    %5693 = vmatpush1.msra.mxu0 0.0
    %5694 = vmatprep.subr.mxu0 0.0
    %5695 = vmatpush1.msra.mxu0 0.0
    %5696 = vmatprep.subr.mxu0 0.0
    %5697 = vmatpush1.msra.mxu0 0.0
    %5698 = vmatprep.subr.mxu0 0.0
    %5699 = vmatpush1.msra.mxu0 0.0
    %5700 = vmatprep.subr.mxu0 0.0
    %5701 = vmatpush1.msra.mxu0 0.0
    %5702 = vmatprep.subr.mxu0 0.0
    %5703 = vmatpush1.msra.mxu0 0.0
    %5704 = vmatprep.subr.mxu0 0.0
    %5705 = vmatpush1.msra.mxu0 0.0
    %5706 = vmatprep.mubr.f32.mxu0 0.0
    %5707 = vmatmul.mubr.f32.gmra.mrb[0].mxu0 %v5638
    %v5708 = vpop.f32.mrb[0].mxu0
    %v5709 = vadd.f32 0.0, %v5708
    %v5710 = vpop.f32.mrb[0].mxu0
    %5711 = vdwg.mxu0
    %5712 = vrot.lane.b32.xlu0 %v5546, 120
    %v5713 = vpop.permute.xlu0 %5712
    %5714 = vrot.lane.b32.xlu0 %v5546, 88
    %v5715 = vpop.permute.xlu0 %5714
    %v5716 = vsel %vm990, %v5713, 0
    %v5718 = vsel %vm990, %v5715, 0
    %5720 = vmatprep.subr.mxu0 0.0
    %5721 = vmatpush1.xpose.msra.mxu0 %v5718
    %5722 = vmatprep.subr.mxu0 0.0
    %5723 = vmatpush1.xpose.msra.mxu0 0.0
    %5724 = vmatprep.subr.mxu0 0.0
    %5725 = vmatpush1.xpose.msra.mxu0 0.0
    %5726 = vmatprep.subr.mxu0 0.0
    %5727 = vmatpush1.xpose.msra.mxu0 0.0
    %5728 = vmatprep.subr.mxu0 0.0
    %5729 = vmatpush1.xpose.msra.mxu0 0.0
    %5730 = vmatprep.subr.mxu0 0.0
    %5731 = vmatpush1.xpose.msra.mxu0 0.0
    %5732 = vmatprep.subr.mxu0 0.0
    %5733 = vmatpush1.xpose.msra.mxu0 0.0
    %5734 = vmatprep.subr.mxu0 0.0
    %5735 = vmatpush1.xpose.msra.mxu0 0.0
    %5736 = vmatprep.subr.mxu0 0.0
    %5737 = vmatpush1.xpose.msra.mxu0 0.0
    %5738 = vmatprep.subr.mxu0 0.0
    %5739 = vmatpush1.xpose.msra.mxu0 0.0
    %5740 = vmatprep.subr.mxu0 0.0
    %5741 = vmatpush1.xpose.msra.mxu0 0.0
    %5742 = vmatprep.subr.mxu0 0.0
    %5743 = vmatpush1.xpose.msra.mxu0 0.0
    %5744 = vmatprep.subr.mxu0 0.0
    %5745 = vmatpush1.xpose.msra.mxu0 0.0
    %5746 = vmatprep.subr.mxu0 0.0
    %5747 = vmatpush1.xpose.msra.mxu0 0.0
    %5748 = vmatprep.subr.mxu0 0.0
    %5749 = vmatpush1.xpose.msra.mxu0 0.0
    %5750 = vmatprep.subr.mxu0 0.0
    %5751 = vmatpush1.xpose.msra.mxu0 0.0
    %5752 = vmatprep.subr.mxu0 0.0
    %5753 = vmatpush1.xpose.msra.mxu0 0.0
    %5754 = vmatprep.subr.mxu0 0.0
    %5755 = vmatpush1.xpose.msra.mxu0 0.0
    %5756 = vmatprep.subr.mxu0 0.0
    %5757 = vmatpush1.xpose.msra.mxu0 0.0
    %5758 = vmatprep.subr.mxu0 0.0
    %5759 = vmatpush1.xpose.msra.mxu0 0.0
    %5760 = vmatprep.subr.mxu0 0.0
    %5761 = vmatpush1.xpose.msra.mxu0 0.0
    %5762 = vmatprep.subr.mxu0 0.0
    %5763 = vmatpush1.xpose.msra.mxu0 0.0
    %5764 = vmatprep.subr.mxu0 0.0
    %5765 = vmatpush1.xpose.msra.mxu0 0.0
    %5766 = vmatprep.subr.mxu0 0.0
    %5767 = vmatpush1.xpose.msra.mxu0 0.0
    %5768 = vmatprep.subr.mxu0 0.0
    %5769 = vmatpush1.xpose.msra.mxu0 0.0
    %5770 = vmatprep.subr.mxu0 0.0
    %5771 = vmatpush1.xpose.msra.mxu0 0.0
    %5772 = vmatprep.subr.mxu0 0.0
    %5773 = vmatpush1.xpose.msra.mxu0 0.0
    %5774 = vmatprep.subr.mxu0 0.0
    %5775 = vmatpush1.xpose.msra.mxu0 0.0
    %5776 = vmatprep.subr.mxu0 0.0
    %5777 = vmatpush1.xpose.msra.mxu0 0.0
    %5778 = vmatprep.subr.mxu0 0.0
    %5779 = vmatpush1.xpose.msra.mxu0 0.0
    %5780 = vmatprep.subr.mxu0 0.0
    %5781 = vmatpush1.xpose.msra.mxu0 0.0
    %5782 = vmatprep.subr.mxu0 0.0
    %5783 = vmatpush1.xpose.msra.mxu0 0.0
    %5784 = vmatprep.mubr.f32.mxu0 0.0
    %5785 = vmatmul.mubr.f32.gmra.mrb[0].mxu0 %v5716
    %v5786 = vpop.f32.mrb[0].mxu0
    %v5787 = vadd.f32 0.0, %v5786
    %v5788 = vpop.f32.mrb[0].mxu0
    %5789 = vdwg.mxu0
    %v5790 = vmul.f32 %v5787, 0.35355338
    %v5791 = vsel %vm4940, %v5790, -inf
    %5792 = vmax.xlane.f32.xlu0 %v5791
    %v5793 = vpop.xlane.xlu0 %5792
    %v5794 = vsub.f32 %v5790, %v5793
    %v5795 = vmul.f32 %v5794, 1.442695
    %v5796 = vpow.pop %v5795
    %v5797 = vsel %vm4940, %v5796, 0.0
    %5798 = vadd.xlane.f32.xlu0 %v5797
    %v5799 = vpop.xlane.xlu0 %5798
    %v5800 = vrcp.pop %v5799
    %v5801 = vmul.f32 %v5796, %v5800
    %5802 = vrot.lane.b32.xlu0 %v5546, 56
    %v5803 = vpop.permute.xlu0 %5802
    %v5805 = vsel %vm4954, %v5801, 0
    %v5807 = vsel %vm4753, %v5803, 0
    %5809 = vmatprep.subr.mxu0 0.0
    %5810 = vmatpush1.msra.mxu0 %v5807
    %5811 = vmatprep.subr.mxu0 0.0
    %5812 = vmatpush1.msra.mxu0 0.0
    %5813 = vmatprep.subr.mxu0 0.0
    %5814 = vmatpush1.msra.mxu0 0.0
    %5815 = vmatprep.subr.mxu0 0.0
    %5816 = vmatpush1.msra.mxu0 0.0
    %5817 = vmatprep.subr.mxu0 0.0
    %5818 = vmatpush1.msra.mxu0 0.0
    %5819 = vmatprep.subr.mxu0 0.0
    %5820 = vmatpush1.msra.mxu0 0.0
    %5821 = vmatprep.subr.mxu0 0.0
    %5822 = vmatpush1.msra.mxu0 0.0
    %5823 = vmatprep.subr.mxu0 0.0
    %5824 = vmatpush1.msra.mxu0 0.0
    %5825 = vmatprep.subr.mxu0 0.0
    %5826 = vmatpush1.msra.mxu0 0.0
    %5827 = vmatprep.subr.mxu0 0.0
    %5828 = vmatpush1.msra.mxu0 0.0
    %5829 = vmatprep.subr.mxu0 0.0
    %5830 = vmatpush1.msra.mxu0 0.0
    %5831 = vmatprep.subr.mxu0 0.0
    %5832 = vmatpush1.msra.mxu0 0.0
    %5833 = vmatprep.subr.mxu0 0.0
    %5834 = vmatpush1.msra.mxu0 0.0
    %5835 = vmatprep.subr.mxu0 0.0
    %5836 = vmatpush1.msra.mxu0 0.0
    %5837 = vmatprep.subr.mxu0 0.0
    %5838 = vmatpush1.msra.mxu0 0.0
    %5839 = vmatprep.subr.mxu0 0.0
    %5840 = vmatpush1.msra.mxu0 0.0
    %5841 = vmatprep.subr.mxu0 0.0
    %5842 = vmatpush1.msra.mxu0 0.0
    %5843 = vmatprep.subr.mxu0 0.0
    %5844 = vmatpush1.msra.mxu0 0.0
    %5845 = vmatprep.subr.mxu0 0.0
    %5846 = vmatpush1.msra.mxu0 0.0
    %5847 = vmatprep.subr.mxu0 0.0
    %5848 = vmatpush1.msra.mxu0 0.0
    %5849 = vmatprep.subr.mxu0 0.0
    %5850 = vmatpush1.msra.mxu0 0.0
    %5851 = vmatprep.subr.mxu0 0.0
    %5852 = vmatpush1.msra.mxu0 0.0
    %5853 = vmatprep.subr.mxu0 0.0
    %5854 = vmatpush1.msra.mxu0 0.0
    %5855 = vmatprep.subr.mxu0 0.0
    %5856 = vmatpush1.msra.mxu0 0.0
    %5857 = vmatprep.subr.mxu0 0.0
    %5858 = vmatpush1.msra.mxu0 0.0
    %5859 = vmatprep.subr.mxu0 0.0
    %5860 = vmatpush1.msra.mxu0 0.0
    %5861 = vmatprep.subr.mxu0 0.0
    %5862 = vmatpush1.msra.mxu0 0.0
    %5863 = vmatprep.subr.mxu0 0.0
    %5864 = vmatpush1.msra.mxu0 0.0
    %5865 = vmatprep.subr.mxu0 0.0
    %5866 = vmatpush1.msra.mxu0 0.0
    %5867 = vmatprep.subr.mxu0 0.0
    %5868 = vmatpush1.msra.mxu0 0.0
    %5869 = vmatprep.subr.mxu0 0.0
    %5870 = vmatpush1.msra.mxu0 0.0
    %5871 = vmatprep.subr.mxu0 0.0
    %5872 = vmatpush1.msra.mxu0 0.0
    %5873 = vmatprep.mubr.f32.mxu0 0.0
    %5874 = vmatmul.mubr.f32.gmra.mrb[0].mxu0 %v5805
    %v5875 = vpop.f32.mrb[0].mxu0
    %v5876 = vadd.f32 0.0, %v5875
    %v5877 = vpop.f32.mrb[0].mxu0
    %5878 = vdwg.mxu0
    %5879 = vrot.lane.b32.xlu0 %v5546, 112
    %v5880 = vpop.permute.xlu0 %5879
    %5881 = vrot.lane.b32.xlu0 %v5546, 80
    %v5882 = vpop.permute.xlu0 %5881
    %v5883 = vsel %vm990, %v5880, 0
    %v5885 = vsel %vm990, %v5882, 0
    %5887 = vmatprep.subr.mxu0 0.0
    %5888 = vmatpush1.xpose.msra.mxu0 %v5885
    %5889 = vmatprep.subr.mxu0 0.0
    %5890 = vmatpush1.xpose.msra.mxu0 0.0
    %5891 = vmatprep.subr.mxu0 0.0
    %5892 = vmatpush1.xpose.msra.mxu0 0.0
    %5893 = vmatprep.subr.mxu0 0.0
    %5894 = vmatpush1.xpose.msra.mxu0 0.0
    %5895 = vmatprep.subr.mxu0 0.0
    %5896 = vmatpush1.xpose.msra.mxu0 0.0
    %5897 = vmatprep.subr.mxu0 0.0
    %5898 = vmatpush1.xpose.msra.mxu0 0.0
    %5899 = vmatprep.subr.mxu0 0.0
    %5900 = vmatpush1.xpose.msra.mxu0 0.0
    %5901 = vmatprep.subr.mxu0 0.0
    %5902 = vmatpush1.xpose.msra.mxu0 0.0
    %5903 = vmatprep.subr.mxu0 0.0
    %5904 = vmatpush1.xpose.msra.mxu0 0.0
    %5905 = vmatprep.subr.mxu0 0.0
    %5906 = vmatpush1.xpose.msra.mxu0 0.0
    %5907 = vmatprep.subr.mxu0 0.0
    %5908 = vmatpush1.xpose.msra.mxu0 0.0
    %5909 = vmatprep.subr.mxu0 0.0
    %5910 = vmatpush1.xpose.msra.mxu0 0.0
    %5911 = vmatprep.subr.mxu0 0.0
    %5912 = vmatpush1.xpose.msra.mxu0 0.0
    %5913 = vmatprep.subr.mxu0 0.0
    %5914 = vmatpush1.xpose.msra.mxu0 0.0
    %5915 = vmatprep.subr.mxu0 0.0
    %5916 = vmatpush1.xpose.msra.mxu0 0.0
    %5917 = vmatprep.subr.mxu0 0.0
    %5918 = vmatpush1.xpose.msra.mxu0 0.0
    %5919 = vmatprep.subr.mxu0 0.0
    %5920 = vmatpush1.xpose.msra.mxu0 0.0
    %5921 = vmatprep.subr.mxu0 0.0
    %5922 = vmatpush1.xpose.msra.mxu0 0.0
    %5923 = vmatprep.subr.mxu0 0.0
    %5924 = vmatpush1.xpose.msra.mxu0 0.0
    %5925 = vmatprep.subr.mxu0 0.0
    %5926 = vmatpush1.xpose.msra.mxu0 0.0
    %5927 = vmatprep.subr.mxu0 0.0
    %5928 = vmatpush1.xpose.msra.mxu0 0.0
    %5929 = vmatprep.subr.mxu0 0.0
    %5930 = vmatpush1.xpose.msra.mxu0 0.0
    %5931 = vmatprep.subr.mxu0 0.0
    %5932 = vmatpush1.xpose.msra.mxu0 0.0
    %5933 = vmatprep.subr.mxu0 0.0
    %5934 = vmatpush1.xpose.msra.mxu0 0.0
    %5935 = vmatprep.subr.mxu0 0.0
    %5936 = vmatpush1.xpose.msra.mxu0 0.0
    %5937 = vmatprep.subr.mxu0 0.0
    %5938 = vmatpush1.xpose.msra.mxu0 0.0
    %5939 = vmatprep.subr.mxu0 0.0
    %5940 = vmatpush1.xpose.msra.mxu0 0.0
    %5941 = vmatprep.subr.mxu0 0.0
    %5942 = vmatpush1.xpose.msra.mxu0 0.0
    %5943 = vmatprep.subr.mxu0 0.0
    %5944 = vmatpush1.xpose.msra.mxu0 0.0
    %5945 = vmatprep.subr.mxu0 0.0
    %5946 = vmatpush1.xpose.msra.mxu0 0.0
    %5947 = vmatprep.subr.mxu0 0.0
    %5948 = vmatpush1.xpose.msra.mxu0 0.0
    %5949 = vmatprep.subr.mxu0 0.0
    %5950 = vmatpush1.xpose.msra.mxu0 0.0
    %5951 = vmatprep.mubr.f32.mxu0 0.0
    %5952 = vmatmul.mubr.f32.gmra.mrb[0].mxu0 %v5883
    %v5953 = vpop.f32.mrb[0].mxu0
    %v5954 = vadd.f32 0.0, %v5953
    %v5955 = vpop.f32.mrb[0].mxu0
    %5956 = vdwg.mxu0
    %v5957 = vmul.f32 %v5954, 0.35355338
    %v5958 = vsel %vm4940, %v5957, -inf
    %5959 = vmax.xlane.f32.xlu0 %v5958
    %v5960 = vpop.xlane.xlu0 %5959
    %v5961 = vsub.f32 %v5957, %v5960
    %v5962 = vmul.f32 %v5961, 1.442695
    %v5963 = vpow.pop %v5962
    %v5964 = vsel %vm4940, %v5963, 0.0
    %5965 = vadd.xlane.f32.xlu0 %v5964
    %v5966 = vpop.xlane.xlu0 %5965
    %v5967 = vrcp.pop %v5966
    %v5968 = vmul.f32 %v5963, %v5967
    %5969 = vrot.lane.b32.xlu0 %v5546, 48
    %v5970 = vpop.permute.xlu0 %5969
    %v5972 = vsel %vm4954, %v5968, 0
    %v5974 = vsel %vm4753, %v5970, 0
    %5976 = vmatprep.subr.mxu0 0.0
    %5977 = vmatpush1.msra.mxu0 %v5974
    %5978 = vmatprep.subr.mxu0 0.0
    %5979 = vmatpush1.msra.mxu0 0.0
    %5980 = vmatprep.subr.mxu0 0.0
    %5981 = vmatpush1.msra.mxu0 0.0
    %5982 = vmatprep.subr.mxu0 0.0
    %5983 = vmatpush1.msra.mxu0 0.0
    %5984 = vmatprep.subr.mxu0 0.0
    %5985 = vmatpush1.msra.mxu0 0.0
    %5986 = vmatprep.subr.mxu0 0.0
    %5987 = vmatpush1.msra.mxu0 0.0
    %5988 = vmatprep.subr.mxu0 0.0
    %5989 = vmatpush1.msra.mxu0 0.0
    %5990 = vmatprep.subr.mxu0 0.0
    %5991 = vmatpush1.msra.mxu0 0.0
    %5992 = vmatprep.subr.mxu0 0.0
    %5993 = vmatpush1.msra.mxu0 0.0
    %5994 = vmatprep.subr.mxu0 0.0
    %5995 = vmatpush1.msra.mxu0 0.0
    %5996 = vmatprep.subr.mxu0 0.0
    %5997 = vmatpush1.msra.mxu0 0.0
    %5998 = vmatprep.subr.mxu0 0.0
    %5999 = vmatpush1.msra.mxu0 0.0
    %6000 = vmatprep.subr.mxu0 0.0
    %6001 = vmatpush1.msra.mxu0 0.0
    %6002 = vmatprep.subr.mxu0 0.0
    %6003 = vmatpush1.msra.mxu0 0.0
    %6004 = vmatprep.subr.mxu0 0.0
    %6005 = vmatpush1.msra.mxu0 0.0
    %6006 = vmatprep.subr.mxu0 0.0
    %6007 = vmatpush1.msra.mxu0 0.0
    %6008 = vmatprep.subr.mxu0 0.0
    %6009 = vmatpush1.msra.mxu0 0.0
    %6010 = vmatprep.subr.mxu0 0.0
    %6011 = vmatpush1.msra.mxu0 0.0
    %6012 = vmatprep.subr.mxu0 0.0
    %6013 = vmatpush1.msra.mxu0 0.0
    %6014 = vmatprep.subr.mxu0 0.0
    %6015 = vmatpush1.msra.mxu0 0.0
    %6016 = vmatprep.subr.mxu0 0.0
    %6017 = vmatpush1.msra.mxu0 0.0
    %6018 = vmatprep.subr.mxu0 0.0
    %6019 = vmatpush1.msra.mxu0 0.0
    %6020 = vmatprep.subr.mxu0 0.0
    %6021 = vmatpush1.msra.mxu0 0.0
    %6022 = vmatprep.subr.mxu0 0.0
    %6023 = vmatpush1.msra.mxu0 0.0
    %6024 = vmatprep.subr.mxu0 0.0
    %6025 = vmatpush1.msra.mxu0 0.0
    %6026 = vmatprep.subr.mxu0 0.0
    %6027 = vmatpush1.msra.mxu0 0.0
    %6028 = vmatprep.subr.mxu0 0.0
    %6029 = vmatpush1.msra.mxu0 0.0
    %6030 = vmatprep.subr.mxu0 0.0
    %6031 = vmatpush1.msra.mxu0 0.0
    %6032 = vmatprep.subr.mxu0 0.0
    %6033 = vmatpush1.msra.mxu0 0.0
    %6034 = vmatprep.subr.mxu0 0.0
    %6035 = vmatpush1.msra.mxu0 0.0
    %6036 = vmatprep.subr.mxu0 0.0
    %6037 = vmatpush1.msra.mxu0 0.0
    %6038 = vmatprep.subr.mxu0 0.0
    %6039 = vmatpush1.msra.mxu0 0.0
    %6040 = vmatprep.mubr.f32.mxu0 0.0
    %6041 = vmatmul.mubr.f32.gmra.mrb[0].mxu0 %v5972
    %v6042 = vpop.f32.mrb[0].mxu0
    %v6043 = vadd.f32 0.0, %v6042
    %v6044 = vpop.f32.mrb[0].mxu0
    %6045 = vdwg.mxu0
    %6046 = vrot.lane.b32.xlu0 %v5546, 104
    %v6047 = vpop.permute.xlu0 %6046
    %6048 = vrot.lane.b32.xlu0 %v5546, 72
    %v6049 = vpop.permute.xlu0 %6048
    %v6050 = vsel %vm990, %v6047, 0
    %v6052 = vsel %vm990, %v6049, 0
    %6054 = vmatprep.subr.mxu0 0.0
    %6055 = vmatpush1.xpose.msra.mxu0 %v6052
    %6056 = vmatprep.subr.mxu0 0.0
    %6057 = vmatpush1.xpose.msra.mxu0 0.0
    %6058 = vmatprep.subr.mxu0 0.0
    %6059 = vmatpush1.xpose.msra.mxu0 0.0
    %6060 = vmatprep.subr.mxu0 0.0
    %6061 = vmatpush1.xpose.msra.mxu0 0.0
    %6062 = vmatprep.subr.mxu0 0.0
    %6063 = vmatpush1.xpose.msra.mxu0 0.0
    %6064 = vmatprep.subr.mxu0 0.0
    %6065 = vmatpush1.xpose.msra.mxu0 0.0
    %6066 = vmatprep.subr.mxu0 0.0
    %6067 = vmatpush1.xpose.msra.mxu0 0.0
    %6068 = vmatprep.subr.mxu0 0.0
    %6069 = vmatpush1.xpose.msra.mxu0 0.0
    %6070 = vmatprep.subr.mxu0 0.0
    %6071 = vmatpush1.xpose.msra.mxu0 0.0
    %6072 = vmatprep.subr.mxu0 0.0
    %6073 = vmatpush1.xpose.msra.mxu0 0.0
    %6074 = vmatprep.subr.mxu0 0.0
    %6075 = vmatpush1.xpose.msra.mxu0 0.0
    %6076 = vmatprep.subr.mxu0 0.0
    %6077 = vmatpush1.xpose.msra.mxu0 0.0
    %6078 = vmatprep.subr.mxu0 0.0
    %6079 = vmatpush1.xpose.msra.mxu0 0.0
    %6080 = vmatprep.subr.mxu0 0.0
    %6081 = vmatpush1.xpose.msra.mxu0 0.0
    %6082 = vmatprep.subr.mxu0 0.0
    %6083 = vmatpush1.xpose.msra.mxu0 0.0
    %6084 = vmatprep.subr.mxu0 0.0
    %6085 = vmatpush1.xpose.msra.mxu0 0.0
    %6086 = vmatprep.subr.mxu0 0.0
    %6087 = vmatpush1.xpose.msra.mxu0 0.0
    %6088 = vmatprep.subr.mxu0 0.0
    %6089 = vmatpush1.xpose.msra.mxu0 0.0
    %6090 = vmatprep.subr.mxu0 0.0
    %6091 = vmatpush1.xpose.msra.mxu0 0.0
    %6092 = vmatprep.subr.mxu0 0.0
    %6093 = vmatpush1.xpose.msra.mxu0 0.0
    %6094 = vmatprep.subr.mxu0 0.0
    %6095 = vmatpush1.xpose.msra.mxu0 0.0
    %6096 = vmatprep.subr.mxu0 0.0
    %6097 = vmatpush1.xpose.msra.mxu0 0.0
    %6098 = vmatprep.subr.mxu0 0.0
    %6099 = vmatpush1.xpose.msra.mxu0 0.0
    %6100 = vmatprep.subr.mxu0 0.0
    %6101 = vmatpush1.xpose.msra.mxu0 0.0
    %6102 = vmatprep.subr.mxu0 0.0
    %6103 = vmatpush1.xpose.msra.mxu0 0.0
    %6104 = vmatprep.subr.mxu0 0.0
    %6105 = vmatpush1.xpose.msra.mxu0 0.0
    %6106 = vmatprep.subr.mxu0 0.0
    %6107 = vmatpush1.xpose.msra.mxu0 0.0
    %6108 = vmatprep.subr.mxu0 0.0
    %6109 = vmatpush1.xpose.msra.mxu0 0.0
    %6110 = vmatprep.subr.mxu0 0.0
    %6111 = vmatpush1.xpose.msra.mxu0 0.0
    %6112 = vmatprep.subr.mxu0 0.0
    %6113 = vmatpush1.xpose.msra.mxu0 0.0
    %6114 = vmatprep.subr.mxu0 0.0
    %6115 = vmatpush1.xpose.msra.mxu0 0.0
    %6116 = vmatprep.subr.mxu0 0.0
    %6117 = vmatpush1.xpose.msra.mxu0 0.0
    %6118 = vmatprep.mubr.f32.mxu0 0.0
    %6119 = vmatmul.mubr.f32.gmra.mrb[0].mxu0 %v6050
    %v6120 = vpop.f32.mrb[0].mxu0
    %v6121 = vadd.f32 0.0, %v6120
    %v6122 = vpop.f32.mrb[0].mxu0
    %6123 = vdwg.mxu0
    %v6124 = vmul.f32 %v6121, 0.35355338
    %v6125 = vsel %vm4940, %v6124, -inf
    %6126 = vmax.xlane.f32.xlu0 %v6125
    %v6127 = vpop.xlane.xlu0 %6126
    %v6128 = vsub.f32 %v6124, %v6127
    %v6129 = vmul.f32 %v6128, 1.442695
    %v6130 = vpow.pop %v6129
    %v6131 = vsel %vm4940, %v6130, 0.0
    %6132 = vadd.xlane.f32.xlu0 %v6131
    %v6133 = vpop.xlane.xlu0 %6132
    %v6134 = vrcp.pop %v6133
    %v6135 = vmul.f32 %v6130, %v6134
    %6136 = vrot.lane.b32.xlu0 %v5546, 40
    %v6137 = vpop.permute.xlu0 %6136
    %v6139 = vsel %vm4954, %v6135, 0
    %v6141 = vsel %vm4753, %v6137, 0
    %6143 = vmatprep.subr.mxu0 0.0
    %6144 = vmatpush1.msra.mxu0 %v6141
    %6145 = vmatprep.subr.mxu0 0.0
    %6146 = vmatpush1.msra.mxu0 0.0
    %6147 = vmatprep.subr.mxu0 0.0
    %6148 = vmatpush1.msra.mxu0 0.0
    %6149 = vmatprep.subr.mxu0 0.0
    %6150 = vmatpush1.msra.mxu0 0.0
    %6151 = vmatprep.subr.mxu0 0.0
    %6152 = vmatpush1.msra.mxu0 0.0
    %6153 = vmatprep.subr.mxu0 0.0
    %6154 = vmatpush1.msra.mxu0 0.0
    %6155 = vmatprep.subr.mxu0 0.0
    %6156 = vmatpush1.msra.mxu0 0.0
    %6157 = vmatprep.subr.mxu0 0.0
    %6158 = vmatpush1.msra.mxu0 0.0
    %6159 = vmatprep.subr.mxu0 0.0
    %6160 = vmatpush1.msra.mxu0 0.0
    %6161 = vmatprep.subr.mxu0 0.0
    %6162 = vmatpush1.msra.mxu0 0.0
    %6163 = vmatprep.subr.mxu0 0.0
    %6164 = vmatpush1.msra.mxu0 0.0
    %6165 = vmatprep.subr.mxu0 0.0
    %6166 = vmatpush1.msra.mxu0 0.0
    %6167 = vmatprep.subr.mxu0 0.0
    %6168 = vmatpush1.msra.mxu0 0.0
    %6169 = vmatprep.subr.mxu0 0.0
    %6170 = vmatpush1.msra.mxu0 0.0
    %6171 = vmatprep.subr.mxu0 0.0
    %6172 = vmatpush1.msra.mxu0 0.0
    %6173 = vmatprep.subr.mxu0 0.0
    %6174 = vmatpush1.msra.mxu0 0.0
    %6175 = vmatprep.subr.mxu0 0.0
    %6176 = vmatpush1.msra.mxu0 0.0
    %6177 = vmatprep.subr.mxu0 0.0
    %6178 = vmatpush1.msra.mxu0 0.0
    %6179 = vmatprep.subr.mxu0 0.0
    %6180 = vmatpush1.msra.mxu0 0.0
    %6181 = vmatprep.subr.mxu0 0.0
    %6182 = vmatpush1.msra.mxu0 0.0
    %6183 = vmatprep.subr.mxu0 0.0
    %6184 = vmatpush1.msra.mxu0 0.0
    %6185 = vmatprep.subr.mxu0 0.0
    %6186 = vmatpush1.msra.mxu0 0.0
    %6187 = vmatprep.subr.mxu0 0.0
    %6188 = vmatpush1.msra.mxu0 0.0
    %6189 = vmatprep.subr.mxu0 0.0
    %6190 = vmatpush1.msra.mxu0 0.0
    %6191 = vmatprep.subr.mxu0 0.0
    %6192 = vmatpush1.msra.mxu0 0.0
    %6193 = vmatprep.subr.mxu0 0.0
    %6194 = vmatpush1.msra.mxu0 0.0
    %6195 = vmatprep.subr.mxu0 0.0
    %6196 = vmatpush1.msra.mxu0 0.0
    %6197 = vmatprep.subr.mxu0 0.0
    %6198 = vmatpush1.msra.mxu0 0.0
    %6199 = vmatprep.subr.mxu0 0.0
    %6200 = vmatpush1.msra.mxu0 0.0
    %6201 = vmatprep.subr.mxu0 0.0
    %6202 = vmatpush1.msra.mxu0 0.0
    %6203 = vmatprep.subr.mxu0 0.0
    %6204 = vmatpush1.msra.mxu0 0.0
    %6205 = vmatprep.subr.mxu0 0.0
    %6206 = vmatpush1.msra.mxu0 0.0
    %6207 = vmatprep.mubr.f32.mxu0 0.0
    %6208 = vmatmul.mubr.f32.gmra.mrb[0].mxu0 %v6139
    %v6209 = vpop.f32.mrb[0].mxu0
    %v6210 = vadd.f32 0.0, %v6209
    %v6211 = vpop.f32.mrb[0].mxu0
    %6212 = vdwg.mxu0
    %6214 = vrot.lane.b32.xlu0 %v5876, 8
    %v6215 = vpop.permute.xlu0 %6214
    %6218 = vrot.lane.b32.xlu0 %v6043, 16
    %v6219 = vpop.permute.xlu0 %6218
    %6222 = vrot.lane.b32.xlu0 %v6210, 24
    %v6223 = vpop.permute.xlu0 %6222
    %v6225 = vsel %vm990, %v5709, %v6215
    %v6226 = vsel %vm1671, %v6225, %v6219
    %v6227 = vsel %vm1673, %v6226, %v6223
    %v6229 = vrot.slane %v6227, 6
    %v6231 = vsel %vm4753, %v5545, %v6229
    %v6233 = vlaneseq
    %v6234 = vshrl.u32 %v6233, 7
    %v6235 = vsub.s32 0, %v6234
    %v6236 = vrot.slane %v423, %v6235
    %v6239 = vsel %vm813, %v6231, 0
    %6241 = vmatprep.subr.mxu0 0.0
    %6242 = vmatpush1.msra.mxu0 %v419
    %6243 = vmatprep.subr.mxu0 0.0
    %6244 = vmatpush1.msra.mxu0 %v420
    %6245 = vmatprep.subr.mxu0 0.0
    %6246 = vmatpush1.msra.mxu0 %v421
    %6247 = vmatprep.subr.mxu0 0.0
    %6248 = vmatpush1.msra.mxu0 %v422
    %6249 = vmatprep.subr.mxu0 0.0
    %6250 = vmatpush1.msra.mxu0 0.0
    %6251 = vmatprep.subr.mxu0 0.0
    %6252 = vmatpush1.msra.mxu0 0.0
    %6253 = vmatprep.subr.mxu0 0.0
    %6254 = vmatpush1.msra.mxu0 0.0
    %6255 = vmatprep.subr.mxu0 0.0
    %6256 = vmatpush1.msra.mxu0 0.0
    %6257 = vmatprep.subr.mxu0 0.0
    %6258 = vmatpush1.msra.mxu0 0.0
    %6259 = vmatprep.subr.mxu0 0.0
    %6260 = vmatpush1.msra.mxu0 0.0
    %6261 = vmatprep.subr.mxu0 0.0
    %6262 = vmatpush1.msra.mxu0 0.0
    %6263 = vmatprep.subr.mxu0 0.0
    %6264 = vmatpush1.msra.mxu0 0.0
    %6265 = vmatprep.subr.mxu0 0.0
    %6266 = vmatpush1.msra.mxu0 0.0
    %6267 = vmatprep.subr.mxu0 0.0
    %6268 = vmatpush1.msra.mxu0 0.0
    %6269 = vmatprep.subr.mxu0 0.0
    %6270 = vmatpush1.msra.mxu0 0.0
    %6271 = vmatprep.subr.mxu0 0.0
    %6272 = vmatpush1.msra.mxu0 0.0
    %6273 = vmatprep.subr.mxu0 0.0
    %6274 = vmatpush1.msra.mxu0 0.0
    %6275 = vmatprep.subr.mxu0 0.0
    %6276 = vmatpush1.msra.mxu0 0.0
    %6277 = vmatprep.subr.mxu0 0.0
    %6278 = vmatpush1.msra.mxu0 0.0
    %6279 = vmatprep.subr.mxu0 0.0
    %6280 = vmatpush1.msra.mxu0 0.0
    %6281 = vmatprep.subr.mxu0 0.0
    %6282 = vmatpush1.msra.mxu0 0.0
    %6283 = vmatprep.subr.mxu0 0.0
    %6284 = vmatpush1.msra.mxu0 0.0
    %6285 = vmatprep.subr.mxu0 0.0
    %6286 = vmatpush1.msra.mxu0 0.0
    %6287 = vmatprep.subr.mxu0 0.0
    %6288 = vmatpush1.msra.mxu0 0.0
    %6289 = vmatprep.subr.mxu0 0.0
    %6290 = vmatpush1.msra.mxu0 0.0
    %6291 = vmatprep.subr.mxu0 0.0
    %6292 = vmatpush1.msra.mxu0 0.0
    %6293 = vmatprep.subr.mxu0 0.0
    %6294 = vmatpush1.msra.mxu0 0.0
    %6295 = vmatprep.subr.mxu0 0.0
    %6296 = vmatpush1.msra.mxu0 0.0
    %6297 = vmatprep.subr.mxu0 0.0
    %6298 = vmatpush1.msra.mxu0 0.0
    %6299 = vmatprep.subr.mxu0 0.0
    %6300 = vmatpush1.msra.mxu0 0.0
    %6301 = vmatprep.subr.mxu0 0.0
    %6302 = vmatpush1.msra.mxu0 0.0
    %6303 = vmatprep.subr.mxu0 0.0
    %6304 = vmatpush1.msra.mxu0 0.0
    %6305 = vmatprep.mubr.f32.mxu0 0.0
    %6306 = vmatmul.mubr.f32.gmra.mrb[0].mxu0 %v6239
    %v6307 = vpop.f32.mrb[0].mxu0
    %v6308 = vadd.f32 %v6236, %v6307
    %v6309 = vpop.f32.mrb[0].mxu0
    %6310 = vdwg.mxu0
    %v6311 = vadd.f32 %v4754, %v6308
    %v6312 = vsel %vm4755, %v6311, 0.0
    %6313 = vadd.xlane.f32.xlu0 %v6312
    %v6314 = vpop.xlane.xlu0 %6313
    %v6315 = vmul.f32 %v6314, %v821
    %v6316 = vsub.f32 %v6311, %v6315
    %v6317 = vmul.f32 %v6316, %v6316
    %v6318 = vsel %vm4755, %v6317, 0.0
    %6319 = vadd.xlane.f32.xlu0 %v6318
    %v6320 = vpop.xlane.xlu0 %6319
    %v6321 = vmul.f32 %v6320, %v821
    %v6322 = vadd.f32 %v6321, 1e-05
    %v6323 = vrsqrt.pop %v6322
    %v6324 = vmul.f32 %v6316, %v6323
    %v6326 = vlaneseq
    %v6327 = vshrl.u32 %v6326, 7
    %v6328 = vsub.s32 0, %v6327
    %v6329 = vrot.slane %v424, %v6328
    %v6331 = vmul.f32 %v6324, %v6329
    %v6333 = vlaneseq
    %v6334 = vshrl.u32 %v6333, 7
    %v6335 = vsub.s32 0, %v6334
    %v6336 = vrot.slane %v425, %v6335
    %v6338 = vadd.f32 %v6331, %v6336
    %v6340 = vlaneseq
    %v6341 = vshrl.u32 %v6340, 7
    %v6342 = vsub.s32 0, %v6341
    %v6343 = vrot.slane %v430, %v6342
    %v6346 = vsel %vm813, %v6338, 0
    %6348 = vmatprep.subr.mxu0 0.0
    %6349 = vmatpush1.msra.mxu0 %v426
    %6350 = vmatprep.subr.mxu0 0.0
    %6351 = vmatpush1.msra.mxu0 %v427
    %6352 = vmatprep.subr.mxu0 0.0
    %6353 = vmatpush1.msra.mxu0 %v428
    %6354 = vmatprep.subr.mxu0 0.0
    %6355 = vmatpush1.msra.mxu0 %v429
    %6356 = vmatprep.subr.mxu0 0.0
    %6357 = vmatpush1.msra.mxu0 0.0
    %6358 = vmatprep.subr.mxu0 0.0
    %6359 = vmatpush1.msra.mxu0 0.0
    %6360 = vmatprep.subr.mxu0 0.0
    %6361 = vmatpush1.msra.mxu0 0.0
    %6362 = vmatprep.subr.mxu0 0.0
    %6363 = vmatpush1.msra.mxu0 0.0
    %6364 = vmatprep.subr.mxu0 0.0
    %6365 = vmatpush1.msra.mxu0 0.0
    %6366 = vmatprep.subr.mxu0 0.0
    %6367 = vmatpush1.msra.mxu0 0.0
    %6368 = vmatprep.subr.mxu0 0.0
    %6369 = vmatpush1.msra.mxu0 0.0
    %6370 = vmatprep.subr.mxu0 0.0
    %6371 = vmatpush1.msra.mxu0 0.0
    %6372 = vmatprep.subr.mxu0 0.0
    %6373 = vmatpush1.msra.mxu0 0.0
    %6374 = vmatprep.subr.mxu0 0.0
    %6375 = vmatpush1.msra.mxu0 0.0
    %6376 = vmatprep.subr.mxu0 0.0
    %6377 = vmatpush1.msra.mxu0 0.0
    %6378 = vmatprep.subr.mxu0 0.0
    %6379 = vmatpush1.msra.mxu0 0.0
    %6380 = vmatprep.subr.mxu0 0.0
    %6381 = vmatpush1.msra.mxu0 0.0
    %6382 = vmatprep.subr.mxu0 0.0
    %6383 = vmatpush1.msra.mxu0 0.0
    %6384 = vmatprep.subr.mxu0 0.0
    %6385 = vmatpush1.msra.mxu0 0.0
    %6386 = vmatprep.subr.mxu0 0.0
    %6387 = vmatpush1.msra.mxu0 0.0
    %6388 = vmatprep.subr.mxu0 0.0
    %6389 = vmatpush1.msra.mxu0 0.0
    %6390 = vmatprep.subr.mxu0 0.0
    %6391 = vmatpush1.msra.mxu0 0.0
    %6392 = vmatprep.subr.mxu0 0.0
    %6393 = vmatpush1.msra.mxu0 0.0
    %6394 = vmatprep.subr.mxu0 0.0
    %6395 = vmatpush1.msra.mxu0 0.0
    %6396 = vmatprep.subr.mxu0 0.0
    %6397 = vmatpush1.msra.mxu0 0.0
    %6398 = vmatprep.subr.mxu0 0.0
    %6399 = vmatpush1.msra.mxu0 0.0
    %6400 = vmatprep.subr.mxu0 0.0
    %6401 = vmatpush1.msra.mxu0 0.0
    %6402 = vmatprep.subr.mxu0 0.0
    %6403 = vmatpush1.msra.mxu0 0.0
    %6404 = vmatprep.subr.mxu0 0.0
    %6405 = vmatpush1.msra.mxu0 0.0
    %6406 = vmatprep.subr.mxu0 0.0
    %6407 = vmatpush1.msra.mxu0 0.0
    %6408 = vmatprep.subr.mxu0 0.0
    %6409 = vmatpush1.msra.mxu0 0.0
    %6410 = vmatprep.subr.mxu0 0.0
    %6411 = vmatpush1.msra.mxu0 0.0
    %6412 = vmatprep.mubr.f32.mxu0 0.0
    %6413 = vmatmul.mubr.f32.gmra.mrb[0].mxu0 %v6346
    %v6414 = vpop.f32.mrb[0].mxu0
    %v6415 = vadd.f32 %v6343, %v6414
    %v6416 = vpop.f32.mrb[0].mxu0
    %6417 = vdwg.mxu0
    %v6418 = vmul.f32 %v6415, 1.702
    %v6419 = vxor.u32 %v6418, 2147483648
    %v6420 = vmul.f32 %v6419, 1.442695
    %v6421 = vpow.pop %v6420
    %v6422 = vadd.f32 %v6421, 1.0
    %v6423 = vrcp.pop %v6422
    %v6424 = vmul.f32 1.0, %v6423
    %v6425 = vmul.f32 %v6415, %v6424
    %v6427 = vlaneseq
    %v6428 = vshrl.u32 %v6427, 7
    %v6429 = vsub.s32 0, %v6428
    %v6430 = vrot.slane %v447, %v6429
    %6432 = vmatprep.subr.mxu0 0.0
    %6433 = vmatpush1.msra.mxu0 %v431
    %6434 = vmatprep.subr.mxu0 0.0
    %6435 = vmatpush1.msra.mxu0 %v432
    %6436 = vmatprep.subr.mxu0 0.0
    %6437 = vmatpush1.msra.mxu0 %v433
    %6438 = vmatprep.subr.mxu0 0.0
    %6439 = vmatpush1.msra.mxu0 %v434
    %6440 = vmatprep.subr.mxu0 0.0
    %6441 = vmatpush1.msra.mxu0 %v435
    %6442 = vmatprep.subr.mxu0 0.0
    %6443 = vmatpush1.msra.mxu0 %v436
    %6444 = vmatprep.subr.mxu0 0.0
    %6445 = vmatpush1.msra.mxu0 %v437
    %6446 = vmatprep.subr.mxu0 0.0
    %6447 = vmatpush1.msra.mxu0 %v438
    %6448 = vmatprep.subr.mxu0 0.0
    %6449 = vmatpush1.msra.mxu0 %v439
    %6450 = vmatprep.subr.mxu0 0.0
    %6451 = vmatpush1.msra.mxu0 %v440
    %6452 = vmatprep.subr.mxu0 0.0
    %6453 = vmatpush1.msra.mxu0 %v441
    %6454 = vmatprep.subr.mxu0 0.0
    %6455 = vmatpush1.msra.mxu0 %v442
    %6456 = vmatprep.subr.mxu0 0.0
    %6457 = vmatpush1.msra.mxu0 %v443
    %6458 = vmatprep.subr.mxu0 0.0
    %6459 = vmatpush1.msra.mxu0 %v444
    %6460 = vmatprep.subr.mxu0 0.0
    %6461 = vmatpush1.msra.mxu0 %v445
    %6462 = vmatprep.subr.mxu0 0.0
    %6463 = vmatpush1.msra.mxu0 %v446
    %6464 = vmatprep.subr.mxu0 0.0
    %6465 = vmatpush1.msra.mxu0 0.0
    %6466 = vmatprep.subr.mxu0 0.0
    %6467 = vmatpush1.msra.mxu0 0.0
    %6468 = vmatprep.subr.mxu0 0.0
    %6469 = vmatpush1.msra.mxu0 0.0
    %6470 = vmatprep.subr.mxu0 0.0
    %6471 = vmatpush1.msra.mxu0 0.0
    %6472 = vmatprep.subr.mxu0 0.0
    %6473 = vmatpush1.msra.mxu0 0.0
    %6474 = vmatprep.subr.mxu0 0.0
    %6475 = vmatpush1.msra.mxu0 0.0
    %6476 = vmatprep.subr.mxu0 0.0
    %6477 = vmatpush1.msra.mxu0 0.0
    %6478 = vmatprep.subr.mxu0 0.0
    %6479 = vmatpush1.msra.mxu0 0.0
    %6480 = vmatprep.subr.mxu0 0.0
    %6481 = vmatpush1.msra.mxu0 0.0
    %6482 = vmatprep.subr.mxu0 0.0
    %6483 = vmatpush1.msra.mxu0 0.0
    %6484 = vmatprep.subr.mxu0 0.0
    %6485 = vmatpush1.msra.mxu0 0.0
    %6486 = vmatprep.subr.mxu0 0.0
    %6487 = vmatpush1.msra.mxu0 0.0
    %6488 = vmatprep.subr.mxu0 0.0
    %6489 = vmatpush1.msra.mxu0 0.0
    %6490 = vmatprep.subr.mxu0 0.0
    %6491 = vmatpush1.msra.mxu0 0.0
    %6492 = vmatprep.subr.mxu0 0.0
    %6493 = vmatpush1.msra.mxu0 0.0
    %6494 = vmatprep.subr.mxu0 0.0
    %6495 = vmatpush1.msra.mxu0 0.0
    %6496 = vmatprep.mubr.f32.mxu0 0.0
    %6497 = vmatmul.mubr.f32.gmra.mrb[0].mxu0 %v6425
    %v6498 = vpop.f32.mrb[0].mxu0
    %v6499 = vadd.f32 %v6430, %v6498
    %v6500 = vpop.f32.mrb[0].mxu0
    %6501 = vdwg.mxu0
    %v6502 = vadd.f32 %v6311, %v6499
    %v6504 = vrot.slane %v6502, 1
    %v6506 = vsel %vm2682, %v6502, %v6504
    %v6507 = vrot.slane %v6502, 2
    %v6509 = vsel %vm2682, %v6504, %v6507
    %v6511 = vlaneseq
    %v6512 = vshrl.u32 %v6511, 7
    %v6513 = vsub.s32 0, %v6512
    %v6514 = vrot.slane %v452, %v6513
    %v6517 = vsel %vm813, %v6506, 0
    %6519 = vmatprep.subr.mxu0 0.0
    %6520 = vmatpush1.msra.mxu0 %v448
    %6521 = vmatprep.subr.mxu0 0.0
    %6522 = vmatpush1.msra.mxu0 %v449
    %6523 = vmatprep.subr.mxu0 0.0
    %6524 = vmatpush1.msra.mxu0 %v450
    %6525 = vmatprep.subr.mxu0 0.0
    %6526 = vmatpush1.msra.mxu0 %v451
    %6527 = vmatprep.subr.mxu0 0.0
    %6528 = vmatpush1.msra.mxu0 0.0
    %6529 = vmatprep.subr.mxu0 0.0
    %6530 = vmatpush1.msra.mxu0 0.0
    %6531 = vmatprep.subr.mxu0 0.0
    %6532 = vmatpush1.msra.mxu0 0.0
    %6533 = vmatprep.subr.mxu0 0.0
    %6534 = vmatpush1.msra.mxu0 0.0
    %6535 = vmatprep.subr.mxu0 0.0
    %6536 = vmatpush1.msra.mxu0 0.0
    %6537 = vmatprep.subr.mxu0 0.0
    %6538 = vmatpush1.msra.mxu0 0.0
    %6539 = vmatprep.subr.mxu0 0.0
    %6540 = vmatpush1.msra.mxu0 0.0
    %6541 = vmatprep.subr.mxu0 0.0
    %6542 = vmatpush1.msra.mxu0 0.0
    %6543 = vmatprep.subr.mxu0 0.0
    %6544 = vmatpush1.msra.mxu0 0.0
    %6545 = vmatprep.subr.mxu0 0.0
    %6546 = vmatpush1.msra.mxu0 0.0
    %6547 = vmatprep.subr.mxu0 0.0
    %6548 = vmatpush1.msra.mxu0 0.0
    %6549 = vmatprep.subr.mxu0 0.0
    %6550 = vmatpush1.msra.mxu0 0.0
    %6551 = vmatprep.subr.mxu0 0.0
    %6552 = vmatpush1.msra.mxu0 0.0
    %6553 = vmatprep.subr.mxu0 0.0
    %6554 = vmatpush1.msra.mxu0 0.0
    %6555 = vmatprep.subr.mxu0 0.0
    %6556 = vmatpush1.msra.mxu0 0.0
    %6557 = vmatprep.subr.mxu0 0.0
    %6558 = vmatpush1.msra.mxu0 0.0
    %6559 = vmatprep.subr.mxu0 0.0
    %6560 = vmatpush1.msra.mxu0 0.0
    %6561 = vmatprep.subr.mxu0 0.0
    %6562 = vmatpush1.msra.mxu0 0.0
    %6563 = vmatprep.subr.mxu0 0.0
    %6564 = vmatpush1.msra.mxu0 0.0
    %6565 = vmatprep.subr.mxu0 0.0
    %6566 = vmatpush1.msra.mxu0 0.0
    %6567 = vmatprep.subr.mxu0 0.0
    %6568 = vmatpush1.msra.mxu0 0.0
    %6569 = vmatprep.subr.mxu0 0.0
    %6570 = vmatpush1.msra.mxu0 0.0
    %6571 = vmatprep.subr.mxu0 0.0
    %6572 = vmatpush1.msra.mxu0 0.0
    %6573 = vmatprep.subr.mxu0 0.0
    %6574 = vmatpush1.msra.mxu0 0.0
    %6575 = vmatprep.subr.mxu0 0.0
    %6576 = vmatpush1.msra.mxu0 0.0
    %6577 = vmatprep.subr.mxu0 0.0
    %6578 = vmatpush1.msra.mxu0 0.0
    %6579 = vmatprep.subr.mxu0 0.0
    %6580 = vmatpush1.msra.mxu0 0.0
    %6581 = vmatprep.subr.mxu0 0.0
    %6582 = vmatpush1.msra.mxu0 0.0
    %6583 = vmatprep.mubr.f32.mxu0 0.0
    %6584 = vmatmul.mubr.f32.gmra.mrb[0].mxu0 %v6517
    %v6585 = vpop.f32.mrb[0].mxu0
    %v6586 = vadd.f32 %v6514, %v6585
    %v6587 = vpop.f32.mrb[0].mxu0
    %6588 = vdwg.mxu0
    %v6589 = vmul.f32 %v6586, %v6586
    %v6590 = vmul.f32 %v6586, %v6589
    %v6591 = vmul.f32 %v6590, 0.044715
    %v6592 = vadd.f32 %v6586, %v6591
    %v6593 = vmul.f32 %v6592, 0.7978846
    %v6594 = vtanh.pop %v6593
    %v6595 = vadd.f32 %v6594, 1.0
    %v6596 = vmul.f32 %v6595, 0.5
    %v6597 = vmul.f32 %v6586, %v6596
    %v6599 = vlaneseq
    %v6600 = vshrl.u32 %v6599, 7
    %v6601 = vsub.s32 0, %v6600
    %v6602 = vrot.slane %v461, %v6601
    %vm6604 = vcmask 523264
    %v6606 = vsel %vm6604, %v6597, 0
    %6608 = vmatprep.subr.mxu0 0.0
    %6609 = vmatpush1.msra.mxu0 %v453
    %6610 = vmatprep.subr.mxu0 0.0
    %6611 = vmatpush1.msra.mxu0 %v454
    %6612 = vmatprep.subr.mxu0 0.0
    %6613 = vmatpush1.msra.mxu0 %v455
    %6614 = vmatprep.subr.mxu0 0.0
    %6615 = vmatpush1.msra.mxu0 %v456
    %6616 = vmatprep.subr.mxu0 0.0
    %6617 = vmatpush1.msra.mxu0 %v457
    %6618 = vmatprep.subr.mxu0 0.0
    %6619 = vmatpush1.msra.mxu0 %v458
    %6620 = vmatprep.subr.mxu0 0.0
    %6621 = vmatpush1.msra.mxu0 %v459
    %6622 = vmatprep.subr.mxu0 0.0
    %6623 = vmatpush1.msra.mxu0 %v460
    %6624 = vmatprep.subr.mxu0 0.0
    %6625 = vmatpush1.msra.mxu0 0.0
    %6626 = vmatprep.subr.mxu0 0.0
    %6627 = vmatpush1.msra.mxu0 0.0
    %6628 = vmatprep.subr.mxu0 0.0
    %6629 = vmatpush1.msra.mxu0 0.0
    %6630 = vmatprep.subr.mxu0 0.0
    %6631 = vmatpush1.msra.mxu0 0.0
    %6632 = vmatprep.subr.mxu0 0.0
    %6633 = vmatpush1.msra.mxu0 0.0
    %6634 = vmatprep.subr.mxu0 0.0
    %6635 = vmatpush1.msra.mxu0 0.0
    %6636 = vmatprep.subr.mxu0 0.0
    %6637 = vmatpush1.msra.mxu0 0.0
    %6638 = vmatprep.subr.mxu0 0.0
    %6639 = vmatpush1.msra.mxu0 0.0
    %6640 = vmatprep.subr.mxu0 0.0
    %6641 = vmatpush1.msra.mxu0 0.0
    %6642 = vmatprep.subr.mxu0 0.0
    %6643 = vmatpush1.msra.mxu0 0.0
    %6644 = vmatprep.subr.mxu0 0.0
    %6645 = vmatpush1.msra.mxu0 0.0
    %6646 = vmatprep.subr.mxu0 0.0
    %6647 = vmatpush1.msra.mxu0 0.0
    %6648 = vmatprep.subr.mxu0 0.0
    %6649 = vmatpush1.msra.mxu0 0.0
    %6650 = vmatprep.subr.mxu0 0.0
    %6651 = vmatpush1.msra.mxu0 0.0
    %6652 = vmatprep.subr.mxu0 0.0
    %6653 = vmatpush1.msra.mxu0 0.0
    %6654 = vmatprep.subr.mxu0 0.0
    %6655 = vmatpush1.msra.mxu0 0.0
    %6656 = vmatprep.subr.mxu0 0.0
    %6657 = vmatpush1.msra.mxu0 0.0
    %6658 = vmatprep.subr.mxu0 0.0
    %6659 = vmatpush1.msra.mxu0 0.0
    %6660 = vmatprep.subr.mxu0 0.0
    %6661 = vmatpush1.msra.mxu0 0.0
    %6662 = vmatprep.subr.mxu0 0.0
    %6663 = vmatpush1.msra.mxu0 0.0
    %6664 = vmatprep.subr.mxu0 0.0
    %6665 = vmatpush1.msra.mxu0 0.0
    %6666 = vmatprep.subr.mxu0 0.0
    %6667 = vmatpush1.msra.mxu0 0.0
    %6668 = vmatprep.subr.mxu0 0.0
    %6669 = vmatpush1.msra.mxu0 0.0
    %6670 = vmatprep.subr.mxu0 0.0
    %6671 = vmatpush1.msra.mxu0 0.0
    %6672 = vmatprep.mubr.f32.mxu0 0.0
    %6673 = vmatmul.mubr.f32.gmra.mrb[0].mxu0 %v6606
    %v6674 = vpop.f32.mrb[0].mxu0
    %v6675 = vadd.f32 %v6602, %v6674
    %v6676 = vpop.f32.mrb[0].mxu0
    %6677 = vdwg.mxu0
    %v6678 = vtanh.pop %v6675
    %vm6679 = vcmask 123904
    %6680 = vst.msk [vmem:[%s115] sm:$0x3] %vm6679, %v6678
    %v6682 = vlaneseq
    %v6683 = vshrl.u32 %v6682, 7
    %v6684 = vsub.s32 0, %v6683
    %v6685 = vrot.slane %v466, %v6684
    %v6688 = vsel %vm813, %v6509, 0
    %6690 = vmatprep.subr.mxu0 0.0
    %6691 = vmatpush1.msra.mxu0 %v462
    %6692 = vmatprep.subr.mxu0 0.0
    %6693 = vmatpush1.msra.mxu0 %v463
    %6694 = vmatprep.subr.mxu0 0.0
    %6695 = vmatpush1.msra.mxu0 %v464
    %6696 = vmatprep.subr.mxu0 0.0
    %6697 = vmatpush1.msra.mxu0 %v465
    %6698 = vmatprep.subr.mxu0 0.0
    %6699 = vmatpush1.msra.mxu0 0.0
    %6700 = vmatprep.subr.mxu0 0.0
    %6701 = vmatpush1.msra.mxu0 0.0
    %6702 = vmatprep.subr.mxu0 0.0
    %6703 = vmatpush1.msra.mxu0 0.0
    %6704 = vmatprep.subr.mxu0 0.0
    %6705 = vmatpush1.msra.mxu0 0.0
    %6706 = vmatprep.subr.mxu0 0.0
    %6707 = vmatpush1.msra.mxu0 0.0
    %6708 = vmatprep.subr.mxu0 0.0
    %6709 = vmatpush1.msra.mxu0 0.0
    %6710 = vmatprep.subr.mxu0 0.0
    %6711 = vmatpush1.msra.mxu0 0.0
    %6712 = vmatprep.subr.mxu0 0.0
    %6713 = vmatpush1.msra.mxu0 0.0
    %6714 = vmatprep.subr.mxu0 0.0
    %6715 = vmatpush1.msra.mxu0 0.0
    %6716 = vmatprep.subr.mxu0 0.0
    %6717 = vmatpush1.msra.mxu0 0.0
    %6718 = vmatprep.subr.mxu0 0.0
    %6719 = vmatpush1.msra.mxu0 0.0
    %6720 = vmatprep.subr.mxu0 0.0
    %6721 = vmatpush1.msra.mxu0 0.0
    %6722 = vmatprep.subr.mxu0 0.0
    %6723 = vmatpush1.msra.mxu0 0.0
    %6724 = vmatprep.subr.mxu0 0.0
    %6725 = vmatpush1.msra.mxu0 0.0
    %6726 = vmatprep.subr.mxu0 0.0
    %6727 = vmatpush1.msra.mxu0 0.0
    %6728 = vmatprep.subr.mxu0 0.0
    %6729 = vmatpush1.msra.mxu0 0.0
    %6730 = vmatprep.subr.mxu0 0.0
    %6731 = vmatpush1.msra.mxu0 0.0
    %6732 = vmatprep.subr.mxu0 0.0
    %6733 = vmatpush1.msra.mxu0 0.0
    %6734 = vmatprep.subr.mxu0 0.0
    %6735 = vmatpush1.msra.mxu0 0.0
    %6736 = vmatprep.subr.mxu0 0.0
    %6737 = vmatpush1.msra.mxu0 0.0
    %6738 = vmatprep.subr.mxu0 0.0
    %6739 = vmatpush1.msra.mxu0 0.0
    %6740 = vmatprep.subr.mxu0 0.0
    %6741 = vmatpush1.msra.mxu0 0.0
    %6742 = vmatprep.subr.mxu0 0.0
    %6743 = vmatpush1.msra.mxu0 0.0
    %6744 = vmatprep.subr.mxu0 0.0
    %6745 = vmatpush1.msra.mxu0 0.0
    %6746 = vmatprep.subr.mxu0 0.0
    %6747 = vmatpush1.msra.mxu0 0.0
    %6748 = vmatprep.subr.mxu0 0.0
    %6749 = vmatpush1.msra.mxu0 0.0
    %6750 = vmatprep.subr.mxu0 0.0
    %6751 = vmatpush1.msra.mxu0 0.0
    %6752 = vmatprep.subr.mxu0 0.0
    %6753 = vmatpush1.msra.mxu0 0.0
    %6754 = vmatprep.mubr.f32.mxu0 0.0
    %6755 = vmatmul.mubr.f32.gmra.mrb[0].mxu0 %v6688
    %v6756 = vpop.f32.mrb[0].mxu0
    %v6757 = vadd.f32 %v6685, %v6756
    %v6758 = vpop.f32.mrb[0].mxu0
    %6759 = vdwg.mxu0
    %v6760 = vmul.f32 %v6757, %v6757
    %v6761 = vmul.f32 %v6757, %v6760
    %v6762 = vmul.f32 %v6761, 0.044715
    %v6763 = vadd.f32 %v6757, %v6762
    %v6764 = vmul.f32 %v6763, 0.7978846
    %v6765 = vtanh.pop %v6764
    %v6766 = vadd.f32 %v6765, 1.0
    %v6767 = vmul.f32 %v6766, 0.5
    %v6768 = vmul.f32 %v6757, %v6767
    %v6770 = vlaneseq
    %v6771 = vshrl.u32 %v6770, 7
    %v6772 = vsub.s32 0, %v6771
    %v6773 = vrot.slane %v475, %v6772
    %v6776 = vsel %vm6604, %v6768, 0
    %6778 = vmatprep.subr.mxu0 0.0
    %6779 = vmatpush1.msra.mxu0 %v467
    %6780 = vmatprep.subr.mxu0 0.0
    %6781 = vmatpush1.msra.mxu0 %v468
    %6782 = vmatprep.subr.mxu0 0.0
    %6783 = vmatpush1.msra.mxu0 %v469
    %6784 = vmatprep.subr.mxu0 0.0
    %6785 = vmatpush1.msra.mxu0 %v470
    %6786 = vmatprep.subr.mxu0 0.0
    %6787 = vmatpush1.msra.mxu0 %v471
    %6788 = vmatprep.subr.mxu0 0.0
    %6789 = vmatpush1.msra.mxu0 %v472
    %6790 = vmatprep.subr.mxu0 0.0
    %6791 = vmatpush1.msra.mxu0 %v473
    %6792 = vmatprep.subr.mxu0 0.0
    %6793 = vmatpush1.msra.mxu0 %v474
    %6794 = vmatprep.subr.mxu0 0.0
    %6795 = vmatpush1.msra.mxu0 0.0
    %6796 = vmatprep.subr.mxu0 0.0
    %6797 = vmatpush1.msra.mxu0 0.0
    %6798 = vmatprep.subr.mxu0 0.0
    %6799 = vmatpush1.msra.mxu0 0.0
    %6800 = vmatprep.subr.mxu0 0.0
    %6801 = vmatpush1.msra.mxu0 0.0
    %6802 = vmatprep.subr.mxu0 0.0
    %6803 = vmatpush1.msra.mxu0 0.0
    %6804 = vmatprep.subr.mxu0 0.0
    %6805 = vmatpush1.msra.mxu0 0.0
    %6806 = vmatprep.subr.mxu0 0.0
    %6807 = vmatpush1.msra.mxu0 0.0
    %6808 = vmatprep.subr.mxu0 0.0
    %6809 = vmatpush1.msra.mxu0 0.0
    %6810 = vmatprep.subr.mxu0 0.0
    %6811 = vmatpush1.msra.mxu0 0.0
    %6812 = vmatprep.subr.mxu0 0.0
    %6813 = vmatpush1.msra.mxu0 0.0
    %6814 = vmatprep.subr.mxu0 0.0
    %6815 = vmatpush1.msra.mxu0 0.0
    %6816 = vmatprep.subr.mxu0 0.0
    %6817 = vmatpush1.msra.mxu0 0.0
    %6818 = vmatprep.subr.mxu0 0.0
    %6819 = vmatpush1.msra.mxu0 0.0
    %6820 = vmatprep.subr.mxu0 0.0
    %6821 = vmatpush1.msra.mxu0 0.0
    %6822 = vmatprep.subr.mxu0 0.0
    %6823 = vmatpush1.msra.mxu0 0.0
    %6824 = vmatprep.subr.mxu0 0.0
    %6825 = vmatpush1.msra.mxu0 0.0
    %6826 = vmatprep.subr.mxu0 0.0
    %6827 = vmatpush1.msra.mxu0 0.0
    %6828 = vmatprep.subr.mxu0 0.0
    %6829 = vmatpush1.msra.mxu0 0.0
    %6830 = vmatprep.subr.mxu0 0.0
    %6831 = vmatpush1.msra.mxu0 0.0
    %6832 = vmatprep.subr.mxu0 0.0
    %6833 = vmatpush1.msra.mxu0 0.0
    %6834 = vmatprep.subr.mxu0 0.0
    %6835 = vmatpush1.msra.mxu0 0.0
    %6836 = vmatprep.subr.mxu0 0.0
    %6837 = vmatpush1.msra.mxu0 0.0
    %6838 = vmatprep.subr.mxu0 0.0
    %6839 = vmatpush1.msra.mxu0 0.0
    %6840 = vmatprep.subr.mxu0 0.0
    %6841 = vmatpush1.msra.mxu0 0.0
    %6842 = vmatprep.mubr.f32.mxu0 0.0
    %6843 = vmatmul.mubr.f32.gmra.mrb[0].mxu0 %v6776
    %v6844 = vpop.f32.mrb[0].mxu0
    %v6845 = vadd.f32 %v6773, %v6844
    %v6846 = vpop.f32.mrb[0].mxu0
    %6847 = vdwg.mxu0
    %v6848 = vtanh.pop %v6845
    %s6849 = scalar_lea.vmem %s115, 2
    %6850 = vst.msk [vmem:[%s6849] sm:$0x3] %vm6679, %v6848
    // Predicated region
    $region266: #{cagmh_forward.1} parent=1 // pred_check
      _
    $region267: #{cagmh_forward.1} parent=1 // pred_check_branch
      %6852 = sbr.rel (0) target = $region269
    $region268: #{cagmh_forward.1} parent=1 // pred_region
      _
    $region269: #{cagmh_forward.1} parent=1 // pred_fallthru
      _
    // Predicated region
    $region270: #{cagmh_forward.1} parent=1 // pred_check
      _
    $region271: #{cagmh_forward.1} parent=1 // pred_check_branch
      %6854 = sbr.rel (0) target = $region273
    $region272: #{cagmh_forward.1} parent=1 // pred_region
      _
    $region273: #{cagmh_forward.1} parent=1 // pred_fallthru
      _
    %6855 = vsyncpa [#allocation4], 1
    %6856 = vsyncpa [#allocation8], 1
    %6857 = vsyncpa [#allocation11], 1
    %6858 = vsyncpa [#allocation14], 1
    %6859 = vsyncpa [#allocation17], 1
    %6860 = vsyncpa [#allocation5], 1

</llo_original>
